<compile_context>
chip_gen: v5e
topology: v5e:2x2
jax: 0.10.0
libtpu: 0.0.40
codegen_flags: <defaults>
</compile_context>

<pallas_src>
import jax
import jax.numpy as jnp
import numpy as np
from jax.experimental import pallas as pl
from jax.experimental.pallas import tpu as pltpu


# --------------------------------------------------------------------------
# Fused kernel: biGRU encoder -> 1-step decoder GRU -> pointer + softmax
# --------------------------------------------------------------------------
def segbot_kernel(start_ref, x_ref,
                  wih_enc_ref, whh_cat_ref,
                  wih_d_ref, w1_ref, w2_ref, bias_ref,
                  attn_ref,
                  xp_ref, enc_ref):
    T = x_ref.shape[0]
    H = whh_cat_ref.shape[0]
    H3 = 3 * H

    # ---- packed-bias slices (static offsets, lane-aligned when H % 128 == 0) ----
    bih_enc = bias_ref[:, 0:2 * H3]            # (1, 6H)  [fwd r,z,n | bwd r,z,n]
    bhh_f = bias_ref[:, 2 * H3:3 * H3]         # (1, 3H)
    bhh_b = bias_ref[:, 3 * H3:4 * H3]         # (1, 3H)
    dec_bih = bias_ref[:, 4 * H3:5 * H3]       # (1, 3H)
    dec_bhh = bias_ref[:, 5 * H3:6 * H3]       # (1, 3H)
    b1 = bias_ref[:, 18 * H:19 * H]            # (1, H)
    b2 = bias_ref[:, 19 * H:20 * H]            # (1, H)
    v = bias_ref[:, 20 * H:21 * H]             # (1, H)

    # ---- Stage 1: fused input projection for BOTH directions (one MXU matmul) ----
    # columns [0:3H] = forward gates, [3H:6H] = backward gates (PyTorch r,z,n order)
    xp_ref[...] = (jnp.dot(x_ref[...], wih_enc_ref[...],
                           preferred_element_type=jnp.float32) + bih_enc)

    whh = whh_cat_ref[...]                     # (H, 6H) = [Whh_f^T | Whh_b^T]

    # ---- Stage 2: fused fwd+bwd recurrence; one (2,H)@(H,6H) vmatmul per step ----
    def gru_gates(xg, hg, h_prev):
        r = jax.nn.sigmoid(xg[:, 0:H] + hg[:, 0:H])
        z = jax.nn.sigmoid(xg[:, H:2 * H] + hg[:, H:2 * H])
        n = jnp.tanh(xg[:, 2 * H:H3] + r * hg[:, 2 * H:H3])
        return (1.0 - z) * n + z * h_prev

    def step(t, h2):                           # h2: (2, H), row0 = h_fwd, row1 = h_bwd
        hg2 = jnp.dot(h2, whh, preferred_element_type=jnp.float32)   # (2, 6H)
        p = T - 1 - t
        xgf = xp_ref[pl.ds(t, 1), 0:H3]        # forward gate preacts at position t
        xgb = xp_ref[pl.ds(p, 1), H3:2 * H3]   # backward gate preacts at position T-1-t
        hf = gru_gates(xgf, hg2[0:1, 0:H3] + bhh_f, h2[0:1, :])
        hb = gru_gates(xgb, hg2[1:2, H3:2 * H3] + bhh_b, h2[1:2, :])
        enc_ref[pl.ds(t, 1), 0:H] = hf         # forward half of enc row t
        enc_ref[pl.ds(p, 1), H:2 * H] = hb     # backward half of enc row T-1-t
        return jnp.concatenate([hf, hb], axis=0)

    h0 = jnp.zeros((2, H), jnp.float32)
    # T is small/static here; for long documents switch to a partial unroll factor.
    jax.lax.fori_loop(0, T, step, h0, unroll=True)

    # ---- Stage 3: single-step decoder GRU, initial hidden state = 0 ----
    s = start_ref[0]
    x_d = enc_ref[pl.ds(s, 1), :]                                          # (1, 2H)
    xg = jnp.dot(x_d, wih_d_ref[...], preferred_element_type=jnp.float32) + dec_bih
    hg = dec_bhh                                # h0 == 0 so h0 @ W_hh == 0
    r = jax.nn.sigmoid(xg[:, 0:H] + hg[:, 0:H])
    z = jax.nn.sigmoid(xg[:, H:2 * H] + hg[:, H:2 * H])
    n = jnp.tanh(xg[:, 2 * H:H3] + r * hg[:, 2 * H:H3])
    h1 = (1.0 - z) * n                                                     # (1, H)

    # ---- Stage 4: pointer scores v(tanh(W1 enc + W2 dec)) and softmax over T ----
    enc = enc_ref[...]                                                     # (T, 2H)
    s1 = jnp.dot(enc, w1_ref[...], preferred_element_type=jnp.float32) + b1
    s2 = jnp.dot(h1, w2_ref[...], preferred_element_type=jnp.float32) + b2
    st = jnp.tanh(s1 + s2)                                                 # (T, H)
    # VPU multiply + lane reduction instead of an N=1 matmul (frees the MXU slot).
    scores = jnp.sum(st * v, axis=-1, keepdims=True)                       # (T, 1)
    m = jnp.max(scores, axis=0, keepdims=True)
    e = jnp.exp(scores - m)
    attn_ref[...] = e / jnp.sum(e, axis=0, keepdims=True)


# --------------------------------------------------------------------------
# Parameters (deterministic, PyTorch-shaped), one-time packing, and wrapper
# --------------------------------------------------------------------------
def init_params(key, input_dim, hidden_dim):
    H = hidden_dim
    bound = 1.0 / np.sqrt(H)
    names_shapes = [
        ("enc_wih_f", (3 * H, input_dim)), ("enc_whh_f", (3 * H, H)),
        ("enc_bih_f", (3 * H,)), ("enc_bhh_f", (3 * H,)),
        ("enc_wih_b", (3 * H, input_dim)), ("enc_whh_b", (3 * H, H)),
        ("enc_bih_b", (3 * H,)), ("enc_bhh_b", (3 * H,)),
        ("dec_wih", (3 * H, 2 * H)), ("dec_whh", (3 * H, H)),
        ("dec_bih", (3 * H,)), ("dec_bhh", (3 * H,)),
        ("ptr_w1", (H, 2 * H)), ("ptr_b1", (H,)),
        ("ptr_w2", (H, H)), ("ptr_b2", (H,)),
        ("ptr_v", (1, H)),
    ]
    keys = jax.random.split(key, len(names_shapes))
    return {name: jax.random.uniform(k, shape, jnp.float32, -bound, bound)
            for k, (name, shape) in zip(keys, names_shapes)}


def pack_params(p):
    """One-time packing of PyTorch-shaped weights into the kernel layout.

    Hoisted out of the per-call forward path (the packing XLA ops would otherwise cost
    as much as this microsecond-scale kernel).
    """
    H = p["ptr_w2"].shape[0]
    # Fused encoder input-projection weights: columns [fwd 3H | bwd 3H].
    wih_enc = jnp.concatenate([p["enc_wih_f"].T, p["enc_wih_b"].T], axis=1)   # (D, 6H)
    # Two-row-LHS recurrent weight: (H, 6H) = [Whh_f^T | Whh_b^T] (no zero padding).
    whh_cat = jnp.concatenate([p["enc_whh_f"].T, p["enc_whh_b"].T], axis=1)   # (H, 6H)
    # All small bias / v vectors packed into a single (1, 21H) VMEM input.
    bias_pack = jnp.concatenate([
        p["enc_bih_f"], p["enc_bih_b"],      # [0    : 6H ]
        p["enc_bhh_f"], p["enc_bhh_b"],      # [6H   : 12H]
        p["dec_bih"], p["dec_bhh"],          # [12H  : 18H]
        p["ptr_b1"], p["ptr_b2"],            # [18H  : 20H]
        p["ptr_v"][0],                       # [20H  : 21H]
    ])[None]
    return {
        "H": int(H),
        "wih_enc": wih_enc,
        "whh_cat": whh_cat,
        "dec_wih_t": p["dec_wih"].T,          # (2H, 3H)
        "w1_t": p["ptr_w1"].T,                # (2H, H)
        "w2_t": p["ptr_w2"].T,                # (H, H)
        "bias_pack": bias_pack,               # (1, 21H)
    }


def segbot_forward(x, start_units, packed):
    B, T, D = x.shape
    assert B == 1, "reference SEGBOT pointer broadcasting requires batch == 1"
    H = packed["H"]
    x2 = x[0].astype(jnp.float32)                                          # (T, D)

    vmem = pl.BlockSpec(memory_space=pltpu.MemorySpace.VMEM)
    smem = pl.BlockSpec(memory_space=pltpu.MemorySpace.SMEM)
    # Clamp: VMEM OOB reads are unchecked on TPU.
    start_arr = jnp.clip(jnp.asarray([start_units], jnp.int32), 0, T - 1)

    attn = pl.pallas_call(
        segbot_kernel,
        out_shape=jax.ShapeDtypeStruct((T, 1), jnp.float32),
        in_specs=[smem] + [vmem] * 7,
        out_specs=vmem,
        scratch_shapes=[pltpu.VMEM((T, 6 * H), jnp.float32),   # fused input projections
                        pltpu.VMEM((T, 2 * H), jnp.float32)],  # encoder outputs (never leave VMEM)
    )(start_arr, x2,
      packed["wih_enc"], packed["whh_cat"],
      packed["dec_wih_t"], packed["w1_t"], packed["w2_t"],
      packed["bias_pack"])

    return attn[None]                                                      # (1, T, 1), like torch


# --------------------------------------------------------------------------
# Pure-JAX reference (mirrors PyTorch nn.GRU / Linear semantics exactly)
# --------------------------------------------------------------------------
def segbot_reference(x, start_units, p):
    H = p["ptr_w2"].shape[0]

    def gru_seq(seq, w_ih, w_hh, b_ih, b_hh):
        h = jnp.zeros((seq.shape[0], H), jnp.float32)
        outs = []
        for t in range(seq.shape[1]):
            xg = seq[:, t] @ w_ih.T + b_ih
            hg = h @ w_hh.T + b_hh
            r = jax.nn.sigmoid(xg[:, :H] + hg[:, :H])
            z = jax.nn.sigmoid(xg[:, H:2 * H] + hg[:, H:2 * H])
            n = jnp.tanh(xg[:, 2 * H:] + r * hg[:, 2 * H:])
            h = (1.0 - z) * n + z * h
            outs.append(h)
        return jnp.stack(outs, axis=1)                                     # (B, T, H)

    hf = gru_seq(x, p["enc_wih_f"], p["enc_whh_f"], p["enc_bih_f"], p["enc_bhh_f"])
    hb = gru_seq(x[:, ::-1], p["enc_wih_b"], p["enc_whh_b"],
                 p["enc_bih_b"], p["enc_bhh_b"])[:, ::-1]
    enc = jnp.concatenate([hf, hb], axis=-1)                               # (B, T, 2H)

    d_in = enc[:, start_units]                                             # (B, 2H)
    h0 = jnp.zeros((x.shape[0], H), jnp.float32)
    xg = d_in @ p["dec_wih"].T + p["dec_bih"]
    hg = h0 @ p["dec_whh"].T + p["dec_bhh"]
    r = jax.nn.sigmoid(xg[:, :H] + hg[:, :H])
    z = jax.nn.sigmoid(xg[:, H:2 * H] + hg[:, H:2 * H])
    n = jnp.tanh(xg[:, 2 * H:] + r * hg[:, 2 * H:])
    h1 = (1.0 - z) * n + z * h0                                            # (B, H)

    s1 = enc @ p["ptr_w1"].T + p["ptr_b1"]                                 # (B, T, H)
    s2 = h1 @ p["ptr_w2"].T + p["ptr_b2"]                                  # (B, H)
    scores = jnp.tanh(s1 + s2[:, None, :]) @ p["ptr_v"].T                  # (B, T, 1)
    return jax.nn.softmax(scores, axis=1)


# TODO(synk): segment_text() is host-side numpy/scipy (find_peaks) post-processing,
# not part of the accelerated forward pass, so it is not translated to Pallas.

if __name__ == "__main__":
    key = jax.random.PRNGKey(0)
    k_x, k_p = jax.random.split(key)

    # Small shapes; H is a multiple of 128 so gate slices / stores are lane-aligned.
    B, T, D, H = 1, 16, 64, 128
    x = jax.random.normal(k_x, (B, T, D), jnp.float32)
    params = init_params(k_p, D, H)
    packed = pack_params(params)            # one-time packing, hoisted out of forward
    packed = jax.block_until_ready(packed)
    start_units = 0

    out = segbot_forward(x, start_units, packed)
    out = jax.block_until_ready(out)

    ref = segbot_reference(x, start_units, params)
    assert out.shape == (B, T, 1)
    np.testing.assert_allclose(np.asarray(out), np.asarray(ref), rtol=1e-4, atol=1e-5)

    print("KERNEL_OK")
</pallas_src>

<mosaic_0001>
module attributes {stable_mosaic.version = 11 : i64} {
  func.func @segbot_kernel(%arg0: memref<1xi32, #tpu.memory_space<smem>>, %arg1: memref<16x64xf32, #tpu.memory_space<vmem>>, %arg2: memref<64x768xf32, #tpu.memory_space<vmem>>, %arg3: memref<128x768xf32, #tpu.memory_space<vmem>>, %arg4: memref<256x384xf32, #tpu.memory_space<vmem>>, %arg5: memref<256x128xf32, #tpu.memory_space<vmem>>, %arg6: memref<128x128xf32, #tpu.memory_space<vmem>>, %arg7: memref<1x2688xf32, #tpu.memory_space<vmem>>, %arg8: memref<16x1xf32, #tpu.memory_space<vmem>>, %arg9: memref<16x768xf32, #tpu.memory_space<vmem>>, %arg10: memref<16x256xf32, #tpu.memory_space<vmem>>) attributes {dimension_semantics = [], scalar_prefetch = 0 : i64, scratch_operands = 2 : i64, tpu.core_type = #tpu.core_type<tc>} {
    %c0 = arith.constant 0 : index
    %c0_0 = arith.constant 0 : index
    %0 = vector.load %arg7[%c0, %c0_0] : memref<1x2688xf32, #tpu.memory_space<vmem>>, vector<1x768xf32>
    %c0_1 = arith.constant 0 : index
    %c768 = arith.constant 768 : index
    %1 = vector.load %arg7[%c0_1, %c768] : memref<1x2688xf32, #tpu.memory_space<vmem>>, vector<1x384xf32>
    %c0_2 = arith.constant 0 : index
    %c1152 = arith.constant 1152 : index
    %2 = vector.load %arg7[%c0_2, %c1152] : memref<1x2688xf32, #tpu.memory_space<vmem>>, vector<1x384xf32>
    %c0_3 = arith.constant 0 : index
    %c1536 = arith.constant 1536 : index
    %3 = vector.load %arg7[%c0_3, %c1536] : memref<1x2688xf32, #tpu.memory_space<vmem>>, vector<1x384xf32>
    %c0_4 = arith.constant 0 : index
    %c1920 = arith.constant 1920 : index
    %4 = vector.load %arg7[%c0_4, %c1920] : memref<1x2688xf32, #tpu.memory_space<vmem>>, vector<1x384xf32>
    %c0_5 = arith.constant 0 : index
    %c2304 = arith.constant 2304 : index
    %5 = vector.load %arg7[%c0_5, %c2304] : memref<1x2688xf32, #tpu.memory_space<vmem>>, vector<1x128xf32>
    %c0_6 = arith.constant 0 : index
    %c2432 = arith.constant 2432 : index
    %6 = vector.load %arg7[%c0_6, %c2432] : memref<1x2688xf32, #tpu.memory_space<vmem>>, vector<1x128xf32>
    %c0_7 = arith.constant 0 : index
    %c2560 = arith.constant 2560 : index
    %7 = vector.load %arg7[%c0_7, %c2560] : memref<1x2688xf32, #tpu.memory_space<vmem>>, vector<1x128xf32>
    %c0_8 = arith.constant 0 : index
    %c0_9 = arith.constant 0 : index
    %8 = vector.load %arg1[%c0_8, %c0_9] : memref<16x64xf32, #tpu.memory_space<vmem>>, vector<16x64xf32>
    %c0_10 = arith.constant 0 : index
    %c0_11 = arith.constant 0 : index
    %9 = vector.load %arg2[%c0_10, %c0_11] : memref<64x768xf32, #tpu.memory_space<vmem>>, vector<64x768xf32>
    %cst = arith.constant dense<0.000000e+00> : vector<16x768xf32>
    %10 = tpu.matmul %8, %9, %cst {dimension_numbers = #tpu.dot_dimension_numbers<[1], [0], [0], [1], [0, 0, 1, 1], [], []>} : vector<16x64xf32>, vector<64x768xf32>, vector<16x768xf32> -> vector<16x768xf32>
    %11 = vector.broadcast %0 : vector<1x768xf32> to vector<16x768xf32>
    %12 = arith.addf %10, %11 : vector<16x768xf32>
    %c0_12 = arith.constant 0 : index
    %c0_13 = arith.constant 0 : index
    %13 = vector.load %arg9[%c0_12, %c0_13] : memref<16x768xf32, #tpu.memory_space<vmem>>, vector<16x768xf32>
    tpu.vector_store %arg9[%c0_12, %c0_13], %12 {strides = array<i32>} : memref<16x768xf32, #tpu.memory_space<vmem>>, vector<16x768xf32>,
    %c0_14 = arith.constant 0 : index
    %c0_15 = arith.constant 0 : index
    %14 = vector.load %arg3[%c0_14, %c0_15] : memref<128x768xf32, #tpu.memory_space<vmem>>, vector<128x768xf32>
    %cst_16 = arith.constant 0.000000e+00 : f32
    %15 = vector.broadcast %cst_16 : f32 to vector<2x128xf32>
    %c0_i32 = arith.constant 0 : i32
    %cst_17 = arith.constant dense<0.000000e+00> : vector<2x768xf32>
    %16 = tpu.matmul %15, %14, %cst_17 {dimension_numbers = #tpu.dot_dimension_numbers<[1], [0], [0], [1], [0, 0, 1, 1], [], []>} : vector<2x128xf32>, vector<128x768xf32>, vector<2x768xf32> -> vector<2x768xf32>
    %c15_i32 = arith.constant 15 : i32
    %17 = arith.subi %c15_i32, %c0_i32 : i32
    %18 = arith.index_cast %c0_i32 : i32 to index
    %c0_18 = arith.constant 0 : index
    %19 = vector.load %arg9[%18, %c0_18] : memref<16x768xf32, #tpu.memory_space<vmem>>, vector<1x384xf32>
    %20 = arith.index_cast %17 : i32 to index
    %c384 = arith.constant 384 : index
    %21 = vector.load %arg9[%20, %c384] : memref<16x768xf32, #tpu.memory_space<vmem>>, vector<1x384xf32>
    %22 = vector.extract_strided_slice %16 {offsets = [0, 0], sizes = [1, 384], strides = [1, 1]} : vector<2x768xf32> to vector<1x384xf32>
    %23 = arith.addf %22, %1 : vector<1x384xf32>
    %24 = vector.extract_strided_slice %15 {offsets = [0, 0], sizes = [1, 128], strides = [1, 1]} : vector<2x128xf32> to vector<1x128xf32>
    %25 = vector.extract_strided_slice %19 {offsets = [0, 0], sizes = [1, 128], strides = [1, 1]} : vector<1x384xf32> to vector<1x128xf32>
    %26 = vector.extract_strided_slice %23 {offsets = [0, 0], sizes = [1, 128], strides = [1, 1]} : vector<1x384xf32> to vector<1x128xf32>
    %27 = arith.addf %25, %26 : vector<1x128xf32>
    %28 = arith.negf %27 : vector<1x128xf32>
    %29 = math.exp %28 : vector<1x128xf32>
    %cst_19 = arith.constant 1.000000e+00 : f32
    %30 = vector.broadcast %cst_19 : f32 to vector<1x128xf32>
    %31 = arith.addf %30, %29 : vector<1x128xf32>
    %32 = arith.divf %30, %31 : vector<1x128xf32>
    %33 = vector.extract_strided_slice %19 {offsets = [0, 128], sizes = [1, 128], strides = [1, 1]} : vector<1x384xf32> to vector<1x128xf32>
    %34 = vector.extract_strided_slice %23 {offsets = [0, 128], sizes = [1, 128], strides = [1, 1]} : vector<1x384xf32> to vector<1x128xf32>
    %35 = arith.addf %33, %34 : vector<1x128xf32>
    %36 = arith.negf %35 : vector<1x128xf32>
    %37 = math.exp %36 : vector<1x128xf32>
    %cst_20 = arith.constant 1.000000e+00 : f32
    %38 = vector.broadcast %cst_20 : f32 to vector<1x128xf32>
    %39 = arith.addf %38, %37 : vector<1x128xf32>
    %40 = arith.divf %38, %39 : vector<1x128xf32>
    %41 = vector.extract_strided_slice %19 {offsets = [0, 256], sizes = [1, 128], strides = [1, 1]} : vector<1x384xf32> to vector<1x128xf32>
    %42 = vector.extract_strided_slice %23 {offsets = [0, 256], sizes = [1, 128], strides = [1, 1]} : vector<1x384xf32> to vector<1x128xf32>
    %43 = arith.mulf %32, %42 : vector<1x128xf32>
    %44 = arith.addf %41, %43 : vector<1x128xf32>
    %45 = math.tanh %44 : vector<1x128xf32>
    %cst_21 = arith.constant 1.000000e+00 : f32
    %46 = vector.broadcast %cst_21 : f32 to vector<1x128xf32>
    %47 = arith.subf %46, %40 : vector<1x128xf32>
    %48 = arith.mulf %47, %45 : vector<1x128xf32>
    %49 = arith.mulf %40, %24 : vector<1x128xf32>
    %50 = arith.addf %48, %49 : vector<1x128xf32>
    %51 = vector.extract_strided_slice %16 {offsets = [1, 384], sizes = [1, 384], strides = [1, 1]} : vector<2x768xf32> to vector<1x384xf32>
    %52 = arith.addf %51, %2 : vector<1x384xf32>
    %53 = vector.extract_strided_slice %15 {offsets = [1, 0], sizes = [1, 128], strides = [1, 1]} : vector<2x128xf32> to vector<1x128xf32>
    %54 = vector.extract_strided_slice %21 {offsets = [0, 0], sizes = [1, 128], strides = [1, 1]} : vector<1x384xf32> to vector<1x128xf32>
    %55 = vector.extract_strided_slice %52 {offsets = [0, 0], sizes = [1, 128], strides = [1, 1]} : vector<1x384xf32> to vector<1x128xf32>
    %56 = arith.addf %54, %55 : vector<1x128xf32>
    %57 = arith.negf %56 : vector<1x128xf32>
    %58 = math.exp %57 : vector<1x128xf32>
    %cst_22 = arith.constant 1.000000e+00 : f32
    %59 = vector.broadcast %cst_22 : f32 to vector<1x128xf32>
    %60 = arith.addf %59, %58 : vector<1x128xf32>
    %61 = arith.divf %59, %60 : vector<1x128xf32>
    %62 = vector.extract_strided_slice %21 {offsets = [0, 128], sizes = [1, 128], strides = [1, 1]} : vector<1x384xf32> to vector<1x128xf32>
    %63 = vector.extract_strided_slice %52 {offsets = [0, 128], sizes = [1, 128], strides = [1, 1]} : vector<1x384xf32> to vector<1x128xf32>
    %64 = arith.addf %62, %63 : vector<1x128xf32>
    %65 = arith.negf %64 : vector<1x128xf32>
    %66 = math.exp %65 : vector<1x128xf32>
    %cst_23 = arith.constant 1.000000e+00 : f32
    %67 = vector.broadcast %cst_23 : f32 to vector<1x128xf32>
    %68 = arith.addf %67, %66 : vector<1x128xf32>
    %69 = arith.divf %67, %68 : vector<1x128xf32>
    %70 = vector.extract_strided_slice %21 {offsets = [0, 256], sizes = [1, 128], strides = [1, 1]} : vector<1x384xf32> to vector<1x128xf32>
    %71 = vector.extract_strided_slice %52 {offsets = [0, 256], sizes = [1, 128], strides = [1, 1]} : vector<1x384xf32> to vector<1x128xf32>
    %72 = arith.mulf %61, %71 : vector<1x128xf32>
    %73 = arith.addf %70, %72 : vector<1x128xf32>
    %74 = math.tanh %73 : vector<1x128xf32>
    %cst_24 = arith.constant 1.000000e+00 : f32
    %75 = vector.broadcast %cst_24 : f32 to vector<1x128xf32>
    %76 = arith.subf %75, %69 : vector<1x128xf32>
    %77 = arith.mulf %76, %74 : vector<1x128xf32>
    %78 = arith.mulf %69, %53 : vector<1x128xf32>
    %79 = arith.addf %77, %78 : vector<1x128xf32>
    %80 = arith.index_cast %c0_i32 : i32 to index
    %c0_25 = arith.constant 0 : index
    %81 = vector.load %arg10[%80, %c0_25] : memref<16x256xf32, #tpu.memory_space<vmem>>, vector<1x128xf32>
    tpu.vector_store %arg10[%80, %c0_25], %50 {strides = array<i32>} : memref<16x256xf32, #tpu.memory_space<vmem>>, vector<1x128xf32>,
    %82 = arith.index_cast %17 : i32 to index
    %c128 = arith.constant 128 : index
    %83 = vector.load %arg10[%82, %c128] : memref<16x256xf32, #tpu.memory_space<vmem>>, vector<1x128xf32>
    tpu.vector_store %arg10[%82, %c128], %79 {strides = array<i32>} : memref<16x256xf32, #tpu.memory_space<vmem>>, vector<1x128xf32>,
    %84 = tpu.concatenate %50, %79 in 0 : vector<1x128xf32>, vector<1x128xf32> -> vector<2x128xf32>
    %c1_i32 = arith.constant 1 : i32
    %cst_26 = arith.constant dense<0.000000e+00> : vector<2x768xf32>
    %85 = tpu.matmul %84, %14, %cst_26 {dimension_numbers = #tpu.dot_dimension_numbers<[1], [0], [0], [1], [0, 0, 1, 1], [], []>} : vector<2x128xf32>, vector<128x768xf32>, vector<2x768xf32> -> vector<2x768xf32>
    %c15_i32_27 = arith.constant 15 : i32
    %86 = arith.subi %c15_i32_27, %c1_i32 : i32
    %87 = arith.index_cast %c1_i32 : i32 to index
    %c0_28 = arith.constant 0 : index
    %88 = vector.load %arg9[%87, %c0_28] : memref<16x768xf32, #tpu.memory_space<vmem>>, vector<1x384xf32>
    %89 = arith.index_cast %86 : i32 to index
    %c384_29 = arith.constant 384 : index
    %90 = vector.load %arg9[%89, %c384_29] : memref<16x768xf32, #tpu.memory_space<vmem>>, vector<1x384xf32>
    %91 = vector.extract_strided_slice %85 {offsets = [0, 0], sizes = [1, 384], strides = [1, 1]} : vector<2x768xf32> to vector<1x384xf32>
    %92 = arith.addf %91, %1 : vector<1x384xf32>
    %93 = vector.extract_strided_slice %84 {offsets = [0, 0], sizes = [1, 128], strides = [1, 1]} : vector<2x128xf32> to vector<1x128xf32>
    %94 = vector.extract_strided_slice %88 {offsets = [0, 0], sizes = [1, 128], strides = [1, 1]} : vector<1x384xf32> to vector<1x128xf32>
    %95 = vector.extract_strided_slice %92 {offsets = [0, 0], sizes = [1, 128], strides = [1, 1]} : vector<1x384xf32> to vector<1x128xf32>
    %96 = arith.addf %94, %95 : vector<1x128xf32>
    %97 = arith.negf %96 : vector<1x128xf32>
    %98 = math.exp %97 : vector<1x128xf32>
    %cst_30 = arith.constant 1.000000e+00 : f32
    %99 = vector.broadcast %cst_30 : f32 to vector<1x128xf32>
    %100 = arith.addf %99, %98 : vector<1x128xf32>
    %101 = arith.divf %99, %100 : vector<1x128xf32>
    %102 = vector.extract_strided_slice %88 {offsets = [0, 128], sizes = [1, 128], strides = [1, 1]} : vector<1x384xf32> to vector<1x128xf32>
    %103 = vector.extract_strided_slice %92 {offsets = [0, 128], sizes = [1, 128], strides = [1, 1]} : vector<1x384xf32> to vector<1x128xf32>
    %104 = arith.addf %102, %103 : vector<1x128xf32>
    %105 = arith.negf %104 : vector<1x128xf32>
    %106 = math.exp %105 : vector<1x128xf32>
    %cst_31 = arith.constant 1.000000e+00 : f32
    %107 = vector.broadcast %cst_31 : f32 to vector<1x128xf32>
    %108 = arith.addf %107, %106 : vector<1x128xf32>
    %109 = arith.divf %107, %108 : vector<1x128xf32>
    %110 = vector.extract_strided_slice %88 {offsets = [0, 256], sizes = [1, 128], strides = [1, 1]} : vector<1x384xf32> to vector<1x128xf32>
    %111 = vector.extract_strided_slice %92 {offsets = [0, 256], sizes = [1, 128], strides = [1, 1]} : vector<1x384xf32> to vector<1x128xf32>
    %112 = arith.mulf %101, %111 : vector<1x128xf32>
    %113 = arith.addf %110, %112 : vector<1x128xf32>
    %114 = math.tanh %113 : vector<1x128xf32>
    %cst_32 = arith.constant 1.000000e+00 : f32
    %115 = vector.broadcast %cst_32 : f32 to vector<1x128xf32>
    %116 = arith.subf %115, %109 : vector<1x128xf32>
    %117 = arith.mulf %116, %114 : vector<1x128xf32>
    %118 = arith.mulf %109, %93 : vector<1x128xf32>
    %119 = arith.addf %117, %118 : vector<1x128xf32>
    %120 = vector.extract_strided_slice %85 {offsets = [1, 384], sizes = [1, 384], strides = [1, 1]} : vector<2x768xf32> to vector<1x384xf32>
    %121 = arith.addf %120, %2 : vector<1x384xf32>
    %122 = vector.extract_strided_slice %84 {offsets = [1, 0], sizes = [1, 128], strides = [1, 1]} : vector<2x128xf32> to vector<1x128xf32>
    %123 = vector.extract_strided_slice %90 {offsets = [0, 0], sizes = [1, 128], strides = [1, 1]} : vector<1x384xf32> to vector<1x128xf32>
    %124 = vector.extract_strided_slice %121 {offsets = [0, 0], sizes = [1, 128], strides = [1, 1]} : vector<1x384xf32> to vector<1x128xf32>
    %125 = arith.addf %123, %124 : vector<1x128xf32>
    %126 = arith.negf %125 : vector<1x128xf32>
    %127 = math.exp %126 : vector<1x128xf32>
    %cst_33 = arith.constant 1.000000e+00 : f32
    %128 = vector.broadcast %cst_33 : f32 to vector<1x128xf32>
    %129 = arith.addf %128, %127 : vector<1x128xf32>
    %130 = arith.divf %128, %129 : vector<1x128xf32>
    %131 = vector.extract_strided_slice %90 {offsets = [0, 128], sizes = [1, 128], strides = [1, 1]} : vector<1x384xf32> to vector<1x128xf32>
    %132 = vector.extract_strided_slice %121 {offsets = [0, 128], sizes = [1, 128], strides = [1, 1]} : vector<1x384xf32> to vector<1x128xf32>
    %133 = arith.addf %131, %132 : vector<1x128xf32>
    %134 = arith.negf %133 : vector<1x128xf32>
    %135 = math.exp %134 : vector<1x128xf32>
    %cst_34 = arith.constant 1.000000e+00 : f32
    %136 = vector.broadcast %cst_34 : f32 to vector<1x128xf32>
    %137 = arith.addf %136, %135 : vector<1x128xf32>
    %138 = arith.divf %136, %137 : vector<1x128xf32>
    %139 = vector.extract_strided_slice %90 {offsets = [0, 256], sizes = [1, 128], strides = [1, 1]} : vector<1x384xf32> to vector<1x128xf32>
    %140 = vector.extract_strided_slice %121 {offsets = [0, 256], sizes = [1, 128], strides = [1, 1]} : vector<1x384xf32> to vector<1x128xf32>
    %141 = arith.mulf %130, %140 : vector<1x128xf32>
    %142 = arith.addf %139, %141 : vector<1x128xf32>
    %143 = math.tanh %142 : vector<1x128xf32>
    %cst_35 = arith.constant 1.000000e+00 : f32
    %144 = vector.broadcast %cst_35 : f32 to vector<1x128xf32>
    %145 = arith.subf %144, %138 : vector<1x128xf32>
    %146 = arith.mulf %145, %143 : vector<1x128xf32>
    %147 = arith.mulf %138, %122 : vector<1x128xf32>
    %148 = arith.addf %146, %147 : vector<1x128xf32>
    %149 = arith.index_cast %c1_i32 : i32 to index
    %c0_36 = arith.constant 0 : index
    %150 = vector.load %arg10[%149, %c0_36] : memref<16x256xf32, #tpu.memory_space<vmem>>, vector<1x128xf32>
    tpu.vector_store %arg10[%149, %c0_36], %119 {strides = array<i32>} : memref<16x256xf32, #tpu.memory_space<vmem>>, vector<1x128xf32>,
    %151 = arith.index_cast %86 : i32 to index
    %c128_37 = arith.constant 128 : index
    %152 = vector.load %arg10[%151, %c128_37] : memref<16x256xf32, #tpu.memory_space<vmem>>, vector<1x128xf32>
    tpu.vector_store %arg10[%151, %c128_37], %148 {strides = array<i32>} : memref<16x256xf32, #tpu.memory_space<vmem>>, vector<1x128xf32>,
    %153 = tpu.concatenate %119, %148 in 0 : vector<1x128xf32>, vector<1x128xf32> -> vector<2x128xf32>
    %c2_i32 = arith.constant 2 : i32
    %cst_38 = arith.constant dense<0.000000e+00> : vector<2x768xf32>
    %154 = tpu.matmul %153, %14, %cst_38 {dimension_numbers = #tpu.dot_dimension_numbers<[1], [0], [0], [1], [0, 0, 1, 1], [], []>} : vector<2x128xf32>, vector<128x768xf32>, vector<2x768xf32> -> vector<2x768xf32>
    %c15_i32_39 = arith.constant 15 : i32
    %155 = arith.subi %c15_i32_39, %c2_i32 : i32
    %156 = arith.index_cast %c2_i32 : i32 to index
    %c0_40 = arith.constant 0 : index
    %157 = vector.load %arg9[%156, %c0_40] : memref<16x768xf32, #tpu.memory_space<vmem>>, vector<1x384xf32>
    %158 = arith.index_cast %155 : i32 to index
    %c384_41 = arith.constant 384 : index
    %159 = vector.load %arg9[%158, %c384_41] : memref<16x768xf32, #tpu.memory_space<vmem>>, vector<1x384xf32>
    %160 = vector.extract_strided_slice %154 {offsets = [0, 0], sizes = [1, 384], strides = [1, 1]} : vector<2x768xf32> to vector<1x384xf32>
    %161 = arith.addf %160, %1 : vector<1x384xf32>
    %162 = vector.extract_strided_slice %153 {offsets = [0, 0], sizes = [1, 128], strides = [1, 1]} : vector<2x128xf32> to vector<1x128xf32>
    %163 = vector.extract_strided_slice %157 {offsets = [0, 0], sizes = [1, 128], strides = [1, 1]} : vector<1x384xf32> to vector<1x128xf32>
    %164 = vector.extract_strided_slice %161 {offsets = [0, 0], sizes = [1, 128], strides = [1, 1]} : vector<1x384xf32> to vector<1x128xf32>
    %165 = arith.addf %163, %164 : vector<1x128xf32>
    %166 = arith.negf %165 : vector<1x128xf32>
    %167 = math.exp %166 : vector<1x128xf32>
    %cst_42 = arith.constant 1.000000e+00 : f32
    %168 = vector.broadcast %cst_42 : f32 to vector<1x128xf32>
    %169 = arith.addf %168, %167 : vector<1x128xf32>
    %170 = arith.divf %168, %169 : vector<1x128xf32>
    %171 = vector.extract_strided_slice %157 {offsets = [0, 128], sizes = [1, 128], strides = [1, 1]} : vector<1x384xf32> to vector<1x128xf32>
    %172 = vector.extract_strided_slice %161 {offsets = [0, 128], sizes = [1, 128], strides = [1, 1]} : vector<1x384xf32> to vector<1x128xf32>
    %173 = arith.addf %171, %172 : vector<1x128xf32>
    %174 = arith.negf %173 : vector<1x128xf32>
    %175 = math.exp %174 : vector<1x128xf32>
    %cst_43 = arith.constant 1.000000e+00 : f32
    %176 = vector.broadcast %cst_43 : f32 to vector<1x128xf32>
    %177 = arith.addf %176, %175 : vector<1x128xf32>
    %178 = arith.divf %176, %177 : vector<1x128xf32>
    %179 = vector.extract_strided_slice %157 {offsets = [0, 256], sizes = [1, 128], strides = [1, 1]} : vector<1x384xf32> to vector<1x128xf32>
    %180 = vector.extract_strided_slice %161 {offsets = [0, 256], sizes = [1, 128], strides = [1, 1]} : vector<1x384xf32> to vector<1x128xf32>
    %181 = arith.mulf %170, %180 : vector<1x128xf32>
    %182 = arith.addf %179, %181 : vector<1x128xf32>
    %183 = math.tanh %182 : vector<1x128xf32>
    %cst_44 = arith.constant 1.000000e+00 : f32
    %184 = vector.broadcast %cst_44 : f32 to vector<1x128xf32>
    %185 = arith.subf %184, %178 : vector<1x128xf32>
    %186 = arith.mulf %185, %183 : vector<1x128xf32>
    %187 = arith.mulf %178, %162 : vector<1x128xf32>
    %188 = arith.addf %186, %187 : vector<1x128xf32>
    %189 = vector.extract_strided_slice %154 {offsets = [1, 384], sizes = [1, 384], strides = [1, 1]} : vector<2x768xf32> to vector<1x384xf32>
    %190 = arith.addf %189, %2 : vector<1x384xf32>
    %191 = vector.extract_strided_slice %153 {offsets = [1, 0], sizes = [1, 128], strides = [1, 1]} : vector<2x128xf32> to vector<1x128xf32>
    %192 = vector.extract_strided_slice %159 {offsets = [0, 0], sizes = [1, 128], strides = [1, 1]} : vector<1x384xf32> to vector<1x128xf32>
    %193 = vector.extract_strided_slice %190 {offsets = [0, 0], sizes = [1, 128], strides = [1, 1]} : vector<1x384xf32> to vector<1x128xf32>
    %194 = arith.addf %192, %193 : vector<1x128xf32>
    %195 = arith.negf %194 : vector<1x128xf32>
    %196 = math.exp %195 : vector<1x128xf32>
    %cst_45 = arith.constant 1.000000e+00 : f32
    %197 = vector.broadcast %cst_45 : f32 to vector<1x128xf32>
    %198 = arith.addf %197, %196 : vector<1x128xf32>
    %199 = arith.divf %197, %198 : vector<1x128xf32>
    %200 = vector.extract_strided_slice %159 {offsets = [0, 128], sizes = [1, 128], strides = [1, 1]} : vector<1x384xf32> to vector<1x128xf32>
    %201 = vector.extract_strided_slice %190 {offsets = [0, 128], sizes = [1, 128], strides = [1, 1]} : vector<1x384xf32> to vector<1x128xf32>
    %202 = arith.addf %200, %201 : vector<1x128xf32>
    %203 = arith.negf %202 : vector<1x128xf32>
    %204 = math.exp %203 : vector<1x128xf32>
    %cst_46 = arith.constant 1.000000e+00 : f32
    %205 = vector.broadcast %cst_46 : f32 to vector<1x128xf32>
    %206 = arith.addf %205, %204 : vector<1x128xf32>
    %207 = arith.divf %205, %206 : vector<1x128xf32>
    %208 = vector.extract_strided_slice %159 {offsets = [0, 256], sizes = [1, 128], strides = [1, 1]} : vector<1x384xf32> to vector<1x128xf32>
    %209 = vector.extract_strided_slice %190 {offsets = [0, 256], sizes = [1, 128], strides = [1, 1]} : vector<1x384xf32> to vector<1x128xf32>
    %210 = arith.mulf %199, %209 : vector<1x128xf32>
    %211 = arith.addf %208, %210 : vector<1x128xf32>
    %212 = math.tanh %211 : vector<1x128xf32>
    %cst_47 = arith.constant 1.000000e+00 : f32
    %213 = vector.broadcast %cst_47 : f32 to vector<1x128xf32>
    %214 = arith.subf %213, %207 : vector<1x128xf32>
    %215 = arith.mulf %214, %212 : vector<1x128xf32>
    %216 = arith.mulf %207, %191 : vector<1x128xf32>
    %217 = arith.addf %215, %216 : vector<1x128xf32>
    %218 = arith.index_cast %c2_i32 : i32 to index
    %c0_48 = arith.constant 0 : index
    %219 = vector.load %arg10[%218, %c0_48] : memref<16x256xf32, #tpu.memory_space<vmem>>, vector<1x128xf32>
    tpu.vector_store %arg10[%218, %c0_48], %188 {strides = array<i32>} : memref<16x256xf32, #tpu.memory_space<vmem>>, vector<1x128xf32>,
    %220 = arith.index_cast %155 : i32 to index
    %c128_49 = arith.constant 128 : index
    %221 = vector.load %arg10[%220, %c128_49] : memref<16x256xf32, #tpu.memory_space<vmem>>, vector<1x128xf32>
    tpu.vector_store %arg10[%220, %c128_49], %217 {strides = array<i32>} : memref<16x256xf32, #tpu.memory_space<vmem>>, vector<1x128xf32>,
    %222 = tpu.concatenate %188, %217 in 0 : vector<1x128xf32>, vector<1x128xf32> -> vector<2x128xf32>
    %c3_i32 = arith.constant 3 : i32
    %cst_50 = arith.constant dense<0.000000e+00> : vector<2x768xf32>
    %223 = tpu.matmul %222, %14, %cst_50 {dimension_numbers = #tpu.dot_dimension_numbers<[1], [0], [0], [1], [0, 0, 1, 1], [], []>} : vector<2x128xf32>, vector<128x768xf32>, vector<2x768xf32> -> vector<2x768xf32>
    %c15_i32_51 = arith.constant 15 : i32
    %224 = arith.subi %c15_i32_51, %c3_i32 : i32
    %225 = arith.index_cast %c3_i32 : i32 to index
    %c0_52 = arith.constant 0 : index
    %226 = vector.load %arg9[%225, %c0_52] : memref<16x768xf32, #tpu.memory_space<vmem>>, vector<1x384xf32>
    %227 = arith.index_cast %224 : i32 to index
    %c384_53 = arith.constant 384 : index
    %228 = vector.load %arg9[%227, %c384_53] : memref<16x768xf32, #tpu.memory_space<vmem>>, vector<1x384xf32>
    %229 = vector.extract_strided_slice %223 {offsets = [0, 0], sizes = [1, 384], strides = [1, 1]} : vector<2x768xf32> to vector<1x384xf32>
    %230 = arith.addf %229, %1 : vector<1x384xf32>
    %231 = vector.extract_strided_slice %222 {offsets = [0, 0], sizes = [1, 128], strides = [1, 1]} : vector<2x128xf32> to vector<1x128xf32>
    %232 = vector.extract_strided_slice %226 {offsets = [0, 0], sizes = [1, 128], strides = [1, 1]} : vector<1x384xf32> to vector<1x128xf32>
    %233 = vector.extract_strided_slice %230 {offsets = [0, 0], sizes = [1, 128], strides = [1, 1]} : vector<1x384xf32> to vector<1x128xf32>
    %234 = arith.addf %232, %233 : vector<1x128xf32>
    %235 = arith.negf %234 : vector<1x128xf32>
    %236 = math.exp %235 : vector<1x128xf32>
    %cst_54 = arith.constant 1.000000e+00 : f32
    %237 = vector.broadcast %cst_54 : f32 to vector<1x128xf32>
    %238 = arith.addf %237, %236 : vector<1x128xf32>
    %239 = arith.divf %237, %238 : vector<1x128xf32>
    %240 = vector.extract_strided_slice %226 {offsets = [0, 128], sizes = [1, 128], strides = [1, 1]} : vector<1x384xf32> to vector<1x128xf32>
    %241 = vector.extract_strided_slice %230 {offsets = [0, 128], sizes = [1, 128], strides = [1, 1]} : vector<1x384xf32> to vector<1x128xf32>
    %242 = arith.addf %240, %241 : vector<1x128xf32>
    %243 = arith.negf %242 : vector<1x128xf32>
    %244 = math.exp %243 : vector<1x128xf32>
    %cst_55 = arith.constant 1.000000e+00 : f32
    %245 = vector.broadcast %cst_55 : f32 to vector<1x128xf32>
    %246 = arith.addf %245, %244 : vector<1x128xf32>
    %247 = arith.divf %245, %246 : vector<1x128xf32>
    %248 = vector.extract_strided_slice %226 {offsets = [0, 256], sizes = [1, 128], strides = [1, 1]} : vector<1x384xf32> to vector<1x128xf32>
    %249 = vector.extract_strided_slice %230 {offsets = [0, 256], sizes = [1, 128], strides = [1, 1]} : vector<1x384xf32> to vector<1x128xf32>
    %250 = arith.mulf %239, %249 : vector<1x128xf32>
    %251 = arith.addf %248, %250 : vector<1x128xf32>
    %252 = math.tanh %251 : vector<1x128xf32>
    %cst_56 = arith.constant 1.000000e+00 : f32
    %253 = vector.broadcast %cst_56 : f32 to vector<1x128xf32>
    %254 = arith.subf %253, %247 : vector<1x128xf32>
    %255 = arith.mulf %254, %252 : vector<1x128xf32>
    %256 = arith.mulf %247, %231 : vector<1x128xf32>
    %257 = arith.addf %255, %256 : vector<1x128xf32>
    %258 = vector.extract_strided_slice %223 {offsets = [1, 384], sizes = [1, 384], strides = [1, 1]} : vector<2x768xf32> to vector<1x384xf32>
    %259 = arith.addf %258, %2 : vector<1x384xf32>
    %260 = vector.extract_strided_slice %222 {offsets = [1, 0], sizes = [1, 128], strides = [1, 1]} : vector<2x128xf32> to vector<1x128xf32>
    %261 = vector.extract_strided_slice %228 {offsets = [0, 0], sizes = [1, 128], strides = [1, 1]} : vector<1x384xf32> to vector<1x128xf32>
    %262 = vector.extract_strided_slice %259 {offsets = [0, 0], sizes = [1, 128], strides = [1, 1]} : vector<1x384xf32> to vector<1x128xf32>
    %263 = arith.addf %261, %262 : vector<1x128xf32>
    %264 = arith.negf %263 : vector<1x128xf32>
    %265 = math.exp %264 : vector<1x128xf32>
    %cst_57 = arith.constant 1.000000e+00 : f32
    %266 = vector.broadcast %cst_57 : f32 to vector<1x128xf32>
    %267 = arith.addf %266, %265 : vector<1x128xf32>
    %268 = arith.divf %266, %267 : vector<1x128xf32>
    %269 = vector.extract_strided_slice %228 {offsets = [0, 128], sizes = [1, 128], strides = [1, 1]} : vector<1x384xf32> to vector<1x128xf32>
    %270 = vector.extract_strided_slice %259 {offsets = [0, 128], sizes = [1, 128], strides = [1, 1]} : vector<1x384xf32> to vector<1x128xf32>
    %271 = arith.addf %269, %270 : vector<1x128xf32>
    %272 = arith.negf %271 : vector<1x128xf32>
    %273 = math.exp %272 : vector<1x128xf32>
    %cst_58 = arith.constant 1.000000e+00 : f32
    %274 = vector.broadcast %cst_58 : f32 to vector<1x128xf32>
    %275 = arith.addf %274, %273 : vector<1x128xf32>
    %276 = arith.divf %274, %275 : vector<1x128xf32>
    %277 = vector.extract_strided_slice %228 {offsets = [0, 256], sizes = [1, 128], strides = [1, 1]} : vector<1x384xf32> to vector<1x128xf32>
    %278 = vector.extract_strided_slice %259 {offsets = [0, 256], sizes = [1, 128], strides = [1, 1]} : vector<1x384xf32> to vector<1x128xf32>
    %279 = arith.mulf %268, %278 : vector<1x128xf32>
    %280 = arith.addf %277, %279 : vector<1x128xf32>
    %281 = math.tanh %280 : vector<1x128xf32>
    %cst_59 = arith.constant 1.000000e+00 : f32
    %282 = vector.broadcast %cst_59 : f32 to vector<1x128xf32>
    %283 = arith.subf %282, %276 : vector<1x128xf32>
    %284 = arith.mulf %283, %281 : vector<1x128xf32>
    %285 = arith.mulf %276, %260 : vector<1x128xf32>
    %286 = arith.addf %284, %285 : vector<1x128xf32>
    %287 = arith.index_cast %c3_i32 : i32 to index
    %c0_60 = arith.constant 0 : index
    %288 = vector.load %arg10[%287, %c0_60] : memref<16x256xf32, #tpu.memory_space<vmem>>, vector<1x128xf32>
    tpu.vector_store %arg10[%287, %c0_60], %257 {strides = array<i32>} : memref<16x256xf32, #tpu.memory_space<vmem>>, vector<1x128xf32>,
    %289 = arith.index_cast %224 : i32 to index
    %c128_61 = arith.constant 128 : index
    %290 = vector.load %arg10[%289, %c128_61] : memref<16x256xf32, #tpu.memory_space<vmem>>, vector<1x128xf32>
    tpu.vector_store %arg10[%289, %c128_61], %286 {strides = array<i32>} : memref<16x256xf32, #tpu.memory_space<vmem>>, vector<1x128xf32>,
    %291 = tpu.concatenate %257, %286 in 0 : vector<1x128xf32>, vector<1x128xf32> -> vector<2x128xf32>
    %c4_i32 = arith.constant 4 : i32
    %cst_62 = arith.constant dense<0.000000e+00> : vector<2x768xf32>
    %292 = tpu.matmul %291, %14, %cst_62 {dimension_numbers = #tpu.dot_dimension_numbers<[1], [0], [0], [1], [0, 0, 1, 1], [], []>} : vector<2x128xf32>, vector<128x768xf32>, vector<2x768xf32> -> vector<2x768xf32>
    %c15_i32_63 = arith.constant 15 : i32
    %293 = arith.subi %c15_i32_63, %c4_i32 : i32
    %294 = arith.index_cast %c4_i32 : i32 to index
    %c0_64 = arith.constant 0 : index
    %295 = vector.load %arg9[%294, %c0_64] : memref<16x768xf32, #tpu.memory_space<vmem>>, vector<1x384xf32>
    %296 = arith.index_cast %293 : i32 to index
    %c384_65 = arith.constant 384 : index
    %297 = vector.load %arg9[%296, %c384_65] : memref<16x768xf32, #tpu.memory_space<vmem>>, vector<1x384xf32>
    %298 = vector.extract_strided_slice %292 {offsets = [0, 0], sizes = [1, 384], strides = [1, 1]} : vector<2x768xf32> to vector<1x384xf32>
    %299 = arith.addf %298, %1 : vector<1x384xf32>
    %300 = vector.extract_strided_slice %291 {offsets = [0, 0], sizes = [1, 128], strides = [1, 1]} : vector<2x128xf32> to vector<1x128xf32>
    %301 = vector.extract_strided_slice %295 {offsets = [0, 0], sizes = [1, 128], strides = [1, 1]} : vector<1x384xf32> to vector<1x128xf32>
    %302 = vector.extract_strided_slice %299 {offsets = [0, 0], sizes = [1, 128], strides = [1, 1]} : vector<1x384xf32> to vector<1x128xf32>
    %303 = arith.addf %301, %302 : vector<1x128xf32>
    %304 = arith.negf %303 : vector<1x128xf32>
    %305 = math.exp %304 : vector<1x128xf32>
    %cst_66 = arith.constant 1.000000e+00 : f32
    %306 = vector.broadcast %cst_66 : f32 to vector<1x128xf32>
    %307 = arith.addf %306, %305 : vector<1x128xf32>
    %308 = arith.divf %306, %307 : vector<1x128xf32>
    %309 = vector.extract_strided_slice %295 {offsets = [0, 128], sizes = [1, 128], strides = [1, 1]} : vector<1x384xf32> to vector<1x128xf32>
    %310 = vector.extract_strided_slice %299 {offsets = [0, 128], sizes = [1, 128], strides = [1, 1]} : vector<1x384xf32> to vector<1x128xf32>
    %311 = arith.addf %309, %310 : vector<1x128xf32>
    %312 = arith.negf %311 : vector<1x128xf32>
    %313 = math.exp %312 : vector<1x128xf32>
    %cst_67 = arith.constant 1.000000e+00 : f32
    %314 = vector.broadcast %cst_67 : f32 to vector<1x128xf32>
    %315 = arith.addf %314, %313 : vector<1x128xf32>
    %316 = arith.divf %314, %315 : vector<1x128xf32>
    %317 = vector.extract_strided_slice %295 {offsets = [0, 256], sizes = [1, 128], strides = [1, 1]} : vector<1x384xf32> to vector<1x128xf32>
    %318 = vector.extract_strided_slice %299 {offsets = [0, 256], sizes = [1, 128], strides = [1, 1]} : vector<1x384xf32> to vector<1x128xf32>
    %319 = arith.mulf %308, %318 : vector<1x128xf32>
    %320 = arith.addf %317, %319 : vector<1x128xf32>
    %321 = math.tanh %320 : vector<1x128xf32>
    %cst_68 = arith.constant 1.000000e+00 : f32
    %322 = vector.broadcast %cst_68 : f32 to vector<1x128xf32>
    %323 = arith.subf %322, %316 : vector<1x128xf32>
    %324 = arith.mulf %323, %321 : vector<1x128xf32>
    %325 = arith.mulf %316, %300 : vector<1x128xf32>
    %326 = arith.addf %324, %325 : vector<1x128xf32>
    %327 = vector.extract_strided_slice %292 {offsets = [1, 384], sizes = [1, 384], strides = [1, 1]} : vector<2x768xf32> to vector<1x384xf32>
    %328 = arith.addf %327, %2 : vector<1x384xf32>
    %329 = vector.extract_strided_slice %291 {offsets = [1, 0], sizes = [1, 128], strides = [1, 1]} : vector<2x128xf32> to vector<1x128xf32>
    %330 = vector.extract_strided_slice %297 {offsets = [0, 0], sizes = [1, 128], strides = [1, 1]} : vector<1x384xf32> to vector<1x128xf32>
    %331 = vector.extract_strided_slice %328 {offsets = [0, 0], sizes = [1, 128], strides = [1, 1]} : vector<1x384xf32> to vector<1x128xf32>
    %332 = arith.addf %330, %331 : vector<1x128xf32>
    %333 = arith.negf %332 : vector<1x128xf32>
    %334 = math.exp %333 : vector<1x128xf32>
    %cst_69 = arith.constant 1.000000e+00 : f32
    %335 = vector.broadcast %cst_69 : f32 to vector<1x128xf32>
    %336 = arith.addf %335, %334 : vector<1x128xf32>
    %337 = arith.divf %335, %336 : vector<1x128xf32>
    %338 = vector.extract_strided_slice %297 {offsets = [0, 128], sizes = [1, 128], strides = [1, 1]} : vector<1x384xf32> to vector<1x128xf32>
    %339 = vector.extract_strided_slice %328 {offsets = [0, 128], sizes = [1, 128], strides = [1, 1]} : vector<1x384xf32> to vector<1x128xf32>
    %340 = arith.addf %338, %339 : vector<1x128xf32>
    %341 = arith.negf %340 : vector<1x128xf32>
    %342 = math.exp %341 : vector<1x128xf32>
    %cst_70 = arith.constant 1.000000e+00 : f32
    %343 = vector.broadcast %cst_70 : f32 to vector<1x128xf32>
    %344 = arith.addf %343, %342 : vector<1x128xf32>
    %345 = arith.divf %343, %344 : vector<1x128xf32>
    %346 = vector.extract_strided_slice %297 {offsets = [0, 256], sizes = [1, 128], strides = [1, 1]} : vector<1x384xf32> to vector<1x128xf32>
    %347 = vector.extract_strided_slice %328 {offsets = [0, 256], sizes = [1, 128], strides = [1, 1]} : vector<1x384xf32> to vector<1x128xf32>
    %348 = arith.mulf %337, %347 : vector<1x128xf32>
    %349 = arith.addf %346, %348 : vector<1x128xf32>
    %350 = math.tanh %349 : vector<1x128xf32>
    %cst_71 = arith.constant 1.000000e+00 : f32
    %351 = vector.broadcast %cst_71 : f32 to vector<1x128xf32>
    %352 = arith.subf %351, %345 : vector<1x128xf32>
    %353 = arith.mulf %352, %350 : vector<1x128xf32>
    %354 = arith.mulf %345, %329 : vector<1x128xf32>
    %355 = arith.addf %353, %354 : vector<1x128xf32>
    %356 = arith.index_cast %c4_i32 : i32 to index
    %c0_72 = arith.constant 0 : index
    %357 = vector.load %arg10[%356, %c0_72] : memref<16x256xf32, #tpu.memory_space<vmem>>, vector<1x128xf32>
    tpu.vector_store %arg10[%356, %c0_72], %326 {strides = array<i32>} : memref<16x256xf32, #tpu.memory_space<vmem>>, vector<1x128xf32>,
    %358 = arith.index_cast %293 : i32 to index
    %c128_73 = arith.constant 128 : index
    %359 = vector.load %arg10[%358, %c128_73] : memref<16x256xf32, #tpu.memory_space<vmem>>, vector<1x128xf32>
    tpu.vector_store %arg10[%358, %c128_73], %355 {strides = array<i32>} : memref<16x256xf32, #tpu.memory_space<vmem>>, vector<1x128xf32>,
    %360 = tpu.concatenate %326, %355 in 0 : vector<1x128xf32>, vector<1x128xf32> -> vector<2x128xf32>
    %c5_i32 = arith.constant 5 : i32
    %cst_74 = arith.constant dense<0.000000e+00> : vector<2x768xf32>
    %361 = tpu.matmul %360, %14, %cst_74 {dimension_numbers = #tpu.dot_dimension_numbers<[1], [0], [0], [1], [0, 0, 1, 1], [], []>} : vector<2x128xf32>, vector<128x768xf32>, vector<2x768xf32> -> vector<2x768xf32>
    %c15_i32_75 = arith.constant 15 : i32
    %362 = arith.subi %c15_i32_75, %c5_i32 : i32
    %363 = arith.index_cast %c5_i32 : i32 to index
    %c0_76 = arith.constant 0 : index
    %364 = vector.load %arg9[%363, %c0_76] : memref<16x768xf32, #tpu.memory_space<vmem>>, vector<1x384xf32>
    %365 = arith.index_cast %362 : i32 to index
    %c384_77 = arith.constant 384 : index
    %366 = vector.load %arg9[%365, %c384_77] : memref<16x768xf32, #tpu.memory_space<vmem>>, vector<1x384xf32>
    %367 = vector.extract_strided_slice %361 {offsets = [0, 0], sizes = [1, 384], strides = [1, 1]} : vector<2x768xf32> to vector<1x384xf32>
    %368 = arith.addf %367, %1 : vector<1x384xf32>
    %369 = vector.extract_strided_slice %360 {offsets = [0, 0], sizes = [1, 128], strides = [1, 1]} : vector<2x128xf32> to vector<1x128xf32>
    %370 = vector.extract_strided_slice %364 {offsets = [0, 0], sizes = [1, 128], strides = [1, 1]} : vector<1x384xf32> to vector<1x128xf32>
    %371 = vector.extract_strided_slice %368 {offsets = [0, 0], sizes = [1, 128], strides = [1, 1]} : vector<1x384xf32> to vector<1x128xf32>
    %372 = arith.addf %370, %371 : vector<1x128xf32>
    %373 = arith.negf %372 : vector<1x128xf32>
    %374 = math.exp %373 : vector<1x128xf32>
    %cst_78 = arith.constant 1.000000e+00 : f32
    %375 = vector.broadcast %cst_78 : f32 to vector<1x128xf32>
    %376 = arith.addf %375, %374 : vector<1x128xf32>
    %377 = arith.divf %375, %376 : vector<1x128xf32>
    %378 = vector.extract_strided_slice %364 {offsets = [0, 128], sizes = [1, 128], strides = [1, 1]} : vector<1x384xf32> to vector<1x128xf32>
    %379 = vector.extract_strided_slice %368 {offsets = [0, 128], sizes = [1, 128], strides = [1, 1]} : vector<1x384xf32> to vector<1x128xf32>
    %380 = arith.addf %378, %379 : vector<1x128xf32>
    %381 = arith.negf %380 : vector<1x128xf32>
    %382 = math.exp %381 : vector<1x128xf32>
    %cst_79 = arith.constant 1.000000e+00 : f32
    %383 = vector.broadcast %cst_79 : f32 to vector<1x128xf32>
    %384 = arith.addf %383, %382 : vector<1x128xf32>
    %385 = arith.divf %383, %384 : vector<1x128xf32>
    %386 = vector.extract_strided_slice %364 {offsets = [0, 256], sizes = [1, 128], strides = [1, 1]} : vector<1x384xf32> to vector<1x128xf32>
    %387 = vector.extract_strided_slice %368 {offsets = [0, 256], sizes = [1, 128], strides = [1, 1]} : vector<1x384xf32> to vector<1x128xf32>
    %388 = arith.mulf %377, %387 : vector<1x128xf32>
    %389 = arith.addf %386, %388 : vector<1x128xf32>
    %390 = math.tanh %389 : vector<1x128xf32>
    %cst_80 = arith.constant 1.000000e+00 : f32
    %391 = vector.broadcast %cst_80 : f32 to vector<1x128xf32>
    %392 = arith.subf %391, %385 : vector<1x128xf32>
    %393 = arith.mulf %392, %390 : vector<1x128xf32>
    %394 = arith.mulf %385, %369 : vector<1x128xf32>
    %395 = arith.addf %393, %394 : vector<1x128xf32>
    %396 = vector.extract_strided_slice %361 {offsets = [1, 384], sizes = [1, 384], strides = [1, 1]} : vector<2x768xf32> to vector<1x384xf32>
    %397 = arith.addf %396, %2 : vector<1x384xf32>
    %398 = vector.extract_strided_slice %360 {offsets = [1, 0], sizes = [1, 128], strides = [1, 1]} : vector<2x128xf32> to vector<1x128xf32>
    %399 = vector.extract_strided_slice %366 {offsets = [0, 0], sizes = [1, 128], strides = [1, 1]} : vector<1x384xf32> to vector<1x128xf32>
    %400 = vector.extract_strided_slice %397 {offsets = [0, 0], sizes = [1, 128], strides = [1, 1]} : vector<1x384xf32> to vector<1x128xf32>
    %401 = arith.addf %399, %400 : vector<1x128xf32>
    %402 = arith.negf %401 : vector<1x128xf32>
    %403 = math.exp %402 : vector<1x128xf32>
    %cst_81 = arith.constant 1.000000e+00 : f32
    %404 = vector.broadcast %cst_81 : f32 to vector<1x128xf32>
    %405 = arith.addf %404, %403 : vector<1x128xf32>
    %406 = arith.divf %404, %405 : vector<1x128xf32>
    %407 = vector.extract_strided_slice %366 {offsets = [0, 128], sizes = [1, 128], strides = [1, 1]} : vector<1x384xf32> to vector<1x128xf32>
    %408 = vector.extract_strided_slice %397 {offsets = [0, 128], sizes = [1, 128], strides = [1, 1]} : vector<1x384xf32> to vector<1x128xf32>
    %409 = arith.addf %407, %408 : vector<1x128xf32>
    %410 = arith.negf %409 : vector<1x128xf32>
    %411 = math.exp %410 : vector<1x128xf32>
    %cst_82 = arith.constant 1.000000e+00 : f32
    %412 = vector.broadcast %cst_82 : f32 to vector<1x128xf32>
    %413 = arith.addf %412, %411 : vector<1x128xf32>
    %414 = arith.divf %412, %413 : vector<1x128xf32>
    %415 = vector.extract_strided_slice %366 {offsets = [0, 256], sizes = [1, 128], strides = [1, 1]} : vector<1x384xf32> to vector<1x128xf32>
    %416 = vector.extract_strided_slice %397 {offsets = [0, 256], sizes = [1, 128], strides = [1, 1]} : vector<1x384xf32> to vector<1x128xf32>
    %417 = arith.mulf %406, %416 : vector<1x128xf32>
    %418 = arith.addf %415, %417 : vector<1x128xf32>
    %419 = math.tanh %418 : vector<1x128xf32>
    %cst_83 = arith.constant 1.000000e+00 : f32
    %420 = vector.broadcast %cst_83 : f32 to vector<1x128xf32>
    %421 = arith.subf %420, %414 : vector<1x128xf32>
    %422 = arith.mulf %421, %419 : vector<1x128xf32>
    %423 = arith.mulf %414, %398 : vector<1x128xf32>
    %424 = arith.addf %422, %423 : vector<1x128xf32>
    %425 = arith.index_cast %c5_i32 : i32 to index
    %c0_84 = arith.constant 0 : index
    %426 = vector.load %arg10[%425, %c0_84] : memref<16x256xf32, #tpu.memory_space<vmem>>, vector<1x128xf32>
    tpu.vector_store %arg10[%425, %c0_84], %395 {strides = array<i32>} : memref<16x256xf32, #tpu.memory_space<vmem>>, vector<1x128xf32>,
    %427 = arith.index_cast %362 : i32 to index
    %c128_85 = arith.constant 128 : index
    %428 = vector.load %arg10[%427, %c128_85] : memref<16x256xf32, #tpu.memory_space<vmem>>, vector<1x128xf32>
    tpu.vector_store %arg10[%427, %c128_85], %424 {strides = array<i32>} : memref<16x256xf32, #tpu.memory_space<vmem>>, vector<1x128xf32>,
    %429 = tpu.concatenate %395, %424 in 0 : vector<1x128xf32>, vector<1x128xf32> -> vector<2x128xf32>
    %c6_i32 = arith.constant 6 : i32
    %cst_86 = arith.constant dense<0.000000e+00> : vector<2x768xf32>
    %430 = tpu.matmul %429, %14, %cst_86 {dimension_numbers = #tpu.dot_dimension_numbers<[1], [0], [0], [1], [0, 0, 1, 1], [], []>} : vector<2x128xf32>, vector<128x768xf32>, vector<2x768xf32> -> vector<2x768xf32>
    %c15_i32_87 = arith.constant 15 : i32
    %431 = arith.subi %c15_i32_87, %c6_i32 : i32
    %432 = arith.index_cast %c6_i32 : i32 to index
    %c0_88 = arith.constant 0 : index
    %433 = vector.load %arg9[%432, %c0_88] : memref<16x768xf32, #tpu.memory_space<vmem>>, vector<1x384xf32>
    %434 = arith.index_cast %431 : i32 to index
    %c384_89 = arith.constant 384 : index
    %435 = vector.load %arg9[%434, %c384_89] : memref<16x768xf32, #tpu.memory_space<vmem>>, vector<1x384xf32>
    %436 = vector.extract_strided_slice %430 {offsets = [0, 0], sizes = [1, 384], strides = [1, 1]} : vector<2x768xf32> to vector<1x384xf32>
    %437 = arith.addf %436, %1 : vector<1x384xf32>
    %438 = vector.extract_strided_slice %429 {offsets = [0, 0], sizes = [1, 128], strides = [1, 1]} : vector<2x128xf32> to vector<1x128xf32>
    %439 = vector.extract_strided_slice %433 {offsets = [0, 0], sizes = [1, 128], strides = [1, 1]} : vector<1x384xf32> to vector<1x128xf32>
    %440 = vector.extract_strided_slice %437 {offsets = [0, 0], sizes = [1, 128], strides = [1, 1]} : vector<1x384xf32> to vector<1x128xf32>
    %441 = arith.addf %439, %440 : vector<1x128xf32>
    %442 = arith.negf %441 : vector<1x128xf32>
    %443 = math.exp %442 : vector<1x128xf32>
    %cst_90 = arith.constant 1.000000e+00 : f32
    %444 = vector.broadcast %cst_90 : f32 to vector<1x128xf32>
    %445 = arith.addf %444, %443 : vector<1x128xf32>
    %446 = arith.divf %444, %445 : vector<1x128xf32>
    %447 = vector.extract_strided_slice %433 {offsets = [0, 128], sizes = [1, 128], strides = [1, 1]} : vector<1x384xf32> to vector<1x128xf32>
    %448 = vector.extract_strided_slice %437 {offsets = [0, 128], sizes = [1, 128], strides = [1, 1]} : vector<1x384xf32> to vector<1x128xf32>
    %449 = arith.addf %447, %448 : vector<1x128xf32>
    %450 = arith.negf %449 : vector<1x128xf32>
    %451 = math.exp %450 : vector<1x128xf32>
    %cst_91 = arith.constant 1.000000e+00 : f32
    %452 = vector.broadcast %cst_91 : f32 to vector<1x128xf32>
    %453 = arith.addf %452, %451 : vector<1x128xf32>
    %454 = arith.divf %452, %453 : vector<1x128xf32>
    %455 = vector.extract_strided_slice %433 {offsets = [0, 256], sizes = [1, 128], strides = [1, 1]} : vector<1x384xf32> to vector<1x128xf32>
    %456 = vector.extract_strided_slice %437 {offsets = [0, 256], sizes = [1, 128], strides = [1, 1]} : vector<1x384xf32> to vector<1x128xf32>
    %457 = arith.mulf %446, %456 : vector<1x128xf32>
    %458 = arith.addf %455, %457 : vector<1x128xf32>
    %459 = math.tanh %458 : vector<1x128xf32>
    %cst_92 = arith.constant 1.000000e+00 : f32
    %460 = vector.broadcast %cst_92 : f32 to vector<1x128xf32>
    %461 = arith.subf %460, %454 : vector<1x128xf32>
    %462 = arith.mulf %461, %459 : vector<1x128xf32>
    %463 = arith.mulf %454, %438 : vector<1x128xf32>
    %464 = arith.addf %462, %463 : vector<1x128xf32>
    %465 = vector.extract_strided_slice %430 {offsets = [1, 384], sizes = [1, 384], strides = [1, 1]} : vector<2x768xf32> to vector<1x384xf32>
    %466 = arith.addf %465, %2 : vector<1x384xf32>
    %467 = vector.extract_strided_slice %429 {offsets = [1, 0], sizes = [1, 128], strides = [1, 1]} : vector<2x128xf32> to vector<1x128xf32>
    %468 = vector.extract_strided_slice %435 {offsets = [0, 0], sizes = [1, 128], strides = [1, 1]} : vector<1x384xf32> to vector<1x128xf32>
    %469 = vector.extract_strided_slice %466 {offsets = [0, 0], sizes = [1, 128], strides = [1, 1]} : vector<1x384xf32> to vector<1x128xf32>
    %470 = arith.addf %468, %469 : vector<1x128xf32>
    %471 = arith.negf %470 : vector<1x128xf32>
    %472 = math.exp %471 : vector<1x128xf32>
    %cst_93 = arith.constant 1.000000e+00 : f32
    %473 = vector.broadcast %cst_93 : f32 to vector<1x128xf32>
    %474 = arith.addf %473, %472 : vector<1x128xf32>
    %475 = arith.divf %473, %474 : vector<1x128xf32>
    %476 = vector.extract_strided_slice %435 {offsets = [0, 128], sizes = [1, 128], strides = [1, 1]} : vector<1x384xf32> to vector<1x128xf32>
    %477 = vector.extract_strided_slice %466 {offsets = [0, 128], sizes = [1, 128], strides = [1, 1]} : vector<1x384xf32> to vector<1x128xf32>
    %478 = arith.addf %476, %477 : vector<1x128xf32>
    %479 = arith.negf %478 : vector<1x128xf32>
    %480 = math.exp %479 : vector<1x128xf32>
    %cst_94 = arith.constant 1.000000e+00 : f32
    %481 = vector.broadcast %cst_94 : f32 to vector<1x128xf32>
    %482 = arith.addf %481, %480 : vector<1x128xf32>
    %483 = arith.divf %481, %482 : vector<1x128xf32>
    %484 = vector.extract_strided_slice %435 {offsets = [0, 256], sizes = [1, 128], strides = [1, 1]} : vector<1x384xf32> to vector<1x128xf32>
    %485 = vector.extract_strided_slice %466 {offsets = [0, 256], sizes = [1, 128], strides = [1, 1]} : vector<1x384xf32> to vector<1x128xf32>
    %486 = arith.mulf %475, %485 : vector<1x128xf32>
    %487 = arith.addf %484, %486 : vector<1x128xf32>
    %488 = math.tanh %487 : vector<1x128xf32>
    %cst_95 = arith.constant 1.000000e+00 : f32
    %489 = vector.broadcast %cst_95 : f32 to vector<1x128xf32>
    %490 = arith.subf %489, %483 : vector<1x128xf32>
    %491 = arith.mulf %490, %488 : vector<1x128xf32>
    %492 = arith.mulf %483, %467 : vector<1x128xf32>
    %493 = arith.addf %491, %492 : vector<1x128xf32>
    %494 = arith.index_cast %c6_i32 : i32 to index
    %c0_96 = arith.constant 0 : index
    %495 = vector.load %arg10[%494, %c0_96] : memref<16x256xf32, #tpu.memory_space<vmem>>, vector<1x128xf32>
    tpu.vector_store %arg10[%494, %c0_96], %464 {strides = array<i32>} : memref<16x256xf32, #tpu.memory_space<vmem>>, vector<1x128xf32>,
    %496 = arith.index_cast %431 : i32 to index
    %c128_97 = arith.constant 128 : index
    %497 = vector.load %arg10[%496, %c128_97] : memref<16x256xf32, #tpu.memory_space<vmem>>, vector<1x128xf32>
    tpu.vector_store %arg10[%496, %c128_97], %493 {strides = array<i32>} : memref<16x256xf32, #tpu.memory_space<vmem>>, vector<1x128xf32>,
    %498 = tpu.concatenate %464, %493 in 0 : vector<1x128xf32>, vector<1x128xf32> -> vector<2x128xf32>
    %c7_i32 = arith.constant 7 : i32
    %cst_98 = arith.constant dense<0.000000e+00> : vector<2x768xf32>
    %499 = tpu.matmul %498, %14, %cst_98 {dimension_numbers = #tpu.dot_dimension_numbers<[1], [0], [0], [1], [0, 0, 1, 1], [], []>} : vector<2x128xf32>, vector<128x768xf32>, vector<2x768xf32> -> vector<2x768xf32>
    %c15_i32_99 = arith.constant 15 : i32
    %500 = arith.subi %c15_i32_99, %c7_i32 : i32
    %501 = arith.index_cast %c7_i32 : i32 to index
    %c0_100 = arith.constant 0 : index
    %502 = vector.load %arg9[%501, %c0_100] : memref<16x768xf32, #tpu.memory_space<vmem>>, vector<1x384xf32>
    %503 = arith.index_cast %500 : i32 to index
    %c384_101 = arith.constant 384 : index
    %504 = vector.load %arg9[%503, %c384_101] : memref<16x768xf32, #tpu.memory_space<vmem>>, vector<1x384xf32>
    %505 = vector.extract_strided_slice %499 {offsets = [0, 0], sizes = [1, 384], strides = [1, 1]} : vector<2x768xf32> to vector<1x384xf32>
    %506 = arith.addf %505, %1 : vector<1x384xf32>
    %507 = vector.extract_strided_slice %498 {offsets = [0, 0], sizes = [1, 128], strides = [1, 1]} : vector<2x128xf32> to vector<1x128xf32>
    %508 = vector.extract_strided_slice %502 {offsets = [0, 0], sizes = [1, 128], strides = [1, 1]} : vector<1x384xf32> to vector<1x128xf32>
    %509 = vector.extract_strided_slice %506 {offsets = [0, 0], sizes = [1, 128], strides = [1, 1]} : vector<1x384xf32> to vector<1x128xf32>
    %510 = arith.addf %508, %509 : vector<1x128xf32>
    %511 = arith.negf %510 : vector<1x128xf32>
    %512 = math.exp %511 : vector<1x128xf32>
    %cst_102 = arith.constant 1.000000e+00 : f32
    %513 = vector.broadcast %cst_102 : f32 to vector<1x128xf32>
    %514 = arith.addf %513, %512 : vector<1x128xf32>
    %515 = arith.divf %513, %514 : vector<1x128xf32>
    %516 = vector.extract_strided_slice %502 {offsets = [0, 128], sizes = [1, 128], strides = [1, 1]} : vector<1x384xf32> to vector<1x128xf32>
    %517 = vector.extract_strided_slice %506 {offsets = [0, 128], sizes = [1, 128], strides = [1, 1]} : vector<1x384xf32> to vector<1x128xf32>
    %518 = arith.addf %516, %517 : vector<1x128xf32>
    %519 = arith.negf %518 : vector<1x128xf32>
    %520 = math.exp %519 : vector<1x128xf32>
    %cst_103 = arith.constant 1.000000e+00 : f32
    %521 = vector.broadcast %cst_103 : f32 to vector<1x128xf32>
    %522 = arith.addf %521, %520 : vector<1x128xf32>
    %523 = arith.divf %521, %522 : vector<1x128xf32>
    %524 = vector.extract_strided_slice %502 {offsets = [0, 256], sizes = [1, 128], strides = [1, 1]} : vector<1x384xf32> to vector<1x128xf32>
    %525 = vector.extract_strided_slice %506 {offsets = [0, 256], sizes = [1, 128], strides = [1, 1]} : vector<1x384xf32> to vector<1x128xf32>
    %526 = arith.mulf %515, %525 : vector<1x128xf32>
    %527 = arith.addf %524, %526 : vector<1x128xf32>
    %528 = math.tanh %527 : vector<1x128xf32>
    %cst_104 = arith.constant 1.000000e+00 : f32
    %529 = vector.broadcast %cst_104 : f32 to vector<1x128xf32>
    %530 = arith.subf %529, %523 : vector<1x128xf32>
    %531 = arith.mulf %530, %528 : vector<1x128xf32>
    %532 = arith.mulf %523, %507 : vector<1x128xf32>
    %533 = arith.addf %531, %532 : vector<1x128xf32>
    %534 = vector.extract_strided_slice %499 {offsets = [1, 384], sizes = [1, 384], strides = [1, 1]} : vector<2x768xf32> to vector<1x384xf32>
    %535 = arith.addf %534, %2 : vector<1x384xf32>
    %536 = vector.extract_strided_slice %498 {offsets = [1, 0], sizes = [1, 128], strides = [1, 1]} : vector<2x128xf32> to vector<1x128xf32>
    %537 = vector.extract_strided_slice %504 {offsets = [0, 0], sizes = [1, 128], strides = [1, 1]} : vector<1x384xf32> to vector<1x128xf32>
    %538 = vector.extract_strided_slice %535 {offsets = [0, 0], sizes = [1, 128], strides = [1, 1]} : vector<1x384xf32> to vector<1x128xf32>
    %539 = arith.addf %537, %538 : vector<1x128xf32>
    %540 = arith.negf %539 : vector<1x128xf32>
    %541 = math.exp %540 : vector<1x128xf32>
    %cst_105 = arith.constant 1.000000e+00 : f32
    %542 = vector.broadcast %cst_105 : f32 to vector<1x128xf32>
    %543 = arith.addf %542, %541 : vector<1x128xf32>
    %544 = arith.divf %542, %543 : vector<1x128xf32>
    %545 = vector.extract_strided_slice %504 {offsets = [0, 128], sizes = [1, 128], strides = [1, 1]} : vector<1x384xf32> to vector<1x128xf32>
    %546 = vector.extract_strided_slice %535 {offsets = [0, 128], sizes = [1, 128], strides = [1, 1]} : vector<1x384xf32> to vector<1x128xf32>
    %547 = arith.addf %545, %546 : vector<1x128xf32>
    %548 = arith.negf %547 : vector<1x128xf32>
    %549 = math.exp %548 : vector<1x128xf32>
    %cst_106 = arith.constant 1.000000e+00 : f32
    %550 = vector.broadcast %cst_106 : f32 to vector<1x128xf32>
    %551 = arith.addf %550, %549 : vector<1x128xf32>
    %552 = arith.divf %550, %551 : vector<1x128xf32>
    %553 = vector.extract_strided_slice %504 {offsets = [0, 256], sizes = [1, 128], strides = [1, 1]} : vector<1x384xf32> to vector<1x128xf32>
    %554 = vector.extract_strided_slice %535 {offsets = [0, 256], sizes = [1, 128], strides = [1, 1]} : vector<1x384xf32> to vector<1x128xf32>
    %555 = arith.mulf %544, %554 : vector<1x128xf32>
    %556 = arith.addf %553, %555 : vector<1x128xf32>
    %557 = math.tanh %556 : vector<1x128xf32>
    %cst_107 = arith.constant 1.000000e+00 : f32
    %558 = vector.broadcast %cst_107 : f32 to vector<1x128xf32>
    %559 = arith.subf %558, %552 : vector<1x128xf32>
    %560 = arith.mulf %559, %557 : vector<1x128xf32>
    %561 = arith.mulf %552, %536 : vector<1x128xf32>
    %562 = arith.addf %560, %561 : vector<1x128xf32>
    %563 = arith.index_cast %c7_i32 : i32 to index
    %c0_108 = arith.constant 0 : index
    %564 = vector.load %arg10[%563, %c0_108] : memref<16x256xf32, #tpu.memory_space<vmem>>, vector<1x128xf32>
    tpu.vector_store %arg10[%563, %c0_108], %533 {strides = array<i32>} : memref<16x256xf32, #tpu.memory_space<vmem>>, vector<1x128xf32>,
    %565 = arith.index_cast %500 : i32 to index
    %c128_109 = arith.constant 128 : index
    %566 = vector.load %arg10[%565, %c128_109] : memref<16x256xf32, #tpu.memory_space<vmem>>, vector<1x128xf32>
    tpu.vector_store %arg10[%565, %c128_109], %562 {strides = array<i32>} : memref<16x256xf32, #tpu.memory_space<vmem>>, vector<1x128xf32>,
    %567 = tpu.concatenate %533, %562 in 0 : vector<1x128xf32>, vector<1x128xf32> -> vector<2x128xf32>
    %c8_i32 = arith.constant 8 : i32
    %cst_110 = arith.constant dense<0.000000e+00> : vector<2x768xf32>
    %568 = tpu.matmul %567, %14, %cst_110 {dimension_numbers = #tpu.dot_dimension_numbers<[1], [0], [0], [1], [0, 0, 1, 1], [], []>} : vector<2x128xf32>, vector<128x768xf32>, vector<2x768xf32> -> vector<2x768xf32>
    %c15_i32_111 = arith.constant 15 : i32
    %569 = arith.subi %c15_i32_111, %c8_i32 : i32
    %570 = arith.index_cast %c8_i32 : i32 to index
    %c0_112 = arith.constant 0 : index
    %571 = vector.load %arg9[%570, %c0_112] : memref<16x768xf32, #tpu.memory_space<vmem>>, vector<1x384xf32>
    %572 = arith.index_cast %569 : i32 to index
    %c384_113 = arith.constant 384 : index
    %573 = vector.load %arg9[%572, %c384_113] : memref<16x768xf32, #tpu.memory_space<vmem>>, vector<1x384xf32>
    %574 = vector.extract_strided_slice %568 {offsets = [0, 0], sizes = [1, 384], strides = [1, 1]} : vector<2x768xf32> to vector<1x384xf32>
    %575 = arith.addf %574, %1 : vector<1x384xf32>
    %576 = vector.extract_strided_slice %567 {offsets = [0, 0], sizes = [1, 128], strides = [1, 1]} : vector<2x128xf32> to vector<1x128xf32>
    %577 = vector.extract_strided_slice %571 {offsets = [0, 0], sizes = [1, 128], strides = [1, 1]} : vector<1x384xf32> to vector<1x128xf32>
    %578 = vector.extract_strided_slice %575 {offsets = [0, 0], sizes = [1, 128], strides = [1, 1]} : vector<1x384xf32> to vector<1x128xf32>
    %579 = arith.addf %577, %578 : vector<1x128xf32>
    %580 = arith.negf %579 : vector<1x128xf32>
    %581 = math.exp %580 : vector<1x128xf32>
    %cst_114 = arith.constant 1.000000e+00 : f32
    %582 = vector.broadcast %cst_114 : f32 to vector<1x128xf32>
    %583 = arith.addf %582, %581 : vector<1x128xf32>
    %584 = arith.divf %582, %583 : vector<1x128xf32>
    %585 = vector.extract_strided_slice %571 {offsets = [0, 128], sizes = [1, 128], strides = [1, 1]} : vector<1x384xf32> to vector<1x128xf32>
    %586 = vector.extract_strided_slice %575 {offsets = [0, 128], sizes = [1, 128], strides = [1, 1]} : vector<1x384xf32> to vector<1x128xf32>
    %587 = arith.addf %585, %586 : vector<1x128xf32>
    %588 = arith.negf %587 : vector<1x128xf32>
    %589 = math.exp %588 : vector<1x128xf32>
    %cst_115 = arith.constant 1.000000e+00 : f32
    %590 = vector.broadcast %cst_115 : f32 to vector<1x128xf32>
    %591 = arith.addf %590, %589 : vector<1x128xf32>
    %592 = arith.divf %590, %591 : vector<1x128xf32>
    %593 = vector.extract_strided_slice %571 {offsets = [0, 256], sizes = [1, 128], strides = [1, 1]} : vector<1x384xf32> to vector<1x128xf32>
    %594 = vector.extract_strided_slice %575 {offsets = [0, 256], sizes = [1, 128], strides = [1, 1]} : vector<1x384xf32> to vector<1x128xf32>
    %595 = arith.mulf %584, %594 : vector<1x128xf32>
    %596 = arith.addf %593, %595 : vector<1x128xf32>
    %597 = math.tanh %596 : vector<1x128xf32>
    %cst_116 = arith.constant 1.000000e+00 : f32
    %598 = vector.broadcast %cst_116 : f32 to vector<1x128xf32>
    %599 = arith.subf %598, %592 : vector<1x128xf32>
    %600 = arith.mulf %599, %597 : vector<1x128xf32>
    %601 = arith.mulf %592, %576 : vector<1x128xf32>
    %602 = arith.addf %600, %601 : vector<1x128xf32>
    %603 = vector.extract_strided_slice %568 {offsets = [1, 384], sizes = [1, 384], strides = [1, 1]} : vector<2x768xf32> to vector<1x384xf32>
    %604 = arith.addf %603, %2 : vector<1x384xf32>
    %605 = vector.extract_strided_slice %567 {offsets = [1, 0], sizes = [1, 128], strides = [1, 1]} : vector<2x128xf32> to vector<1x128xf32>
    %606 = vector.extract_strided_slice %573 {offsets = [0, 0], sizes = [1, 128], strides = [1, 1]} : vector<1x384xf32> to vector<1x128xf32>
    %607 = vector.extract_strided_slice %604 {offsets = [0, 0], sizes = [1, 128], strides = [1, 1]} : vector<1x384xf32> to vector<1x128xf32>
    %608 = arith.addf %606, %607 : vector<1x128xf32>
    %609 = arith.negf %608 : vector<1x128xf32>
    %610 = math.exp %609 : vector<1x128xf32>
    %cst_117 = arith.constant 1.000000e+00 : f32
    %611 = vector.broadcast %cst_117 : f32 to vector<1x128xf32>
    %612 = arith.addf %611, %610 : vector<1x128xf32>
    %613 = arith.divf %611, %612 : vector<1x128xf32>
    %614 = vector.extract_strided_slice %573 {offsets = [0, 128], sizes = [1, 128], strides = [1, 1]} : vector<1x384xf32> to vector<1x128xf32>
    %615 = vector.extract_strided_slice %604 {offsets = [0, 128], sizes = [1, 128], strides = [1, 1]} : vector<1x384xf32> to vector<1x128xf32>
    %616 = arith.addf %614, %615 : vector<1x128xf32>
    %617 = arith.negf %616 : vector<1x128xf32>
    %618 = math.exp %617 : vector<1x128xf32>
    %cst_118 = arith.constant 1.000000e+00 : f32
    %619 = vector.broadcast %cst_118 : f32 to vector<1x128xf32>
    %620 = arith.addf %619, %618 : vector<1x128xf32>
    %621 = arith.divf %619, %620 : vector<1x128xf32>
    %622 = vector.extract_strided_slice %573 {offsets = [0, 256], sizes = [1, 128], strides = [1, 1]} : vector<1x384xf32> to vector<1x128xf32>
    %623 = vector.extract_strided_slice %604 {offsets = [0, 256], sizes = [1, 128], strides = [1, 1]} : vector<1x384xf32> to vector<1x128xf32>
    %624 = arith.mulf %613, %623 : vector<1x128xf32>
    %625 = arith.addf %622, %624 : vector<1x128xf32>
    %626 = math.tanh %625 : vector<1x128xf32>
    %cst_119 = arith.constant 1.000000e+00 : f32
    %627 = vector.broadcast %cst_119 : f32 to vector<1x128xf32>
    %628 = arith.subf %627, %621 : vector<1x128xf32>
    %629 = arith.mulf %628, %626 : vector<1x128xf32>
    %630 = arith.mulf %621, %605 : vector<1x128xf32>
    %631 = arith.addf %629, %630 : vector<1x128xf32>
    %632 = arith.index_cast %c8_i32 : i32 to index
    %c0_120 = arith.constant 0 : index
    %633 = vector.load %arg10[%632, %c0_120] : memref<16x256xf32, #tpu.memory_space<vmem>>, vector<1x128xf32>
    tpu.vector_store %arg10[%632, %c0_120], %602 {strides = array<i32>} : memref<16x256xf32, #tpu.memory_space<vmem>>, vector<1x128xf32>,
    %634 = arith.index_cast %569 : i32 to index
    %c128_121 = arith.constant 128 : index
    %635 = vector.load %arg10[%634, %c128_121] : memref<16x256xf32, #tpu.memory_space<vmem>>, vector<1x128xf32>
    tpu.vector_store %arg10[%634, %c128_121], %631 {strides = array<i32>} : memref<16x256xf32, #tpu.memory_space<vmem>>, vector<1x128xf32>,
    %636 = tpu.concatenate %602, %631 in 0 : vector<1x128xf32>, vector<1x128xf32> -> vector<2x128xf32>
    %c9_i32 = arith.constant 9 : i32
    %cst_122 = arith.constant dense<0.000000e+00> : vector<2x768xf32>
    %637 = tpu.matmul %636, %14, %cst_122 {dimension_numbers = #tpu.dot_dimension_numbers<[1], [0], [0], [1], [0, 0, 1, 1], [], []>} : vector<2x128xf32>, vector<128x768xf32>, vector<2x768xf32> -> vector<2x768xf32>
    %c15_i32_123 = arith.constant 15 : i32
    %638 = arith.subi %c15_i32_123, %c9_i32 : i32
    %639 = arith.index_cast %c9_i32 : i32 to index
    %c0_124 = arith.constant 0 : index
    %640 = vector.load %arg9[%639, %c0_124] : memref<16x768xf32, #tpu.memory_space<vmem>>, vector<1x384xf32>
    %641 = arith.index_cast %638 : i32 to index
    %c384_125 = arith.constant 384 : index
    %642 = vector.load %arg9[%641, %c384_125] : memref<16x768xf32, #tpu.memory_space<vmem>>, vector<1x384xf32>
    %643 = vector.extract_strided_slice %637 {offsets = [0, 0], sizes = [1, 384], strides = [1, 1]} : vector<2x768xf32> to vector<1x384xf32>
    %644 = arith.addf %643, %1 : vector<1x384xf32>
    %645 = vector.extract_strided_slice %636 {offsets = [0, 0], sizes = [1, 128], strides = [1, 1]} : vector<2x128xf32> to vector<1x128xf32>
    %646 = vector.extract_strided_slice %640 {offsets = [0, 0], sizes = [1, 128], strides = [1, 1]} : vector<1x384xf32> to vector<1x128xf32>
    %647 = vector.extract_strided_slice %644 {offsets = [0, 0], sizes = [1, 128], strides = [1, 1]} : vector<1x384xf32> to vector<1x128xf32>
    %648 = arith.addf %646, %647 : vector<1x128xf32>
    %649 = arith.negf %648 : vector<1x128xf32>
    %650 = math.exp %649 : vector<1x128xf32>
    %cst_126 = arith.constant 1.000000e+00 : f32
    %651 = vector.broadcast %cst_126 : f32 to vector<1x128xf32>
    %652 = arith.addf %651, %650 : vector<1x128xf32>
    %653 = arith.divf %651, %652 : vector<1x128xf32>
    %654 = vector.extract_strided_slice %640 {offsets = [0, 128], sizes = [1, 128], strides = [1, 1]} : vector<1x384xf32> to vector<1x128xf32>
    %655 = vector.extract_strided_slice %644 {offsets = [0, 128], sizes = [1, 128], strides = [1, 1]} : vector<1x384xf32> to vector<1x128xf32>
    %656 = arith.addf %654, %655 : vector<1x128xf32>
    %657 = arith.negf %656 : vector<1x128xf32>
    %658 = math.exp %657 : vector<1x128xf32>
    %cst_127 = arith.constant 1.000000e+00 : f32
    %659 = vector.broadcast %cst_127 : f32 to vector<1x128xf32>
    %660 = arith.addf %659, %658 : vector<1x128xf32>
    %661 = arith.divf %659, %660 : vector<1x128xf32>
    %662 = vector.extract_strided_slice %640 {offsets = [0, 256], sizes = [1, 128], strides = [1, 1]} : vector<1x384xf32> to vector<1x128xf32>
    %663 = vector.extract_strided_slice %644 {offsets = [0, 256], sizes = [1, 128], strides = [1, 1]} : vector<1x384xf32> to vector<1x128xf32>
    %664 = arith.mulf %653, %663 : vector<1x128xf32>
    %665 = arith.addf %662, %664 : vector<1x128xf32>
    %666 = math.tanh %665 : vector<1x128xf32>
    %cst_128 = arith.constant 1.000000e+00 : f32
    %667 = vector.broadcast %cst_128 : f32 to vector<1x128xf32>
    %668 = arith.subf %667, %661 : vector<1x128xf32>
    %669 = arith.mulf %668, %666 : vector<1x128xf32>
    %670 = arith.mulf %661, %645 : vector<1x128xf32>
    %671 = arith.addf %669, %670 : vector<1x128xf32>
    %672 = vector.extract_strided_slice %637 {offsets = [1, 384], sizes = [1, 384], strides = [1, 1]} : vector<2x768xf32> to vector<1x384xf32>
    %673 = arith.addf %672, %2 : vector<1x384xf32>
    %674 = vector.extract_strided_slice %636 {offsets = [1, 0], sizes = [1, 128], strides = [1, 1]} : vector<2x128xf32> to vector<1x128xf32>
    %675 = vector.extract_strided_slice %642 {offsets = [0, 0], sizes = [1, 128], strides = [1, 1]} : vector<1x384xf32> to vector<1x128xf32>
    %676 = vector.extract_strided_slice %673 {offsets = [0, 0], sizes = [1, 128], strides = [1, 1]} : vector<1x384xf32> to vector<1x128xf32>
    %677 = arith.addf %675, %676 : vector<1x128xf32>
    %678 = arith.negf %677 : vector<1x128xf32>
    %679 = math.exp %678 : vector<1x128xf32>
    %cst_129 = arith.constant 1.000000e+00 : f32
    %680 = vector.broadcast %cst_129 : f32 to vector<1x128xf32>
    %681 = arith.addf %680, %679 : vector<1x128xf32>
    %682 = arith.divf %680, %681 : vector<1x128xf32>
    %683 = vector.extract_strided_slice %642 {offsets = [0, 128], sizes = [1, 128], strides = [1, 1]} : vector<1x384xf32> to vector<1x128xf32>
    %684 = vector.extract_strided_slice %673 {offsets = [0, 128], sizes = [1, 128], strides = [1, 1]} : vector<1x384xf32> to vector<1x128xf32>
    %685 = arith.addf %683, %684 : vector<1x128xf32>
    %686 = arith.negf %685 : vector<1x128xf32>
    %687 = math.exp %686 : vector<1x128xf32>
    %cst_130 = arith.constant 1.000000e+00 : f32
    %688 = vector.broadcast %cst_130 : f32 to vector<1x128xf32>
    %689 = arith.addf %688, %687 : vector<1x128xf32>
    %690 = arith.divf %688, %689 : vector<1x128xf32>
    %691 = vector.extract_strided_slice %642 {offsets = [0, 256], sizes = [1, 128], strides = [1, 1]} : vector<1x384xf32> to vector<1x128xf32>
    %692 = vector.extract_strided_slice %673 {offsets = [0, 256], sizes = [1, 128], strides = [1, 1]} : vector<1x384xf32> to vector<1x128xf32>
    %693 = arith.mulf %682, %692 : vector<1x128xf32>
    %694 = arith.addf %691, %693 : vector<1x128xf32>
    %695 = math.tanh %694 : vector<1x128xf32>
    %cst_131 = arith.constant 1.000000e+00 : f32
    %696 = vector.broadcast %cst_131 : f32 to vector<1x128xf32>
    %697 = arith.subf %696, %690 : vector<1x128xf32>
    %698 = arith.mulf %697, %695 : vector<1x128xf32>
    %699 = arith.mulf %690, %674 : vector<1x128xf32>
    %700 = arith.addf %698, %699 : vector<1x128xf32>
    %701 = arith.index_cast %c9_i32 : i32 to index
    %c0_132 = arith.constant 0 : index
    %702 = vector.load %arg10[%701, %c0_132] : memref<16x256xf32, #tpu.memory_space<vmem>>, vector<1x128xf32>
    tpu.vector_store %arg10[%701, %c0_132], %671 {strides = array<i32>} : memref<16x256xf32, #tpu.memory_space<vmem>>, vector<1x128xf32>,
    %703 = arith.index_cast %638 : i32 to index
    %c128_133 = arith.constant 128 : index
    %704 = vector.load %arg10[%703, %c128_133] : memref<16x256xf32, #tpu.memory_space<vmem>>, vector<1x128xf32>
    tpu.vector_store %arg10[%703, %c128_133], %700 {strides = array<i32>} : memref<16x256xf32, #tpu.memory_space<vmem>>, vector<1x128xf32>,
    %705 = tpu.concatenate %671, %700 in 0 : vector<1x128xf32>, vector<1x128xf32> -> vector<2x128xf32>
    %c10_i32 = arith.constant 10 : i32
    %cst_134 = arith.constant dense<0.000000e+00> : vector<2x768xf32>
    %706 = tpu.matmul %705, %14, %cst_134 {dimension_numbers = #tpu.dot_dimension_numbers<[1], [0], [0], [1], [0, 0, 1, 1], [], []>} : vector<2x128xf32>, vector<128x768xf32>, vector<2x768xf32> -> vector<2x768xf32>
    %c15_i32_135 = arith.constant 15 : i32
    %707 = arith.subi %c15_i32_135, %c10_i32 : i32
    %708 = arith.index_cast %c10_i32 : i32 to index
    %c0_136 = arith.constant 0 : index
    %709 = vector.load %arg9[%708, %c0_136] : memref<16x768xf32, #tpu.memory_space<vmem>>, vector<1x384xf32>
    %710 = arith.index_cast %707 : i32 to index
    %c384_137 = arith.constant 384 : index
    %711 = vector.load %arg9[%710, %c384_137] : memref<16x768xf32, #tpu.memory_space<vmem>>, vector<1x384xf32>
    %712 = vector.extract_strided_slice %706 {offsets = [0, 0], sizes = [1, 384], strides = [1, 1]} : vector<2x768xf32> to vector<1x384xf32>
    %713 = arith.addf %712, %1 : vector<1x384xf32>
    %714 = vector.extract_strided_slice %705 {offsets = [0, 0], sizes = [1, 128], strides = [1, 1]} : vector<2x128xf32> to vector<1x128xf32>
    %715 = vector.extract_strided_slice %709 {offsets = [0, 0], sizes = [1, 128], strides = [1, 1]} : vector<1x384xf32> to vector<1x128xf32>
    %716 = vector.extract_strided_slice %713 {offsets = [0, 0], sizes = [1, 128], strides = [1, 1]} : vector<1x384xf32> to vector<1x128xf32>
    %717 = arith.addf %715, %716 : vector<1x128xf32>
    %718 = arith.negf %717 : vector<1x128xf32>
    %719 = math.exp %718 : vector<1x128xf32>
    %cst_138 = arith.constant 1.000000e+00 : f32
    %720 = vector.broadcast %cst_138 : f32 to vector<1x128xf32>
    %721 = arith.addf %720, %719 : vector<1x128xf32>
    %722 = arith.divf %720, %721 : vector<1x128xf32>
    %723 = vector.extract_strided_slice %709 {offsets = [0, 128], sizes = [1, 128], strides = [1, 1]} : vector<1x384xf32> to vector<1x128xf32>
    %724 = vector.extract_strided_slice %713 {offsets = [0, 128], sizes = [1, 128], strides = [1, 1]} : vector<1x384xf32> to vector<1x128xf32>
    %725 = arith.addf %723, %724 : vector<1x128xf32>
    %726 = arith.negf %725 : vector<1x128xf32>
    %727 = math.exp %726 : vector<1x128xf32>
    %cst_139 = arith.constant 1.000000e+00 : f32
    %728 = vector.broadcast %cst_139 : f32 to vector<1x128xf32>
    %729 = arith.addf %728, %727 : vector<1x128xf32>
    %730 = arith.divf %728, %729 : vector<1x128xf32>
    %731 = vector.extract_strided_slice %709 {offsets = [0, 256], sizes = [1, 128], strides = [1, 1]} : vector<1x384xf32> to vector<1x128xf32>
    %732 = vector.extract_strided_slice %713 {offsets = [0, 256], sizes = [1, 128], strides = [1, 1]} : vector<1x384xf32> to vector<1x128xf32>
    %733 = arith.mulf %722, %732 : vector<1x128xf32>
    %734 = arith.addf %731, %733 : vector<1x128xf32>
    %735 = math.tanh %734 : vector<1x128xf32>
    %cst_140 = arith.constant 1.000000e+00 : f32
    %736 = vector.broadcast %cst_140 : f32 to vector<1x128xf32>
    %737 = arith.subf %736, %730 : vector<1x128xf32>
    %738 = arith.mulf %737, %735 : vector<1x128xf32>
    %739 = arith.mulf %730, %714 : vector<1x128xf32>
    %740 = arith.addf %738, %739 : vector<1x128xf32>
    %741 = vector.extract_strided_slice %706 {offsets = [1, 384], sizes = [1, 384], strides = [1, 1]} : vector<2x768xf32> to vector<1x384xf32>
    %742 = arith.addf %741, %2 : vector<1x384xf32>
    %743 = vector.extract_strided_slice %705 {offsets = [1, 0], sizes = [1, 128], strides = [1, 1]} : vector<2x128xf32> to vector<1x128xf32>
    %744 = vector.extract_strided_slice %711 {offsets = [0, 0], sizes = [1, 128], strides = [1, 1]} : vector<1x384xf32> to vector<1x128xf32>
    %745 = vector.extract_strided_slice %742 {offsets = [0, 0], sizes = [1, 128], strides = [1, 1]} : vector<1x384xf32> to vector<1x128xf32>
    %746 = arith.addf %744, %745 : vector<1x128xf32>
    %747 = arith.negf %746 : vector<1x128xf32>
    %748 = math.exp %747 : vector<1x128xf32>
    %cst_141 = arith.constant 1.000000e+00 : f32
    %749 = vector.broadcast %cst_141 : f32 to vector<1x128xf32>
    %750 = arith.addf %749, %748 : vector<1x128xf32>
    %751 = arith.divf %749, %750 : vector<1x128xf32>
    %752 = vector.extract_strided_slice %711 {offsets = [0, 128], sizes = [1, 128], strides = [1, 1]} : vector<1x384xf32> to vector<1x128xf32>
    %753 = vector.extract_strided_slice %742 {offsets = [0, 128], sizes = [1, 128], strides = [1, 1]} : vector<1x384xf32> to vector<1x128xf32>
    %754 = arith.addf %752, %753 : vector<1x128xf32>
    %755 = arith.negf %754 : vector<1x128xf32>
    %756 = math.exp %755 : vector<1x128xf32>
    %cst_142 = arith.constant 1.000000e+00 : f32
    %757 = vector.broadcast %cst_142 : f32 to vector<1x128xf32>
    %758 = arith.addf %757, %756 : vector<1x128xf32>
    %759 = arith.divf %757, %758 : vector<1x128xf32>
    %760 = vector.extract_strided_slice %711 {offsets = [0, 256], sizes = [1, 128], strides = [1, 1]} : vector<1x384xf32> to vector<1x128xf32>
    %761 = vector.extract_strided_slice %742 {offsets = [0, 256], sizes = [1, 128], strides = [1, 1]} : vector<1x384xf32> to vector<1x128xf32>
    %762 = arith.mulf %751, %761 : vector<1x128xf32>
    %763 = arith.addf %760, %762 : vector<1x128xf32>
    %764 = math.tanh %763 : vector<1x128xf32>
    %cst_143 = arith.constant 1.000000e+00 : f32
    %765 = vector.broadcast %cst_143 : f32 to vector<1x128xf32>
    %766 = arith.subf %765, %759 : vector<1x128xf32>
    %767 = arith.mulf %766, %764 : vector<1x128xf32>
    %768 = arith.mulf %759, %743 : vector<1x128xf32>
    %769 = arith.addf %767, %768 : vector<1x128xf32>
    %770 = arith.index_cast %c10_i32 : i32 to index
    %c0_144 = arith.constant 0 : index
    %771 = vector.load %arg10[%770, %c0_144] : memref<16x256xf32, #tpu.memory_space<vmem>>, vector<1x128xf32>
    tpu.vector_store %arg10[%770, %c0_144], %740 {strides = array<i32>} : memref<16x256xf32, #tpu.memory_space<vmem>>, vector<1x128xf32>,
    %772 = arith.index_cast %707 : i32 to index
    %c128_145 = arith.constant 128 : index
    %773 = vector.load %arg10[%772, %c128_145] : memref<16x256xf32, #tpu.memory_space<vmem>>, vector<1x128xf32>
    tpu.vector_store %arg10[%772, %c128_145], %769 {strides = array<i32>} : memref<16x256xf32, #tpu.memory_space<vmem>>, vector<1x128xf32>,
    %774 = tpu.concatenate %740, %769 in 0 : vector<1x128xf32>, vector<1x128xf32> -> vector<2x128xf32>
    %c11_i32 = arith.constant 11 : i32
    %cst_146 = arith.constant dense<0.000000e+00> : vector<2x768xf32>
    %775 = tpu.matmul %774, %14, %cst_146 {dimension_numbers = #tpu.dot_dimension_numbers<[1], [0], [0], [1], [0, 0, 1, 1], [], []>} : vector<2x128xf32>, vector<128x768xf32>, vector<2x768xf32> -> vector<2x768xf32>
    %c15_i32_147 = arith.constant 15 : i32
    %776 = arith.subi %c15_i32_147, %c11_i32 : i32
    %777 = arith.index_cast %c11_i32 : i32 to index
    %c0_148 = arith.constant 0 : index
    %778 = vector.load %arg9[%777, %c0_148] : memref<16x768xf32, #tpu.memory_space<vmem>>, vector<1x384xf32>
    %779 = arith.index_cast %776 : i32 to index
    %c384_149 = arith.constant 384 : index
    %780 = vector.load %arg9[%779, %c384_149] : memref<16x768xf32, #tpu.memory_space<vmem>>, vector<1x384xf32>
    %781 = vector.extract_strided_slice %775 {offsets = [0, 0], sizes = [1, 384], strides = [1, 1]} : vector<2x768xf32> to vector<1x384xf32>
    %782 = arith.addf %781, %1 : vector<1x384xf32>
    %783 = vector.extract_strided_slice %774 {offsets = [0, 0], sizes = [1, 128], strides = [1, 1]} : vector<2x128xf32> to vector<1x128xf32>
    %784 = vector.extract_strided_slice %778 {offsets = [0, 0], sizes = [1, 128], strides = [1, 1]} : vector<1x384xf32> to vector<1x128xf32>
    %785 = vector.extract_strided_slice %782 {offsets = [0, 0], sizes = [1, 128], strides = [1, 1]} : vector<1x384xf32> to vector<1x128xf32>
    %786 = arith.addf %784, %785 : vector<1x128xf32>
    %787 = arith.negf %786 : vector<1x128xf32>
    %788 = math.exp %787 : vector<1x128xf32>
    %cst_150 = arith.constant 1.000000e+00 : f32
    %789 = vector.broadcast %cst_150 : f32 to vector<1x128xf32>
    %790 = arith.addf %789, %788 : vector<1x128xf32>
    %791 = arith.divf %789, %790 : vector<1x128xf32>
    %792 = vector.extract_strided_slice %778 {offsets = [0, 128], sizes = [1, 128], strides = [1, 1]} : vector<1x384xf32> to vector<1x128xf32>
    %793 = vector.extract_strided_slice %782 {offsets = [0, 128], sizes = [1, 128], strides = [1, 1]} : vector<1x384xf32> to vector<1x128xf32>
    %794 = arith.addf %792, %793 : vector<1x128xf32>
    %795 = arith.negf %794 : vector<1x128xf32>
    %796 = math.exp %795 : vector<1x128xf32>
    %cst_151 = arith.constant 1.000000e+00 : f32
    %797 = vector.broadcast %cst_151 : f32 to vector<1x128xf32>
    %798 = arith.addf %797, %796 : vector<1x128xf32>
    %799 = arith.divf %797, %798 : vector<1x128xf32>
    %800 = vector.extract_strided_slice %778 {offsets = [0, 256], sizes = [1, 128], strides = [1, 1]} : vector<1x384xf32> to vector<1x128xf32>
    %801 = vector.extract_strided_slice %782 {offsets = [0, 256], sizes = [1, 128], strides = [1, 1]} : vector<1x384xf32> to vector<1x128xf32>
    %802 = arith.mulf %791, %801 : vector<1x128xf32>
    %803 = arith.addf %800, %802 : vector<1x128xf32>
    %804 = math.tanh %803 : vector<1x128xf32>
    %cst_152 = arith.constant 1.000000e+00 : f32
    %805 = vector.broadcast %cst_152 : f32 to vector<1x128xf32>
    %806 = arith.subf %805, %799 : vector<1x128xf32>
    %807 = arith.mulf %806, %804 : vector<1x128xf32>
    %808 = arith.mulf %799, %783 : vector<1x128xf32>
    %809 = arith.addf %807, %808 : vector<1x128xf32>
    %810 = vector.extract_strided_slice %775 {offsets = [1, 384], sizes = [1, 384], strides = [1, 1]} : vector<2x768xf32> to vector<1x384xf32>
    %811 = arith.addf %810, %2 : vector<1x384xf32>
    %812 = vector.extract_strided_slice %774 {offsets = [1, 0], sizes = [1, 128], strides = [1, 1]} : vector<2x128xf32> to vector<1x128xf32>
    %813 = vector.extract_strided_slice %780 {offsets = [0, 0], sizes = [1, 128], strides = [1, 1]} : vector<1x384xf32> to vector<1x128xf32>
    %814 = vector.extract_strided_slice %811 {offsets = [0, 0], sizes = [1, 128], strides = [1, 1]} : vector<1x384xf32> to vector<1x128xf32>
    %815 = arith.addf %813, %814 : vector<1x128xf32>
    %816 = arith.negf %815 : vector<1x128xf32>
    %817 = math.exp %816 : vector<1x128xf32>
    %cst_153 = arith.constant 1.000000e+00 : f32
    %818 = vector.broadcast %cst_153 : f32 to vector<1x128xf32>
    %819 = arith.addf %818, %817 : vector<1x128xf32>
    %820 = arith.divf %818, %819 : vector<1x128xf32>
    %821 = vector.extract_strided_slice %780 {offsets = [0, 128], sizes = [1, 128], strides = [1, 1]} : vector<1x384xf32> to vector<1x128xf32>
    %822 = vector.extract_strided_slice %811 {offsets = [0, 128], sizes = [1, 128], strides = [1, 1]} : vector<1x384xf32> to vector<1x128xf32>
    %823 = arith.addf %821, %822 : vector<1x128xf32>
    %824 = arith.negf %823 : vector<1x128xf32>
    %825 = math.exp %824 : vector<1x128xf32>
    %cst_154 = arith.constant 1.000000e+00 : f32
    %826 = vector.broadcast %cst_154 : f32 to vector<1x128xf32>
    %827 = arith.addf %826, %825 : vector<1x128xf32>
    %828 = arith.divf %826, %827 : vector<1x128xf32>
    %829 = vector.extract_strided_slice %780 {offsets = [0, 256], sizes = [1, 128], strides = [1, 1]} : vector<1x384xf32> to vector<1x128xf32>
    %830 = vector.extract_strided_slice %811 {offsets = [0, 256], sizes = [1, 128], strides = [1, 1]} : vector<1x384xf32> to vector<1x128xf32>
    %831 = arith.mulf %820, %830 : vector<1x128xf32>
    %832 = arith.addf %829, %831 : vector<1x128xf32>
    %833 = math.tanh %832 : vector<1x128xf32>
    %cst_155 = arith.constant 1.000000e+00 : f32
    %834 = vector.broadcast %cst_155 : f32 to vector<1x128xf32>
    %835 = arith.subf %834, %828 : vector<1x128xf32>
    %836 = arith.mulf %835, %833 : vector<1x128xf32>
    %837 = arith.mulf %828, %812 : vector<1x128xf32>
    %838 = arith.addf %836, %837 : vector<1x128xf32>
    %839 = arith.index_cast %c11_i32 : i32 to index
    %c0_156 = arith.constant 0 : index
    %840 = vector.load %arg10[%839, %c0_156] : memref<16x256xf32, #tpu.memory_space<vmem>>, vector<1x128xf32>
    tpu.vector_store %arg10[%839, %c0_156], %809 {strides = array<i32>} : memref<16x256xf32, #tpu.memory_space<vmem>>, vector<1x128xf32>,
    %841 = arith.index_cast %776 : i32 to index
    %c128_157 = arith.constant 128 : index
    %842 = vector.load %arg10[%841, %c128_157] : memref<16x256xf32, #tpu.memory_space<vmem>>, vector<1x128xf32>
    tpu.vector_store %arg10[%841, %c128_157], %838 {strides = array<i32>} : memref<16x256xf32, #tpu.memory_space<vmem>>, vector<1x128xf32>,
    %843 = tpu.concatenate %809, %838 in 0 : vector<1x128xf32>, vector<1x128xf32> -> vector<2x128xf32>
    %c12_i32 = arith.constant 12 : i32
    %cst_158 = arith.constant dense<0.000000e+00> : vector<2x768xf32>
    %844 = tpu.matmul %843, %14, %cst_158 {dimension_numbers = #tpu.dot_dimension_numbers<[1], [0], [0], [1], [0, 0, 1, 1], [], []>} : vector<2x128xf32>, vector<128x768xf32>, vector<2x768xf32> -> vector<2x768xf32>
    %c15_i32_159 = arith.constant 15 : i32
    %845 = arith.subi %c15_i32_159, %c12_i32 : i32
    %846 = arith.index_cast %c12_i32 : i32 to index
    %c0_160 = arith.constant 0 : index
    %847 = vector.load %arg9[%846, %c0_160] : memref<16x768xf32, #tpu.memory_space<vmem>>, vector<1x384xf32>
    %848 = arith.index_cast %845 : i32 to index
    %c384_161 = arith.constant 384 : index
    %849 = vector.load %arg9[%848, %c384_161] : memref<16x768xf32, #tpu.memory_space<vmem>>, vector<1x384xf32>
    %850 = vector.extract_strided_slice %844 {offsets = [0, 0], sizes = [1, 384], strides = [1, 1]} : vector<2x768xf32> to vector<1x384xf32>
    %851 = arith.addf %850, %1 : vector<1x384xf32>
    %852 = vector.extract_strided_slice %843 {offsets = [0, 0], sizes = [1, 128], strides = [1, 1]} : vector<2x128xf32> to vector<1x128xf32>
    %853 = vector.extract_strided_slice %847 {offsets = [0, 0], sizes = [1, 128], strides = [1, 1]} : vector<1x384xf32> to vector<1x128xf32>
    %854 = vector.extract_strided_slice %851 {offsets = [0, 0], sizes = [1, 128], strides = [1, 1]} : vector<1x384xf32> to vector<1x128xf32>
    %855 = arith.addf %853, %854 : vector<1x128xf32>
    %856 = arith.negf %855 : vector<1x128xf32>
    %857 = math.exp %856 : vector<1x128xf32>
    %cst_162 = arith.constant 1.000000e+00 : f32
    %858 = vector.broadcast %cst_162 : f32 to vector<1x128xf32>
    %859 = arith.addf %858, %857 : vector<1x128xf32>
    %860 = arith.divf %858, %859 : vector<1x128xf32>
    %861 = vector.extract_strided_slice %847 {offsets = [0, 128], sizes = [1, 128], strides = [1, 1]} : vector<1x384xf32> to vector<1x128xf32>
    %862 = vector.extract_strided_slice %851 {offsets = [0, 128], sizes = [1, 128], strides = [1, 1]} : vector<1x384xf32> to vector<1x128xf32>
    %863 = arith.addf %861, %862 : vector<1x128xf32>
    %864 = arith.negf %863 : vector<1x128xf32>
    %865 = math.exp %864 : vector<1x128xf32>
    %cst_163 = arith.constant 1.000000e+00 : f32
    %866 = vector.broadcast %cst_163 : f32 to vector<1x128xf32>
    %867 = arith.addf %866, %865 : vector<1x128xf32>
    %868 = arith.divf %866, %867 : vector<1x128xf32>
    %869 = vector.extract_strided_slice %847 {offsets = [0, 256], sizes = [1, 128], strides = [1, 1]} : vector<1x384xf32> to vector<1x128xf32>
    %870 = vector.extract_strided_slice %851 {offsets = [0, 256], sizes = [1, 128], strides = [1, 1]} : vector<1x384xf32> to vector<1x128xf32>
    %871 = arith.mulf %860, %870 : vector<1x128xf32>
    %872 = arith.addf %869, %871 : vector<1x128xf32>
    %873 = math.tanh %872 : vector<1x128xf32>
    %cst_164 = arith.constant 1.000000e+00 : f32
    %874 = vector.broadcast %cst_164 : f32 to vector<1x128xf32>
    %875 = arith.subf %874, %868 : vector<1x128xf32>
    %876 = arith.mulf %875, %873 : vector<1x128xf32>
    %877 = arith.mulf %868, %852 : vector<1x128xf32>
    %878 = arith.addf %876, %877 : vector<1x128xf32>
    %879 = vector.extract_strided_slice %844 {offsets = [1, 384], sizes = [1, 384], strides = [1, 1]} : vector<2x768xf32> to vector<1x384xf32>
    %880 = arith.addf %879, %2 : vector<1x384xf32>
    %881 = vector.extract_strided_slice %843 {offsets = [1, 0], sizes = [1, 128], strides = [1, 1]} : vector<2x128xf32> to vector<1x128xf32>
    %882 = vector.extract_strided_slice %849 {offsets = [0, 0], sizes = [1, 128], strides = [1, 1]} : vector<1x384xf32> to vector<1x128xf32>
    %883 = vector.extract_strided_slice %880 {offsets = [0, 0], sizes = [1, 128], strides = [1, 1]} : vector<1x384xf32> to vector<1x128xf32>
    %884 = arith.addf %882, %883 : vector<1x128xf32>
    %885 = arith.negf %884 : vector<1x128xf32>
    %886 = math.exp %885 : vector<1x128xf32>
    %cst_165 = arith.constant 1.000000e+00 : f32
    %887 = vector.broadcast %cst_165 : f32 to vector<1x128xf32>
    %888 = arith.addf %887, %886 : vector<1x128xf32>
    %889 = arith.divf %887, %888 : vector<1x128xf32>
    %890 = vector.extract_strided_slice %849 {offsets = [0, 128], sizes = [1, 128], strides = [1, 1]} : vector<1x384xf32> to vector<1x128xf32>
    %891 = vector.extract_strided_slice %880 {offsets = [0, 128], sizes = [1, 128], strides = [1, 1]} : vector<1x384xf32> to vector<1x128xf32>
    %892 = arith.addf %890, %891 : vector<1x128xf32>
    %893 = arith.negf %892 : vector<1x128xf32>
    %894 = math.exp %893 : vector<1x128xf32>
    %cst_166 = arith.constant 1.000000e+00 : f32
    %895 = vector.broadcast %cst_166 : f32 to vector<1x128xf32>
    %896 = arith.addf %895, %894 : vector<1x128xf32>
    %897 = arith.divf %895, %896 : vector<1x128xf32>
    %898 = vector.extract_strided_slice %849 {offsets = [0, 256], sizes = [1, 128], strides = [1, 1]} : vector<1x384xf32> to vector<1x128xf32>
    %899 = vector.extract_strided_slice %880 {offsets = [0, 256], sizes = [1, 128], strides = [1, 1]} : vector<1x384xf32> to vector<1x128xf32>
    %900 = arith.mulf %889, %899 : vector<1x128xf32>
    %901 = arith.addf %898, %900 : vector<1x128xf32>
    %902 = math.tanh %901 : vector<1x128xf32>
    %cst_167 = arith.constant 1.000000e+00 : f32
    %903 = vector.broadcast %cst_167 : f32 to vector<1x128xf32>
    %904 = arith.subf %903, %897 : vector<1x128xf32>
    %905 = arith.mulf %904, %902 : vector<1x128xf32>
    %906 = arith.mulf %897, %881 : vector<1x128xf32>
    %907 = arith.addf %905, %906 : vector<1x128xf32>
    %908 = arith.index_cast %c12_i32 : i32 to index
    %c0_168 = arith.constant 0 : index
    %909 = vector.load %arg10[%908, %c0_168] : memref<16x256xf32, #tpu.memory_space<vmem>>, vector<1x128xf32>
    tpu.vector_store %arg10[%908, %c0_168], %878 {strides = array<i32>} : memref<16x256xf32, #tpu.memory_space<vmem>>, vector<1x128xf32>,
    %910 = arith.index_cast %845 : i32 to index
    %c128_169 = arith.constant 128 : index
    %911 = vector.load %arg10[%910, %c128_169] : memref<16x256xf32, #tpu.memory_space<vmem>>, vector<1x128xf32>
    tpu.vector_store %arg10[%910, %c128_169], %907 {strides = array<i32>} : memref<16x256xf32, #tpu.memory_space<vmem>>, vector<1x128xf32>,
    %912 = tpu.concatenate %878, %907 in 0 : vector<1x128xf32>, vector<1x128xf32> -> vector<2x128xf32>
    %c13_i32 = arith.constant 13 : i32
    %cst_170 = arith.constant dense<0.000000e+00> : vector<2x768xf32>
    %913 = tpu.matmul %912, %14, %cst_170 {dimension_numbers = #tpu.dot_dimension_numbers<[1], [0], [0], [1], [0, 0, 1, 1], [], []>} : vector<2x128xf32>, vector<128x768xf32>, vector<2x768xf32> -> vector<2x768xf32>
    %c15_i32_171 = arith.constant 15 : i32
    %914 = arith.subi %c15_i32_171, %c13_i32 : i32
    %915 = arith.index_cast %c13_i32 : i32 to index
    %c0_172 = arith.constant 0 : index
    %916 = vector.load %arg9[%915, %c0_172] : memref<16x768xf32, #tpu.memory_space<vmem>>, vector<1x384xf32>
    %917 = arith.index_cast %914 : i32 to index
    %c384_173 = arith.constant 384 : index
    %918 = vector.load %arg9[%917, %c384_173] : memref<16x768xf32, #tpu.memory_space<vmem>>, vector<1x384xf32>
    %919 = vector.extract_strided_slice %913 {offsets = [0, 0], sizes = [1, 384], strides = [1, 1]} : vector<2x768xf32> to vector<1x384xf32>
    %920 = arith.addf %919, %1 : vector<1x384xf32>
    %921 = vector.extract_strided_slice %912 {offsets = [0, 0], sizes = [1, 128], strides = [1, 1]} : vector<2x128xf32> to vector<1x128xf32>
    %922 = vector.extract_strided_slice %916 {offsets = [0, 0], sizes = [1, 128], strides = [1, 1]} : vector<1x384xf32> to vector<1x128xf32>
    %923 = vector.extract_strided_slice %920 {offsets = [0, 0], sizes = [1, 128], strides = [1, 1]} : vector<1x384xf32> to vector<1x128xf32>
    %924 = arith.addf %922, %923 : vector<1x128xf32>
    %925 = arith.negf %924 : vector<1x128xf32>
    %926 = math.exp %925 : vector<1x128xf32>
    %cst_174 = arith.constant 1.000000e+00 : f32
    %927 = vector.broadcast %cst_174 : f32 to vector<1x128xf32>
    %928 = arith.addf %927, %926 : vector<1x128xf32>
    %929 = arith.divf %927, %928 : vector<1x128xf32>
    %930 = vector.extract_strided_slice %916 {offsets = [0, 128], sizes = [1, 128], strides = [1, 1]} : vector<1x384xf32> to vector<1x128xf32>
    %931 = vector.extract_strided_slice %920 {offsets = [0, 128], sizes = [1, 128], strides = [1, 1]} : vector<1x384xf32> to vector<1x128xf32>
    %932 = arith.addf %930, %931 : vector<1x128xf32>
    %933 = arith.negf %932 : vector<1x128xf32>
    %934 = math.exp %933 : vector<1x128xf32>
    %cst_175 = arith.constant 1.000000e+00 : f32
    %935 = vector.broadcast %cst_175 : f32 to vector<1x128xf32>
    %936 = arith.addf %935, %934 : vector<1x128xf32>
    %937 = arith.divf %935, %936 : vector<1x128xf32>
    %938 = vector.extract_strided_slice %916 {offsets = [0, 256], sizes = [1, 128], strides = [1, 1]} : vector<1x384xf32> to vector<1x128xf32>
    %939 = vector.extract_strided_slice %920 {offsets = [0, 256], sizes = [1, 128], strides = [1, 1]} : vector<1x384xf32> to vector<1x128xf32>
    %940 = arith.mulf %929, %939 : vector<1x128xf32>
    %941 = arith.addf %938, %940 : vector<1x128xf32>
    %942 = math.tanh %941 : vector<1x128xf32>
    %cst_176 = arith.constant 1.000000e+00 : f32
    %943 = vector.broadcast %cst_176 : f32 to vector<1x128xf32>
    %944 = arith.subf %943, %937 : vector<1x128xf32>
    %945 = arith.mulf %944, %942 : vector<1x128xf32>
    %946 = arith.mulf %937, %921 : vector<1x128xf32>
    %947 = arith.addf %945, %946 : vector<1x128xf32>
    %948 = vector.extract_strided_slice %913 {offsets = [1, 384], sizes = [1, 384], strides = [1, 1]} : vector<2x768xf32> to vector<1x384xf32>
    %949 = arith.addf %948, %2 : vector<1x384xf32>
    %950 = vector.extract_strided_slice %912 {offsets = [1, 0], sizes = [1, 128], strides = [1, 1]} : vector<2x128xf32> to vector<1x128xf32>
    %951 = vector.extract_strided_slice %918 {offsets = [0, 0], sizes = [1, 128], strides = [1, 1]} : vector<1x384xf32> to vector<1x128xf32>
    %952 = vector.extract_strided_slice %949 {offsets = [0, 0], sizes = [1, 128], strides = [1, 1]} : vector<1x384xf32> to vector<1x128xf32>
    %953 = arith.addf %951, %952 : vector<1x128xf32>
    %954 = arith.negf %953 : vector<1x128xf32>
    %955 = math.exp %954 : vector<1x128xf32>
    %cst_177 = arith.constant 1.000000e+00 : f32
    %956 = vector.broadcast %cst_177 : f32 to vector<1x128xf32>
    %957 = arith.addf %956, %955 : vector<1x128xf32>
    %958 = arith.divf %956, %957 : vector<1x128xf32>
    %959 = vector.extract_strided_slice %918 {offsets = [0, 128], sizes = [1, 128], strides = [1, 1]} : vector<1x384xf32> to vector<1x128xf32>
    %960 = vector.extract_strided_slice %949 {offsets = [0, 128], sizes = [1, 128], strides = [1, 1]} : vector<1x384xf32> to vector<1x128xf32>
    %961 = arith.addf %959, %960 : vector<1x128xf32>
    %962 = arith.negf %961 : vector<1x128xf32>
    %963 = math.exp %962 : vector<1x128xf32>
    %cst_178 = arith.constant 1.000000e+00 : f32
    %964 = vector.broadcast %cst_178 : f32 to vector<1x128xf32>
    %965 = arith.addf %964, %963 : vector<1x128xf32>
    %966 = arith.divf %964, %965 : vector<1x128xf32>
    %967 = vector.extract_strided_slice %918 {offsets = [0, 256], sizes = [1, 128], strides = [1, 1]} : vector<1x384xf32> to vector<1x128xf32>
    %968 = vector.extract_strided_slice %949 {offsets = [0, 256], sizes = [1, 128], strides = [1, 1]} : vector<1x384xf32> to vector<1x128xf32>
    %969 = arith.mulf %958, %968 : vector<1x128xf32>
    %970 = arith.addf %967, %969 : vector<1x128xf32>
    %971 = math.tanh %970 : vector<1x128xf32>
    %cst_179 = arith.constant 1.000000e+00 : f32
    %972 = vector.broadcast %cst_179 : f32 to vector<1x128xf32>
    %973 = arith.subf %972, %966 : vector<1x128xf32>
    %974 = arith.mulf %973, %971 : vector<1x128xf32>
    %975 = arith.mulf %966, %950 : vector<1x128xf32>
    %976 = arith.addf %974, %975 : vector<1x128xf32>
    %977 = arith.index_cast %c13_i32 : i32 to index
    %c0_180 = arith.constant 0 : index
    %978 = vector.load %arg10[%977, %c0_180] : memref<16x256xf32, #tpu.memory_space<vmem>>, vector<1x128xf32>
    tpu.vector_store %arg10[%977, %c0_180], %947 {strides = array<i32>} : memref<16x256xf32, #tpu.memory_space<vmem>>, vector<1x128xf32>,
    %979 = arith.index_cast %914 : i32 to index
    %c128_181 = arith.constant 128 : index
    %980 = vector.load %arg10[%979, %c128_181] : memref<16x256xf32, #tpu.memory_space<vmem>>, vector<1x128xf32>
    tpu.vector_store %arg10[%979, %c128_181], %976 {strides = array<i32>} : memref<16x256xf32, #tpu.memory_space<vmem>>, vector<1x128xf32>,
    %981 = tpu.concatenate %947, %976 in 0 : vector<1x128xf32>, vector<1x128xf32> -> vector<2x128xf32>
    %c14_i32 = arith.constant 14 : i32
    %cst_182 = arith.constant dense<0.000000e+00> : vector<2x768xf32>
    %982 = tpu.matmul %981, %14, %cst_182 {dimension_numbers = #tpu.dot_dimension_numbers<[1], [0], [0], [1], [0, 0, 1, 1], [], []>} : vector<2x128xf32>, vector<128x768xf32>, vector<2x768xf32> -> vector<2x768xf32>
    %c15_i32_183 = arith.constant 15 : i32
    %983 = arith.subi %c15_i32_183, %c14_i32 : i32
    %984 = arith.index_cast %c14_i32 : i32 to index
    %c0_184 = arith.constant 0 : index
    %985 = vector.load %arg9[%984, %c0_184] : memref<16x768xf32, #tpu.memory_space<vmem>>, vector<1x384xf32>
    %986 = arith.index_cast %983 : i32 to index
    %c384_185 = arith.constant 384 : index
    %987 = vector.load %arg9[%986, %c384_185] : memref<16x768xf32, #tpu.memory_space<vmem>>, vector<1x384xf32>
    %988 = vector.extract_strided_slice %982 {offsets = [0, 0], sizes = [1, 384], strides = [1, 1]} : vector<2x768xf32> to vector<1x384xf32>
    %989 = arith.addf %988, %1 : vector<1x384xf32>
    %990 = vector.extract_strided_slice %981 {offsets = [0, 0], sizes = [1, 128], strides = [1, 1]} : vector<2x128xf32> to vector<1x128xf32>
    %991 = vector.extract_strided_slice %985 {offsets = [0, 0], sizes = [1, 128], strides = [1, 1]} : vector<1x384xf32> to vector<1x128xf32>
    %992 = vector.extract_strided_slice %989 {offsets = [0, 0], sizes = [1, 128], strides = [1, 1]} : vector<1x384xf32> to vector<1x128xf32>
    %993 = arith.addf %991, %992 : vector<1x128xf32>
    %994 = arith.negf %993 : vector<1x128xf32>
    %995 = math.exp %994 : vector<1x128xf32>
    %cst_186 = arith.constant 1.000000e+00 : f32
    %996 = vector.broadcast %cst_186 : f32 to vector<1x128xf32>
    %997 = arith.addf %996, %995 : vector<1x128xf32>
    %998 = arith.divf %996, %997 : vector<1x128xf32>
    %999 = vector.extract_strided_slice %985 {offsets = [0, 128], sizes = [1, 128], strides = [1, 1]} : vector<1x384xf32> to vector<1x128xf32>
    %1000 = vector.extract_strided_slice %989 {offsets = [0, 128], sizes = [1, 128], strides = [1, 1]} : vector<1x384xf32> to vector<1x128xf32>
    %1001 = arith.addf %999, %1000 : vector<1x128xf32>
    %1002 = arith.negf %1001 : vector<1x128xf32>
    %1003 = math.exp %1002 : vector<1x128xf32>
    %cst_187 = arith.constant 1.000000e+00 : f32
    %1004 = vector.broadcast %cst_187 : f32 to vector<1x128xf32>
    %1005 = arith.addf %1004, %1003 : vector<1x128xf32>
    %1006 = arith.divf %1004, %1005 : vector<1x128xf32>
    %1007 = vector.extract_strided_slice %985 {offsets = [0, 256], sizes = [1, 128], strides = [1, 1]} : vector<1x384xf32> to vector<1x128xf32>
    %1008 = vector.extract_strided_slice %989 {offsets = [0, 256], sizes = [1, 128], strides = [1, 1]} : vector<1x384xf32> to vector<1x128xf32>
    %1009 = arith.mulf %998, %1008 : vector<1x128xf32>
    %1010 = arith.addf %1007, %1009 : vector<1x128xf32>
    %1011 = math.tanh %1010 : vector<1x128xf32>
    %cst_188 = arith.constant 1.000000e+00 : f32
    %1012 = vector.broadcast %cst_188 : f32 to vector<1x128xf32>
    %1013 = arith.subf %1012, %1006 : vector<1x128xf32>
    %1014 = arith.mulf %1013, %1011 : vector<1x128xf32>
    %1015 = arith.mulf %1006, %990 : vector<1x128xf32>
    %1016 = arith.addf %1014, %1015 : vector<1x128xf32>
    %1017 = vector.extract_strided_slice %982 {offsets = [1, 384], sizes = [1, 384], strides = [1, 1]} : vector<2x768xf32> to vector<1x384xf32>
    %1018 = arith.addf %1017, %2 : vector<1x384xf32>
    %1019 = vector.extract_strided_slice %981 {offsets = [1, 0], sizes = [1, 128], strides = [1, 1]} : vector<2x128xf32> to vector<1x128xf32>
    %1020 = vector.extract_strided_slice %987 {offsets = [0, 0], sizes = [1, 128], strides = [1, 1]} : vector<1x384xf32> to vector<1x128xf32>
    %1021 = vector.extract_strided_slice %1018 {offsets = [0, 0], sizes = [1, 128], strides = [1, 1]} : vector<1x384xf32> to vector<1x128xf32>
    %1022 = arith.addf %1020, %1021 : vector<1x128xf32>
    %1023 = arith.negf %1022 : vector<1x128xf32>
    %1024 = math.exp %1023 : vector<1x128xf32>
    %cst_189 = arith.constant 1.000000e+00 : f32
    %1025 = vector.broadcast %cst_189 : f32 to vector<1x128xf32>
    %1026 = arith.addf %1025, %1024 : vector<1x128xf32>
    %1027 = arith.divf %1025, %1026 : vector<1x128xf32>
    %1028 = vector.extract_strided_slice %987 {offsets = [0, 128], sizes = [1, 128], strides = [1, 1]} : vector<1x384xf32> to vector<1x128xf32>
    %1029 = vector.extract_strided_slice %1018 {offsets = [0, 128], sizes = [1, 128], strides = [1, 1]} : vector<1x384xf32> to vector<1x128xf32>
    %1030 = arith.addf %1028, %1029 : vector<1x128xf32>
    %1031 = arith.negf %1030 : vector<1x128xf32>
    %1032 = math.exp %1031 : vector<1x128xf32>
    %cst_190 = arith.constant 1.000000e+00 : f32
    %1033 = vector.broadcast %cst_190 : f32 to vector<1x128xf32>
    %1034 = arith.addf %1033, %1032 : vector<1x128xf32>
    %1035 = arith.divf %1033, %1034 : vector<1x128xf32>
    %1036 = vector.extract_strided_slice %987 {offsets = [0, 256], sizes = [1, 128], strides = [1, 1]} : vector<1x384xf32> to vector<1x128xf32>
    %1037 = vector.extract_strided_slice %1018 {offsets = [0, 256], sizes = [1, 128], strides = [1, 1]} : vector<1x384xf32> to vector<1x128xf32>
    %1038 = arith.mulf %1027, %1037 : vector<1x128xf32>
    %1039 = arith.addf %1036, %1038 : vector<1x128xf32>
    %1040 = math.tanh %1039 : vector<1x128xf32>
    %cst_191 = arith.constant 1.000000e+00 : f32
    %1041 = vector.broadcast %cst_191 : f32 to vector<1x128xf32>
    %1042 = arith.subf %1041, %1035 : vector<1x128xf32>
    %1043 = arith.mulf %1042, %1040 : vector<1x128xf32>
    %1044 = arith.mulf %1035, %1019 : vector<1x128xf32>
    %1045 = arith.addf %1043, %1044 : vector<1x128xf32>
    %1046 = arith.index_cast %c14_i32 : i32 to index
    %c0_192 = arith.constant 0 : index
    %1047 = vector.load %arg10[%1046, %c0_192] : memref<16x256xf32, #tpu.memory_space<vmem>>, vector<1x128xf32>
    tpu.vector_store %arg10[%1046, %c0_192], %1016 {strides = array<i32>} : memref<16x256xf32, #tpu.memory_space<vmem>>, vector<1x128xf32>,
    %1048 = arith.index_cast %983 : i32 to index
    %c128_193 = arith.constant 128 : index
    %1049 = vector.load %arg10[%1048, %c128_193] : memref<16x256xf32, #tpu.memory_space<vmem>>, vector<1x128xf32>
    tpu.vector_store %arg10[%1048, %c128_193], %1045 {strides = array<i32>} : memref<16x256xf32, #tpu.memory_space<vmem>>, vector<1x128xf32>,
    %1050 = tpu.concatenate %1016, %1045 in 0 : vector<1x128xf32>, vector<1x128xf32> -> vector<2x128xf32>
    %c15_i32_194 = arith.constant 15 : i32
    %cst_195 = arith.constant dense<0.000000e+00> : vector<2x768xf32>
    %1051 = tpu.matmul %1050, %14, %cst_195 {dimension_numbers = #tpu.dot_dimension_numbers<[1], [0], [0], [1], [0, 0, 1, 1], [], []>} : vector<2x128xf32>, vector<128x768xf32>, vector<2x768xf32> -> vector<2x768xf32>
    %c15_i32_196 = arith.constant 15 : i32
    %1052 = arith.subi %c15_i32_196, %c15_i32_194 : i32
    %1053 = arith.index_cast %c15_i32_194 : i32 to index
    %c0_197 = arith.constant 0 : index
    %1054 = vector.load %arg9[%1053, %c0_197] : memref<16x768xf32, #tpu.memory_space<vmem>>, vector<1x384xf32>
    %1055 = arith.index_cast %1052 : i32 to index
    %c384_198 = arith.constant 384 : index
    %1056 = vector.load %arg9[%1055, %c384_198] : memref<16x768xf32, #tpu.memory_space<vmem>>, vector<1x384xf32>
    %1057 = vector.extract_strided_slice %1051 {offsets = [0, 0], sizes = [1, 384], strides = [1, 1]} : vector<2x768xf32> to vector<1x384xf32>
    %1058 = arith.addf %1057, %1 : vector<1x384xf32>
    %1059 = vector.extract_strided_slice %1050 {offsets = [0, 0], sizes = [1, 128], strides = [1, 1]} : vector<2x128xf32> to vector<1x128xf32>
    %1060 = vector.extract_strided_slice %1054 {offsets = [0, 0], sizes = [1, 128], strides = [1, 1]} : vector<1x384xf32> to vector<1x128xf32>
    %1061 = vector.extract_strided_slice %1058 {offsets = [0, 0], sizes = [1, 128], strides = [1, 1]} : vector<1x384xf32> to vector<1x128xf32>
    %1062 = arith.addf %1060, %1061 : vector<1x128xf32>
    %1063 = arith.negf %1062 : vector<1x128xf32>
    %1064 = math.exp %1063 : vector<1x128xf32>
    %cst_199 = arith.constant 1.000000e+00 : f32
    %1065 = vector.broadcast %cst_199 : f32 to vector<1x128xf32>
    %1066 = arith.addf %1065, %1064 : vector<1x128xf32>
    %1067 = arith.divf %1065, %1066 : vector<1x128xf32>
    %1068 = vector.extract_strided_slice %1054 {offsets = [0, 128], sizes = [1, 128], strides = [1, 1]} : vector<1x384xf32> to vector<1x128xf32>
    %1069 = vector.extract_strided_slice %1058 {offsets = [0, 128], sizes = [1, 128], strides = [1, 1]} : vector<1x384xf32> to vector<1x128xf32>
    %1070 = arith.addf %1068, %1069 : vector<1x128xf32>
    %1071 = arith.negf %1070 : vector<1x128xf32>
    %1072 = math.exp %1071 : vector<1x128xf32>
    %cst_200 = arith.constant 1.000000e+00 : f32
    %1073 = vector.broadcast %cst_200 : f32 to vector<1x128xf32>
    %1074 = arith.addf %1073, %1072 : vector<1x128xf32>
    %1075 = arith.divf %1073, %1074 : vector<1x128xf32>
    %1076 = vector.extract_strided_slice %1054 {offsets = [0, 256], sizes = [1, 128], strides = [1, 1]} : vector<1x384xf32> to vector<1x128xf32>
    %1077 = vector.extract_strided_slice %1058 {offsets = [0, 256], sizes = [1, 128], strides = [1, 1]} : vector<1x384xf32> to vector<1x128xf32>
    %1078 = arith.mulf %1067, %1077 : vector<1x128xf32>
    %1079 = arith.addf %1076, %1078 : vector<1x128xf32>
    %1080 = math.tanh %1079 : vector<1x128xf32>
    %cst_201 = arith.constant 1.000000e+00 : f32
    %1081 = vector.broadcast %cst_201 : f32 to vector<1x128xf32>
    %1082 = arith.subf %1081, %1075 : vector<1x128xf32>
    %1083 = arith.mulf %1082, %1080 : vector<1x128xf32>
    %1084 = arith.mulf %1075, %1059 : vector<1x128xf32>
    %1085 = arith.addf %1083, %1084 : vector<1x128xf32>
    %1086 = vector.extract_strided_slice %1051 {offsets = [1, 384], sizes = [1, 384], strides = [1, 1]} : vector<2x768xf32> to vector<1x384xf32>
    %1087 = arith.addf %1086, %2 : vector<1x384xf32>
    %1088 = vector.extract_strided_slice %1050 {offsets = [1, 0], sizes = [1, 128], strides = [1, 1]} : vector<2x128xf32> to vector<1x128xf32>
    %1089 = vector.extract_strided_slice %1056 {offsets = [0, 0], sizes = [1, 128], strides = [1, 1]} : vector<1x384xf32> to vector<1x128xf32>
    %1090 = vector.extract_strided_slice %1087 {offsets = [0, 0], sizes = [1, 128], strides = [1, 1]} : vector<1x384xf32> to vector<1x128xf32>
    %1091 = arith.addf %1089, %1090 : vector<1x128xf32>
    %1092 = arith.negf %1091 : vector<1x128xf32>
    %1093 = math.exp %1092 : vector<1x128xf32>
    %cst_202 = arith.constant 1.000000e+00 : f32
    %1094 = vector.broadcast %cst_202 : f32 to vector<1x128xf32>
    %1095 = arith.addf %1094, %1093 : vector<1x128xf32>
    %1096 = arith.divf %1094, %1095 : vector<1x128xf32>
    %1097 = vector.extract_strided_slice %1056 {offsets = [0, 128], sizes = [1, 128], strides = [1, 1]} : vector<1x384xf32> to vector<1x128xf32>
    %1098 = vector.extract_strided_slice %1087 {offsets = [0, 128], sizes = [1, 128], strides = [1, 1]} : vector<1x384xf32> to vector<1x128xf32>
    %1099 = arith.addf %1097, %1098 : vector<1x128xf32>
    %1100 = arith.negf %1099 : vector<1x128xf32>
    %1101 = math.exp %1100 : vector<1x128xf32>
    %cst_203 = arith.constant 1.000000e+00 : f32
    %1102 = vector.broadcast %cst_203 : f32 to vector<1x128xf32>
    %1103 = arith.addf %1102, %1101 : vector<1x128xf32>
    %1104 = arith.divf %1102, %1103 : vector<1x128xf32>
    %1105 = vector.extract_strided_slice %1056 {offsets = [0, 256], sizes = [1, 128], strides = [1, 1]} : vector<1x384xf32> to vector<1x128xf32>
    %1106 = vector.extract_strided_slice %1087 {offsets = [0, 256], sizes = [1, 128], strides = [1, 1]} : vector<1x384xf32> to vector<1x128xf32>
    %1107 = arith.mulf %1096, %1106 : vector<1x128xf32>
    %1108 = arith.addf %1105, %1107 : vector<1x128xf32>
    %1109 = math.tanh %1108 : vector<1x128xf32>
    %cst_204 = arith.constant 1.000000e+00 : f32
    %1110 = vector.broadcast %cst_204 : f32 to vector<1x128xf32>
    %1111 = arith.subf %1110, %1104 : vector<1x128xf32>
    %1112 = arith.mulf %1111, %1109 : vector<1x128xf32>
    %1113 = arith.mulf %1104, %1088 : vector<1x128xf32>
    %1114 = arith.addf %1112, %1113 : vector<1x128xf32>
    %1115 = arith.index_cast %c15_i32_194 : i32 to index
    %c0_205 = arith.constant 0 : index
    %1116 = vector.load %arg10[%1115, %c0_205] : memref<16x256xf32, #tpu.memory_space<vmem>>, vector<1x128xf32>
    tpu.vector_store %arg10[%1115, %c0_205], %1085 {strides = array<i32>} : memref<16x256xf32, #tpu.memory_space<vmem>>, vector<1x128xf32>,
    %1117 = arith.index_cast %1052 : i32 to index
    %c128_206 = arith.constant 128 : index
    %1118 = vector.load %arg10[%1117, %c128_206] : memref<16x256xf32, #tpu.memory_space<vmem>>, vector<1x128xf32>
    tpu.vector_store %arg10[%1117, %c128_206], %1114 {strides = array<i32>} : memref<16x256xf32, #tpu.memory_space<vmem>>, vector<1x128xf32>,
    %1119 = tpu.concatenate %1085, %1114 in 0 : vector<1x128xf32>, vector<1x128xf32> -> vector<2x128xf32>
    %c16_i32 = arith.constant 16 : i32
    %c0_207 = arith.constant 0 : index
    %1120 = memref.load %arg0[%c0_207] : memref<1xi32, #tpu.memory_space<smem>>
    %1121 = arith.index_cast %1120 : i32 to index
    %c0_208 = arith.constant 0 : index
    %1122 = vector.load %arg10[%1121, %c0_208] : memref<16x256xf32, #tpu.memory_space<vmem>>, vector<1x256xf32>
    %c0_209 = arith.constant 0 : index
    %c0_210 = arith.constant 0 : index
    %1123 = vector.load %arg4[%c0_209, %c0_210] : memref<256x384xf32, #tpu.memory_space<vmem>>, vector<256x384xf32>
    %cst_211 = arith.constant dense<0.000000e+00> : vector<1x384xf32>
    %1124 = tpu.matmul %1122, %1123, %cst_211 {dimension_numbers = #tpu.dot_dimension_numbers<[1], [0], [0], [1], [0, 0, 1, 1], [], []>} : vector<1x256xf32>, vector<256x384xf32>, vector<1x384xf32> -> vector<1x384xf32>
    %1125 = arith.addf %1124, %3 : vector<1x384xf32>
    %1126 = vector.extract_strided_slice %1125 {offsets = [0, 0], sizes = [1, 128], strides = [1, 1]} : vector<1x384xf32> to vector<1x128xf32>
    %1127 = vector.extract_strided_slice %4 {offsets = [0, 0], sizes = [1, 128], strides = [1, 1]} : vector<1x384xf32> to vector<1x128xf32>
    %1128 = arith.addf %1126, %1127 : vector<1x128xf32>
    %1129 = arith.negf %1128 : vector<1x128xf32>
    %1130 = math.exp %1129 : vector<1x128xf32>
    %cst_212 = arith.constant 1.000000e+00 : f32
    %1131 = vector.broadcast %cst_212 : f32 to vector<1x128xf32>
    %1132 = arith.addf %1131, %1130 : vector<1x128xf32>
    %1133 = arith.divf %1131, %1132 : vector<1x128xf32>
    %1134 = vector.extract_strided_slice %1125 {offsets = [0, 128], sizes = [1, 128], strides = [1, 1]} : vector<1x384xf32> to vector<1x128xf32>
    %1135 = vector.extract_strided_slice %4 {offsets = [0, 128], sizes = [1, 128], strides = [1, 1]} : vector<1x384xf32> to vector<1x128xf32>
    %1136 = arith.addf %1134, %1135 : vector<1x128xf32>
    %1137 = arith.negf %1136 : vector<1x128xf32>
    %1138 = math.exp %1137 : vector<1x128xf32>
    %cst_213 = arith.constant 1.000000e+00 : f32
    %1139 = vector.broadcast %cst_213 : f32 to vector<1x128xf32>
    %1140 = arith.addf %1139, %1138 : vector<1x128xf32>
    %1141 = arith.divf %1139, %1140 : vector<1x128xf32>
    %1142 = vector.extract_strided_slice %1125 {offsets = [0, 256], sizes = [1, 128], strides = [1, 1]} : vector<1x384xf32> to vector<1x128xf32>
    %1143 = vector.extract_strided_slice %4 {offsets = [0, 256], sizes = [1, 128], strides = [1, 1]} : vector<1x384xf32> to vector<1x128xf32>
    %1144 = arith.mulf %1133, %1143 : vector<1x128xf32>
    %1145 = arith.addf %1142, %1144 : vector<1x128xf32>
    %1146 = math.tanh %1145 : vector<1x128xf32>
    %cst_214 = arith.constant 1.000000e+00 : f32
    %1147 = vector.broadcast %cst_214 : f32 to vector<1x128xf32>
    %1148 = arith.subf %1147, %1141 : vector<1x128xf32>
    %1149 = arith.mulf %1148, %1146 : vector<1x128xf32>
    %c0_215 = arith.constant 0 : index
    %c0_216 = arith.constant 0 : index
    %1150 = vector.load %arg10[%c0_215, %c0_216] : memref<16x256xf32, #tpu.memory_space<vmem>>, vector<16x256xf32>
    %c0_217 = arith.constant 0 : index
    %c0_218 = arith.constant 0 : index
    %1151 = vector.load %arg5[%c0_217, %c0_218] : memref<256x128xf32, #tpu.memory_space<vmem>>, vector<256x128xf32>
    %cst_219 = arith.constant dense<0.000000e+00> : vector<16x128xf32>
    %1152 = tpu.matmul %1150, %1151, %cst_219 {dimension_numbers = #tpu.dot_dimension_numbers<[1], [0], [0], [1], [0, 0, 1, 1], [], []>} : vector<16x256xf32>, vector<256x128xf32>, vector<16x128xf32> -> vector<16x128xf32>
    %1153 = vector.broadcast %5 : vector<1x128xf32> to vector<16x128xf32>
    %1154 = arith.addf %1152, %1153 : vector<16x128xf32>
    %c0_220 = arith.constant 0 : index
    %c0_221 = arith.constant 0 : index
    %1155 = vector.load %arg6[%c0_220, %c0_221] : memref<128x128xf32, #tpu.memory_space<vmem>>, vector<128x128xf32>
    %cst_222 = arith.constant dense<0.000000e+00> : vector<1x128xf32>
    %1156 = tpu.matmul %1149, %1155, %cst_222 {dimension_numbers = #tpu.dot_dimension_numbers<[1], [0], [0], [1], [0, 0, 1, 1], [], []>} : vector<1x128xf32>, vector<128x128xf32>, vector<1x128xf32> -> vector<1x128xf32>
    %1157 = arith.addf %1156, %6 : vector<1x128xf32>
    %1158 = vector.broadcast %1157 : vector<1x128xf32> to vector<16x128xf32>
    %1159 = arith.addf %1154, %1158 : vector<16x128xf32>
    %1160 = math.tanh %1159 : vector<16x128xf32>
    %1161 = vector.broadcast %7 : vector<1x128xf32> to vector<16x128xf32>
    %1162 = arith.mulf %1160, %1161 : vector<16x128xf32>
    %cst_223 = arith.constant dense<0.000000e+00> : vector<16xf32>
    %1163 = vector.multi_reduction <add>, %1162, %cst_223 [1] : vector<16x128xf32> to vector<16xf32>
    %1164 = vector.shape_cast %1163 : vector<16xf32> to vector<16x1xf32>
    %cst_224 = arith.constant dense<0xFF800000> : vector<1xf32>
    %1165 = vector.multi_reduction <maximumf>, %1164, %cst_224 [0] : vector<16x1xf32> to vector<1xf32>
    %1166 = vector.shape_cast %1165 : vector<1xf32> to vector<1x1xf32>
    %1167 = vector.broadcast %1166 : vector<1x1xf32> to vector<16x1xf32>
    %1168 = arith.subf %1164, %1167 : vector<16x1xf32>
    %1169 = math.exp %1168 : vector<16x1xf32>
    %cst_225 = arith.constant dense<0.000000e+00> : vector<1xf32>
    %1170 = vector.multi_reduction <add>, %1169, %cst_225 [0] : vector<16x1xf32> to vector<1xf32>
    %1171 = vector.shape_cast %1170 : vector<1xf32> to vector<1x1xf32>
    %1172 = vector.broadcast %1171 : vector<1x1xf32> to vector<16x1xf32>
    %1173 = arith.divf %1169, %1172 : vector<16x1xf32>
    %c0_226 = arith.constant 0 : index
    %c0_227 = arith.constant 0 : index
    %1174 = vector.load %arg8[%c0_226, %c0_227] : memref<16x1xf32, #tpu.memory_space<vmem>>, vector<16x1xf32>
    tpu.vector_store %arg8[%c0_226, %c0_227], %1173 {strides = array<i32>} : memref<16x1xf32, #tpu.memory_space<vmem>>, vector<16x1xf32>,
    return
  }
}

</mosaic_0001>

<llo_original>
// kernel: tpu_custom_call.1
$region0: #{tpu_custom_call.1}
  #allocation0 [shape = 'u32[]', space=smem, size = 0x4, offset = 0x4, fixed_abs, tag = 'smem constant byte address 0x4 - core index']
  #allocation1 [shape = 'u32[72,128]{1,0:T(1,128)}', space=vmem, size = 0x9000, scoped, tag = 'internal scratch']
  #allocation2 [shape = 'f32[16,768]{1,0:T(8,128)}', space=vmem, size = 0xc000, scoped, tag = 'scratch operand']
  #allocation3 [shape = 'f32[16,256]{1,0:T(8,128)}', space=vmem, size = 0x4000, scoped, tag = 'scratch operand']
  #allocation4 [shape = 's32[1]{0:T(128)S(6)}', space=smem, size = 0x200, scoped, tag = 'scoped memory for tpu_custom_call.1']
  %s0 = inlined_call_operand.<no memory space> [shape: s32[1], index: 0, kind: input, shape index: {}]
  %s1 = inlined_call_operand.hbm [shape: f32[16,64], index: 1, kind: input, shape index: {}]
  %s2 = inlined_call_operand.hbm [shape: f32[64,768], index: 2, kind: input, shape index: {}]
  %s3 = inlined_call_operand.hbm [shape: f32[128,768], index: 3, kind: input, shape index: {}]
  %s4 = inlined_call_operand.hbm [shape: f32[256,384], index: 4, kind: input, shape index: {}]
  %s5 = inlined_call_operand.hbm [shape: f32[256,128], index: 5, kind: input, shape index: {}]
  %s6 = inlined_call_operand.hbm [shape: f32[128,128], index: 6, kind: input, shape index: {}]
  %s7 = inlined_call_operand.hbm [shape: f32[1,2688], index: 7, kind: input, shape index: {}]
  %s8 = inlined_call_operand.vmem [shape: f32[16,1], index: 8, kind: output, shape index: {}]
  %s9 = sld [smem:[#allocation0]]
  $region70: #{tpu_custom_call.1} parent=0
    _
  %s11 = ssub.s32 1, %s9
  %s12 = scalar_select 0, %s11, %s9
  %13 = sst [smem:[#allocation4]] %s0
  $region1: #{tpu_custom_call.1} parent=0
    #allocation5 [shape = 'u8[8192]{0}', space=vmem, size = 0x2000, scoped, tag = 'input window, operand 1, single buffered']
    #allocation6 [shape = 's32[1]{0}', space=sflag, size = 0x4, scoped, tag = 'scoped memory for tpu_custom_call.1']
    #allocation7 [shape = 'u8[196608]{0}', space=vmem, size = 0x30000, scoped, tag = 'input window, operand 2, single buffered']
    #allocation8 [shape = 's32[1]{0}', space=sflag, size = 0x4, scoped, tag = 'scoped memory for tpu_custom_call.1']
    #allocation9 [shape = 'u8[393216]{0}', space=vmem, size = 0x60000, scoped, tag = 'input window, operand 3, single buffered']
    #allocation10 [shape = 'u8[393216]{0}', space=vmem, size = 0x60000, scoped, tag = 'input window, operand 4, single buffered']
    #allocation11 [shape = 's32[1]{0}', space=sflag, size = 0x4, scoped, tag = 'scoped memory for tpu_custom_call.1']
    #allocation12 [shape = 'u8[131072]{0}', space=vmem, size = 0x20000, scoped, tag = 'input window, operand 5, single buffered']
    #allocation13 [shape = 'u8[65536]{0}', space=vmem, size = 0x10000, scoped, tag = 'input window, operand 6, single buffered']
    #allocation14 [shape = 's32[1]{0}', space=sflag, size = 0x4, scoped, tag = 'scoped memory for tpu_custom_call.1']
    #allocation15 [shape = 'u8[10752]{0}', space=vmem, size = 0x2c00, scoped, tag = 'input window, operand 7, single buffered']
    %14 = vsyncpa [#allocation6], 0
    %15 = vsyncpa [#allocation8], 0
    %16 = vsyncpa [#allocation11], 0
    %17 = vsyncpa [#allocation14], 0
    // Predicated region
    $region2: #{tpu_custom_call.1} parent=1 // pred_check
      _
    $region3: #{tpu_custom_call.1} parent=1 // pred_check_branch
      %19 = sbr.rel (0) target = $region5
    $region4: #{tpu_custom_call.1} parent=1 // pred_region
      _
    $region5: #{tpu_custom_call.1} parent=1 // pred_fallthru
      _
    // Predicated region
    $region6: #{tpu_custom_call.1} parent=1 // pred_check
      _
    $region7: #{tpu_custom_call.1} parent=1 // pred_check_branch
      %21 = sbr.rel (0) target = $region9
    $region8: #{tpu_custom_call.1} parent=1 // pred_region
      %23 = vsyncadd [#allocation6], 0
      %s24 = sshll.u32 %s1, 4
      %s25 = int_to_ptr.hbm [resolvable:$true] %s24
      %s26 = sshll.u32 [#allocation5], 4
      %s27 = int_to_ptr.vmem [resolvable:$true] %s26
      %32 = dma.hbm_to_vmem [thread:$0]  %s25, 256, %s27, [#allocation6], 128, 128, 8
    $region9: #{tpu_custom_call.1} parent=1 // pred_fallthru
      _
    // Predicated region
    $region10: #{tpu_custom_call.1} parent=1 // pred_check
      _
    $region11: #{tpu_custom_call.1} parent=1 // pred_check_branch
      %34 = sbr.rel (0) target = $region13
    $region12: #{tpu_custom_call.1} parent=1 // pred_region
      %36 = vsyncadd [#allocation8], 0
      %s37 = sshll.u32 %s2, 4
      %s38 = int_to_ptr.hbm [resolvable:$true] %s37
      %s39 = sshll.u32 [#allocation7], 4
      %s40 = int_to_ptr.vmem [resolvable:$true] %s39
      %45 = dma.hbm_to_vmem [thread:$0]  %s38, 6144, %s40, [#allocation8], 768, 768, 48
    $region13: #{tpu_custom_call.1} parent=1 // pred_fallthru
      _
    // Predicated region
    $region14: #{tpu_custom_call.1} parent=1 // pred_check
      _
    $region15: #{tpu_custom_call.1} parent=1 // pred_check_branch
      %47 = sbr.rel (0) target = $region17
    $region16: #{tpu_custom_call.1} parent=1 // pred_region
      %49 = vsyncadd [#allocation8], 0
      %s50 = sshll.u32 %s3, 4
      %s51 = int_to_ptr.hbm [resolvable:$true] %s50
      %s52 = sshll.u32 [#allocation9], 4
      %s53 = int_to_ptr.vmem [resolvable:$true] %s52
      %58 = dma.hbm_to_vmem [thread:$0]  %s51, 12288, %s53, [#allocation8], 768, 768, 48
    $region17: #{tpu_custom_call.1} parent=1 // pred_fallthru
      _
    // Predicated region
    $region18: #{tpu_custom_call.1} parent=1 // pred_check
      _
    $region19: #{tpu_custom_call.1} parent=1 // pred_check_branch
      %60 = sbr.rel (0) target = $region21
    $region20: #{tpu_custom_call.1} parent=1 // pred_region
      %62 = vsyncadd [#allocation11], 0
      %s63 = sshll.u32 %s4, 4
      %s64 = int_to_ptr.hbm [resolvable:$true] %s63
      %s65 = sshll.u32 [#allocation10], 4
      %s66 = int_to_ptr.vmem [resolvable:$true] %s65
      %71 = dma.hbm_to_vmem [thread:$0]  %s64, 12288, %s66, [#allocation11], 384, 384, 24
    $region21: #{tpu_custom_call.1} parent=1 // pred_fallthru
      _
    // Predicated region
    $region22: #{tpu_custom_call.1} parent=1 // pred_check
      _
    $region23: #{tpu_custom_call.1} parent=1 // pred_check_branch
      %73 = sbr.rel (0) target = $region25
    $region24: #{tpu_custom_call.1} parent=1 // pred_region
      %75 = vsyncadd [#allocation11], 0
      %s76 = sshll.u32 %s5, 4
      %s77 = int_to_ptr.hbm [resolvable:$true] %s76
      %s78 = sshll.u32 [#allocation12], 4
      %s79 = int_to_ptr.vmem [resolvable:$true] %s78
      %84 = dma.hbm_to_vmem [thread:$0]  %s77, 4096, %s79, [#allocation11], 128, 128, 8
    $region25: #{tpu_custom_call.1} parent=1 // pred_fallthru
      _
    // Predicated region
    $region26: #{tpu_custom_call.1} parent=1 // pred_check
      _
    $region27: #{tpu_custom_call.1} parent=1 // pred_check_branch
      %86 = sbr.rel (0) target = $region29
    $region28: #{tpu_custom_call.1} parent=1 // pred_region
      %88 = vsyncadd [#allocation14], 0
      %s89 = sshll.u32 %s6, 4
      %s90 = int_to_ptr.hbm [resolvable:$true] %s89
      %s91 = sshll.u32 [#allocation13], 4
      %s92 = int_to_ptr.vmem [resolvable:$true] %s91
      %97 = dma.hbm_to_vmem [thread:$0]  %s90, 2048, %s92, [#allocation14], 128, 128, 8
    $region29: #{tpu_custom_call.1} parent=1 // pred_fallthru
      _
    // Predicated region
    $region30: #{tpu_custom_call.1} parent=1 // pred_check
      _
    $region31: #{tpu_custom_call.1} parent=1 // pred_check_branch
      %99 = sbr.rel (0) target = $region33
    $region32: #{tpu_custom_call.1} parent=1 // pred_region
      %101 = vsyncadd [#allocation14], 0
      %s103 = sshll.u32 %s7, 4
      %s104 = int_to_ptr.hbm [resolvable:$true] %s103
      %s105 = sshll.u32 [#allocation15], 4
      %s106 = int_to_ptr.vmem [resolvable:$true] %s105
      %108 = dma.hbm_to_vmem [thread:$0]  %s104, 336, %s106, [#allocation14]
    $region33: #{tpu_custom_call.1} parent=1 // pred_fallthru
      _
    // Predicated region
    $region34: #{tpu_custom_call.1} parent=1 // pred_check
      _
    $region35: #{tpu_custom_call.1} parent=1 // pred_check_branch
      %110 = sbr.rel (0) target = $region37
    $region36: #{tpu_custom_call.1} parent=1 // pred_region
      %112 = dma.done [#allocation6], 256
    $region37: #{tpu_custom_call.1} parent=1 // pred_fallthru
      _
    // Predicated region
    $region38: #{tpu_custom_call.1} parent=1 // pred_check
      _
    $region39: #{tpu_custom_call.1} parent=1 // pred_check_branch
      %114 = sbr.rel (0) target = $region41
    $region40: #{tpu_custom_call.1} parent=1 // pred_region
      %116 = dma.done [#allocation8], 6144
    $region41: #{tpu_custom_call.1} parent=1 // pred_fallthru
      _
    // Predicated region
    $region42: #{tpu_custom_call.1} parent=1 // pred_check
      _
    $region43: #{tpu_custom_call.1} parent=1 // pred_check_branch
      %118 = sbr.rel (0) target = $region45
    $region44: #{tpu_custom_call.1} parent=1 // pred_region
      %120 = dma.done [#allocation8], 12288
    $region45: #{tpu_custom_call.1} parent=1 // pred_fallthru
      _
    // Predicated region
    $region46: #{tpu_custom_call.1} parent=1 // pred_check
      _
    $region47: #{tpu_custom_call.1} parent=1 // pred_check_branch
      %122 = sbr.rel (0) target = $region49
    $region48: #{tpu_custom_call.1} parent=1 // pred_region
      %124 = dma.done [#allocation11], 12288
    $region49: #{tpu_custom_call.1} parent=1 // pred_fallthru
      _
    // Predicated region
    $region50: #{tpu_custom_call.1} parent=1 // pred_check
      _
    $region51: #{tpu_custom_call.1} parent=1 // pred_check_branch
      %126 = sbr.rel (0) target = $region53
    $region52: #{tpu_custom_call.1} parent=1 // pred_region
      %128 = dma.done [#allocation11], 4096
    $region53: #{tpu_custom_call.1} parent=1 // pred_fallthru
      _
    // Predicated region
    $region54: #{tpu_custom_call.1} parent=1 // pred_check
      _
    $region55: #{tpu_custom_call.1} parent=1 // pred_check_branch
      %130 = sbr.rel (0) target = $region57
    $region56: #{tpu_custom_call.1} parent=1 // pred_region
      %132 = dma.done [#allocation14], 2048
    $region57: #{tpu_custom_call.1} parent=1 // pred_fallthru
      _
    // Predicated region
    $region58: #{tpu_custom_call.1} parent=1 // pred_check
      _
    $region59: #{tpu_custom_call.1} parent=1 // pred_check_branch
      %134 = sbr.rel (0) target = $region61
    $region60: #{tpu_custom_call.1} parent=1 // pred_region
      %136 = dma.done [#allocation14], 336
    $region61: #{tpu_custom_call.1} parent=1 // pred_fallthru
      _
    %v137 = vld [vmem:[#allocation15] sm:$0x3f]
    %v138 = vld [vmem:[#allocation15 + $0x6] sm:$0x7]
    %v139 = vld [vmem:[#allocation15 + $0x9] sm:$0x7]
    %v140 = vld [vmem:[#allocation15 + $0xc] sm:$0x7]
    %v141 = vld [vmem:[#allocation15 + $0xf] sm:$0x7]
    %v142 = vld [vmem:[#allocation15 + $0x12] sm:$0x1]
    %v143 = vld [vmem:[#allocation15 + $0x13] sm:$0x1]
    %v144 = vld [vmem:[#allocation15 + $0x14] sm:$0x1]
    %v145 = vld [vmem:[#allocation5] sm:$0xff]
    %v146 = vld [vmem:[#allocation5 + $0x8] sm:$0xff]
    %v147 = vld [vmem:[#allocation7] sm:$0xff]
    %v148 = vld [vmem:[#allocation7 + $0x8] sm:$0xff]
    %v149 = vld [vmem:[#allocation7 + $0x10] sm:$0xff]
    %v150 = vld [vmem:[#allocation7 + $0x18] sm:$0xff]
    %v151 = vld [vmem:[#allocation7 + $0x20] sm:$0xff]
    %v152 = vld [vmem:[#allocation7 + $0x28] sm:$0xff]
    %v153 = vld [vmem:[#allocation7 + $0x30] sm:$0xff]
    %v154 = vld [vmem:[#allocation7 + $0x38] sm:$0xff]
    %v155 = vld [vmem:[#allocation7 + $0x40] sm:$0xff]
    %v156 = vld [vmem:[#allocation7 + $0x48] sm:$0xff]
    %v157 = vld [vmem:[#allocation7 + $0x50] sm:$0xff]
    %v158 = vld [vmem:[#allocation7 + $0x58] sm:$0xff]
    %v159 = vld [vmem:[#allocation7 + $0x60] sm:$0xff]
    %v160 = vld [vmem:[#allocation7 + $0x68] sm:$0xff]
    %v161 = vld [vmem:[#allocation7 + $0x70] sm:$0xff]
    %v162 = vld [vmem:[#allocation7 + $0x78] sm:$0xff]
    %v163 = vld [vmem:[#allocation7 + $0x80] sm:$0xff]
    %v164 = vld [vmem:[#allocation7 + $0x88] sm:$0xff]
    %v165 = vld [vmem:[#allocation7 + $0x90] sm:$0xff]
    %v166 = vld [vmem:[#allocation7 + $0x98] sm:$0xff]
    %v167 = vld [vmem:[#allocation7 + $0xa0] sm:$0xff]
    %v168 = vld [vmem:[#allocation7 + $0xa8] sm:$0xff]
    %v169 = vld [vmem:[#allocation7 + $0xb0] sm:$0xff]
    %v170 = vld [vmem:[#allocation7 + $0xb8] sm:$0xff]
    %v171 = vld [vmem:[#allocation7 + $0xc0] sm:$0xff]
    %v172 = vld [vmem:[#allocation7 + $0xc8] sm:$0xff]
    %v173 = vld [vmem:[#allocation7 + $0xd0] sm:$0xff]
    %v174 = vld [vmem:[#allocation7 + $0xd8] sm:$0xff]
    %v175 = vld [vmem:[#allocation7 + $0xe0] sm:$0xff]
    %v176 = vld [vmem:[#allocation7 + $0xe8] sm:$0xff]
    %v177 = vld [vmem:[#allocation7 + $0xf0] sm:$0xff]
    %v178 = vld [vmem:[#allocation7 + $0xf8] sm:$0xff]
    %v179 = vld [vmem:[#allocation7 + $0x100] sm:$0xff]
    %v180 = vld [vmem:[#allocation7 + $0x108] sm:$0xff]
    %v181 = vld [vmem:[#allocation7 + $0x110] sm:$0xff]
    %v182 = vld [vmem:[#allocation7 + $0x118] sm:$0xff]
    %v183 = vld [vmem:[#allocation7 + $0x120] sm:$0xff]
    %v184 = vld [vmem:[#allocation7 + $0x128] sm:$0xff]
    %v185 = vld [vmem:[#allocation7 + $0x130] sm:$0xff]
    %v186 = vld [vmem:[#allocation7 + $0x138] sm:$0xff]
    %v187 = vld [vmem:[#allocation7 + $0x140] sm:$0xff]
    %v188 = vld [vmem:[#allocation7 + $0x148] sm:$0xff]
    %v189 = vld [vmem:[#allocation7 + $0x150] sm:$0xff]
    %v190 = vld [vmem:[#allocation7 + $0x158] sm:$0xff]
    %v191 = vld [vmem:[#allocation7 + $0x160] sm:$0xff]
    %v192 = vld [vmem:[#allocation7 + $0x168] sm:$0xff]
    %v193 = vld [vmem:[#allocation7 + $0x170] sm:$0xff]
    %v194 = vld [vmem:[#allocation7 + $0x178] sm:$0xff]
    %v196 = vperm.slane %v137, 0
    %v197 = vperm.slane %v137, 1
    %v198 = vperm.slane %v137, 2
    %v199 = vperm.slane %v137, 3
    %v200 = vperm.slane %v137, 4
    %v201 = vperm.slane %v137, 5
    %vm208 = vcmask 523264
    %v210 = vsel %vm208, %v145, 0
    %v213 = vsel %vm208, %v146, 0
    %215 = vmatpush.msra.mxu0 0.0
    %216 = vmatpush.msra.mxu0 0.0
    %217 = vmatpush.msra.mxu0 0.0
    %218 = vmatpush.msra.mxu0 0.0
    %219 = vmatpush.msra.mxu0 0.0
    %220 = vmatpush.msra.mxu0 0.0
    %221 = vmatpush.msra.mxu0 0.0
    %222 = vmatpush.msra.mxu0 0.0
    %223 = vmatpush.msra.mxu0 %v189
    %224 = vmatpush.msra.mxu0 %v183
    %225 = vmatpush.msra.mxu0 %v177
    %226 = vmatpush.msra.mxu0 %v171
    %227 = vmatpush.msra.mxu0 %v165
    %228 = vmatpush.msra.mxu0 %v159
    %229 = vmatpush.msra.mxu0 %v153
    %230 = vmatpush.msra.mxu0 %v147
    %231 = vmatmul.f32.gmra.mxu0 %v210
    %v232 = vpop.f32.mrf.mxu0
    %v233 = vadd.f32 %v196, %v232
    %234 = vmatmul.f32.gmra.mxu0 %v213
    %v235 = vpop.f32.mrf.mxu0
    %v236 = vadd.f32 %v196, %v235
    %237 = vdwg.mxu0
    %238 = vmatpush.msra.mxu0 0.0
    %239 = vmatpush.msra.mxu0 0.0
    %240 = vmatpush.msra.mxu0 0.0
    %241 = vmatpush.msra.mxu0 0.0
    %242 = vmatpush.msra.mxu0 0.0
    %243 = vmatpush.msra.mxu0 0.0
    %244 = vmatpush.msra.mxu0 0.0
    %245 = vmatpush.msra.mxu0 0.0
    %246 = vmatpush.msra.mxu0 %v190
    %247 = vmatpush.msra.mxu0 %v184
    %248 = vmatpush.msra.mxu0 %v178
    %249 = vmatpush.msra.mxu0 %v172
    %250 = vmatpush.msra.mxu0 %v166
    %251 = vmatpush.msra.mxu0 %v160
    %252 = vmatpush.msra.mxu0 %v154
    %253 = vmatpush.msra.mxu0 %v148
    %254 = vmatmul.f32.gmra.mxu0 %v210
    %v255 = vpop.f32.mrf.mxu0
    %v256 = vadd.f32 %v197, %v255
    %257 = vmatmul.f32.gmra.mxu0 %v213
    %v258 = vpop.f32.mrf.mxu0
    %v259 = vadd.f32 %v197, %v258
    %260 = vdwg.mxu0
    %261 = vmatpush.msra.mxu0 0.0
    %262 = vmatpush.msra.mxu0 0.0
    %263 = vmatpush.msra.mxu0 0.0
    %264 = vmatpush.msra.mxu0 0.0
    %265 = vmatpush.msra.mxu0 0.0
    %266 = vmatpush.msra.mxu0 0.0
    %267 = vmatpush.msra.mxu0 0.0
    %268 = vmatpush.msra.mxu0 0.0
    %269 = vmatpush.msra.mxu0 %v191
    %270 = vmatpush.msra.mxu0 %v185
    %271 = vmatpush.msra.mxu0 %v179
    %272 = vmatpush.msra.mxu0 %v173
    %273 = vmatpush.msra.mxu0 %v167
    %274 = vmatpush.msra.mxu0 %v161
    %275 = vmatpush.msra.mxu0 %v155
    %276 = vmatpush.msra.mxu0 %v149
    %277 = vmatmul.f32.gmra.mxu0 %v210
    %v278 = vpop.f32.mrf.mxu0
    %v279 = vadd.f32 %v198, %v278
    %280 = vmatmul.f32.gmra.mxu0 %v213
    %v281 = vpop.f32.mrf.mxu0
    %v282 = vadd.f32 %v198, %v281
    %283 = vdwg.mxu0
    %284 = vmatpush.msra.mxu0 0.0
    %285 = vmatpush.msra.mxu0 0.0
    %286 = vmatpush.msra.mxu0 0.0
    %287 = vmatpush.msra.mxu0 0.0
    %288 = vmatpush.msra.mxu0 0.0
    %289 = vmatpush.msra.mxu0 0.0
    %290 = vmatpush.msra.mxu0 0.0
    %291 = vmatpush.msra.mxu0 0.0
    %292 = vmatpush.msra.mxu0 %v192
    %293 = vmatpush.msra.mxu0 %v186
    %294 = vmatpush.msra.mxu0 %v180
    %295 = vmatpush.msra.mxu0 %v174
    %296 = vmatpush.msra.mxu0 %v168
    %297 = vmatpush.msra.mxu0 %v162
    %298 = vmatpush.msra.mxu0 %v156
    %299 = vmatpush.msra.mxu0 %v150
    %300 = vmatmul.f32.gmra.mxu0 %v210
    %v301 = vpop.f32.mrf.mxu0
    %v302 = vadd.f32 %v199, %v301
    %303 = vmatmul.f32.gmra.mxu0 %v213
    %v304 = vpop.f32.mrf.mxu0
    %v305 = vadd.f32 %v199, %v304
    %306 = vdwg.mxu0
    %307 = vmatpush.msra.mxu0 0.0
    %308 = vmatpush.msra.mxu0 0.0
    %309 = vmatpush.msra.mxu0 0.0
    %310 = vmatpush.msra.mxu0 0.0
    %311 = vmatpush.msra.mxu0 0.0
    %312 = vmatpush.msra.mxu0 0.0
    %313 = vmatpush.msra.mxu0 0.0
    %314 = vmatpush.msra.mxu0 0.0
    %315 = vmatpush.msra.mxu0 %v193
    %316 = vmatpush.msra.mxu0 %v187
    %317 = vmatpush.msra.mxu0 %v181
    %318 = vmatpush.msra.mxu0 %v175
    %319 = vmatpush.msra.mxu0 %v169
    %320 = vmatpush.msra.mxu0 %v163
    %321 = vmatpush.msra.mxu0 %v157
    %322 = vmatpush.msra.mxu0 %v151
    %323 = vmatmul.f32.gmra.mxu0 %v210
    %v324 = vpop.f32.mrf.mxu0
    %v325 = vadd.f32 %v200, %v324
    %326 = vmatmul.f32.gmra.mxu0 %v213
    %v327 = vpop.f32.mrf.mxu0
    %v328 = vadd.f32 %v200, %v327
    %329 = vdwg.mxu0
    %330 = vmatpush.msra.mxu0 0.0
    %331 = vmatpush.msra.mxu0 0.0
    %332 = vmatpush.msra.mxu0 0.0
    %333 = vmatpush.msra.mxu0 0.0
    %334 = vmatpush.msra.mxu0 0.0
    %335 = vmatpush.msra.mxu0 0.0
    %336 = vmatpush.msra.mxu0 0.0
    %337 = vmatpush.msra.mxu0 0.0
    %338 = vmatpush.msra.mxu0 %v194
    %339 = vmatpush.msra.mxu0 %v188
    %340 = vmatpush.msra.mxu0 %v182
    %341 = vmatpush.msra.mxu0 %v176
    %342 = vmatpush.msra.mxu0 %v170
    %343 = vmatpush.msra.mxu0 %v164
    %344 = vmatpush.msra.mxu0 %v158
    %345 = vmatpush.msra.mxu0 %v152
    %346 = vmatmul.f32.gmra.mxu0 %v210
    %v347 = vpop.f32.mrf.mxu0
    %v348 = vadd.f32 %v201, %v347
    %349 = vmatmul.f32.gmra.mxu0 %v213
    %v350 = vpop.f32.mrf.mxu0
    %v351 = vadd.f32 %v201, %v350
    %352 = vdwg.mxu0
    %353 = vst [vmem:[#allocation2] sm:$0xff] %v233
    %354 = vst [vmem:[#allocation2 + $0x8] sm:$0xff] %v256
    %355 = vst [vmem:[#allocation2 + $0x10] sm:$0xff] %v279
    %356 = vst [vmem:[#allocation2 + $0x18] sm:$0xff] %v302
    %357 = vst [vmem:[#allocation2 + $0x20] sm:$0xff] %v325
    %358 = vst [vmem:[#allocation2 + $0x28] sm:$0xff] %v348
    %359 = vst [vmem:[#allocation2 + $0x30] sm:$0xff] %v236
    %360 = vst [vmem:[#allocation2 + $0x38] sm:$0xff] %v259
    %361 = vst [vmem:[#allocation2 + $0x40] sm:$0xff] %v282
    %362 = vst [vmem:[#allocation2 + $0x48] sm:$0xff] %v305
    %363 = vst [vmem:[#allocation2 + $0x50] sm:$0xff] %v328
    %364 = vst [vmem:[#allocation2 + $0x58] sm:$0xff] %v351
    %v365 = vld [vmem:[#allocation9] sm:$0xff]
    %v366 = vld [vmem:[#allocation9 + $0x8] sm:$0xff]
    %v367 = vld [vmem:[#allocation9 + $0x10] sm:$0xff]
    %v368 = vld [vmem:[#allocation9 + $0x18] sm:$0xff]
    %v369 = vld [vmem:[#allocation9 + $0x20] sm:$0xff]
    %v370 = vld [vmem:[#allocation9 + $0x28] sm:$0xff]
    %v371 = vld [vmem:[#allocation9 + $0x30] sm:$0xff]
    %v372 = vld [vmem:[#allocation9 + $0x38] sm:$0xff]
    %v373 = vld [vmem:[#allocation9 + $0x40] sm:$0xff]
    %v374 = vld [vmem:[#allocation9 + $0x48] sm:$0xff]
    %v375 = vld [vmem:[#allocation9 + $0x50] sm:$0xff]
    %v376 = vld [vmem:[#allocation9 + $0x58] sm:$0xff]
    %v377 = vld [vmem:[#allocation9 + $0x60] sm:$0xff]
    %v378 = vld [vmem:[#allocation9 + $0x68] sm:$0xff]
    %v379 = vld [vmem:[#allocation9 + $0x70] sm:$0xff]
    %v380 = vld [vmem:[#allocation9 + $0x78] sm:$0xff]
    %v381 = vld [vmem:[#allocation9 + $0x80] sm:$0xff]
    %v382 = vld [vmem:[#allocation9 + $0x88] sm:$0xff]
    %v383 = vld [vmem:[#allocation9 + $0x90] sm:$0xff]
    %v384 = vld [vmem:[#allocation9 + $0x98] sm:$0xff]
    %v385 = vld [vmem:[#allocation9 + $0xa0] sm:$0xff]
    %v386 = vld [vmem:[#allocation9 + $0xa8] sm:$0xff]
    %v387 = vld [vmem:[#allocation9 + $0xb0] sm:$0xff]
    %v388 = vld [vmem:[#allocation9 + $0xb8] sm:$0xff]
    %v389 = vld [vmem:[#allocation9 + $0xc0] sm:$0xff]
    %v390 = vld [vmem:[#allocation9 + $0xc8] sm:$0xff]
    %v391 = vld [vmem:[#allocation9 + $0xd0] sm:$0xff]
    %v392 = vld [vmem:[#allocation9 + $0xd8] sm:$0xff]
    %v393 = vld [vmem:[#allocation9 + $0xe0] sm:$0xff]
    %v394 = vld [vmem:[#allocation9 + $0xe8] sm:$0xff]
    %v395 = vld [vmem:[#allocation9 + $0xf0] sm:$0xff]
    %v396 = vld [vmem:[#allocation9 + $0xf8] sm:$0xff]
    %v397 = vld [vmem:[#allocation9 + $0x100] sm:$0xff]
    %v398 = vld [vmem:[#allocation9 + $0x108] sm:$0xff]
    %v399 = vld [vmem:[#allocation9 + $0x110] sm:$0xff]
    %v400 = vld [vmem:[#allocation9 + $0x118] sm:$0xff]
    %v401 = vld [vmem:[#allocation9 + $0x120] sm:$0xff]
    %v402 = vld [vmem:[#allocation9 + $0x128] sm:$0xff]
    %v403 = vld [vmem:[#allocation9 + $0x130] sm:$0xff]
    %v404 = vld [vmem:[#allocation9 + $0x138] sm:$0xff]
    %v405 = vld [vmem:[#allocation9 + $0x140] sm:$0xff]
    %v406 = vld [vmem:[#allocation9 + $0x148] sm:$0xff]
    %v407 = vld [vmem:[#allocation9 + $0x150] sm:$0xff]
    %v408 = vld [vmem:[#allocation9 + $0x158] sm:$0xff]
    %v409 = vld [vmem:[#allocation9 + $0x160] sm:$0xff]
    %v410 = vld [vmem:[#allocation9 + $0x168] sm:$0xff]
    %v411 = vld [vmem:[#allocation9 + $0x170] sm:$0xff]
    %v412 = vld [vmem:[#allocation9 + $0x178] sm:$0xff]
    %v413 = vld [vmem:[#allocation9 + $0x180] sm:$0xff]
    %v414 = vld [vmem:[#allocation9 + $0x188] sm:$0xff]
    %v415 = vld [vmem:[#allocation9 + $0x190] sm:$0xff]
    %v416 = vld [vmem:[#allocation9 + $0x198] sm:$0xff]
    %v417 = vld [vmem:[#allocation9 + $0x1a0] sm:$0xff]
    %v418 = vld [vmem:[#allocation9 + $0x1a8] sm:$0xff]
    %v419 = vld [vmem:[#allocation9 + $0x1b0] sm:$0xff]
    %v420 = vld [vmem:[#allocation9 + $0x1b8] sm:$0xff]
    %v421 = vld [vmem:[#allocation9 + $0x1c0] sm:$0xff]
    %v422 = vld [vmem:[#allocation9 + $0x1c8] sm:$0xff]
    %v423 = vld [vmem:[#allocation9 + $0x1d0] sm:$0xff]
    %v424 = vld [vmem:[#allocation9 + $0x1d8] sm:$0xff]
    %v425 = vld [vmem:[#allocation9 + $0x1e0] sm:$0xff]
    %v426 = vld [vmem:[#allocation9 + $0x1e8] sm:$0xff]
    %v427 = vld [vmem:[#allocation9 + $0x1f0] sm:$0xff]
    %v428 = vld [vmem:[#allocation9 + $0x1f8] sm:$0xff]
    %v429 = vld [vmem:[#allocation9 + $0x200] sm:$0xff]
    %v430 = vld [vmem:[#allocation9 + $0x208] sm:$0xff]
    %v431 = vld [vmem:[#allocation9 + $0x210] sm:$0xff]
    %v432 = vld [vmem:[#allocation9 + $0x218] sm:$0xff]
    %v433 = vld [vmem:[#allocation9 + $0x220] sm:$0xff]
    %v434 = vld [vmem:[#allocation9 + $0x228] sm:$0xff]
    %v435 = vld [vmem:[#allocation9 + $0x230] sm:$0xff]
    %v436 = vld [vmem:[#allocation9 + $0x238] sm:$0xff]
    %v437 = vld [vmem:[#allocation9 + $0x240] sm:$0xff]
    %v438 = vld [vmem:[#allocation9 + $0x248] sm:$0xff]
    %v439 = vld [vmem:[#allocation9 + $0x250] sm:$0xff]
    %v440 = vld [vmem:[#allocation9 + $0x258] sm:$0xff]
    %v441 = vld [vmem:[#allocation9 + $0x260] sm:$0xff]
    %v442 = vld [vmem:[#allocation9 + $0x268] sm:$0xff]
    %v443 = vld [vmem:[#allocation9 + $0x270] sm:$0xff]
    %v444 = vld [vmem:[#allocation9 + $0x278] sm:$0xff]
    %v445 = vld [vmem:[#allocation9 + $0x280] sm:$0xff]
    %v446 = vld [vmem:[#allocation9 + $0x288] sm:$0xff]
    %v447 = vld [vmem:[#allocation9 + $0x290] sm:$0xff]
    %v448 = vld [vmem:[#allocation9 + $0x298] sm:$0xff]
    %v449 = vld [vmem:[#allocation9 + $0x2a0] sm:$0xff]
    %v450 = vld [vmem:[#allocation9 + $0x2a8] sm:$0xff]
    %v451 = vld [vmem:[#allocation9 + $0x2b0] sm:$0xff]
    %v452 = vld [vmem:[#allocation9 + $0x2b8] sm:$0xff]
    %v453 = vld [vmem:[#allocation9 + $0x2c0] sm:$0xff]
    %v454 = vld [vmem:[#allocation9 + $0x2c8] sm:$0xff]
    %v455 = vld [vmem:[#allocation9 + $0x2d0] sm:$0xff]
    %v456 = vld [vmem:[#allocation9 + $0x2d8] sm:$0xff]
    %v457 = vld [vmem:[#allocation9 + $0x2e0] sm:$0xff]
    %v458 = vld [vmem:[#allocation9 + $0x2e8] sm:$0xff]
    %v459 = vld [vmem:[#allocation9 + $0x2f0] sm:$0xff]
    %v460 = vld [vmem:[#allocation9 + $0x2f8] sm:$0xff]
    %461 = vmatpush.msra.mxu0 %v455
    %462 = vmatpush.msra.mxu0 %v449
    %463 = vmatpush.msra.mxu0 %v443
    %464 = vmatpush.msra.mxu0 %v437
    %465 = vmatpush.msra.mxu0 %v431
    %466 = vmatpush.msra.mxu0 %v425
    %467 = vmatpush.msra.mxu0 %v419
    %468 = vmatpush.msra.mxu0 %v413
    %469 = vmatpush.msra.mxu0 %v407
    %470 = vmatpush.msra.mxu0 %v401
    %471 = vmatpush.msra.mxu0 %v395
    %472 = vmatpush.msra.mxu0 %v389
    %473 = vmatpush.msra.mxu0 %v383
    %474 = vmatpush.msra.mxu0 %v377
    %475 = vmatpush.msra.mxu0 %v371
    %476 = vmatpush.msra.mxu0 %v365
    %477 = vmatmul.f32.gmra.mxu0 0.0
    %v478 = vpop.f32.mrf.mxu0
    %v479 = vadd.f32 0.0, %v478
    %480 = vdwg.mxu0
    %481 = vmatpush.msra.mxu0 %v456
    %482 = vmatpush.msra.mxu0 %v450
    %483 = vmatpush.msra.mxu0 %v444
    %484 = vmatpush.msra.mxu0 %v438
    %485 = vmatpush.msra.mxu0 %v432
    %486 = vmatpush.msra.mxu0 %v426
    %487 = vmatpush.msra.mxu0 %v420
    %488 = vmatpush.msra.mxu0 %v414
    %489 = vmatpush.msra.mxu0 %v408
    %490 = vmatpush.msra.mxu0 %v402
    %491 = vmatpush.msra.mxu0 %v396
    %492 = vmatpush.msra.mxu0 %v390
    %493 = vmatpush.msra.mxu0 %v384
    %494 = vmatpush.msra.mxu0 %v378
    %495 = vmatpush.msra.mxu0 %v372
    %496 = vmatpush.msra.mxu0 %v366
    %497 = vmatmul.f32.gmra.mxu0 0.0
    %v498 = vpop.f32.mrf.mxu0
    %v499 = vadd.f32 0.0, %v498
    %500 = vdwg.mxu0
    %501 = vmatpush.msra.mxu0 %v457
    %502 = vmatpush.msra.mxu0 %v451
    %503 = vmatpush.msra.mxu0 %v445
    %504 = vmatpush.msra.mxu0 %v439
    %505 = vmatpush.msra.mxu0 %v433
    %506 = vmatpush.msra.mxu0 %v427
    %507 = vmatpush.msra.mxu0 %v421
    %508 = vmatpush.msra.mxu0 %v415
    %509 = vmatpush.msra.mxu0 %v409
    %510 = vmatpush.msra.mxu0 %v403
    %511 = vmatpush.msra.mxu0 %v397
    %512 = vmatpush.msra.mxu0 %v391
    %513 = vmatpush.msra.mxu0 %v385
    %514 = vmatpush.msra.mxu0 %v379
    %515 = vmatpush.msra.mxu0 %v373
    %516 = vmatpush.msra.mxu0 %v367
    %517 = vmatmul.f32.gmra.mxu0 0.0
    %v518 = vpop.f32.mrf.mxu0
    %v519 = vadd.f32 0.0, %v518
    %520 = vdwg.mxu0
    %521 = vmatpush.msra.mxu0 %v458
    %522 = vmatpush.msra.mxu0 %v452
    %523 = vmatpush.msra.mxu0 %v446
    %524 = vmatpush.msra.mxu0 %v440
    %525 = vmatpush.msra.mxu0 %v434
    %526 = vmatpush.msra.mxu0 %v428
    %527 = vmatpush.msra.mxu0 %v422
    %528 = vmatpush.msra.mxu0 %v416
    %529 = vmatpush.msra.mxu0 %v410
    %530 = vmatpush.msra.mxu0 %v404
    %531 = vmatpush.msra.mxu0 %v398
    %532 = vmatpush.msra.mxu0 %v392
    %533 = vmatpush.msra.mxu0 %v386
    %534 = vmatpush.msra.mxu0 %v380
    %535 = vmatpush.msra.mxu0 %v374
    %536 = vmatpush.msra.mxu0 %v368
    %537 = vmatmul.f32.gmra.mxu0 0.0
    %v538 = vpop.f32.mrf.mxu0
    %v539 = vadd.f32 0.0, %v538
    %540 = vdwg.mxu0
    %541 = vmatpush.msra.mxu0 %v459
    %542 = vmatpush.msra.mxu0 %v453
    %543 = vmatpush.msra.mxu0 %v447
    %544 = vmatpush.msra.mxu0 %v441
    %545 = vmatpush.msra.mxu0 %v435
    %546 = vmatpush.msra.mxu0 %v429
    %547 = vmatpush.msra.mxu0 %v423
    %548 = vmatpush.msra.mxu0 %v417
    %549 = vmatpush.msra.mxu0 %v411
    %550 = vmatpush.msra.mxu0 %v405
    %551 = vmatpush.msra.mxu0 %v399
    %552 = vmatpush.msra.mxu0 %v393
    %553 = vmatpush.msra.mxu0 %v387
    %554 = vmatpush.msra.mxu0 %v381
    %555 = vmatpush.msra.mxu0 %v375
    %556 = vmatpush.msra.mxu0 %v369
    %557 = vmatmul.f32.gmra.mxu0 0.0
    %v558 = vpop.f32.mrf.mxu0
    %v559 = vadd.f32 0.0, %v558
    %560 = vdwg.mxu0
    %561 = vmatpush.msra.mxu0 %v460
    %562 = vmatpush.msra.mxu0 %v454
    %563 = vmatpush.msra.mxu0 %v448
    %564 = vmatpush.msra.mxu0 %v442
    %565 = vmatpush.msra.mxu0 %v436
    %566 = vmatpush.msra.mxu0 %v430
    %567 = vmatpush.msra.mxu0 %v424
    %568 = vmatpush.msra.mxu0 %v418
    %569 = vmatpush.msra.mxu0 %v412
    %570 = vmatpush.msra.mxu0 %v406
    %571 = vmatpush.msra.mxu0 %v400
    %572 = vmatpush.msra.mxu0 %v394
    %573 = vmatpush.msra.mxu0 %v388
    %574 = vmatpush.msra.mxu0 %v382
    %575 = vmatpush.msra.mxu0 %v376
    %576 = vmatpush.msra.mxu0 %v370
    %577 = vmatmul.f32.gmra.mxu0 0.0
    %v578 = vpop.f32.mrf.mxu0
    %v579 = vadd.f32 0.0, %v578
    %580 = vdwg.mxu0
    %v581 = vld [vmem:[#allocation2] ss:$8 sm:$0x7]
    %s582 = scalar_lea.vmem [#allocation2], 79
    %v583 = vld [vmem:[%s582] ss:$8 sm:$0x7]
    %v585 = vperm.slane %v138, 0
    %v586 = vperm.slane %v138, 1
    %v587 = vperm.slane %v138, 2
    %v591 = vadd.f32 %v479, %v585
    %v592 = vadd.f32 %v499, %v586
    %v593 = vadd.f32 %v519, %v587
    %v594 = vadd.f32 %v581, %v591
    %v595 = vxor.u32 %v594, 2147483648
    %v596 = vmul.f32 %v595, 1.442695
    %v597 = vpow.pop %v596
    %v598 = vadd.f32 %v597, 1.0
    %v599 = vrcp.pop %v598
    %v600 = vmul.f32 %v598, %v599
    %v601 = vsub.f32 1.0, %v600
    %v602 = vmul.f32 %v599, %v601
    %v603 = vadd.f32 %v599, %v602
    %vm604 = vweird.f32 %v598
    %vm605 = vweird.f32 %v599
    %vm606 = vmor %vm604, %vm605
    %v607 = vsel %vm606, %v599, %v603
    %v608 = vand.u32 2147483647, %v598
    %vm609 = vcmp.eq.f32.partialorder %v608, 8.507059e+37
    %v610 = vand.u32 %v598, 2147483648
    %v611 = vor.u32 1.1754944e-38, %v610
    %v612 = vsel %vm609, %v611, %v607
    %v613 = vmul.f32 1.0, %v612
    %v615 = vrot.slane %v581, 1
    %v617 = vadd.f32 %v615, %v592
    %v618 = vxor.u32 %v617, 2147483648
    %v619 = vmul.f32 %v618, 1.442695
    %v620 = vpow.pop %v619
    %v621 = vadd.f32 %v620, 1.0
    %v622 = vrcp.pop %v621
    %v623 = vmul.f32 %v621, %v622
    %v624 = vsub.f32 1.0, %v623
    %v625 = vmul.f32 %v622, %v624
    %v626 = vadd.f32 %v622, %v625
    %vm627 = vweird.f32 %v621
    %vm628 = vweird.f32 %v622
    %vm629 = vmor %vm627, %vm628
    %v630 = vsel %vm629, %v622, %v626
    %v631 = vand.u32 2147483647, %v621
    %vm632 = vcmp.eq.f32.partialorder %v631, 8.507059e+37
    %v633 = vand.u32 %v621, 2147483648
    %v634 = vor.u32 1.1754944e-38, %v633
    %v635 = vsel %vm632, %v634, %v630
    %v636 = vmul.f32 1.0, %v635
    %v637 = vmul.f32 %v613, %v593
    %v638 = vrot.slane %v581, 2
    %v640 = vadd.f32 %v638, %v637
    %v641 = vtanh.pop %v640
    %v642 = vsub.f32 1.0, %v636
    %v643 = vmul.f32 %v642, %v641
    %v644 = vmul.f32 %v636, 0.0
    %v645 = vadd.f32 %v643, %v644
    %v647 = vperm.slane %v139, 0
    %v648 = vperm.slane %v139, 1
    %v649 = vperm.slane %v139, 2
    %v653 = vadd.f32 %v539, %v647
    %v654 = vadd.f32 %v559, %v648
    %v655 = vadd.f32 %v579, %v649
    %657 = vst [vmem:[#allocation1] sm:$0xff] %v653
    %s658 = scalar_lea.vmem [#allocation1], 1
    %v659 = vld [vmem:[%s658] ss:$9 sm:$0xff]
    %v661 = vadd.f32 %v583, %v659
    %v662 = vxor.u32 %v661, 2147483648
    %v663 = vmul.f32 %v662, 1.442695
    %v664 = vpow.pop %v663
    %v665 = vadd.f32 %v664, 1.0
    %v666 = vrcp.pop %v665
    %v667 = vmul.f32 %v665, %v666
    %v668 = vsub.f32 1.0, %v667
    %v669 = vmul.f32 %v666, %v668
    %v670 = vadd.f32 %v666, %v669
    %vm671 = vweird.f32 %v665
    %vm672 = vweird.f32 %v666
    %vm673 = vmor %vm671, %vm672
    %v674 = vsel %vm673, %v666, %v670
    %v675 = vand.u32 2147483647, %v665
    %vm676 = vcmp.eq.f32.partialorder %v675, 8.507059e+37
    %v677 = vand.u32 %v665, 2147483648
    %v678 = vor.u32 1.1754944e-38, %v677
    %v679 = vsel %vm676, %v678, %v674
    %v680 = vmul.f32 1.0, %v679
    %v682 = vrot.slane %v583, 1
    %685 = vst [vmem:[#allocation1] sm:$0xff] %v654
    %s686 = scalar_lea.vmem [#allocation1], 1
    %v687 = vld [vmem:[%s686] ss:$9 sm:$0xff]
    %v689 = vadd.f32 %v682, %v687
    %v690 = vxor.u32 %v689, 2147483648
    %v691 = vmul.f32 %v690, 1.442695
    %v692 = vpow.pop %v691
    %v693 = vadd.f32 %v692, 1.0
    %v694 = vrcp.pop %v693
    %v695 = vmul.f32 %v693, %v694
    %v696 = vsub.f32 1.0, %v695
    %v697 = vmul.f32 %v694, %v696
    %v698 = vadd.f32 %v694, %v697
    %vm699 = vweird.f32 %v693
    %vm700 = vweird.f32 %v694
    %vm701 = vmor %vm699, %vm700
    %v702 = vsel %vm701, %v694, %v698
    %v703 = vand.u32 2147483647, %v693
    %vm704 = vcmp.eq.f32.partialorder %v703, 8.507059e+37
    %v705 = vand.u32 %v693, 2147483648
    %v706 = vor.u32 1.1754944e-38, %v705
    %v707 = vsel %vm704, %v706, %v702
    %v708 = vmul.f32 1.0, %v707
    %710 = vst [vmem:[#allocation1] sm:$0xff] %v655
    %s711 = scalar_lea.vmem [#allocation1], 1
    %v712 = vld [vmem:[%s711] ss:$9 sm:$0xff]
    %v714 = vmul.f32 %v680, %v712
    %v715 = vrot.slane %v583, 2
    %v717 = vadd.f32 %v715, %v714
    %v718 = vtanh.pop %v717
    %v719 = vsub.f32 1.0, %v708
    %v720 = vmul.f32 %v719, %v718
    %v721 = vmul.f32 %v708, 0.0
    %v722 = vadd.f32 %v720, %v721
    %723 = vst [vmem:[#allocation3] sm:$0x1] %v645
    %724 = vst [vmem:[#allocation3 + $0x1f] sm:$0x1] %v722
    %v726 = vperm.slane %v722, 0
    %vm728 = vcmask 1040384
    %v729 = vsel %vm728, %v645, %v726
    %730 = vmatpush.msra.mxu0 %v455
    %731 = vmatpush.msra.mxu0 %v449
    %732 = vmatpush.msra.mxu0 %v443
    %733 = vmatpush.msra.mxu0 %v437
    %734 = vmatpush.msra.mxu0 %v431
    %735 = vmatpush.msra.mxu0 %v425
    %736 = vmatpush.msra.mxu0 %v419
    %737 = vmatpush.msra.mxu0 %v413
    %738 = vmatpush.msra.mxu0 %v407
    %739 = vmatpush.msra.mxu0 %v401
    %740 = vmatpush.msra.mxu0 %v395
    %741 = vmatpush.msra.mxu0 %v389
    %742 = vmatpush.msra.mxu0 %v383
    %743 = vmatpush.msra.mxu0 %v377
    %744 = vmatpush.msra.mxu0 %v371
    %745 = vmatpush.msra.mxu0 %v365
    %746 = vmatmul.f32.gmra.mxu0 %v729
    %v747 = vpop.f32.mrf.mxu0
    %v748 = vadd.f32 0.0, %v747
    %749 = vdwg.mxu0
    %750 = vmatpush.msra.mxu0 %v456
    %751 = vmatpush.msra.mxu0 %v450
    %752 = vmatpush.msra.mxu0 %v444
    %753 = vmatpush.msra.mxu0 %v438
    %754 = vmatpush.msra.mxu0 %v432
    %755 = vmatpush.msra.mxu0 %v426
    %756 = vmatpush.msra.mxu0 %v420
    %757 = vmatpush.msra.mxu0 %v414
    %758 = vmatpush.msra.mxu0 %v408
    %759 = vmatpush.msra.mxu0 %v402
    %760 = vmatpush.msra.mxu0 %v396
    %761 = vmatpush.msra.mxu0 %v390
    %762 = vmatpush.msra.mxu0 %v384
    %763 = vmatpush.msra.mxu0 %v378
    %764 = vmatpush.msra.mxu0 %v372
    %765 = vmatpush.msra.mxu0 %v366
    %766 = vmatmul.f32.gmra.mxu0 %v729
    %v767 = vpop.f32.mrf.mxu0
    %v768 = vadd.f32 0.0, %v767
    %769 = vdwg.mxu0
    %770 = vmatpush.msra.mxu0 %v457
    %771 = vmatpush.msra.mxu0 %v451
    %772 = vmatpush.msra.mxu0 %v445
    %773 = vmatpush.msra.mxu0 %v439
    %774 = vmatpush.msra.mxu0 %v433
    %775 = vmatpush.msra.mxu0 %v427
    %776 = vmatpush.msra.mxu0 %v421
    %777 = vmatpush.msra.mxu0 %v415
    %778 = vmatpush.msra.mxu0 %v409
    %779 = vmatpush.msra.mxu0 %v403
    %780 = vmatpush.msra.mxu0 %v397
    %781 = vmatpush.msra.mxu0 %v391
    %782 = vmatpush.msra.mxu0 %v385
    %783 = vmatpush.msra.mxu0 %v379
    %784 = vmatpush.msra.mxu0 %v373
    %785 = vmatpush.msra.mxu0 %v367
    %786 = vmatmul.f32.gmra.mxu0 %v729
    %v787 = vpop.f32.mrf.mxu0
    %v788 = vadd.f32 0.0, %v787
    %789 = vdwg.mxu0
    %790 = vmatpush.msra.mxu0 %v458
    %791 = vmatpush.msra.mxu0 %v452
    %792 = vmatpush.msra.mxu0 %v446
    %793 = vmatpush.msra.mxu0 %v440
    %794 = vmatpush.msra.mxu0 %v434
    %795 = vmatpush.msra.mxu0 %v428
    %796 = vmatpush.msra.mxu0 %v422
    %797 = vmatpush.msra.mxu0 %v416
    %798 = vmatpush.msra.mxu0 %v410
    %799 = vmatpush.msra.mxu0 %v404
    %800 = vmatpush.msra.mxu0 %v398
    %801 = vmatpush.msra.mxu0 %v392
    %802 = vmatpush.msra.mxu0 %v386
    %803 = vmatpush.msra.mxu0 %v380
    %804 = vmatpush.msra.mxu0 %v374
    %805 = vmatpush.msra.mxu0 %v368
    %806 = vmatmul.f32.gmra.mxu0 %v729
    %v807 = vpop.f32.mrf.mxu0
    %v808 = vadd.f32 0.0, %v807
    %809 = vdwg.mxu0
    %810 = vmatpush.msra.mxu0 %v459
    %811 = vmatpush.msra.mxu0 %v453
    %812 = vmatpush.msra.mxu0 %v447
    %813 = vmatpush.msra.mxu0 %v441
    %814 = vmatpush.msra.mxu0 %v435
    %815 = vmatpush.msra.mxu0 %v429
    %816 = vmatpush.msra.mxu0 %v423
    %817 = vmatpush.msra.mxu0 %v417
    %818 = vmatpush.msra.mxu0 %v411
    %819 = vmatpush.msra.mxu0 %v405
    %820 = vmatpush.msra.mxu0 %v399
    %821 = vmatpush.msra.mxu0 %v393
    %822 = vmatpush.msra.mxu0 %v387
    %823 = vmatpush.msra.mxu0 %v381
    %824 = vmatpush.msra.mxu0 %v375
    %825 = vmatpush.msra.mxu0 %v369
    %826 = vmatmul.f32.gmra.mxu0 %v729
    %v827 = vpop.f32.mrf.mxu0
    %v828 = vadd.f32 0.0, %v827
    %829 = vdwg.mxu0
    %830 = vmatpush.msra.mxu0 %v460
    %831 = vmatpush.msra.mxu0 %v454
    %832 = vmatpush.msra.mxu0 %v448
    %833 = vmatpush.msra.mxu0 %v442
    %834 = vmatpush.msra.mxu0 %v436
    %835 = vmatpush.msra.mxu0 %v430
    %836 = vmatpush.msra.mxu0 %v424
    %837 = vmatpush.msra.mxu0 %v418
    %838 = vmatpush.msra.mxu0 %v412
    %839 = vmatpush.msra.mxu0 %v406
    %840 = vmatpush.msra.mxu0 %v400
    %841 = vmatpush.msra.mxu0 %v394
    %842 = vmatpush.msra.mxu0 %v388
    %843 = vmatpush.msra.mxu0 %v382
    %844 = vmatpush.msra.mxu0 %v376
    %845 = vmatpush.msra.mxu0 %v370
    %846 = vmatmul.f32.gmra.mxu0 %v729
    %v847 = vpop.f32.mrf.mxu0
    %v848 = vadd.f32 0.0, %v847
    %849 = vdwg.mxu0
    %s850 = scalar_lea.vmem [#allocation2], 1
    %v851 = vld [vmem:[%s850] ss:$8 sm:$0x7]
    %s852 = scalar_lea.vmem [#allocation2], 78
    %v853 = vld [vmem:[%s852] ss:$8 sm:$0x7]
    %v854 = vadd.f32 %v748, %v585
    %v855 = vadd.f32 %v768, %v586
    %v856 = vadd.f32 %v788, %v587
    %v857 = vadd.f32 %v851, %v854
    %v858 = vxor.u32 %v857, 2147483648
    %v859 = vmul.f32 %v858, 1.442695
    %v860 = vpow.pop %v859
    %v861 = vadd.f32 %v860, 1.0
    %v862 = vrcp.pop %v861
    %v863 = vmul.f32 %v861, %v862
    %v864 = vsub.f32 1.0, %v863
    %v865 = vmul.f32 %v862, %v864
    %v866 = vadd.f32 %v862, %v865
    %vm867 = vweird.f32 %v861
    %vm868 = vweird.f32 %v862
    %vm869 = vmor %vm867, %vm868
    %v870 = vsel %vm869, %v862, %v866
    %v871 = vand.u32 2147483647, %v861
    %vm872 = vcmp.eq.f32.partialorder %v871, 8.507059e+37
    %v873 = vand.u32 %v861, 2147483648
    %v874 = vor.u32 1.1754944e-38, %v873
    %v875 = vsel %vm872, %v874, %v870
    %v876 = vmul.f32 1.0, %v875
    %v878 = vrot.slane %v851, 1
    %v880 = vadd.f32 %v878, %v855
    %v881 = vxor.u32 %v880, 2147483648
    %v882 = vmul.f32 %v881, 1.442695
    %v883 = vpow.pop %v882
    %v884 = vadd.f32 %v883, 1.0
    %v885 = vrcp.pop %v884
    %v886 = vmul.f32 %v884, %v885
    %v887 = vsub.f32 1.0, %v886
    %v888 = vmul.f32 %v885, %v887
    %v889 = vadd.f32 %v885, %v888
    %vm890 = vweird.f32 %v884
    %vm891 = vweird.f32 %v885
    %vm892 = vmor %vm890, %vm891
    %v893 = vsel %vm892, %v885, %v889
    %v894 = vand.u32 2147483647, %v884
    %vm895 = vcmp.eq.f32.partialorder %v894, 8.507059e+37
    %v896 = vand.u32 %v884, 2147483648
    %v897 = vor.u32 1.1754944e-38, %v896
    %v898 = vsel %vm895, %v897, %v893
    %v899 = vmul.f32 1.0, %v898
    %v900 = vmul.f32 %v876, %v856
    %v901 = vrot.slane %v851, 2
    %v903 = vadd.f32 %v901, %v900
    %v904 = vtanh.pop %v903
    %v905 = vsub.f32 1.0, %v899
    %v906 = vmul.f32 %v905, %v904
    %v907 = vmul.f32 %v899, %v729
    %v908 = vadd.f32 %v906, %v907
    %v909 = vadd.f32 %v808, %v647
    %v910 = vadd.f32 %v828, %v648
    %v911 = vadd.f32 %v848, %v649
    %913 = vst [vmem:[#allocation1] sm:$0xff] %v909
    %s914 = scalar_lea.vmem [#allocation1], 1
    %v915 = vld [vmem:[%s914] ss:$9 sm:$0xff]
    %v917 = vadd.f32 %v853, %v915
    %v918 = vxor.u32 %v917, 2147483648
    %v919 = vmul.f32 %v918, 1.442695
    %v920 = vpow.pop %v919
    %v921 = vadd.f32 %v920, 1.0
    %v922 = vrcp.pop %v921
    %v923 = vmul.f32 %v921, %v922
    %v924 = vsub.f32 1.0, %v923
    %v925 = vmul.f32 %v922, %v924
    %v926 = vadd.f32 %v922, %v925
    %vm927 = vweird.f32 %v921
    %vm928 = vweird.f32 %v922
    %vm929 = vmor %vm927, %vm928
    %v930 = vsel %vm929, %v922, %v926
    %v931 = vand.u32 2147483647, %v921
    %vm932 = vcmp.eq.f32.partialorder %v931, 8.507059e+37
    %v933 = vand.u32 %v921, 2147483648
    %v934 = vor.u32 1.1754944e-38, %v933
    %v935 = vsel %vm932, %v934, %v930
    %v936 = vmul.f32 1.0, %v935
    %v938 = vrot.slane %v853, 1
    %941 = vst [vmem:[#allocation1] sm:$0xff] %v910
    %s942 = scalar_lea.vmem [#allocation1], 1
    %v943 = vld [vmem:[%s942] ss:$9 sm:$0xff]
    %v945 = vadd.f32 %v938, %v943
    %v946 = vxor.u32 %v945, 2147483648
    %v947 = vmul.f32 %v946, 1.442695
    %v948 = vpow.pop %v947
    %v949 = vadd.f32 %v948, 1.0
    %v950 = vrcp.pop %v949
    %v951 = vmul.f32 %v949, %v950
    %v952 = vsub.f32 1.0, %v951
    %v953 = vmul.f32 %v950, %v952
    %v954 = vadd.f32 %v950, %v953
    %vm955 = vweird.f32 %v949
    %vm956 = vweird.f32 %v950
    %vm957 = vmor %vm955, %vm956
    %v958 = vsel %vm957, %v950, %v954
    %v959 = vand.u32 2147483647, %v949
    %vm960 = vcmp.eq.f32.partialorder %v959, 8.507059e+37
    %v961 = vand.u32 %v949, 2147483648
    %v962 = vor.u32 1.1754944e-38, %v961
    %v963 = vsel %vm960, %v962, %v958
    %v964 = vmul.f32 1.0, %v963
    %966 = vst [vmem:[#allocation1] sm:$0xff] %v911
    %s967 = scalar_lea.vmem [#allocation1], 1
    %v968 = vld [vmem:[%s967] ss:$9 sm:$0xff]
    %v970 = vmul.f32 %v936, %v968
    %v971 = vrot.slane %v853, 2
    %v973 = vadd.f32 %v971, %v970
    %v974 = vtanh.pop %v973
    %v975 = vsub.f32 1.0, %v964
    %v976 = vmul.f32 %v975, %v974
    %978 = vst [vmem:[#allocation1] sm:$0xff] %v729
    %s979 = scalar_lea.vmem [#allocation1], 1
    %v980 = vld [vmem:[%s979] ss:$9 sm:$0xff]
    %v982 = vmul.f32 %v964, %v980
    %v983 = vadd.f32 %v976, %v982
    %984 = vst [vmem:[#allocation3 + $0x1] sm:$0x1] %v908
    %985 = vst [vmem:[#allocation3 + $0x1e] sm:$0x1] %v983
    %v987 = vperm.slane %v983, 0
    %v989 = vsel %vm728, %v908, %v987
    %990 = vmatpush.msra.mxu0 %v455
    %991 = vmatpush.msra.mxu0 %v449
    %992 = vmatpush.msra.mxu0 %v443
    %993 = vmatpush.msra.mxu0 %v437
    %994 = vmatpush.msra.mxu0 %v431
    %995 = vmatpush.msra.mxu0 %v425
    %996 = vmatpush.msra.mxu0 %v419
    %997 = vmatpush.msra.mxu0 %v413
    %998 = vmatpush.msra.mxu0 %v407
    %999 = vmatpush.msra.mxu0 %v401
    %1000 = vmatpush.msra.mxu0 %v395
    %1001 = vmatpush.msra.mxu0 %v389
    %1002 = vmatpush.msra.mxu0 %v383
    %1003 = vmatpush.msra.mxu0 %v377
    %1004 = vmatpush.msra.mxu0 %v371
    %1005 = vmatpush.msra.mxu0 %v365
    %1006 = vmatmul.f32.gmra.mxu0 %v989
    %v1007 = vpop.f32.mrf.mxu0
    %v1008 = vadd.f32 0.0, %v1007
    %1009 = vdwg.mxu0
    %1010 = vmatpush.msra.mxu0 %v456
    %1011 = vmatpush.msra.mxu0 %v450
    %1012 = vmatpush.msra.mxu0 %v444
    %1013 = vmatpush.msra.mxu0 %v438
    %1014 = vmatpush.msra.mxu0 %v432
    %1015 = vmatpush.msra.mxu0 %v426
    %1016 = vmatpush.msra.mxu0 %v420
    %1017 = vmatpush.msra.mxu0 %v414
    %1018 = vmatpush.msra.mxu0 %v408
    %1019 = vmatpush.msra.mxu0 %v402
    %1020 = vmatpush.msra.mxu0 %v396
    %1021 = vmatpush.msra.mxu0 %v390
    %1022 = vmatpush.msra.mxu0 %v384
    %1023 = vmatpush.msra.mxu0 %v378
    %1024 = vmatpush.msra.mxu0 %v372
    %1025 = vmatpush.msra.mxu0 %v366
    %1026 = vmatmul.f32.gmra.mxu0 %v989
    %v1027 = vpop.f32.mrf.mxu0
    %v1028 = vadd.f32 0.0, %v1027
    %1029 = vdwg.mxu0
    %1030 = vmatpush.msra.mxu0 %v457
    %1031 = vmatpush.msra.mxu0 %v451
    %1032 = vmatpush.msra.mxu0 %v445
    %1033 = vmatpush.msra.mxu0 %v439
    %1034 = vmatpush.msra.mxu0 %v433
    %1035 = vmatpush.msra.mxu0 %v427
    %1036 = vmatpush.msra.mxu0 %v421
    %1037 = vmatpush.msra.mxu0 %v415
    %1038 = vmatpush.msra.mxu0 %v409
    %1039 = vmatpush.msra.mxu0 %v403
    %1040 = vmatpush.msra.mxu0 %v397
    %1041 = vmatpush.msra.mxu0 %v391
    %1042 = vmatpush.msra.mxu0 %v385
    %1043 = vmatpush.msra.mxu0 %v379
    %1044 = vmatpush.msra.mxu0 %v373
    %1045 = vmatpush.msra.mxu0 %v367
    %1046 = vmatmul.f32.gmra.mxu0 %v989
    %v1047 = vpop.f32.mrf.mxu0
    %v1048 = vadd.f32 0.0, %v1047
    %1049 = vdwg.mxu0
    %1050 = vmatpush.msra.mxu0 %v458
    %1051 = vmatpush.msra.mxu0 %v452
    %1052 = vmatpush.msra.mxu0 %v446
    %1053 = vmatpush.msra.mxu0 %v440
    %1054 = vmatpush.msra.mxu0 %v434
    %1055 = vmatpush.msra.mxu0 %v428
    %1056 = vmatpush.msra.mxu0 %v422
    %1057 = vmatpush.msra.mxu0 %v416
    %1058 = vmatpush.msra.mxu0 %v410
    %1059 = vmatpush.msra.mxu0 %v404
    %1060 = vmatpush.msra.mxu0 %v398
    %1061 = vmatpush.msra.mxu0 %v392
    %1062 = vmatpush.msra.mxu0 %v386
    %1063 = vmatpush.msra.mxu0 %v380
    %1064 = vmatpush.msra.mxu0 %v374
    %1065 = vmatpush.msra.mxu0 %v368
    %1066 = vmatmul.f32.gmra.mxu0 %v989
    %v1067 = vpop.f32.mrf.mxu0
    %v1068 = vadd.f32 0.0, %v1067
    %1069 = vdwg.mxu0
    %1070 = vmatpush.msra.mxu0 %v459
    %1071 = vmatpush.msra.mxu0 %v453
    %1072 = vmatpush.msra.mxu0 %v447
    %1073 = vmatpush.msra.mxu0 %v441
    %1074 = vmatpush.msra.mxu0 %v435
    %1075 = vmatpush.msra.mxu0 %v429
    %1076 = vmatpush.msra.mxu0 %v423
    %1077 = vmatpush.msra.mxu0 %v417
    %1078 = vmatpush.msra.mxu0 %v411
    %1079 = vmatpush.msra.mxu0 %v405
    %1080 = vmatpush.msra.mxu0 %v399
    %1081 = vmatpush.msra.mxu0 %v393
    %1082 = vmatpush.msra.mxu0 %v387
    %1083 = vmatpush.msra.mxu0 %v381
    %1084 = vmatpush.msra.mxu0 %v375
    %1085 = vmatpush.msra.mxu0 %v369
    %1086 = vmatmul.f32.gmra.mxu0 %v989
    %v1087 = vpop.f32.mrf.mxu0
    %v1088 = vadd.f32 0.0, %v1087
    %1089 = vdwg.mxu0
    %1090 = vmatpush.msra.mxu0 %v460
    %1091 = vmatpush.msra.mxu0 %v454
    %1092 = vmatpush.msra.mxu0 %v448
    %1093 = vmatpush.msra.mxu0 %v442
    %1094 = vmatpush.msra.mxu0 %v436
    %1095 = vmatpush.msra.mxu0 %v430
    %1096 = vmatpush.msra.mxu0 %v424
    %1097 = vmatpush.msra.mxu0 %v418
    %1098 = vmatpush.msra.mxu0 %v412
    %1099 = vmatpush.msra.mxu0 %v406
    %1100 = vmatpush.msra.mxu0 %v400
    %1101 = vmatpush.msra.mxu0 %v394
    %1102 = vmatpush.msra.mxu0 %v388
    %1103 = vmatpush.msra.mxu0 %v382
    %1104 = vmatpush.msra.mxu0 %v376
    %1105 = vmatpush.msra.mxu0 %v370
    %1106 = vmatmul.f32.gmra.mxu0 %v989
    %v1107 = vpop.f32.mrf.mxu0
    %v1108 = vadd.f32 0.0, %v1107
    %1109 = vdwg.mxu0
    %s1110 = scalar_lea.vmem [#allocation2], 2
    %v1111 = vld [vmem:[%s1110] ss:$8 sm:$0x7]
    %s1112 = scalar_lea.vmem [#allocation2], 77
    %v1113 = vld [vmem:[%s1112] ss:$8 sm:$0x7]
    %v1114 = vadd.f32 %v1008, %v585
    %v1115 = vadd.f32 %v1028, %v586
    %v1116 = vadd.f32 %v1048, %v587
    %v1117 = vadd.f32 %v1111, %v1114
    %v1118 = vxor.u32 %v1117, 2147483648
    %v1119 = vmul.f32 %v1118, 1.442695
    %v1120 = vpow.pop %v1119
    %v1121 = vadd.f32 %v1120, 1.0
    %v1122 = vrcp.pop %v1121
    %v1123 = vmul.f32 %v1121, %v1122
    %v1124 = vsub.f32 1.0, %v1123
    %v1125 = vmul.f32 %v1122, %v1124
    %v1126 = vadd.f32 %v1122, %v1125
    %vm1127 = vweird.f32 %v1121
    %vm1128 = vweird.f32 %v1122
    %vm1129 = vmor %vm1127, %vm1128
    %v1130 = vsel %vm1129, %v1122, %v1126
    %v1131 = vand.u32 2147483647, %v1121
    %vm1132 = vcmp.eq.f32.partialorder %v1131, 8.507059e+37
    %v1133 = vand.u32 %v1121, 2147483648
    %v1134 = vor.u32 1.1754944e-38, %v1133
    %v1135 = vsel %vm1132, %v1134, %v1130
    %v1136 = vmul.f32 1.0, %v1135
    %v1138 = vrot.slane %v1111, 1
    %v1140 = vadd.f32 %v1138, %v1115
    %v1141 = vxor.u32 %v1140, 2147483648
    %v1142 = vmul.f32 %v1141, 1.442695
    %v1143 = vpow.pop %v1142
    %v1144 = vadd.f32 %v1143, 1.0
    %v1145 = vrcp.pop %v1144
    %v1146 = vmul.f32 %v1144, %v1145
    %v1147 = vsub.f32 1.0, %v1146
    %v1148 = vmul.f32 %v1145, %v1147
    %v1149 = vadd.f32 %v1145, %v1148
    %vm1150 = vweird.f32 %v1144
    %vm1151 = vweird.f32 %v1145
    %vm1152 = vmor %vm1150, %vm1151
    %v1153 = vsel %vm1152, %v1145, %v1149
    %v1154 = vand.u32 2147483647, %v1144
    %vm1155 = vcmp.eq.f32.partialorder %v1154, 8.507059e+37
    %v1156 = vand.u32 %v1144, 2147483648
    %v1157 = vor.u32 1.1754944e-38, %v1156
    %v1158 = vsel %vm1155, %v1157, %v1153
    %v1159 = vmul.f32 1.0, %v1158
    %v1160 = vmul.f32 %v1136, %v1116
    %v1161 = vrot.slane %v1111, 2
    %v1163 = vadd.f32 %v1161, %v1160
    %v1164 = vtanh.pop %v1163
    %v1165 = vsub.f32 1.0, %v1159
    %v1166 = vmul.f32 %v1165, %v1164
    %v1167 = vmul.f32 %v1159, %v989
    %v1168 = vadd.f32 %v1166, %v1167
    %v1169 = vadd.f32 %v1068, %v647
    %v1170 = vadd.f32 %v1088, %v648
    %v1171 = vadd.f32 %v1108, %v649
    %1173 = vst [vmem:[#allocation1] sm:$0xff] %v1169
    %s1174 = scalar_lea.vmem [#allocation1], 1
    %v1175 = vld [vmem:[%s1174] ss:$9 sm:$0xff]
    %v1177 = vadd.f32 %v1113, %v1175
    %v1178 = vxor.u32 %v1177, 2147483648
    %v1179 = vmul.f32 %v1178, 1.442695
    %v1180 = vpow.pop %v1179
    %v1181 = vadd.f32 %v1180, 1.0
    %v1182 = vrcp.pop %v1181
    %v1183 = vmul.f32 %v1181, %v1182
    %v1184 = vsub.f32 1.0, %v1183
    %v1185 = vmul.f32 %v1182, %v1184
    %v1186 = vadd.f32 %v1182, %v1185
    %vm1187 = vweird.f32 %v1181
    %vm1188 = vweird.f32 %v1182
    %vm1189 = vmor %vm1187, %vm1188
    %v1190 = vsel %vm1189, %v1182, %v1186
    %v1191 = vand.u32 2147483647, %v1181
    %vm1192 = vcmp.eq.f32.partialorder %v1191, 8.507059e+37
    %v1193 = vand.u32 %v1181, 2147483648
    %v1194 = vor.u32 1.1754944e-38, %v1193
    %v1195 = vsel %vm1192, %v1194, %v1190
    %v1196 = vmul.f32 1.0, %v1195
    %v1198 = vrot.slane %v1113, 1
    %1201 = vst [vmem:[#allocation1] sm:$0xff] %v1170
    %s1202 = scalar_lea.vmem [#allocation1], 1
    %v1203 = vld [vmem:[%s1202] ss:$9 sm:$0xff]
    %v1205 = vadd.f32 %v1198, %v1203
    %v1206 = vxor.u32 %v1205, 2147483648
    %v1207 = vmul.f32 %v1206, 1.442695
    %v1208 = vpow.pop %v1207
    %v1209 = vadd.f32 %v1208, 1.0
    %v1210 = vrcp.pop %v1209
    %v1211 = vmul.f32 %v1209, %v1210
    %v1212 = vsub.f32 1.0, %v1211
    %v1213 = vmul.f32 %v1210, %v1212
    %v1214 = vadd.f32 %v1210, %v1213
    %vm1215 = vweird.f32 %v1209
    %vm1216 = vweird.f32 %v1210
    %vm1217 = vmor %vm1215, %vm1216
    %v1218 = vsel %vm1217, %v1210, %v1214
    %v1219 = vand.u32 2147483647, %v1209
    %vm1220 = vcmp.eq.f32.partialorder %v1219, 8.507059e+37
    %v1221 = vand.u32 %v1209, 2147483648
    %v1222 = vor.u32 1.1754944e-38, %v1221
    %v1223 = vsel %vm1220, %v1222, %v1218
    %v1224 = vmul.f32 1.0, %v1223
    %1226 = vst [vmem:[#allocation1] sm:$0xff] %v1171
    %s1227 = scalar_lea.vmem [#allocation1], 1
    %v1228 = vld [vmem:[%s1227] ss:$9 sm:$0xff]
    %v1230 = vmul.f32 %v1196, %v1228
    %v1231 = vrot.slane %v1113, 2
    %v1233 = vadd.f32 %v1231, %v1230
    %v1234 = vtanh.pop %v1233
    %v1235 = vsub.f32 1.0, %v1224
    %v1236 = vmul.f32 %v1235, %v1234
    %1238 = vst [vmem:[#allocation1] sm:$0xff] %v989
    %s1239 = scalar_lea.vmem [#allocation1], 1
    %v1240 = vld [vmem:[%s1239] ss:$9 sm:$0xff]
    %v1242 = vmul.f32 %v1224, %v1240
    %v1243 = vadd.f32 %v1236, %v1242
    %1244 = vst [vmem:[#allocation3 + $0x2] sm:$0x1] %v1168
    %1245 = vst [vmem:[#allocation3 + $0x1d] sm:$0x1] %v1243
    %v1247 = vperm.slane %v1243, 0
    %v1249 = vsel %vm728, %v1168, %v1247
    %1250 = vmatpush.msra.mxu0 %v455
    %1251 = vmatpush.msra.mxu0 %v449
    %1252 = vmatpush.msra.mxu0 %v443
    %1253 = vmatpush.msra.mxu0 %v437
    %1254 = vmatpush.msra.mxu0 %v431
    %1255 = vmatpush.msra.mxu0 %v425
    %1256 = vmatpush.msra.mxu0 %v419
    %1257 = vmatpush.msra.mxu0 %v413
    %1258 = vmatpush.msra.mxu0 %v407
    %1259 = vmatpush.msra.mxu0 %v401
    %1260 = vmatpush.msra.mxu0 %v395
    %1261 = vmatpush.msra.mxu0 %v389
    %1262 = vmatpush.msra.mxu0 %v383
    %1263 = vmatpush.msra.mxu0 %v377
    %1264 = vmatpush.msra.mxu0 %v371
    %1265 = vmatpush.msra.mxu0 %v365
    %1266 = vmatmul.f32.gmra.mxu0 %v1249
    %v1267 = vpop.f32.mrf.mxu0
    %v1268 = vadd.f32 0.0, %v1267
    %1269 = vdwg.mxu0
    %1270 = vmatpush.msra.mxu0 %v456
    %1271 = vmatpush.msra.mxu0 %v450
    %1272 = vmatpush.msra.mxu0 %v444
    %1273 = vmatpush.msra.mxu0 %v438
    %1274 = vmatpush.msra.mxu0 %v432
    %1275 = vmatpush.msra.mxu0 %v426
    %1276 = vmatpush.msra.mxu0 %v420
    %1277 = vmatpush.msra.mxu0 %v414
    %1278 = vmatpush.msra.mxu0 %v408
    %1279 = vmatpush.msra.mxu0 %v402
    %1280 = vmatpush.msra.mxu0 %v396
    %1281 = vmatpush.msra.mxu0 %v390
    %1282 = vmatpush.msra.mxu0 %v384
    %1283 = vmatpush.msra.mxu0 %v378
    %1284 = vmatpush.msra.mxu0 %v372
    %1285 = vmatpush.msra.mxu0 %v366
    %1286 = vmatmul.f32.gmra.mxu0 %v1249
    %v1287 = vpop.f32.mrf.mxu0
    %v1288 = vadd.f32 0.0, %v1287
    %1289 = vdwg.mxu0
    %1290 = vmatpush.msra.mxu0 %v457
    %1291 = vmatpush.msra.mxu0 %v451
    %1292 = vmatpush.msra.mxu0 %v445
    %1293 = vmatpush.msra.mxu0 %v439
    %1294 = vmatpush.msra.mxu0 %v433
    %1295 = vmatpush.msra.mxu0 %v427
    %1296 = vmatpush.msra.mxu0 %v421
    %1297 = vmatpush.msra.mxu0 %v415
    %1298 = vmatpush.msra.mxu0 %v409
    %1299 = vmatpush.msra.mxu0 %v403
    %1300 = vmatpush.msra.mxu0 %v397
    %1301 = vmatpush.msra.mxu0 %v391
    %1302 = vmatpush.msra.mxu0 %v385
    %1303 = vmatpush.msra.mxu0 %v379
    %1304 = vmatpush.msra.mxu0 %v373
    %1305 = vmatpush.msra.mxu0 %v367
    %1306 = vmatmul.f32.gmra.mxu0 %v1249
    %v1307 = vpop.f32.mrf.mxu0
    %v1308 = vadd.f32 0.0, %v1307
    %1309 = vdwg.mxu0
    %1310 = vmatpush.msra.mxu0 %v458
    %1311 = vmatpush.msra.mxu0 %v452
    %1312 = vmatpush.msra.mxu0 %v446
    %1313 = vmatpush.msra.mxu0 %v440
    %1314 = vmatpush.msra.mxu0 %v434
    %1315 = vmatpush.msra.mxu0 %v428
    %1316 = vmatpush.msra.mxu0 %v422
    %1317 = vmatpush.msra.mxu0 %v416
    %1318 = vmatpush.msra.mxu0 %v410
    %1319 = vmatpush.msra.mxu0 %v404
    %1320 = vmatpush.msra.mxu0 %v398
    %1321 = vmatpush.msra.mxu0 %v392
    %1322 = vmatpush.msra.mxu0 %v386
    %1323 = vmatpush.msra.mxu0 %v380
    %1324 = vmatpush.msra.mxu0 %v374
    %1325 = vmatpush.msra.mxu0 %v368
    %1326 = vmatmul.f32.gmra.mxu0 %v1249
    %v1327 = vpop.f32.mrf.mxu0
    %v1328 = vadd.f32 0.0, %v1327
    %1329 = vdwg.mxu0
    %1330 = vmatpush.msra.mxu0 %v459
    %1331 = vmatpush.msra.mxu0 %v453
    %1332 = vmatpush.msra.mxu0 %v447
    %1333 = vmatpush.msra.mxu0 %v441
    %1334 = vmatpush.msra.mxu0 %v435
    %1335 = vmatpush.msra.mxu0 %v429
    %1336 = vmatpush.msra.mxu0 %v423
    %1337 = vmatpush.msra.mxu0 %v417
    %1338 = vmatpush.msra.mxu0 %v411
    %1339 = vmatpush.msra.mxu0 %v405
    %1340 = vmatpush.msra.mxu0 %v399
    %1341 = vmatpush.msra.mxu0 %v393
    %1342 = vmatpush.msra.mxu0 %v387
    %1343 = vmatpush.msra.mxu0 %v381
    %1344 = vmatpush.msra.mxu0 %v375
    %1345 = vmatpush.msra.mxu0 %v369
    %1346 = vmatmul.f32.gmra.mxu0 %v1249
    %v1347 = vpop.f32.mrf.mxu0
    %v1348 = vadd.f32 0.0, %v1347
    %1349 = vdwg.mxu0
    %1350 = vmatpush.msra.mxu0 %v460
    %1351 = vmatpush.msra.mxu0 %v454
    %1352 = vmatpush.msra.mxu0 %v448
    %1353 = vmatpush.msra.mxu0 %v442
    %1354 = vmatpush.msra.mxu0 %v436
    %1355 = vmatpush.msra.mxu0 %v430
    %1356 = vmatpush.msra.mxu0 %v424
    %1357 = vmatpush.msra.mxu0 %v418
    %1358 = vmatpush.msra.mxu0 %v412
    %1359 = vmatpush.msra.mxu0 %v406
    %1360 = vmatpush.msra.mxu0 %v400
    %1361 = vmatpush.msra.mxu0 %v394
    %1362 = vmatpush.msra.mxu0 %v388
    %1363 = vmatpush.msra.mxu0 %v382
    %1364 = vmatpush.msra.mxu0 %v376
    %1365 = vmatpush.msra.mxu0 %v370
    %1366 = vmatmul.f32.gmra.mxu0 %v1249
    %v1367 = vpop.f32.mrf.mxu0
    %v1368 = vadd.f32 0.0, %v1367
    %1369 = vdwg.mxu0
    %s1370 = scalar_lea.vmem [#allocation2], 3
    %v1371 = vld [vmem:[%s1370] ss:$8 sm:$0x7]
    %s1372 = scalar_lea.vmem [#allocation2], 76
    %v1373 = vld [vmem:[%s1372] ss:$8 sm:$0x7]
    %v1374 = vadd.f32 %v1268, %v585
    %v1375 = vadd.f32 %v1288, %v586
    %v1376 = vadd.f32 %v1308, %v587
    %v1377 = vadd.f32 %v1371, %v1374
    %v1378 = vxor.u32 %v1377, 2147483648
    %v1379 = vmul.f32 %v1378, 1.442695
    %v1380 = vpow.pop %v1379
    %v1381 = vadd.f32 %v1380, 1.0
    %v1382 = vrcp.pop %v1381
    %v1383 = vmul.f32 %v1381, %v1382
    %v1384 = vsub.f32 1.0, %v1383
    %v1385 = vmul.f32 %v1382, %v1384
    %v1386 = vadd.f32 %v1382, %v1385
    %vm1387 = vweird.f32 %v1381
    %vm1388 = vweird.f32 %v1382
    %vm1389 = vmor %vm1387, %vm1388
    %v1390 = vsel %vm1389, %v1382, %v1386
    %v1391 = vand.u32 2147483647, %v1381
    %vm1392 = vcmp.eq.f32.partialorder %v1391, 8.507059e+37
    %v1393 = vand.u32 %v1381, 2147483648
    %v1394 = vor.u32 1.1754944e-38, %v1393
    %v1395 = vsel %vm1392, %v1394, %v1390
    %v1396 = vmul.f32 1.0, %v1395
    %v1398 = vrot.slane %v1371, 1
    %v1400 = vadd.f32 %v1398, %v1375
    %v1401 = vxor.u32 %v1400, 2147483648
    %v1402 = vmul.f32 %v1401, 1.442695
    %v1403 = vpow.pop %v1402
    %v1404 = vadd.f32 %v1403, 1.0
    %v1405 = vrcp.pop %v1404
    %v1406 = vmul.f32 %v1404, %v1405
    %v1407 = vsub.f32 1.0, %v1406
    %v1408 = vmul.f32 %v1405, %v1407
    %v1409 = vadd.f32 %v1405, %v1408
    %vm1410 = vweird.f32 %v1404
    %vm1411 = vweird.f32 %v1405
    %vm1412 = vmor %vm1410, %vm1411
    %v1413 = vsel %vm1412, %v1405, %v1409
    %v1414 = vand.u32 2147483647, %v1404
    %vm1415 = vcmp.eq.f32.partialorder %v1414, 8.507059e+37
    %v1416 = vand.u32 %v1404, 2147483648
    %v1417 = vor.u32 1.1754944e-38, %v1416
    %v1418 = vsel %vm1415, %v1417, %v1413
    %v1419 = vmul.f32 1.0, %v1418
    %v1420 = vmul.f32 %v1396, %v1376
    %v1421 = vrot.slane %v1371, 2
    %v1423 = vadd.f32 %v1421, %v1420
    %v1424 = vtanh.pop %v1423
    %v1425 = vsub.f32 1.0, %v1419
    %v1426 = vmul.f32 %v1425, %v1424
    %v1427 = vmul.f32 %v1419, %v1249
    %v1428 = vadd.f32 %v1426, %v1427
    %v1429 = vadd.f32 %v1328, %v647
    %v1430 = vadd.f32 %v1348, %v648
    %v1431 = vadd.f32 %v1368, %v649
    %1433 = vst [vmem:[#allocation1] sm:$0xff] %v1429
    %s1434 = scalar_lea.vmem [#allocation1], 1
    %v1435 = vld [vmem:[%s1434] ss:$9 sm:$0xff]
    %v1437 = vadd.f32 %v1373, %v1435
    %v1438 = vxor.u32 %v1437, 2147483648
    %v1439 = vmul.f32 %v1438, 1.442695
    %v1440 = vpow.pop %v1439
    %v1441 = vadd.f32 %v1440, 1.0
    %v1442 = vrcp.pop %v1441
    %v1443 = vmul.f32 %v1441, %v1442
    %v1444 = vsub.f32 1.0, %v1443
    %v1445 = vmul.f32 %v1442, %v1444
    %v1446 = vadd.f32 %v1442, %v1445
    %vm1447 = vweird.f32 %v1441
    %vm1448 = vweird.f32 %v1442
    %vm1449 = vmor %vm1447, %vm1448
    %v1450 = vsel %vm1449, %v1442, %v1446
    %v1451 = vand.u32 2147483647, %v1441
    %vm1452 = vcmp.eq.f32.partialorder %v1451, 8.507059e+37
    %v1453 = vand.u32 %v1441, 2147483648
    %v1454 = vor.u32 1.1754944e-38, %v1453
    %v1455 = vsel %vm1452, %v1454, %v1450
    %v1456 = vmul.f32 1.0, %v1455
    %v1458 = vrot.slane %v1373, 1
    %1461 = vst [vmem:[#allocation1] sm:$0xff] %v1430
    %s1462 = scalar_lea.vmem [#allocation1], 1
    %v1463 = vld [vmem:[%s1462] ss:$9 sm:$0xff]
    %v1465 = vadd.f32 %v1458, %v1463
    %v1466 = vxor.u32 %v1465, 2147483648
    %v1467 = vmul.f32 %v1466, 1.442695
    %v1468 = vpow.pop %v1467
    %v1469 = vadd.f32 %v1468, 1.0
    %v1470 = vrcp.pop %v1469
    %v1471 = vmul.f32 %v1469, %v1470
    %v1472 = vsub.f32 1.0, %v1471
    %v1473 = vmul.f32 %v1470, %v1472
    %v1474 = vadd.f32 %v1470, %v1473
    %vm1475 = vweird.f32 %v1469
    %vm1476 = vweird.f32 %v1470
    %vm1477 = vmor %vm1475, %vm1476
    %v1478 = vsel %vm1477, %v1470, %v1474
    %v1479 = vand.u32 2147483647, %v1469
    %vm1480 = vcmp.eq.f32.partialorder %v1479, 8.507059e+37
    %v1481 = vand.u32 %v1469, 2147483648
    %v1482 = vor.u32 1.1754944e-38, %v1481
    %v1483 = vsel %vm1480, %v1482, %v1478
    %v1484 = vmul.f32 1.0, %v1483
    %1486 = vst [vmem:[#allocation1] sm:$0xff] %v1431
    %s1487 = scalar_lea.vmem [#allocation1], 1
    %v1488 = vld [vmem:[%s1487] ss:$9 sm:$0xff]
    %v1490 = vmul.f32 %v1456, %v1488
    %v1491 = vrot.slane %v1373, 2
    %v1493 = vadd.f32 %v1491, %v1490
    %v1494 = vtanh.pop %v1493
    %v1495 = vsub.f32 1.0, %v1484
    %v1496 = vmul.f32 %v1495, %v1494
    %1498 = vst [vmem:[#allocation1] sm:$0xff] %v1249
    %s1499 = scalar_lea.vmem [#allocation1], 1
    %v1500 = vld [vmem:[%s1499] ss:$9 sm:$0xff]
    %v1502 = vmul.f32 %v1484, %v1500
    %v1503 = vadd.f32 %v1496, %v1502
    %1504 = vst [vmem:[#allocation3 + $0x3] sm:$0x1] %v1428
    %1505 = vst [vmem:[#allocation3 + $0x1c] sm:$0x1] %v1503
    %v1507 = vperm.slane %v1503, 0
    %v1509 = vsel %vm728, %v1428, %v1507
    %1510 = vmatpush.msra.mxu0 %v455
    %1511 = vmatpush.msra.mxu0 %v449
    %1512 = vmatpush.msra.mxu0 %v443
    %1513 = vmatpush.msra.mxu0 %v437
    %1514 = vmatpush.msra.mxu0 %v431
    %1515 = vmatpush.msra.mxu0 %v425
    %1516 = vmatpush.msra.mxu0 %v419
    %1517 = vmatpush.msra.mxu0 %v413
    %1518 = vmatpush.msra.mxu0 %v407
    %1519 = vmatpush.msra.mxu0 %v401
    %1520 = vmatpush.msra.mxu0 %v395
    %1521 = vmatpush.msra.mxu0 %v389
    %1522 = vmatpush.msra.mxu0 %v383
    %1523 = vmatpush.msra.mxu0 %v377
    %1524 = vmatpush.msra.mxu0 %v371
    %1525 = vmatpush.msra.mxu0 %v365
    %1526 = vmatmul.f32.gmra.mxu0 %v1509
    %v1527 = vpop.f32.mrf.mxu0
    %v1528 = vadd.f32 0.0, %v1527
    %1529 = vdwg.mxu0
    %1530 = vmatpush.msra.mxu0 %v456
    %1531 = vmatpush.msra.mxu0 %v450
    %1532 = vmatpush.msra.mxu0 %v444
    %1533 = vmatpush.msra.mxu0 %v438
    %1534 = vmatpush.msra.mxu0 %v432
    %1535 = vmatpush.msra.mxu0 %v426
    %1536 = vmatpush.msra.mxu0 %v420
    %1537 = vmatpush.msra.mxu0 %v414
    %1538 = vmatpush.msra.mxu0 %v408
    %1539 = vmatpush.msra.mxu0 %v402
    %1540 = vmatpush.msra.mxu0 %v396
    %1541 = vmatpush.msra.mxu0 %v390
    %1542 = vmatpush.msra.mxu0 %v384
    %1543 = vmatpush.msra.mxu0 %v378
    %1544 = vmatpush.msra.mxu0 %v372
    %1545 = vmatpush.msra.mxu0 %v366
    %1546 = vmatmul.f32.gmra.mxu0 %v1509
    %v1547 = vpop.f32.mrf.mxu0
    %v1548 = vadd.f32 0.0, %v1547
    %1549 = vdwg.mxu0
    %1550 = vmatpush.msra.mxu0 %v457
    %1551 = vmatpush.msra.mxu0 %v451
    %1552 = vmatpush.msra.mxu0 %v445
    %1553 = vmatpush.msra.mxu0 %v439
    %1554 = vmatpush.msra.mxu0 %v433
    %1555 = vmatpush.msra.mxu0 %v427
    %1556 = vmatpush.msra.mxu0 %v421
    %1557 = vmatpush.msra.mxu0 %v415
    %1558 = vmatpush.msra.mxu0 %v409
    %1559 = vmatpush.msra.mxu0 %v403
    %1560 = vmatpush.msra.mxu0 %v397
    %1561 = vmatpush.msra.mxu0 %v391
    %1562 = vmatpush.msra.mxu0 %v385
    %1563 = vmatpush.msra.mxu0 %v379
    %1564 = vmatpush.msra.mxu0 %v373
    %1565 = vmatpush.msra.mxu0 %v367
    %1566 = vmatmul.f32.gmra.mxu0 %v1509
    %v1567 = vpop.f32.mrf.mxu0
    %v1568 = vadd.f32 0.0, %v1567
    %1569 = vdwg.mxu0
    %1570 = vmatpush.msra.mxu0 %v458
    %1571 = vmatpush.msra.mxu0 %v452
    %1572 = vmatpush.msra.mxu0 %v446
    %1573 = vmatpush.msra.mxu0 %v440
    %1574 = vmatpush.msra.mxu0 %v434
    %1575 = vmatpush.msra.mxu0 %v428
    %1576 = vmatpush.msra.mxu0 %v422
    %1577 = vmatpush.msra.mxu0 %v416
    %1578 = vmatpush.msra.mxu0 %v410
    %1579 = vmatpush.msra.mxu0 %v404
    %1580 = vmatpush.msra.mxu0 %v398
    %1581 = vmatpush.msra.mxu0 %v392
    %1582 = vmatpush.msra.mxu0 %v386
    %1583 = vmatpush.msra.mxu0 %v380
    %1584 = vmatpush.msra.mxu0 %v374
    %1585 = vmatpush.msra.mxu0 %v368
    %1586 = vmatmul.f32.gmra.mxu0 %v1509
    %v1587 = vpop.f32.mrf.mxu0
    %v1588 = vadd.f32 0.0, %v1587
    %1589 = vdwg.mxu0
    %1590 = vmatpush.msra.mxu0 %v459
    %1591 = vmatpush.msra.mxu0 %v453
    %1592 = vmatpush.msra.mxu0 %v447
    %1593 = vmatpush.msra.mxu0 %v441
    %1594 = vmatpush.msra.mxu0 %v435
    %1595 = vmatpush.msra.mxu0 %v429
    %1596 = vmatpush.msra.mxu0 %v423
    %1597 = vmatpush.msra.mxu0 %v417
    %1598 = vmatpush.msra.mxu0 %v411
    %1599 = vmatpush.msra.mxu0 %v405
    %1600 = vmatpush.msra.mxu0 %v399
    %1601 = vmatpush.msra.mxu0 %v393
    %1602 = vmatpush.msra.mxu0 %v387
    %1603 = vmatpush.msra.mxu0 %v381
    %1604 = vmatpush.msra.mxu0 %v375
    %1605 = vmatpush.msra.mxu0 %v369
    %1606 = vmatmul.f32.gmra.mxu0 %v1509
    %v1607 = vpop.f32.mrf.mxu0
    %v1608 = vadd.f32 0.0, %v1607
    %1609 = vdwg.mxu0
    %1610 = vmatpush.msra.mxu0 %v460
    %1611 = vmatpush.msra.mxu0 %v454
    %1612 = vmatpush.msra.mxu0 %v448
    %1613 = vmatpush.msra.mxu0 %v442
    %1614 = vmatpush.msra.mxu0 %v436
    %1615 = vmatpush.msra.mxu0 %v430
    %1616 = vmatpush.msra.mxu0 %v424
    %1617 = vmatpush.msra.mxu0 %v418
    %1618 = vmatpush.msra.mxu0 %v412
    %1619 = vmatpush.msra.mxu0 %v406
    %1620 = vmatpush.msra.mxu0 %v400
    %1621 = vmatpush.msra.mxu0 %v394
    %1622 = vmatpush.msra.mxu0 %v388
    %1623 = vmatpush.msra.mxu0 %v382
    %1624 = vmatpush.msra.mxu0 %v376
    %1625 = vmatpush.msra.mxu0 %v370
    %1626 = vmatmul.f32.gmra.mxu0 %v1509
    %v1627 = vpop.f32.mrf.mxu0
    %v1628 = vadd.f32 0.0, %v1627
    %1629 = vdwg.mxu0
    %s1630 = scalar_lea.vmem [#allocation2], 4
    %v1631 = vld [vmem:[%s1630] ss:$8 sm:$0x7]
    %s1632 = scalar_lea.vmem [#allocation2], 75
    %v1633 = vld [vmem:[%s1632] ss:$8 sm:$0x7]
    %v1634 = vadd.f32 %v1528, %v585
    %v1635 = vadd.f32 %v1548, %v586
    %v1636 = vadd.f32 %v1568, %v587
    %v1637 = vadd.f32 %v1631, %v1634
    %v1638 = vxor.u32 %v1637, 2147483648
    %v1639 = vmul.f32 %v1638, 1.442695
    %v1640 = vpow.pop %v1639
    %v1641 = vadd.f32 %v1640, 1.0
    %v1642 = vrcp.pop %v1641
    %v1643 = vmul.f32 %v1641, %v1642
    %v1644 = vsub.f32 1.0, %v1643
    %v1645 = vmul.f32 %v1642, %v1644
    %v1646 = vadd.f32 %v1642, %v1645
    %vm1647 = vweird.f32 %v1641
    %vm1648 = vweird.f32 %v1642
    %vm1649 = vmor %vm1647, %vm1648
    %v1650 = vsel %vm1649, %v1642, %v1646
    %v1651 = vand.u32 2147483647, %v1641
    %vm1652 = vcmp.eq.f32.partialorder %v1651, 8.507059e+37
    %v1653 = vand.u32 %v1641, 2147483648
    %v1654 = vor.u32 1.1754944e-38, %v1653
    %v1655 = vsel %vm1652, %v1654, %v1650
    %v1656 = vmul.f32 1.0, %v1655
    %v1658 = vrot.slane %v1631, 1
    %v1660 = vadd.f32 %v1658, %v1635
    %v1661 = vxor.u32 %v1660, 2147483648
    %v1662 = vmul.f32 %v1661, 1.442695
    %v1663 = vpow.pop %v1662
    %v1664 = vadd.f32 %v1663, 1.0
    %v1665 = vrcp.pop %v1664
    %v1666 = vmul.f32 %v1664, %v1665
    %v1667 = vsub.f32 1.0, %v1666
    %v1668 = vmul.f32 %v1665, %v1667
    %v1669 = vadd.f32 %v1665, %v1668
    %vm1670 = vweird.f32 %v1664
    %vm1671 = vweird.f32 %v1665
    %vm1672 = vmor %vm1670, %vm1671
    %v1673 = vsel %vm1672, %v1665, %v1669
    %v1674 = vand.u32 2147483647, %v1664
    %vm1675 = vcmp.eq.f32.partialorder %v1674, 8.507059e+37
    %v1676 = vand.u32 %v1664, 2147483648
    %v1677 = vor.u32 1.1754944e-38, %v1676
    %v1678 = vsel %vm1675, %v1677, %v1673
    %v1679 = vmul.f32 1.0, %v1678
    %v1680 = vmul.f32 %v1656, %v1636
    %v1681 = vrot.slane %v1631, 2
    %v1683 = vadd.f32 %v1681, %v1680
    %v1684 = vtanh.pop %v1683
    %v1685 = vsub.f32 1.0, %v1679
    %v1686 = vmul.f32 %v1685, %v1684
    %v1687 = vmul.f32 %v1679, %v1509
    %v1688 = vadd.f32 %v1686, %v1687
    %v1689 = vadd.f32 %v1588, %v647
    %v1690 = vadd.f32 %v1608, %v648
    %v1691 = vadd.f32 %v1628, %v649
    %1693 = vst [vmem:[#allocation1] sm:$0xff] %v1689
    %s1694 = scalar_lea.vmem [#allocation1], 1
    %v1695 = vld [vmem:[%s1694] ss:$9 sm:$0xff]
    %v1697 = vadd.f32 %v1633, %v1695
    %v1698 = vxor.u32 %v1697, 2147483648
    %v1699 = vmul.f32 %v1698, 1.442695
    %v1700 = vpow.pop %v1699
    %v1701 = vadd.f32 %v1700, 1.0
    %v1702 = vrcp.pop %v1701
    %v1703 = vmul.f32 %v1701, %v1702
    %v1704 = vsub.f32 1.0, %v1703
    %v1705 = vmul.f32 %v1702, %v1704
    %v1706 = vadd.f32 %v1702, %v1705
    %vm1707 = vweird.f32 %v1701
    %vm1708 = vweird.f32 %v1702
    %vm1709 = vmor %vm1707, %vm1708
    %v1710 = vsel %vm1709, %v1702, %v1706
    %v1711 = vand.u32 2147483647, %v1701
    %vm1712 = vcmp.eq.f32.partialorder %v1711, 8.507059e+37
    %v1713 = vand.u32 %v1701, 2147483648
    %v1714 = vor.u32 1.1754944e-38, %v1713
    %v1715 = vsel %vm1712, %v1714, %v1710
    %v1716 = vmul.f32 1.0, %v1715
    %v1718 = vrot.slane %v1633, 1
    %1721 = vst [vmem:[#allocation1] sm:$0xff] %v1690
    %s1722 = scalar_lea.vmem [#allocation1], 1
    %v1723 = vld [vmem:[%s1722] ss:$9 sm:$0xff]
    %v1725 = vadd.f32 %v1718, %v1723
    %v1726 = vxor.u32 %v1725, 2147483648
    %v1727 = vmul.f32 %v1726, 1.442695
    %v1728 = vpow.pop %v1727
    %v1729 = vadd.f32 %v1728, 1.0
    %v1730 = vrcp.pop %v1729
    %v1731 = vmul.f32 %v1729, %v1730
    %v1732 = vsub.f32 1.0, %v1731
    %v1733 = vmul.f32 %v1730, %v1732
    %v1734 = vadd.f32 %v1730, %v1733
    %vm1735 = vweird.f32 %v1729
    %vm1736 = vweird.f32 %v1730
    %vm1737 = vmor %vm1735, %vm1736
    %v1738 = vsel %vm1737, %v1730, %v1734
    %v1739 = vand.u32 2147483647, %v1729
    %vm1740 = vcmp.eq.f32.partialorder %v1739, 8.507059e+37
    %v1741 = vand.u32 %v1729, 2147483648
    %v1742 = vor.u32 1.1754944e-38, %v1741
    %v1743 = vsel %vm1740, %v1742, %v1738
    %v1744 = vmul.f32 1.0, %v1743
    %1746 = vst [vmem:[#allocation1] sm:$0xff] %v1691
    %s1747 = scalar_lea.vmem [#allocation1], 1
    %v1748 = vld [vmem:[%s1747] ss:$9 sm:$0xff]
    %v1750 = vmul.f32 %v1716, %v1748
    %v1751 = vrot.slane %v1633, 2
    %v1753 = vadd.f32 %v1751, %v1750
    %v1754 = vtanh.pop %v1753
    %v1755 = vsub.f32 1.0, %v1744
    %v1756 = vmul.f32 %v1755, %v1754
    %1758 = vst [vmem:[#allocation1] sm:$0xff] %v1509
    %s1759 = scalar_lea.vmem [#allocation1], 1
    %v1760 = vld [vmem:[%s1759] ss:$9 sm:$0xff]
    %v1762 = vmul.f32 %v1744, %v1760
    %v1763 = vadd.f32 %v1756, %v1762
    %1764 = vst [vmem:[#allocation3 + $0x4] sm:$0x1] %v1688
    %1765 = vst [vmem:[#allocation3 + $0x1b] sm:$0x1] %v1763
    %v1767 = vperm.slane %v1763, 0
    %v1769 = vsel %vm728, %v1688, %v1767
    %1770 = vmatpush.msra.mxu0 %v455
    %1771 = vmatpush.msra.mxu0 %v449
    %1772 = vmatpush.msra.mxu0 %v443
    %1773 = vmatpush.msra.mxu0 %v437
    %1774 = vmatpush.msra.mxu0 %v431
    %1775 = vmatpush.msra.mxu0 %v425
    %1776 = vmatpush.msra.mxu0 %v419
    %1777 = vmatpush.msra.mxu0 %v413
    %1778 = vmatpush.msra.mxu0 %v407
    %1779 = vmatpush.msra.mxu0 %v401
    %1780 = vmatpush.msra.mxu0 %v395
    %1781 = vmatpush.msra.mxu0 %v389
    %1782 = vmatpush.msra.mxu0 %v383
    %1783 = vmatpush.msra.mxu0 %v377
    %1784 = vmatpush.msra.mxu0 %v371
    %1785 = vmatpush.msra.mxu0 %v365
    %1786 = vmatmul.f32.gmra.mxu0 %v1769
    %v1787 = vpop.f32.mrf.mxu0
    %v1788 = vadd.f32 0.0, %v1787
    %1789 = vdwg.mxu0
    %1790 = vmatpush.msra.mxu0 %v456
    %1791 = vmatpush.msra.mxu0 %v450
    %1792 = vmatpush.msra.mxu0 %v444
    %1793 = vmatpush.msra.mxu0 %v438
    %1794 = vmatpush.msra.mxu0 %v432
    %1795 = vmatpush.msra.mxu0 %v426
    %1796 = vmatpush.msra.mxu0 %v420
    %1797 = vmatpush.msra.mxu0 %v414
    %1798 = vmatpush.msra.mxu0 %v408
    %1799 = vmatpush.msra.mxu0 %v402
    %1800 = vmatpush.msra.mxu0 %v396
    %1801 = vmatpush.msra.mxu0 %v390
    %1802 = vmatpush.msra.mxu0 %v384
    %1803 = vmatpush.msra.mxu0 %v378
    %1804 = vmatpush.msra.mxu0 %v372
    %1805 = vmatpush.msra.mxu0 %v366
    %1806 = vmatmul.f32.gmra.mxu0 %v1769
    %v1807 = vpop.f32.mrf.mxu0
    %v1808 = vadd.f32 0.0, %v1807
    %1809 = vdwg.mxu0
    %1810 = vmatpush.msra.mxu0 %v457
    %1811 = vmatpush.msra.mxu0 %v451
    %1812 = vmatpush.msra.mxu0 %v445
    %1813 = vmatpush.msra.mxu0 %v439
    %1814 = vmatpush.msra.mxu0 %v433
    %1815 = vmatpush.msra.mxu0 %v427
    %1816 = vmatpush.msra.mxu0 %v421
    %1817 = vmatpush.msra.mxu0 %v415
    %1818 = vmatpush.msra.mxu0 %v409
    %1819 = vmatpush.msra.mxu0 %v403
    %1820 = vmatpush.msra.mxu0 %v397
    %1821 = vmatpush.msra.mxu0 %v391
    %1822 = vmatpush.msra.mxu0 %v385
    %1823 = vmatpush.msra.mxu0 %v379
    %1824 = vmatpush.msra.mxu0 %v373
    %1825 = vmatpush.msra.mxu0 %v367
    %1826 = vmatmul.f32.gmra.mxu0 %v1769
    %v1827 = vpop.f32.mrf.mxu0
    %v1828 = vadd.f32 0.0, %v1827
    %1829 = vdwg.mxu0
    %1830 = vmatpush.msra.mxu0 %v458
    %1831 = vmatpush.msra.mxu0 %v452
    %1832 = vmatpush.msra.mxu0 %v446
    %1833 = vmatpush.msra.mxu0 %v440
    %1834 = vmatpush.msra.mxu0 %v434
    %1835 = vmatpush.msra.mxu0 %v428
    %1836 = vmatpush.msra.mxu0 %v422
    %1837 = vmatpush.msra.mxu0 %v416
    %1838 = vmatpush.msra.mxu0 %v410
    %1839 = vmatpush.msra.mxu0 %v404
    %1840 = vmatpush.msra.mxu0 %v398
    %1841 = vmatpush.msra.mxu0 %v392
    %1842 = vmatpush.msra.mxu0 %v386
    %1843 = vmatpush.msra.mxu0 %v380
    %1844 = vmatpush.msra.mxu0 %v374
    %1845 = vmatpush.msra.mxu0 %v368
    %1846 = vmatmul.f32.gmra.mxu0 %v1769
    %v1847 = vpop.f32.mrf.mxu0
    %v1848 = vadd.f32 0.0, %v1847
    %1849 = vdwg.mxu0
    %1850 = vmatpush.msra.mxu0 %v459
    %1851 = vmatpush.msra.mxu0 %v453
    %1852 = vmatpush.msra.mxu0 %v447
    %1853 = vmatpush.msra.mxu0 %v441
    %1854 = vmatpush.msra.mxu0 %v435
    %1855 = vmatpush.msra.mxu0 %v429
    %1856 = vmatpush.msra.mxu0 %v423
    %1857 = vmatpush.msra.mxu0 %v417
    %1858 = vmatpush.msra.mxu0 %v411
    %1859 = vmatpush.msra.mxu0 %v405
    %1860 = vmatpush.msra.mxu0 %v399
    %1861 = vmatpush.msra.mxu0 %v393
    %1862 = vmatpush.msra.mxu0 %v387
    %1863 = vmatpush.msra.mxu0 %v381
    %1864 = vmatpush.msra.mxu0 %v375
    %1865 = vmatpush.msra.mxu0 %v369
    %1866 = vmatmul.f32.gmra.mxu0 %v1769
    %v1867 = vpop.f32.mrf.mxu0
    %v1868 = vadd.f32 0.0, %v1867
    %1869 = vdwg.mxu0
    %1870 = vmatpush.msra.mxu0 %v460
    %1871 = vmatpush.msra.mxu0 %v454
    %1872 = vmatpush.msra.mxu0 %v448
    %1873 = vmatpush.msra.mxu0 %v442
    %1874 = vmatpush.msra.mxu0 %v436
    %1875 = vmatpush.msra.mxu0 %v430
    %1876 = vmatpush.msra.mxu0 %v424
    %1877 = vmatpush.msra.mxu0 %v418
    %1878 = vmatpush.msra.mxu0 %v412
    %1879 = vmatpush.msra.mxu0 %v406
    %1880 = vmatpush.msra.mxu0 %v400
    %1881 = vmatpush.msra.mxu0 %v394
    %1882 = vmatpush.msra.mxu0 %v388
    %1883 = vmatpush.msra.mxu0 %v382
    %1884 = vmatpush.msra.mxu0 %v376
    %1885 = vmatpush.msra.mxu0 %v370
    %1886 = vmatmul.f32.gmra.mxu0 %v1769
    %v1887 = vpop.f32.mrf.mxu0
    %v1888 = vadd.f32 0.0, %v1887
    %1889 = vdwg.mxu0
    %s1890 = scalar_lea.vmem [#allocation2], 5
    %v1891 = vld [vmem:[%s1890] ss:$8 sm:$0x7]
    %s1892 = scalar_lea.vmem [#allocation2], 74
    %v1893 = vld [vmem:[%s1892] ss:$8 sm:$0x7]
    %v1894 = vadd.f32 %v1788, %v585
    %v1895 = vadd.f32 %v1808, %v586
    %v1896 = vadd.f32 %v1828, %v587
    %v1897 = vadd.f32 %v1891, %v1894
    %v1898 = vxor.u32 %v1897, 2147483648
    %v1899 = vmul.f32 %v1898, 1.442695
    %v1900 = vpow.pop %v1899
    %v1901 = vadd.f32 %v1900, 1.0
    %v1902 = vrcp.pop %v1901
    %v1903 = vmul.f32 %v1901, %v1902
    %v1904 = vsub.f32 1.0, %v1903
    %v1905 = vmul.f32 %v1902, %v1904
    %v1906 = vadd.f32 %v1902, %v1905
    %vm1907 = vweird.f32 %v1901
    %vm1908 = vweird.f32 %v1902
    %vm1909 = vmor %vm1907, %vm1908
    %v1910 = vsel %vm1909, %v1902, %v1906
    %v1911 = vand.u32 2147483647, %v1901
    %vm1912 = vcmp.eq.f32.partialorder %v1911, 8.507059e+37
    %v1913 = vand.u32 %v1901, 2147483648
    %v1914 = vor.u32 1.1754944e-38, %v1913
    %v1915 = vsel %vm1912, %v1914, %v1910
    %v1916 = vmul.f32 1.0, %v1915
    %v1918 = vrot.slane %v1891, 1
    %v1920 = vadd.f32 %v1918, %v1895
    %v1921 = vxor.u32 %v1920, 2147483648
    %v1922 = vmul.f32 %v1921, 1.442695
    %v1923 = vpow.pop %v1922
    %v1924 = vadd.f32 %v1923, 1.0
    %v1925 = vrcp.pop %v1924
    %v1926 = vmul.f32 %v1924, %v1925
    %v1927 = vsub.f32 1.0, %v1926
    %v1928 = vmul.f32 %v1925, %v1927
    %v1929 = vadd.f32 %v1925, %v1928
    %vm1930 = vweird.f32 %v1924
    %vm1931 = vweird.f32 %v1925
    %vm1932 = vmor %vm1930, %vm1931
    %v1933 = vsel %vm1932, %v1925, %v1929
    %v1934 = vand.u32 2147483647, %v1924
    %vm1935 = vcmp.eq.f32.partialorder %v1934, 8.507059e+37
    %v1936 = vand.u32 %v1924, 2147483648
    %v1937 = vor.u32 1.1754944e-38, %v1936
    %v1938 = vsel %vm1935, %v1937, %v1933
    %v1939 = vmul.f32 1.0, %v1938
    %v1940 = vmul.f32 %v1916, %v1896
    %v1941 = vrot.slane %v1891, 2
    %v1943 = vadd.f32 %v1941, %v1940
    %v1944 = vtanh.pop %v1943
    %v1945 = vsub.f32 1.0, %v1939
    %v1946 = vmul.f32 %v1945, %v1944
    %v1947 = vmul.f32 %v1939, %v1769
    %v1948 = vadd.f32 %v1946, %v1947
    %v1949 = vadd.f32 %v1848, %v647
    %v1950 = vadd.f32 %v1868, %v648
    %v1951 = vadd.f32 %v1888, %v649
    %1953 = vst [vmem:[#allocation1] sm:$0xff] %v1949
    %s1954 = scalar_lea.vmem [#allocation1], 1
    %v1955 = vld [vmem:[%s1954] ss:$9 sm:$0xff]
    %v1957 = vadd.f32 %v1893, %v1955
    %v1958 = vxor.u32 %v1957, 2147483648
    %v1959 = vmul.f32 %v1958, 1.442695
    %v1960 = vpow.pop %v1959
    %v1961 = vadd.f32 %v1960, 1.0
    %v1962 = vrcp.pop %v1961
    %v1963 = vmul.f32 %v1961, %v1962
    %v1964 = vsub.f32 1.0, %v1963
    %v1965 = vmul.f32 %v1962, %v1964
    %v1966 = vadd.f32 %v1962, %v1965
    %vm1967 = vweird.f32 %v1961
    %vm1968 = vweird.f32 %v1962
    %vm1969 = vmor %vm1967, %vm1968
    %v1970 = vsel %vm1969, %v1962, %v1966
    %v1971 = vand.u32 2147483647, %v1961
    %vm1972 = vcmp.eq.f32.partialorder %v1971, 8.507059e+37
    %v1973 = vand.u32 %v1961, 2147483648
    %v1974 = vor.u32 1.1754944e-38, %v1973
    %v1975 = vsel %vm1972, %v1974, %v1970
    %v1976 = vmul.f32 1.0, %v1975
    %v1978 = vrot.slane %v1893, 1
    %1981 = vst [vmem:[#allocation1] sm:$0xff] %v1950
    %s1982 = scalar_lea.vmem [#allocation1], 1
    %v1983 = vld [vmem:[%s1982] ss:$9 sm:$0xff]
    %v1985 = vadd.f32 %v1978, %v1983
    %v1986 = vxor.u32 %v1985, 2147483648
    %v1987 = vmul.f32 %v1986, 1.442695
    %v1988 = vpow.pop %v1987
    %v1989 = vadd.f32 %v1988, 1.0
    %v1990 = vrcp.pop %v1989
    %v1991 = vmul.f32 %v1989, %v1990
    %v1992 = vsub.f32 1.0, %v1991
    %v1993 = vmul.f32 %v1990, %v1992
    %v1994 = vadd.f32 %v1990, %v1993
    %vm1995 = vweird.f32 %v1989
    %vm1996 = vweird.f32 %v1990
    %vm1997 = vmor %vm1995, %vm1996
    %v1998 = vsel %vm1997, %v1990, %v1994
    %v1999 = vand.u32 2147483647, %v1989
    %vm2000 = vcmp.eq.f32.partialorder %v1999, 8.507059e+37
    %v2001 = vand.u32 %v1989, 2147483648
    %v2002 = vor.u32 1.1754944e-38, %v2001
    %v2003 = vsel %vm2000, %v2002, %v1998
    %v2004 = vmul.f32 1.0, %v2003
    %2006 = vst [vmem:[#allocation1] sm:$0xff] %v1951
    %s2007 = scalar_lea.vmem [#allocation1], 1
    %v2008 = vld [vmem:[%s2007] ss:$9 sm:$0xff]
    %v2010 = vmul.f32 %v1976, %v2008
    %v2011 = vrot.slane %v1893, 2
    %v2013 = vadd.f32 %v2011, %v2010
    %v2014 = vtanh.pop %v2013
    %v2015 = vsub.f32 1.0, %v2004
    %v2016 = vmul.f32 %v2015, %v2014
    %2018 = vst [vmem:[#allocation1] sm:$0xff] %v1769
    %s2019 = scalar_lea.vmem [#allocation1], 1
    %v2020 = vld [vmem:[%s2019] ss:$9 sm:$0xff]
    %v2022 = vmul.f32 %v2004, %v2020
    %v2023 = vadd.f32 %v2016, %v2022
    %2024 = vst [vmem:[#allocation3 + $0x5] sm:$0x1] %v1948
    %2025 = vst [vmem:[#allocation3 + $0x1a] sm:$0x1] %v2023
    %v2027 = vperm.slane %v2023, 0
    %v2029 = vsel %vm728, %v1948, %v2027
    %2030 = vmatpush.msra.mxu0 %v455
    %2031 = vmatpush.msra.mxu0 %v449
    %2032 = vmatpush.msra.mxu0 %v443
    %2033 = vmatpush.msra.mxu0 %v437
    %2034 = vmatpush.msra.mxu0 %v431
    %2035 = vmatpush.msra.mxu0 %v425
    %2036 = vmatpush.msra.mxu0 %v419
    %2037 = vmatpush.msra.mxu0 %v413
    %2038 = vmatpush.msra.mxu0 %v407
    %2039 = vmatpush.msra.mxu0 %v401
    %2040 = vmatpush.msra.mxu0 %v395
    %2041 = vmatpush.msra.mxu0 %v389
    %2042 = vmatpush.msra.mxu0 %v383
    %2043 = vmatpush.msra.mxu0 %v377
    %2044 = vmatpush.msra.mxu0 %v371
    %2045 = vmatpush.msra.mxu0 %v365
    %2046 = vmatmul.f32.gmra.mxu0 %v2029
    %v2047 = vpop.f32.mrf.mxu0
    %v2048 = vadd.f32 0.0, %v2047
    %2049 = vdwg.mxu0
    %2050 = vmatpush.msra.mxu0 %v456
    %2051 = vmatpush.msra.mxu0 %v450
    %2052 = vmatpush.msra.mxu0 %v444
    %2053 = vmatpush.msra.mxu0 %v438
    %2054 = vmatpush.msra.mxu0 %v432
    %2055 = vmatpush.msra.mxu0 %v426
    %2056 = vmatpush.msra.mxu0 %v420
    %2057 = vmatpush.msra.mxu0 %v414
    %2058 = vmatpush.msra.mxu0 %v408
    %2059 = vmatpush.msra.mxu0 %v402
    %2060 = vmatpush.msra.mxu0 %v396
    %2061 = vmatpush.msra.mxu0 %v390
    %2062 = vmatpush.msra.mxu0 %v384
    %2063 = vmatpush.msra.mxu0 %v378
    %2064 = vmatpush.msra.mxu0 %v372
    %2065 = vmatpush.msra.mxu0 %v366
    %2066 = vmatmul.f32.gmra.mxu0 %v2029
    %v2067 = vpop.f32.mrf.mxu0
    %v2068 = vadd.f32 0.0, %v2067
    %2069 = vdwg.mxu0
    %2070 = vmatpush.msra.mxu0 %v457
    %2071 = vmatpush.msra.mxu0 %v451
    %2072 = vmatpush.msra.mxu0 %v445
    %2073 = vmatpush.msra.mxu0 %v439
    %2074 = vmatpush.msra.mxu0 %v433
    %2075 = vmatpush.msra.mxu0 %v427
    %2076 = vmatpush.msra.mxu0 %v421
    %2077 = vmatpush.msra.mxu0 %v415
    %2078 = vmatpush.msra.mxu0 %v409
    %2079 = vmatpush.msra.mxu0 %v403
    %2080 = vmatpush.msra.mxu0 %v397
    %2081 = vmatpush.msra.mxu0 %v391
    %2082 = vmatpush.msra.mxu0 %v385
    %2083 = vmatpush.msra.mxu0 %v379
    %2084 = vmatpush.msra.mxu0 %v373
    %2085 = vmatpush.msra.mxu0 %v367
    %2086 = vmatmul.f32.gmra.mxu0 %v2029
    %v2087 = vpop.f32.mrf.mxu0
    %v2088 = vadd.f32 0.0, %v2087
    %2089 = vdwg.mxu0
    %2090 = vmatpush.msra.mxu0 %v458
    %2091 = vmatpush.msra.mxu0 %v452
    %2092 = vmatpush.msra.mxu0 %v446
    %2093 = vmatpush.msra.mxu0 %v440
    %2094 = vmatpush.msra.mxu0 %v434
    %2095 = vmatpush.msra.mxu0 %v428
    %2096 = vmatpush.msra.mxu0 %v422
    %2097 = vmatpush.msra.mxu0 %v416
    %2098 = vmatpush.msra.mxu0 %v410
    %2099 = vmatpush.msra.mxu0 %v404
    %2100 = vmatpush.msra.mxu0 %v398
    %2101 = vmatpush.msra.mxu0 %v392
    %2102 = vmatpush.msra.mxu0 %v386
    %2103 = vmatpush.msra.mxu0 %v380
    %2104 = vmatpush.msra.mxu0 %v374
    %2105 = vmatpush.msra.mxu0 %v368
    %2106 = vmatmul.f32.gmra.mxu0 %v2029
    %v2107 = vpop.f32.mrf.mxu0
    %v2108 = vadd.f32 0.0, %v2107
    %2109 = vdwg.mxu0
    %2110 = vmatpush.msra.mxu0 %v459
    %2111 = vmatpush.msra.mxu0 %v453
    %2112 = vmatpush.msra.mxu0 %v447
    %2113 = vmatpush.msra.mxu0 %v441
    %2114 = vmatpush.msra.mxu0 %v435
    %2115 = vmatpush.msra.mxu0 %v429
    %2116 = vmatpush.msra.mxu0 %v423
    %2117 = vmatpush.msra.mxu0 %v417
    %2118 = vmatpush.msra.mxu0 %v411
    %2119 = vmatpush.msra.mxu0 %v405
    %2120 = vmatpush.msra.mxu0 %v399
    %2121 = vmatpush.msra.mxu0 %v393
    %2122 = vmatpush.msra.mxu0 %v387
    %2123 = vmatpush.msra.mxu0 %v381
    %2124 = vmatpush.msra.mxu0 %v375
    %2125 = vmatpush.msra.mxu0 %v369
    %2126 = vmatmul.f32.gmra.mxu0 %v2029
    %v2127 = vpop.f32.mrf.mxu0
    %v2128 = vadd.f32 0.0, %v2127
    %2129 = vdwg.mxu0
    %2130 = vmatpush.msra.mxu0 %v460
    %2131 = vmatpush.msra.mxu0 %v454
    %2132 = vmatpush.msra.mxu0 %v448
    %2133 = vmatpush.msra.mxu0 %v442
    %2134 = vmatpush.msra.mxu0 %v436
    %2135 = vmatpush.msra.mxu0 %v430
    %2136 = vmatpush.msra.mxu0 %v424
    %2137 = vmatpush.msra.mxu0 %v418
    %2138 = vmatpush.msra.mxu0 %v412
    %2139 = vmatpush.msra.mxu0 %v406
    %2140 = vmatpush.msra.mxu0 %v400
    %2141 = vmatpush.msra.mxu0 %v394
    %2142 = vmatpush.msra.mxu0 %v388
    %2143 = vmatpush.msra.mxu0 %v382
    %2144 = vmatpush.msra.mxu0 %v376
    %2145 = vmatpush.msra.mxu0 %v370
    %2146 = vmatmul.f32.gmra.mxu0 %v2029
    %v2147 = vpop.f32.mrf.mxu0
    %v2148 = vadd.f32 0.0, %v2147
    %2149 = vdwg.mxu0
    %s2150 = scalar_lea.vmem [#allocation2], 6
    %v2151 = vld [vmem:[%s2150] ss:$8 sm:$0x7]
    %s2152 = scalar_lea.vmem [#allocation2], 73
    %v2153 = vld [vmem:[%s2152] ss:$8 sm:$0x7]
    %v2154 = vadd.f32 %v2048, %v585
    %v2155 = vadd.f32 %v2068, %v586
    %v2156 = vadd.f32 %v2088, %v587
    %v2157 = vadd.f32 %v2151, %v2154
    %v2158 = vxor.u32 %v2157, 2147483648
    %v2159 = vmul.f32 %v2158, 1.442695
    %v2160 = vpow.pop %v2159
    %v2161 = vadd.f32 %v2160, 1.0
    %v2162 = vrcp.pop %v2161
    %v2163 = vmul.f32 %v2161, %v2162
    %v2164 = vsub.f32 1.0, %v2163
    %v2165 = vmul.f32 %v2162, %v2164
    %v2166 = vadd.f32 %v2162, %v2165
    %vm2167 = vweird.f32 %v2161
    %vm2168 = vweird.f32 %v2162
    %vm2169 = vmor %vm2167, %vm2168
    %v2170 = vsel %vm2169, %v2162, %v2166
    %v2171 = vand.u32 2147483647, %v2161
    %vm2172 = vcmp.eq.f32.partialorder %v2171, 8.507059e+37
    %v2173 = vand.u32 %v2161, 2147483648
    %v2174 = vor.u32 1.1754944e-38, %v2173
    %v2175 = vsel %vm2172, %v2174, %v2170
    %v2176 = vmul.f32 1.0, %v2175
    %v2178 = vrot.slane %v2151, 1
    %v2180 = vadd.f32 %v2178, %v2155
    %v2181 = vxor.u32 %v2180, 2147483648
    %v2182 = vmul.f32 %v2181, 1.442695
    %v2183 = vpow.pop %v2182
    %v2184 = vadd.f32 %v2183, 1.0
    %v2185 = vrcp.pop %v2184
    %v2186 = vmul.f32 %v2184, %v2185
    %v2187 = vsub.f32 1.0, %v2186
    %v2188 = vmul.f32 %v2185, %v2187
    %v2189 = vadd.f32 %v2185, %v2188
    %vm2190 = vweird.f32 %v2184
    %vm2191 = vweird.f32 %v2185
    %vm2192 = vmor %vm2190, %vm2191
    %v2193 = vsel %vm2192, %v2185, %v2189
    %v2194 = vand.u32 2147483647, %v2184
    %vm2195 = vcmp.eq.f32.partialorder %v2194, 8.507059e+37
    %v2196 = vand.u32 %v2184, 2147483648
    %v2197 = vor.u32 1.1754944e-38, %v2196
    %v2198 = vsel %vm2195, %v2197, %v2193
    %v2199 = vmul.f32 1.0, %v2198
    %v2200 = vmul.f32 %v2176, %v2156
    %v2201 = vrot.slane %v2151, 2
    %v2203 = vadd.f32 %v2201, %v2200
    %v2204 = vtanh.pop %v2203
    %v2205 = vsub.f32 1.0, %v2199
    %v2206 = vmul.f32 %v2205, %v2204
    %v2207 = vmul.f32 %v2199, %v2029
    %v2208 = vadd.f32 %v2206, %v2207
    %v2209 = vadd.f32 %v2108, %v647
    %v2210 = vadd.f32 %v2128, %v648
    %v2211 = vadd.f32 %v2148, %v649
    %2213 = vst [vmem:[#allocation1] sm:$0xff] %v2209
    %s2214 = scalar_lea.vmem [#allocation1], 1
    %v2215 = vld [vmem:[%s2214] ss:$9 sm:$0xff]
    %v2217 = vadd.f32 %v2153, %v2215
    %v2218 = vxor.u32 %v2217, 2147483648
    %v2219 = vmul.f32 %v2218, 1.442695
    %v2220 = vpow.pop %v2219
    %v2221 = vadd.f32 %v2220, 1.0
    %v2222 = vrcp.pop %v2221
    %v2223 = vmul.f32 %v2221, %v2222
    %v2224 = vsub.f32 1.0, %v2223
    %v2225 = vmul.f32 %v2222, %v2224
    %v2226 = vadd.f32 %v2222, %v2225
    %vm2227 = vweird.f32 %v2221
    %vm2228 = vweird.f32 %v2222
    %vm2229 = vmor %vm2227, %vm2228
    %v2230 = vsel %vm2229, %v2222, %v2226
    %v2231 = vand.u32 2147483647, %v2221
    %vm2232 = vcmp.eq.f32.partialorder %v2231, 8.507059e+37
    %v2233 = vand.u32 %v2221, 2147483648
    %v2234 = vor.u32 1.1754944e-38, %v2233
    %v2235 = vsel %vm2232, %v2234, %v2230
    %v2236 = vmul.f32 1.0, %v2235
    %v2238 = vrot.slane %v2153, 1
    %2241 = vst [vmem:[#allocation1] sm:$0xff] %v2210
    %s2242 = scalar_lea.vmem [#allocation1], 1
    %v2243 = vld [vmem:[%s2242] ss:$9 sm:$0xff]
    %v2245 = vadd.f32 %v2238, %v2243
    %v2246 = vxor.u32 %v2245, 2147483648
    %v2247 = vmul.f32 %v2246, 1.442695
    %v2248 = vpow.pop %v2247
    %v2249 = vadd.f32 %v2248, 1.0
    %v2250 = vrcp.pop %v2249
    %v2251 = vmul.f32 %v2249, %v2250
    %v2252 = vsub.f32 1.0, %v2251
    %v2253 = vmul.f32 %v2250, %v2252
    %v2254 = vadd.f32 %v2250, %v2253
    %vm2255 = vweird.f32 %v2249
    %vm2256 = vweird.f32 %v2250
    %vm2257 = vmor %vm2255, %vm2256
    %v2258 = vsel %vm2257, %v2250, %v2254
    %v2259 = vand.u32 2147483647, %v2249
    %vm2260 = vcmp.eq.f32.partialorder %v2259, 8.507059e+37
    %v2261 = vand.u32 %v2249, 2147483648
    %v2262 = vor.u32 1.1754944e-38, %v2261
    %v2263 = vsel %vm2260, %v2262, %v2258
    %v2264 = vmul.f32 1.0, %v2263
    %2266 = vst [vmem:[#allocation1] sm:$0xff] %v2211
    %s2267 = scalar_lea.vmem [#allocation1], 1
    %v2268 = vld [vmem:[%s2267] ss:$9 sm:$0xff]
    %v2270 = vmul.f32 %v2236, %v2268
    %v2271 = vrot.slane %v2153, 2
    %v2273 = vadd.f32 %v2271, %v2270
    %v2274 = vtanh.pop %v2273
    %v2275 = vsub.f32 1.0, %v2264
    %v2276 = vmul.f32 %v2275, %v2274
    %2278 = vst [vmem:[#allocation1] sm:$0xff] %v2029
    %s2279 = scalar_lea.vmem [#allocation1], 1
    %v2280 = vld [vmem:[%s2279] ss:$9 sm:$0xff]
    %v2282 = vmul.f32 %v2264, %v2280
    %v2283 = vadd.f32 %v2276, %v2282
    %2284 = vst [vmem:[#allocation3 + $0x6] sm:$0x1] %v2208
    %2285 = vst [vmem:[#allocation3 + $0x19] sm:$0x1] %v2283
    %v2287 = vperm.slane %v2283, 0
    %v2289 = vsel %vm728, %v2208, %v2287
    %2290 = vmatpush.msra.mxu0 %v455
    %2291 = vmatpush.msra.mxu0 %v449
    %2292 = vmatpush.msra.mxu0 %v443
    %2293 = vmatpush.msra.mxu0 %v437
    %2294 = vmatpush.msra.mxu0 %v431
    %2295 = vmatpush.msra.mxu0 %v425
    %2296 = vmatpush.msra.mxu0 %v419
    %2297 = vmatpush.msra.mxu0 %v413
    %2298 = vmatpush.msra.mxu0 %v407
    %2299 = vmatpush.msra.mxu0 %v401
    %2300 = vmatpush.msra.mxu0 %v395
    %2301 = vmatpush.msra.mxu0 %v389
    %2302 = vmatpush.msra.mxu0 %v383
    %2303 = vmatpush.msra.mxu0 %v377
    %2304 = vmatpush.msra.mxu0 %v371
    %2305 = vmatpush.msra.mxu0 %v365
    %2306 = vmatmul.f32.gmra.mxu0 %v2289
    %v2307 = vpop.f32.mrf.mxu0
    %v2308 = vadd.f32 0.0, %v2307
    %2309 = vdwg.mxu0
    %2310 = vmatpush.msra.mxu0 %v456
    %2311 = vmatpush.msra.mxu0 %v450
    %2312 = vmatpush.msra.mxu0 %v444
    %2313 = vmatpush.msra.mxu0 %v438
    %2314 = vmatpush.msra.mxu0 %v432
    %2315 = vmatpush.msra.mxu0 %v426
    %2316 = vmatpush.msra.mxu0 %v420
    %2317 = vmatpush.msra.mxu0 %v414
    %2318 = vmatpush.msra.mxu0 %v408
    %2319 = vmatpush.msra.mxu0 %v402
    %2320 = vmatpush.msra.mxu0 %v396
    %2321 = vmatpush.msra.mxu0 %v390
    %2322 = vmatpush.msra.mxu0 %v384
    %2323 = vmatpush.msra.mxu0 %v378
    %2324 = vmatpush.msra.mxu0 %v372
    %2325 = vmatpush.msra.mxu0 %v366
    %2326 = vmatmul.f32.gmra.mxu0 %v2289
    %v2327 = vpop.f32.mrf.mxu0
    %v2328 = vadd.f32 0.0, %v2327
    %2329 = vdwg.mxu0
    %2330 = vmatpush.msra.mxu0 %v457
    %2331 = vmatpush.msra.mxu0 %v451
    %2332 = vmatpush.msra.mxu0 %v445
    %2333 = vmatpush.msra.mxu0 %v439
    %2334 = vmatpush.msra.mxu0 %v433
    %2335 = vmatpush.msra.mxu0 %v427
    %2336 = vmatpush.msra.mxu0 %v421
    %2337 = vmatpush.msra.mxu0 %v415
    %2338 = vmatpush.msra.mxu0 %v409
    %2339 = vmatpush.msra.mxu0 %v403
    %2340 = vmatpush.msra.mxu0 %v397
    %2341 = vmatpush.msra.mxu0 %v391
    %2342 = vmatpush.msra.mxu0 %v385
    %2343 = vmatpush.msra.mxu0 %v379
    %2344 = vmatpush.msra.mxu0 %v373
    %2345 = vmatpush.msra.mxu0 %v367
    %2346 = vmatmul.f32.gmra.mxu0 %v2289
    %v2347 = vpop.f32.mrf.mxu0
    %v2348 = vadd.f32 0.0, %v2347
    %2349 = vdwg.mxu0
    %2350 = vmatpush.msra.mxu0 %v458
    %2351 = vmatpush.msra.mxu0 %v452
    %2352 = vmatpush.msra.mxu0 %v446
    %2353 = vmatpush.msra.mxu0 %v440
    %2354 = vmatpush.msra.mxu0 %v434
    %2355 = vmatpush.msra.mxu0 %v428
    %2356 = vmatpush.msra.mxu0 %v422
    %2357 = vmatpush.msra.mxu0 %v416
    %2358 = vmatpush.msra.mxu0 %v410
    %2359 = vmatpush.msra.mxu0 %v404
    %2360 = vmatpush.msra.mxu0 %v398
    %2361 = vmatpush.msra.mxu0 %v392
    %2362 = vmatpush.msra.mxu0 %v386
    %2363 = vmatpush.msra.mxu0 %v380
    %2364 = vmatpush.msra.mxu0 %v374
    %2365 = vmatpush.msra.mxu0 %v368
    %2366 = vmatmul.f32.gmra.mxu0 %v2289
    %v2367 = vpop.f32.mrf.mxu0
    %v2368 = vadd.f32 0.0, %v2367
    %2369 = vdwg.mxu0
    %2370 = vmatpush.msra.mxu0 %v459
    %2371 = vmatpush.msra.mxu0 %v453
    %2372 = vmatpush.msra.mxu0 %v447
    %2373 = vmatpush.msra.mxu0 %v441
    %2374 = vmatpush.msra.mxu0 %v435
    %2375 = vmatpush.msra.mxu0 %v429
    %2376 = vmatpush.msra.mxu0 %v423
    %2377 = vmatpush.msra.mxu0 %v417
    %2378 = vmatpush.msra.mxu0 %v411
    %2379 = vmatpush.msra.mxu0 %v405
    %2380 = vmatpush.msra.mxu0 %v399
    %2381 = vmatpush.msra.mxu0 %v393
    %2382 = vmatpush.msra.mxu0 %v387
    %2383 = vmatpush.msra.mxu0 %v381
    %2384 = vmatpush.msra.mxu0 %v375
    %2385 = vmatpush.msra.mxu0 %v369
    %2386 = vmatmul.f32.gmra.mxu0 %v2289
    %v2387 = vpop.f32.mrf.mxu0
    %v2388 = vadd.f32 0.0, %v2387
    %2389 = vdwg.mxu0
    %2390 = vmatpush.msra.mxu0 %v460
    %2391 = vmatpush.msra.mxu0 %v454
    %2392 = vmatpush.msra.mxu0 %v448
    %2393 = vmatpush.msra.mxu0 %v442
    %2394 = vmatpush.msra.mxu0 %v436
    %2395 = vmatpush.msra.mxu0 %v430
    %2396 = vmatpush.msra.mxu0 %v424
    %2397 = vmatpush.msra.mxu0 %v418
    %2398 = vmatpush.msra.mxu0 %v412
    %2399 = vmatpush.msra.mxu0 %v406
    %2400 = vmatpush.msra.mxu0 %v400
    %2401 = vmatpush.msra.mxu0 %v394
    %2402 = vmatpush.msra.mxu0 %v388
    %2403 = vmatpush.msra.mxu0 %v382
    %2404 = vmatpush.msra.mxu0 %v376
    %2405 = vmatpush.msra.mxu0 %v370
    %2406 = vmatmul.f32.gmra.mxu0 %v2289
    %v2407 = vpop.f32.mrf.mxu0
    %v2408 = vadd.f32 0.0, %v2407
    %2409 = vdwg.mxu0
    %s2410 = scalar_lea.vmem [#allocation2], 7
    %v2411 = vld [vmem:[%s2410] ss:$8 sm:$0x7]
    %s2412 = scalar_lea.vmem [#allocation2], 72
    %v2413 = vld [vmem:[%s2412] ss:$8 sm:$0x7]
    %v2414 = vadd.f32 %v2308, %v585
    %v2415 = vadd.f32 %v2328, %v586
    %v2416 = vadd.f32 %v2348, %v587
    %v2417 = vadd.f32 %v2411, %v2414
    %v2418 = vxor.u32 %v2417, 2147483648
    %v2419 = vmul.f32 %v2418, 1.442695
    %v2420 = vpow.pop %v2419
    %v2421 = vadd.f32 %v2420, 1.0
    %v2422 = vrcp.pop %v2421
    %v2423 = vmul.f32 %v2421, %v2422
    %v2424 = vsub.f32 1.0, %v2423
    %v2425 = vmul.f32 %v2422, %v2424
    %v2426 = vadd.f32 %v2422, %v2425
    %vm2427 = vweird.f32 %v2421
    %vm2428 = vweird.f32 %v2422
    %vm2429 = vmor %vm2427, %vm2428
    %v2430 = vsel %vm2429, %v2422, %v2426
    %v2431 = vand.u32 2147483647, %v2421
    %vm2432 = vcmp.eq.f32.partialorder %v2431, 8.507059e+37
    %v2433 = vand.u32 %v2421, 2147483648
    %v2434 = vor.u32 1.1754944e-38, %v2433
    %v2435 = vsel %vm2432, %v2434, %v2430
    %v2436 = vmul.f32 1.0, %v2435
    %v2438 = vrot.slane %v2411, 1
    %v2440 = vadd.f32 %v2438, %v2415
    %v2441 = vxor.u32 %v2440, 2147483648
    %v2442 = vmul.f32 %v2441, 1.442695
    %v2443 = vpow.pop %v2442
    %v2444 = vadd.f32 %v2443, 1.0
    %v2445 = vrcp.pop %v2444
    %v2446 = vmul.f32 %v2444, %v2445
    %v2447 = vsub.f32 1.0, %v2446
    %v2448 = vmul.f32 %v2445, %v2447
    %v2449 = vadd.f32 %v2445, %v2448
    %vm2450 = vweird.f32 %v2444
    %vm2451 = vweird.f32 %v2445
    %vm2452 = vmor %vm2450, %vm2451
    %v2453 = vsel %vm2452, %v2445, %v2449
    %v2454 = vand.u32 2147483647, %v2444
    %vm2455 = vcmp.eq.f32.partialorder %v2454, 8.507059e+37
    %v2456 = vand.u32 %v2444, 2147483648
    %v2457 = vor.u32 1.1754944e-38, %v2456
    %v2458 = vsel %vm2455, %v2457, %v2453
    %v2459 = vmul.f32 1.0, %v2458
    %v2460 = vmul.f32 %v2436, %v2416
    %v2461 = vrot.slane %v2411, 2
    %v2463 = vadd.f32 %v2461, %v2460
    %v2464 = vtanh.pop %v2463
    %v2465 = vsub.f32 1.0, %v2459
    %v2466 = vmul.f32 %v2465, %v2464
    %v2467 = vmul.f32 %v2459, %v2289
    %v2468 = vadd.f32 %v2466, %v2467
    %v2469 = vadd.f32 %v2368, %v647
    %v2470 = vadd.f32 %v2388, %v648
    %v2471 = vadd.f32 %v2408, %v649
    %2473 = vst [vmem:[#allocation1] sm:$0xff] %v2469
    %s2474 = scalar_lea.vmem [#allocation1], 1
    %v2475 = vld [vmem:[%s2474] ss:$9 sm:$0xff]
    %v2477 = vadd.f32 %v2413, %v2475
    %v2478 = vxor.u32 %v2477, 2147483648
    %v2479 = vmul.f32 %v2478, 1.442695
    %v2480 = vpow.pop %v2479
    %v2481 = vadd.f32 %v2480, 1.0
    %v2482 = vrcp.pop %v2481
    %v2483 = vmul.f32 %v2481, %v2482
    %v2484 = vsub.f32 1.0, %v2483
    %v2485 = vmul.f32 %v2482, %v2484
    %v2486 = vadd.f32 %v2482, %v2485
    %vm2487 = vweird.f32 %v2481
    %vm2488 = vweird.f32 %v2482
    %vm2489 = vmor %vm2487, %vm2488
    %v2490 = vsel %vm2489, %v2482, %v2486
    %v2491 = vand.u32 2147483647, %v2481
    %vm2492 = vcmp.eq.f32.partialorder %v2491, 8.507059e+37
    %v2493 = vand.u32 %v2481, 2147483648
    %v2494 = vor.u32 1.1754944e-38, %v2493
    %v2495 = vsel %vm2492, %v2494, %v2490
    %v2496 = vmul.f32 1.0, %v2495
    %v2498 = vrot.slane %v2413, 1
    %2501 = vst [vmem:[#allocation1] sm:$0xff] %v2470
    %s2502 = scalar_lea.vmem [#allocation1], 1
    %v2503 = vld [vmem:[%s2502] ss:$9 sm:$0xff]
    %v2505 = vadd.f32 %v2498, %v2503
    %v2506 = vxor.u32 %v2505, 2147483648
    %v2507 = vmul.f32 %v2506, 1.442695
    %v2508 = vpow.pop %v2507
    %v2509 = vadd.f32 %v2508, 1.0
    %v2510 = vrcp.pop %v2509
    %v2511 = vmul.f32 %v2509, %v2510
    %v2512 = vsub.f32 1.0, %v2511
    %v2513 = vmul.f32 %v2510, %v2512
    %v2514 = vadd.f32 %v2510, %v2513
    %vm2515 = vweird.f32 %v2509
    %vm2516 = vweird.f32 %v2510
    %vm2517 = vmor %vm2515, %vm2516
    %v2518 = vsel %vm2517, %v2510, %v2514
    %v2519 = vand.u32 2147483647, %v2509
    %vm2520 = vcmp.eq.f32.partialorder %v2519, 8.507059e+37
    %v2521 = vand.u32 %v2509, 2147483648
    %v2522 = vor.u32 1.1754944e-38, %v2521
    %v2523 = vsel %vm2520, %v2522, %v2518
    %v2524 = vmul.f32 1.0, %v2523
    %2526 = vst [vmem:[#allocation1] sm:$0xff] %v2471
    %s2527 = scalar_lea.vmem [#allocation1], 1
    %v2528 = vld [vmem:[%s2527] ss:$9 sm:$0xff]
    %v2530 = vmul.f32 %v2496, %v2528
    %v2531 = vrot.slane %v2413, 2
    %v2533 = vadd.f32 %v2531, %v2530
    %v2534 = vtanh.pop %v2533
    %v2535 = vsub.f32 1.0, %v2524
    %v2536 = vmul.f32 %v2535, %v2534
    %2538 = vst [vmem:[#allocation1] sm:$0xff] %v2289
    %s2539 = scalar_lea.vmem [#allocation1], 1
    %v2540 = vld [vmem:[%s2539] ss:$9 sm:$0xff]
    %v2542 = vmul.f32 %v2524, %v2540
    %v2543 = vadd.f32 %v2536, %v2542
    %2544 = vst [vmem:[#allocation3 + $0x7] sm:$0x1] %v2468
    %2545 = vst [vmem:[#allocation3 + $0x18] sm:$0x1] %v2543
    %v2547 = vperm.slane %v2543, 0
    %v2549 = vsel %vm728, %v2468, %v2547
    %2550 = vmatpush.msra.mxu0 %v455
    %2551 = vmatpush.msra.mxu0 %v449
    %2552 = vmatpush.msra.mxu0 %v443
    %2553 = vmatpush.msra.mxu0 %v437
    %2554 = vmatpush.msra.mxu0 %v431
    %2555 = vmatpush.msra.mxu0 %v425
    %2556 = vmatpush.msra.mxu0 %v419
    %2557 = vmatpush.msra.mxu0 %v413
    %2558 = vmatpush.msra.mxu0 %v407
    %2559 = vmatpush.msra.mxu0 %v401
    %2560 = vmatpush.msra.mxu0 %v395
    %2561 = vmatpush.msra.mxu0 %v389
    %2562 = vmatpush.msra.mxu0 %v383
    %2563 = vmatpush.msra.mxu0 %v377
    %2564 = vmatpush.msra.mxu0 %v371
    %2565 = vmatpush.msra.mxu0 %v365
    %2566 = vmatmul.f32.gmra.mxu0 %v2549
    %v2567 = vpop.f32.mrf.mxu0
    %v2568 = vadd.f32 0.0, %v2567
    %2569 = vdwg.mxu0
    %2570 = vmatpush.msra.mxu0 %v456
    %2571 = vmatpush.msra.mxu0 %v450
    %2572 = vmatpush.msra.mxu0 %v444
    %2573 = vmatpush.msra.mxu0 %v438
    %2574 = vmatpush.msra.mxu0 %v432
    %2575 = vmatpush.msra.mxu0 %v426
    %2576 = vmatpush.msra.mxu0 %v420
    %2577 = vmatpush.msra.mxu0 %v414
    %2578 = vmatpush.msra.mxu0 %v408
    %2579 = vmatpush.msra.mxu0 %v402
    %2580 = vmatpush.msra.mxu0 %v396
    %2581 = vmatpush.msra.mxu0 %v390
    %2582 = vmatpush.msra.mxu0 %v384
    %2583 = vmatpush.msra.mxu0 %v378
    %2584 = vmatpush.msra.mxu0 %v372
    %2585 = vmatpush.msra.mxu0 %v366
    %2586 = vmatmul.f32.gmra.mxu0 %v2549
    %v2587 = vpop.f32.mrf.mxu0
    %v2588 = vadd.f32 0.0, %v2587
    %2589 = vdwg.mxu0
    %2590 = vmatpush.msra.mxu0 %v457
    %2591 = vmatpush.msra.mxu0 %v451
    %2592 = vmatpush.msra.mxu0 %v445
    %2593 = vmatpush.msra.mxu0 %v439
    %2594 = vmatpush.msra.mxu0 %v433
    %2595 = vmatpush.msra.mxu0 %v427
    %2596 = vmatpush.msra.mxu0 %v421
    %2597 = vmatpush.msra.mxu0 %v415
    %2598 = vmatpush.msra.mxu0 %v409
    %2599 = vmatpush.msra.mxu0 %v403
    %2600 = vmatpush.msra.mxu0 %v397
    %2601 = vmatpush.msra.mxu0 %v391
    %2602 = vmatpush.msra.mxu0 %v385
    %2603 = vmatpush.msra.mxu0 %v379
    %2604 = vmatpush.msra.mxu0 %v373
    %2605 = vmatpush.msra.mxu0 %v367
    %2606 = vmatmul.f32.gmra.mxu0 %v2549
    %v2607 = vpop.f32.mrf.mxu0
    %v2608 = vadd.f32 0.0, %v2607
    %2609 = vdwg.mxu0
    %2610 = vmatpush.msra.mxu0 %v458
    %2611 = vmatpush.msra.mxu0 %v452
    %2612 = vmatpush.msra.mxu0 %v446
    %2613 = vmatpush.msra.mxu0 %v440
    %2614 = vmatpush.msra.mxu0 %v434
    %2615 = vmatpush.msra.mxu0 %v428
    %2616 = vmatpush.msra.mxu0 %v422
    %2617 = vmatpush.msra.mxu0 %v416
    %2618 = vmatpush.msra.mxu0 %v410
    %2619 = vmatpush.msra.mxu0 %v404
    %2620 = vmatpush.msra.mxu0 %v398
    %2621 = vmatpush.msra.mxu0 %v392
    %2622 = vmatpush.msra.mxu0 %v386
    %2623 = vmatpush.msra.mxu0 %v380
    %2624 = vmatpush.msra.mxu0 %v374
    %2625 = vmatpush.msra.mxu0 %v368
    %2626 = vmatmul.f32.gmra.mxu0 %v2549
    %v2627 = vpop.f32.mrf.mxu0
    %v2628 = vadd.f32 0.0, %v2627
    %2629 = vdwg.mxu0
    %2630 = vmatpush.msra.mxu0 %v459
    %2631 = vmatpush.msra.mxu0 %v453
    %2632 = vmatpush.msra.mxu0 %v447
    %2633 = vmatpush.msra.mxu0 %v441
    %2634 = vmatpush.msra.mxu0 %v435
    %2635 = vmatpush.msra.mxu0 %v429
    %2636 = vmatpush.msra.mxu0 %v423
    %2637 = vmatpush.msra.mxu0 %v417
    %2638 = vmatpush.msra.mxu0 %v411
    %2639 = vmatpush.msra.mxu0 %v405
    %2640 = vmatpush.msra.mxu0 %v399
    %2641 = vmatpush.msra.mxu0 %v393
    %2642 = vmatpush.msra.mxu0 %v387
    %2643 = vmatpush.msra.mxu0 %v381
    %2644 = vmatpush.msra.mxu0 %v375
    %2645 = vmatpush.msra.mxu0 %v369
    %2646 = vmatmul.f32.gmra.mxu0 %v2549
    %v2647 = vpop.f32.mrf.mxu0
    %v2648 = vadd.f32 0.0, %v2647
    %2649 = vdwg.mxu0
    %2650 = vmatpush.msra.mxu0 %v460
    %2651 = vmatpush.msra.mxu0 %v454
    %2652 = vmatpush.msra.mxu0 %v448
    %2653 = vmatpush.msra.mxu0 %v442
    %2654 = vmatpush.msra.mxu0 %v436
    %2655 = vmatpush.msra.mxu0 %v430
    %2656 = vmatpush.msra.mxu0 %v424
    %2657 = vmatpush.msra.mxu0 %v418
    %2658 = vmatpush.msra.mxu0 %v412
    %2659 = vmatpush.msra.mxu0 %v406
    %2660 = vmatpush.msra.mxu0 %v400
    %2661 = vmatpush.msra.mxu0 %v394
    %2662 = vmatpush.msra.mxu0 %v388
    %2663 = vmatpush.msra.mxu0 %v382
    %2664 = vmatpush.msra.mxu0 %v376
    %2665 = vmatpush.msra.mxu0 %v370
    %2666 = vmatmul.f32.gmra.mxu0 %v2549
    %v2667 = vpop.f32.mrf.mxu0
    %v2668 = vadd.f32 0.0, %v2667
    %2669 = vdwg.mxu0
    %s2670 = scalar_lea.vmem [#allocation2], 48
    %v2671 = vld [vmem:[%s2670] ss:$8 sm:$0x7]
    %s2672 = scalar_lea.vmem [#allocation2], 31
    %v2673 = vld [vmem:[%s2672] ss:$8 sm:$0x7]
    %v2674 = vadd.f32 %v2568, %v585
    %v2675 = vadd.f32 %v2588, %v586
    %v2676 = vadd.f32 %v2608, %v587
    %v2677 = vadd.f32 %v2671, %v2674
    %v2678 = vxor.u32 %v2677, 2147483648
    %v2679 = vmul.f32 %v2678, 1.442695
    %v2680 = vpow.pop %v2679
    %v2681 = vadd.f32 %v2680, 1.0
    %v2682 = vrcp.pop %v2681
    %v2683 = vmul.f32 %v2681, %v2682
    %v2684 = vsub.f32 1.0, %v2683
    %v2685 = vmul.f32 %v2682, %v2684
    %v2686 = vadd.f32 %v2682, %v2685
    %vm2687 = vweird.f32 %v2681
    %vm2688 = vweird.f32 %v2682
    %vm2689 = vmor %vm2687, %vm2688
    %v2690 = vsel %vm2689, %v2682, %v2686
    %v2691 = vand.u32 2147483647, %v2681
    %vm2692 = vcmp.eq.f32.partialorder %v2691, 8.507059e+37
    %v2693 = vand.u32 %v2681, 2147483648
    %v2694 = vor.u32 1.1754944e-38, %v2693
    %v2695 = vsel %vm2692, %v2694, %v2690
    %v2696 = vmul.f32 1.0, %v2695
    %v2698 = vrot.slane %v2671, 1
    %v2700 = vadd.f32 %v2698, %v2675
    %v2701 = vxor.u32 %v2700, 2147483648
    %v2702 = vmul.f32 %v2701, 1.442695
    %v2703 = vpow.pop %v2702
    %v2704 = vadd.f32 %v2703, 1.0
    %v2705 = vrcp.pop %v2704
    %v2706 = vmul.f32 %v2704, %v2705
    %v2707 = vsub.f32 1.0, %v2706
    %v2708 = vmul.f32 %v2705, %v2707
    %v2709 = vadd.f32 %v2705, %v2708
    %vm2710 = vweird.f32 %v2704
    %vm2711 = vweird.f32 %v2705
    %vm2712 = vmor %vm2710, %vm2711
    %v2713 = vsel %vm2712, %v2705, %v2709
    %v2714 = vand.u32 2147483647, %v2704
    %vm2715 = vcmp.eq.f32.partialorder %v2714, 8.507059e+37
    %v2716 = vand.u32 %v2704, 2147483648
    %v2717 = vor.u32 1.1754944e-38, %v2716
    %v2718 = vsel %vm2715, %v2717, %v2713
    %v2719 = vmul.f32 1.0, %v2718
    %v2720 = vmul.f32 %v2696, %v2676
    %v2721 = vrot.slane %v2671, 2
    %v2723 = vadd.f32 %v2721, %v2720
    %v2724 = vtanh.pop %v2723
    %v2725 = vsub.f32 1.0, %v2719
    %v2726 = vmul.f32 %v2725, %v2724
    %v2727 = vmul.f32 %v2719, %v2549
    %v2728 = vadd.f32 %v2726, %v2727
    %v2729 = vadd.f32 %v2628, %v647
    %v2730 = vadd.f32 %v2648, %v648
    %v2731 = vadd.f32 %v2668, %v649
    %2733 = vst [vmem:[#allocation1] sm:$0xff] %v2729
    %s2734 = scalar_lea.vmem [#allocation1], 1
    %v2735 = vld [vmem:[%s2734] ss:$9 sm:$0xff]
    %v2737 = vadd.f32 %v2673, %v2735
    %v2738 = vxor.u32 %v2737, 2147483648
    %v2739 = vmul.f32 %v2738, 1.442695
    %v2740 = vpow.pop %v2739
    %v2741 = vadd.f32 %v2740, 1.0
    %v2742 = vrcp.pop %v2741
    %v2743 = vmul.f32 %v2741, %v2742
    %v2744 = vsub.f32 1.0, %v2743
    %v2745 = vmul.f32 %v2742, %v2744
    %v2746 = vadd.f32 %v2742, %v2745
    %vm2747 = vweird.f32 %v2741
    %vm2748 = vweird.f32 %v2742
    %vm2749 = vmor %vm2747, %vm2748
    %v2750 = vsel %vm2749, %v2742, %v2746
    %v2751 = vand.u32 2147483647, %v2741
    %vm2752 = vcmp.eq.f32.partialorder %v2751, 8.507059e+37
    %v2753 = vand.u32 %v2741, 2147483648
    %v2754 = vor.u32 1.1754944e-38, %v2753
    %v2755 = vsel %vm2752, %v2754, %v2750
    %v2756 = vmul.f32 1.0, %v2755
    %v2758 = vrot.slane %v2673, 1
    %2761 = vst [vmem:[#allocation1] sm:$0xff] %v2730
    %s2762 = scalar_lea.vmem [#allocation1], 1
    %v2763 = vld [vmem:[%s2762] ss:$9 sm:$0xff]
    %v2765 = vadd.f32 %v2758, %v2763
    %v2766 = vxor.u32 %v2765, 2147483648
    %v2767 = vmul.f32 %v2766, 1.442695
    %v2768 = vpow.pop %v2767
    %v2769 = vadd.f32 %v2768, 1.0
    %v2770 = vrcp.pop %v2769
    %v2771 = vmul.f32 %v2769, %v2770
    %v2772 = vsub.f32 1.0, %v2771
    %v2773 = vmul.f32 %v2770, %v2772
    %v2774 = vadd.f32 %v2770, %v2773
    %vm2775 = vweird.f32 %v2769
    %vm2776 = vweird.f32 %v2770
    %vm2777 = vmor %vm2775, %vm2776
    %v2778 = vsel %vm2777, %v2770, %v2774
    %v2779 = vand.u32 2147483647, %v2769
    %vm2780 = vcmp.eq.f32.partialorder %v2779, 8.507059e+37
    %v2781 = vand.u32 %v2769, 2147483648
    %v2782 = vor.u32 1.1754944e-38, %v2781
    %v2783 = vsel %vm2780, %v2782, %v2778
    %v2784 = vmul.f32 1.0, %v2783
    %2786 = vst [vmem:[#allocation1] sm:$0xff] %v2731
    %s2787 = scalar_lea.vmem [#allocation1], 1
    %v2788 = vld [vmem:[%s2787] ss:$9 sm:$0xff]
    %v2790 = vmul.f32 %v2756, %v2788
    %v2791 = vrot.slane %v2673, 2
    %v2793 = vadd.f32 %v2791, %v2790
    %v2794 = vtanh.pop %v2793
    %v2795 = vsub.f32 1.0, %v2784
    %v2796 = vmul.f32 %v2795, %v2794
    %2798 = vst [vmem:[#allocation1] sm:$0xff] %v2549
    %s2799 = scalar_lea.vmem [#allocation1], 1
    %v2800 = vld [vmem:[%s2799] ss:$9 sm:$0xff]
    %v2802 = vmul.f32 %v2784, %v2800
    %v2803 = vadd.f32 %v2796, %v2802
    %2804 = vst [vmem:[#allocation3 + $0x10] sm:$0x1] %v2728
    %2805 = vst [vmem:[#allocation3 + $0xf] sm:$0x1] %v2803
    %v2807 = vperm.slane %v2803, 0
    %v2809 = vsel %vm728, %v2728, %v2807
    %2810 = vmatpush.msra.mxu0 %v455
    %2811 = vmatpush.msra.mxu0 %v449
    %2812 = vmatpush.msra.mxu0 %v443
    %2813 = vmatpush.msra.mxu0 %v437
    %2814 = vmatpush.msra.mxu0 %v431
    %2815 = vmatpush.msra.mxu0 %v425
    %2816 = vmatpush.msra.mxu0 %v419
    %2817 = vmatpush.msra.mxu0 %v413
    %2818 = vmatpush.msra.mxu0 %v407
    %2819 = vmatpush.msra.mxu0 %v401
    %2820 = vmatpush.msra.mxu0 %v395
    %2821 = vmatpush.msra.mxu0 %v389
    %2822 = vmatpush.msra.mxu0 %v383
    %2823 = vmatpush.msra.mxu0 %v377
    %2824 = vmatpush.msra.mxu0 %v371
    %2825 = vmatpush.msra.mxu0 %v365
    %2826 = vmatmul.f32.gmra.mxu0 %v2809
    %v2827 = vpop.f32.mrf.mxu0
    %v2828 = vadd.f32 0.0, %v2827
    %2829 = vdwg.mxu0
    %2830 = vmatpush.msra.mxu0 %v456
    %2831 = vmatpush.msra.mxu0 %v450
    %2832 = vmatpush.msra.mxu0 %v444
    %2833 = vmatpush.msra.mxu0 %v438
    %2834 = vmatpush.msra.mxu0 %v432
    %2835 = vmatpush.msra.mxu0 %v426
    %2836 = vmatpush.msra.mxu0 %v420
    %2837 = vmatpush.msra.mxu0 %v414
    %2838 = vmatpush.msra.mxu0 %v408
    %2839 = vmatpush.msra.mxu0 %v402
    %2840 = vmatpush.msra.mxu0 %v396
    %2841 = vmatpush.msra.mxu0 %v390
    %2842 = vmatpush.msra.mxu0 %v384
    %2843 = vmatpush.msra.mxu0 %v378
    %2844 = vmatpush.msra.mxu0 %v372
    %2845 = vmatpush.msra.mxu0 %v366
    %2846 = vmatmul.f32.gmra.mxu0 %v2809
    %v2847 = vpop.f32.mrf.mxu0
    %v2848 = vadd.f32 0.0, %v2847
    %2849 = vdwg.mxu0
    %2850 = vmatpush.msra.mxu0 %v457
    %2851 = vmatpush.msra.mxu0 %v451
    %2852 = vmatpush.msra.mxu0 %v445
    %2853 = vmatpush.msra.mxu0 %v439
    %2854 = vmatpush.msra.mxu0 %v433
    %2855 = vmatpush.msra.mxu0 %v427
    %2856 = vmatpush.msra.mxu0 %v421
    %2857 = vmatpush.msra.mxu0 %v415
    %2858 = vmatpush.msra.mxu0 %v409
    %2859 = vmatpush.msra.mxu0 %v403
    %2860 = vmatpush.msra.mxu0 %v397
    %2861 = vmatpush.msra.mxu0 %v391
    %2862 = vmatpush.msra.mxu0 %v385
    %2863 = vmatpush.msra.mxu0 %v379
    %2864 = vmatpush.msra.mxu0 %v373
    %2865 = vmatpush.msra.mxu0 %v367
    %2866 = vmatmul.f32.gmra.mxu0 %v2809
    %v2867 = vpop.f32.mrf.mxu0
    %v2868 = vadd.f32 0.0, %v2867
    %2869 = vdwg.mxu0
    %2870 = vmatpush.msra.mxu0 %v458
    %2871 = vmatpush.msra.mxu0 %v452
    %2872 = vmatpush.msra.mxu0 %v446
    %2873 = vmatpush.msra.mxu0 %v440
    %2874 = vmatpush.msra.mxu0 %v434
    %2875 = vmatpush.msra.mxu0 %v428
    %2876 = vmatpush.msra.mxu0 %v422
    %2877 = vmatpush.msra.mxu0 %v416
    %2878 = vmatpush.msra.mxu0 %v410
    %2879 = vmatpush.msra.mxu0 %v404
    %2880 = vmatpush.msra.mxu0 %v398
    %2881 = vmatpush.msra.mxu0 %v392
    %2882 = vmatpush.msra.mxu0 %v386
    %2883 = vmatpush.msra.mxu0 %v380
    %2884 = vmatpush.msra.mxu0 %v374
    %2885 = vmatpush.msra.mxu0 %v368
    %2886 = vmatmul.f32.gmra.mxu0 %v2809
    %v2887 = vpop.f32.mrf.mxu0
    %v2888 = vadd.f32 0.0, %v2887
    %2889 = vdwg.mxu0
    %2890 = vmatpush.msra.mxu0 %v459
    %2891 = vmatpush.msra.mxu0 %v453
    %2892 = vmatpush.msra.mxu0 %v447
    %2893 = vmatpush.msra.mxu0 %v441
    %2894 = vmatpush.msra.mxu0 %v435
    %2895 = vmatpush.msra.mxu0 %v429
    %2896 = vmatpush.msra.mxu0 %v423
    %2897 = vmatpush.msra.mxu0 %v417
    %2898 = vmatpush.msra.mxu0 %v411
    %2899 = vmatpush.msra.mxu0 %v405
    %2900 = vmatpush.msra.mxu0 %v399
    %2901 = vmatpush.msra.mxu0 %v393
    %2902 = vmatpush.msra.mxu0 %v387
    %2903 = vmatpush.msra.mxu0 %v381
    %2904 = vmatpush.msra.mxu0 %v375
    %2905 = vmatpush.msra.mxu0 %v369
    %2906 = vmatmul.f32.gmra.mxu0 %v2809
    %v2907 = vpop.f32.mrf.mxu0
    %v2908 = vadd.f32 0.0, %v2907
    %2909 = vdwg.mxu0
    %2910 = vmatpush.msra.mxu0 %v460
    %2911 = vmatpush.msra.mxu0 %v454
    %2912 = vmatpush.msra.mxu0 %v448
    %2913 = vmatpush.msra.mxu0 %v442
    %2914 = vmatpush.msra.mxu0 %v436
    %2915 = vmatpush.msra.mxu0 %v430
    %2916 = vmatpush.msra.mxu0 %v424
    %2917 = vmatpush.msra.mxu0 %v418
    %2918 = vmatpush.msra.mxu0 %v412
    %2919 = vmatpush.msra.mxu0 %v406
    %2920 = vmatpush.msra.mxu0 %v400
    %2921 = vmatpush.msra.mxu0 %v394
    %2922 = vmatpush.msra.mxu0 %v388
    %2923 = vmatpush.msra.mxu0 %v382
    %2924 = vmatpush.msra.mxu0 %v376
    %2925 = vmatpush.msra.mxu0 %v370
    %2926 = vmatmul.f32.gmra.mxu0 %v2809
    %v2927 = vpop.f32.mrf.mxu0
    %v2928 = vadd.f32 0.0, %v2927
    %2929 = vdwg.mxu0
    %s2930 = scalar_lea.vmem [#allocation2], 49
    %v2931 = vld [vmem:[%s2930] ss:$8 sm:$0x7]
    %s2932 = scalar_lea.vmem [#allocation2], 30
    %v2933 = vld [vmem:[%s2932] ss:$8 sm:$0x7]
    %v2934 = vadd.f32 %v2828, %v585
    %v2935 = vadd.f32 %v2848, %v586
    %v2936 = vadd.f32 %v2868, %v587
    %v2937 = vadd.f32 %v2931, %v2934
    %v2938 = vxor.u32 %v2937, 2147483648
    %v2939 = vmul.f32 %v2938, 1.442695
    %v2940 = vpow.pop %v2939
    %v2941 = vadd.f32 %v2940, 1.0
    %v2942 = vrcp.pop %v2941
    %v2943 = vmul.f32 %v2941, %v2942
    %v2944 = vsub.f32 1.0, %v2943
    %v2945 = vmul.f32 %v2942, %v2944
    %v2946 = vadd.f32 %v2942, %v2945
    %vm2947 = vweird.f32 %v2941
    %vm2948 = vweird.f32 %v2942
    %vm2949 = vmor %vm2947, %vm2948
    %v2950 = vsel %vm2949, %v2942, %v2946
    %v2951 = vand.u32 2147483647, %v2941
    %vm2952 = vcmp.eq.f32.partialorder %v2951, 8.507059e+37
    %v2953 = vand.u32 %v2941, 2147483648
    %v2954 = vor.u32 1.1754944e-38, %v2953
    %v2955 = vsel %vm2952, %v2954, %v2950
    %v2956 = vmul.f32 1.0, %v2955
    %v2958 = vrot.slane %v2931, 1
    %v2960 = vadd.f32 %v2958, %v2935
    %v2961 = vxor.u32 %v2960, 2147483648
    %v2962 = vmul.f32 %v2961, 1.442695
    %v2963 = vpow.pop %v2962
    %v2964 = vadd.f32 %v2963, 1.0
    %v2965 = vrcp.pop %v2964
    %v2966 = vmul.f32 %v2964, %v2965
    %v2967 = vsub.f32 1.0, %v2966
    %v2968 = vmul.f32 %v2965, %v2967
    %v2969 = vadd.f32 %v2965, %v2968
    %vm2970 = vweird.f32 %v2964
    %vm2971 = vweird.f32 %v2965
    %vm2972 = vmor %vm2970, %vm2971
    %v2973 = vsel %vm2972, %v2965, %v2969
    %v2974 = vand.u32 2147483647, %v2964
    %vm2975 = vcmp.eq.f32.partialorder %v2974, 8.507059e+37
    %v2976 = vand.u32 %v2964, 2147483648
    %v2977 = vor.u32 1.1754944e-38, %v2976
    %v2978 = vsel %vm2975, %v2977, %v2973
    %v2979 = vmul.f32 1.0, %v2978
    %v2980 = vmul.f32 %v2956, %v2936
    %v2981 = vrot.slane %v2931, 2
    %v2983 = vadd.f32 %v2981, %v2980
    %v2984 = vtanh.pop %v2983
    %v2985 = vsub.f32 1.0, %v2979
    %v2986 = vmul.f32 %v2985, %v2984
    %v2987 = vmul.f32 %v2979, %v2809
    %v2988 = vadd.f32 %v2986, %v2987
    %v2989 = vadd.f32 %v2888, %v647
    %v2990 = vadd.f32 %v2908, %v648
    %v2991 = vadd.f32 %v2928, %v649
    %2993 = vst [vmem:[#allocation1] sm:$0xff] %v2989
    %s2994 = scalar_lea.vmem [#allocation1], 1
    %v2995 = vld [vmem:[%s2994] ss:$9 sm:$0xff]
    %v2997 = vadd.f32 %v2933, %v2995
    %v2998 = vxor.u32 %v2997, 2147483648
    %v2999 = vmul.f32 %v2998, 1.442695
    %v3000 = vpow.pop %v2999
    %v3001 = vadd.f32 %v3000, 1.0
    %v3002 = vrcp.pop %v3001
    %v3003 = vmul.f32 %v3001, %v3002
    %v3004 = vsub.f32 1.0, %v3003
    %v3005 = vmul.f32 %v3002, %v3004
    %v3006 = vadd.f32 %v3002, %v3005
    %vm3007 = vweird.f32 %v3001
    %vm3008 = vweird.f32 %v3002
    %vm3009 = vmor %vm3007, %vm3008
    %v3010 = vsel %vm3009, %v3002, %v3006
    %v3011 = vand.u32 2147483647, %v3001
    %vm3012 = vcmp.eq.f32.partialorder %v3011, 8.507059e+37
    %v3013 = vand.u32 %v3001, 2147483648
    %v3014 = vor.u32 1.1754944e-38, %v3013
    %v3015 = vsel %vm3012, %v3014, %v3010
    %v3016 = vmul.f32 1.0, %v3015
    %v3018 = vrot.slane %v2933, 1
    %3021 = vst [vmem:[#allocation1] sm:$0xff] %v2990
    %s3022 = scalar_lea.vmem [#allocation1], 1
    %v3023 = vld [vmem:[%s3022] ss:$9 sm:$0xff]
    %v3025 = vadd.f32 %v3018, %v3023
    %v3026 = vxor.u32 %v3025, 2147483648
    %v3027 = vmul.f32 %v3026, 1.442695
    %v3028 = vpow.pop %v3027
    %v3029 = vadd.f32 %v3028, 1.0
    %v3030 = vrcp.pop %v3029
    %v3031 = vmul.f32 %v3029, %v3030
    %v3032 = vsub.f32 1.0, %v3031
    %v3033 = vmul.f32 %v3030, %v3032
    %v3034 = vadd.f32 %v3030, %v3033
    %vm3035 = vweird.f32 %v3029
    %vm3036 = vweird.f32 %v3030
    %vm3037 = vmor %vm3035, %vm3036
    %v3038 = vsel %vm3037, %v3030, %v3034
    %v3039 = vand.u32 2147483647, %v3029
    %vm3040 = vcmp.eq.f32.partialorder %v3039, 8.507059e+37
    %v3041 = vand.u32 %v3029, 2147483648
    %v3042 = vor.u32 1.1754944e-38, %v3041
    %v3043 = vsel %vm3040, %v3042, %v3038
    %v3044 = vmul.f32 1.0, %v3043
    %3046 = vst [vmem:[#allocation1] sm:$0xff] %v2991
    %s3047 = scalar_lea.vmem [#allocation1], 1
    %v3048 = vld [vmem:[%s3047] ss:$9 sm:$0xff]
    %v3050 = vmul.f32 %v3016, %v3048
    %v3051 = vrot.slane %v2933, 2
    %v3053 = vadd.f32 %v3051, %v3050
    %v3054 = vtanh.pop %v3053
    %v3055 = vsub.f32 1.0, %v3044
    %v3056 = vmul.f32 %v3055, %v3054
    %3058 = vst [vmem:[#allocation1] sm:$0xff] %v2809
    %s3059 = scalar_lea.vmem [#allocation1], 1
    %v3060 = vld [vmem:[%s3059] ss:$9 sm:$0xff]
    %v3062 = vmul.f32 %v3044, %v3060
    %v3063 = vadd.f32 %v3056, %v3062
    %3064 = vst [vmem:[#allocation3 + $0x11] sm:$0x1] %v2988
    %3065 = vst [vmem:[#allocation3 + $0xe] sm:$0x1] %v3063
    %v3067 = vperm.slane %v3063, 0
    %v3069 = vsel %vm728, %v2988, %v3067
    %3070 = vmatpush.msra.mxu0 %v455
    %3071 = vmatpush.msra.mxu0 %v449
    %3072 = vmatpush.msra.mxu0 %v443
    %3073 = vmatpush.msra.mxu0 %v437
    %3074 = vmatpush.msra.mxu0 %v431
    %3075 = vmatpush.msra.mxu0 %v425
    %3076 = vmatpush.msra.mxu0 %v419
    %3077 = vmatpush.msra.mxu0 %v413
    %3078 = vmatpush.msra.mxu0 %v407
    %3079 = vmatpush.msra.mxu0 %v401
    %3080 = vmatpush.msra.mxu0 %v395
    %3081 = vmatpush.msra.mxu0 %v389
    %3082 = vmatpush.msra.mxu0 %v383
    %3083 = vmatpush.msra.mxu0 %v377
    %3084 = vmatpush.msra.mxu0 %v371
    %3085 = vmatpush.msra.mxu0 %v365
    %3086 = vmatmul.f32.gmra.mxu0 %v3069
    %v3087 = vpop.f32.mrf.mxu0
    %v3088 = vadd.f32 0.0, %v3087
    %3089 = vdwg.mxu0
    %3090 = vmatpush.msra.mxu0 %v456
    %3091 = vmatpush.msra.mxu0 %v450
    %3092 = vmatpush.msra.mxu0 %v444
    %3093 = vmatpush.msra.mxu0 %v438
    %3094 = vmatpush.msra.mxu0 %v432
    %3095 = vmatpush.msra.mxu0 %v426
    %3096 = vmatpush.msra.mxu0 %v420
    %3097 = vmatpush.msra.mxu0 %v414
    %3098 = vmatpush.msra.mxu0 %v408
    %3099 = vmatpush.msra.mxu0 %v402
    %3100 = vmatpush.msra.mxu0 %v396
    %3101 = vmatpush.msra.mxu0 %v390
    %3102 = vmatpush.msra.mxu0 %v384
    %3103 = vmatpush.msra.mxu0 %v378
    %3104 = vmatpush.msra.mxu0 %v372
    %3105 = vmatpush.msra.mxu0 %v366
    %3106 = vmatmul.f32.gmra.mxu0 %v3069
    %v3107 = vpop.f32.mrf.mxu0
    %v3108 = vadd.f32 0.0, %v3107
    %3109 = vdwg.mxu0
    %3110 = vmatpush.msra.mxu0 %v457
    %3111 = vmatpush.msra.mxu0 %v451
    %3112 = vmatpush.msra.mxu0 %v445
    %3113 = vmatpush.msra.mxu0 %v439
    %3114 = vmatpush.msra.mxu0 %v433
    %3115 = vmatpush.msra.mxu0 %v427
    %3116 = vmatpush.msra.mxu0 %v421
    %3117 = vmatpush.msra.mxu0 %v415
    %3118 = vmatpush.msra.mxu0 %v409
    %3119 = vmatpush.msra.mxu0 %v403
    %3120 = vmatpush.msra.mxu0 %v397
    %3121 = vmatpush.msra.mxu0 %v391
    %3122 = vmatpush.msra.mxu0 %v385
    %3123 = vmatpush.msra.mxu0 %v379
    %3124 = vmatpush.msra.mxu0 %v373
    %3125 = vmatpush.msra.mxu0 %v367
    %3126 = vmatmul.f32.gmra.mxu0 %v3069
    %v3127 = vpop.f32.mrf.mxu0
    %v3128 = vadd.f32 0.0, %v3127
    %3129 = vdwg.mxu0
    %3130 = vmatpush.msra.mxu0 %v458
    %3131 = vmatpush.msra.mxu0 %v452
    %3132 = vmatpush.msra.mxu0 %v446
    %3133 = vmatpush.msra.mxu0 %v440
    %3134 = vmatpush.msra.mxu0 %v434
    %3135 = vmatpush.msra.mxu0 %v428
    %3136 = vmatpush.msra.mxu0 %v422
    %3137 = vmatpush.msra.mxu0 %v416
    %3138 = vmatpush.msra.mxu0 %v410
    %3139 = vmatpush.msra.mxu0 %v404
    %3140 = vmatpush.msra.mxu0 %v398
    %3141 = vmatpush.msra.mxu0 %v392
    %3142 = vmatpush.msra.mxu0 %v386
    %3143 = vmatpush.msra.mxu0 %v380
    %3144 = vmatpush.msra.mxu0 %v374
    %3145 = vmatpush.msra.mxu0 %v368
    %3146 = vmatmul.f32.gmra.mxu0 %v3069
    %v3147 = vpop.f32.mrf.mxu0
    %v3148 = vadd.f32 0.0, %v3147
    %3149 = vdwg.mxu0
    %3150 = vmatpush.msra.mxu0 %v459
    %3151 = vmatpush.msra.mxu0 %v453
    %3152 = vmatpush.msra.mxu0 %v447
    %3153 = vmatpush.msra.mxu0 %v441
    %3154 = vmatpush.msra.mxu0 %v435
    %3155 = vmatpush.msra.mxu0 %v429
    %3156 = vmatpush.msra.mxu0 %v423
    %3157 = vmatpush.msra.mxu0 %v417
    %3158 = vmatpush.msra.mxu0 %v411
    %3159 = vmatpush.msra.mxu0 %v405
    %3160 = vmatpush.msra.mxu0 %v399
    %3161 = vmatpush.msra.mxu0 %v393
    %3162 = vmatpush.msra.mxu0 %v387
    %3163 = vmatpush.msra.mxu0 %v381
    %3164 = vmatpush.msra.mxu0 %v375
    %3165 = vmatpush.msra.mxu0 %v369
    %3166 = vmatmul.f32.gmra.mxu0 %v3069
    %v3167 = vpop.f32.mrf.mxu0
    %v3168 = vadd.f32 0.0, %v3167
    %3169 = vdwg.mxu0
    %3170 = vmatpush.msra.mxu0 %v460
    %3171 = vmatpush.msra.mxu0 %v454
    %3172 = vmatpush.msra.mxu0 %v448
    %3173 = vmatpush.msra.mxu0 %v442
    %3174 = vmatpush.msra.mxu0 %v436
    %3175 = vmatpush.msra.mxu0 %v430
    %3176 = vmatpush.msra.mxu0 %v424
    %3177 = vmatpush.msra.mxu0 %v418
    %3178 = vmatpush.msra.mxu0 %v412
    %3179 = vmatpush.msra.mxu0 %v406
    %3180 = vmatpush.msra.mxu0 %v400
    %3181 = vmatpush.msra.mxu0 %v394
    %3182 = vmatpush.msra.mxu0 %v388
    %3183 = vmatpush.msra.mxu0 %v382
    %3184 = vmatpush.msra.mxu0 %v376
    %3185 = vmatpush.msra.mxu0 %v370
    %3186 = vmatmul.f32.gmra.mxu0 %v3069
    %v3187 = vpop.f32.mrf.mxu0
    %v3188 = vadd.f32 0.0, %v3187
    %3189 = vdwg.mxu0
    %s3190 = scalar_lea.vmem [#allocation2], 50
    %v3191 = vld [vmem:[%s3190] ss:$8 sm:$0x7]
    %s3192 = scalar_lea.vmem [#allocation2], 29
    %v3193 = vld [vmem:[%s3192] ss:$8 sm:$0x7]
    %v3194 = vadd.f32 %v3088, %v585
    %v3195 = vadd.f32 %v3108, %v586
    %v3196 = vadd.f32 %v3128, %v587
    %v3197 = vadd.f32 %v3191, %v3194
    %v3198 = vxor.u32 %v3197, 2147483648
    %v3199 = vmul.f32 %v3198, 1.442695
    %v3200 = vpow.pop %v3199
    %v3201 = vadd.f32 %v3200, 1.0
    %v3202 = vrcp.pop %v3201
    %v3203 = vmul.f32 %v3201, %v3202
    %v3204 = vsub.f32 1.0, %v3203
    %v3205 = vmul.f32 %v3202, %v3204
    %v3206 = vadd.f32 %v3202, %v3205
    %vm3207 = vweird.f32 %v3201
    %vm3208 = vweird.f32 %v3202
    %vm3209 = vmor %vm3207, %vm3208
    %v3210 = vsel %vm3209, %v3202, %v3206
    %v3211 = vand.u32 2147483647, %v3201
    %vm3212 = vcmp.eq.f32.partialorder %v3211, 8.507059e+37
    %v3213 = vand.u32 %v3201, 2147483648
    %v3214 = vor.u32 1.1754944e-38, %v3213
    %v3215 = vsel %vm3212, %v3214, %v3210
    %v3216 = vmul.f32 1.0, %v3215
    %v3218 = vrot.slane %v3191, 1
    %v3220 = vadd.f32 %v3218, %v3195
    %v3221 = vxor.u32 %v3220, 2147483648
    %v3222 = vmul.f32 %v3221, 1.442695
    %v3223 = vpow.pop %v3222
    %v3224 = vadd.f32 %v3223, 1.0
    %v3225 = vrcp.pop %v3224
    %v3226 = vmul.f32 %v3224, %v3225
    %v3227 = vsub.f32 1.0, %v3226
    %v3228 = vmul.f32 %v3225, %v3227
    %v3229 = vadd.f32 %v3225, %v3228
    %vm3230 = vweird.f32 %v3224
    %vm3231 = vweird.f32 %v3225
    %vm3232 = vmor %vm3230, %vm3231
    %v3233 = vsel %vm3232, %v3225, %v3229
    %v3234 = vand.u32 2147483647, %v3224
    %vm3235 = vcmp.eq.f32.partialorder %v3234, 8.507059e+37
    %v3236 = vand.u32 %v3224, 2147483648
    %v3237 = vor.u32 1.1754944e-38, %v3236
    %v3238 = vsel %vm3235, %v3237, %v3233
    %v3239 = vmul.f32 1.0, %v3238
    %v3240 = vmul.f32 %v3216, %v3196
    %v3241 = vrot.slane %v3191, 2
    %v3243 = vadd.f32 %v3241, %v3240
    %v3244 = vtanh.pop %v3243
    %v3245 = vsub.f32 1.0, %v3239
    %v3246 = vmul.f32 %v3245, %v3244
    %v3247 = vmul.f32 %v3239, %v3069
    %v3248 = vadd.f32 %v3246, %v3247
    %v3249 = vadd.f32 %v3148, %v647
    %v3250 = vadd.f32 %v3168, %v648
    %v3251 = vadd.f32 %v3188, %v649
    %3253 = vst [vmem:[#allocation1] sm:$0xff] %v3249
    %s3254 = scalar_lea.vmem [#allocation1], 1
    %v3255 = vld [vmem:[%s3254] ss:$9 sm:$0xff]
    %v3257 = vadd.f32 %v3193, %v3255
    %v3258 = vxor.u32 %v3257, 2147483648
    %v3259 = vmul.f32 %v3258, 1.442695
    %v3260 = vpow.pop %v3259
    %v3261 = vadd.f32 %v3260, 1.0
    %v3262 = vrcp.pop %v3261
    %v3263 = vmul.f32 %v3261, %v3262
    %v3264 = vsub.f32 1.0, %v3263
    %v3265 = vmul.f32 %v3262, %v3264
    %v3266 = vadd.f32 %v3262, %v3265
    %vm3267 = vweird.f32 %v3261
    %vm3268 = vweird.f32 %v3262
    %vm3269 = vmor %vm3267, %vm3268
    %v3270 = vsel %vm3269, %v3262, %v3266
    %v3271 = vand.u32 2147483647, %v3261
    %vm3272 = vcmp.eq.f32.partialorder %v3271, 8.507059e+37
    %v3273 = vand.u32 %v3261, 2147483648
    %v3274 = vor.u32 1.1754944e-38, %v3273
    %v3275 = vsel %vm3272, %v3274, %v3270
    %v3276 = vmul.f32 1.0, %v3275
    %v3278 = vrot.slane %v3193, 1
    %3281 = vst [vmem:[#allocation1] sm:$0xff] %v3250
    %s3282 = scalar_lea.vmem [#allocation1], 1
    %v3283 = vld [vmem:[%s3282] ss:$9 sm:$0xff]
    %v3285 = vadd.f32 %v3278, %v3283
    %v3286 = vxor.u32 %v3285, 2147483648
    %v3287 = vmul.f32 %v3286, 1.442695
    %v3288 = vpow.pop %v3287
    %v3289 = vadd.f32 %v3288, 1.0
    %v3290 = vrcp.pop %v3289
    %v3291 = vmul.f32 %v3289, %v3290
    %v3292 = vsub.f32 1.0, %v3291
    %v3293 = vmul.f32 %v3290, %v3292
    %v3294 = vadd.f32 %v3290, %v3293
    %vm3295 = vweird.f32 %v3289
    %vm3296 = vweird.f32 %v3290
    %vm3297 = vmor %vm3295, %vm3296
    %v3298 = vsel %vm3297, %v3290, %v3294
    %v3299 = vand.u32 2147483647, %v3289
    %vm3300 = vcmp.eq.f32.partialorder %v3299, 8.507059e+37
    %v3301 = vand.u32 %v3289, 2147483648
    %v3302 = vor.u32 1.1754944e-38, %v3301
    %v3303 = vsel %vm3300, %v3302, %v3298
    %v3304 = vmul.f32 1.0, %v3303
    %3306 = vst [vmem:[#allocation1] sm:$0xff] %v3251
    %s3307 = scalar_lea.vmem [#allocation1], 1
    %v3308 = vld [vmem:[%s3307] ss:$9 sm:$0xff]
    %v3310 = vmul.f32 %v3276, %v3308
    %v3311 = vrot.slane %v3193, 2
    %v3313 = vadd.f32 %v3311, %v3310
    %v3314 = vtanh.pop %v3313
    %v3315 = vsub.f32 1.0, %v3304
    %v3316 = vmul.f32 %v3315, %v3314
    %3318 = vst [vmem:[#allocation1] sm:$0xff] %v3069
    %s3319 = scalar_lea.vmem [#allocation1], 1
    %v3320 = vld [vmem:[%s3319] ss:$9 sm:$0xff]
    %v3322 = vmul.f32 %v3304, %v3320
    %v3323 = vadd.f32 %v3316, %v3322
    %3324 = vst [vmem:[#allocation3 + $0x12] sm:$0x1] %v3248
    %3325 = vst [vmem:[#allocation3 + $0xd] sm:$0x1] %v3323
    %v3327 = vperm.slane %v3323, 0
    %v3329 = vsel %vm728, %v3248, %v3327
    %3330 = vmatpush.msra.mxu0 %v455
    %3331 = vmatpush.msra.mxu0 %v449
    %3332 = vmatpush.msra.mxu0 %v443
    %3333 = vmatpush.msra.mxu0 %v437
    %3334 = vmatpush.msra.mxu0 %v431
    %3335 = vmatpush.msra.mxu0 %v425
    %3336 = vmatpush.msra.mxu0 %v419
    %3337 = vmatpush.msra.mxu0 %v413
    %3338 = vmatpush.msra.mxu0 %v407
    %3339 = vmatpush.msra.mxu0 %v401
    %3340 = vmatpush.msra.mxu0 %v395
    %3341 = vmatpush.msra.mxu0 %v389
    %3342 = vmatpush.msra.mxu0 %v383
    %3343 = vmatpush.msra.mxu0 %v377
    %3344 = vmatpush.msra.mxu0 %v371
    %3345 = vmatpush.msra.mxu0 %v365
    %3346 = vmatmul.f32.gmra.mxu0 %v3329
    %v3347 = vpop.f32.mrf.mxu0
    %v3348 = vadd.f32 0.0, %v3347
    %3349 = vdwg.mxu0
    %3350 = vmatpush.msra.mxu0 %v456
    %3351 = vmatpush.msra.mxu0 %v450
    %3352 = vmatpush.msra.mxu0 %v444
    %3353 = vmatpush.msra.mxu0 %v438
    %3354 = vmatpush.msra.mxu0 %v432
    %3355 = vmatpush.msra.mxu0 %v426
    %3356 = vmatpush.msra.mxu0 %v420
    %3357 = vmatpush.msra.mxu0 %v414
    %3358 = vmatpush.msra.mxu0 %v408
    %3359 = vmatpush.msra.mxu0 %v402
    %3360 = vmatpush.msra.mxu0 %v396
    %3361 = vmatpush.msra.mxu0 %v390
    %3362 = vmatpush.msra.mxu0 %v384
    %3363 = vmatpush.msra.mxu0 %v378
    %3364 = vmatpush.msra.mxu0 %v372
    %3365 = vmatpush.msra.mxu0 %v366
    %3366 = vmatmul.f32.gmra.mxu0 %v3329
    %v3367 = vpop.f32.mrf.mxu0
    %v3368 = vadd.f32 0.0, %v3367
    %3369 = vdwg.mxu0
    %3370 = vmatpush.msra.mxu0 %v457
    %3371 = vmatpush.msra.mxu0 %v451
    %3372 = vmatpush.msra.mxu0 %v445
    %3373 = vmatpush.msra.mxu0 %v439
    %3374 = vmatpush.msra.mxu0 %v433
    %3375 = vmatpush.msra.mxu0 %v427
    %3376 = vmatpush.msra.mxu0 %v421
    %3377 = vmatpush.msra.mxu0 %v415
    %3378 = vmatpush.msra.mxu0 %v409
    %3379 = vmatpush.msra.mxu0 %v403
    %3380 = vmatpush.msra.mxu0 %v397
    %3381 = vmatpush.msra.mxu0 %v391
    %3382 = vmatpush.msra.mxu0 %v385
    %3383 = vmatpush.msra.mxu0 %v379
    %3384 = vmatpush.msra.mxu0 %v373
    %3385 = vmatpush.msra.mxu0 %v367
    %3386 = vmatmul.f32.gmra.mxu0 %v3329
    %v3387 = vpop.f32.mrf.mxu0
    %v3388 = vadd.f32 0.0, %v3387
    %3389 = vdwg.mxu0
    %3390 = vmatpush.msra.mxu0 %v458
    %3391 = vmatpush.msra.mxu0 %v452
    %3392 = vmatpush.msra.mxu0 %v446
    %3393 = vmatpush.msra.mxu0 %v440
    %3394 = vmatpush.msra.mxu0 %v434
    %3395 = vmatpush.msra.mxu0 %v428
    %3396 = vmatpush.msra.mxu0 %v422
    %3397 = vmatpush.msra.mxu0 %v416
    %3398 = vmatpush.msra.mxu0 %v410
    %3399 = vmatpush.msra.mxu0 %v404
    %3400 = vmatpush.msra.mxu0 %v398
    %3401 = vmatpush.msra.mxu0 %v392
    %3402 = vmatpush.msra.mxu0 %v386
    %3403 = vmatpush.msra.mxu0 %v380
    %3404 = vmatpush.msra.mxu0 %v374
    %3405 = vmatpush.msra.mxu0 %v368
    %3406 = vmatmul.f32.gmra.mxu0 %v3329
    %v3407 = vpop.f32.mrf.mxu0
    %v3408 = vadd.f32 0.0, %v3407
    %3409 = vdwg.mxu0
    %3410 = vmatpush.msra.mxu0 %v459
    %3411 = vmatpush.msra.mxu0 %v453
    %3412 = vmatpush.msra.mxu0 %v447
    %3413 = vmatpush.msra.mxu0 %v441
    %3414 = vmatpush.msra.mxu0 %v435
    %3415 = vmatpush.msra.mxu0 %v429
    %3416 = vmatpush.msra.mxu0 %v423
    %3417 = vmatpush.msra.mxu0 %v417
    %3418 = vmatpush.msra.mxu0 %v411
    %3419 = vmatpush.msra.mxu0 %v405
    %3420 = vmatpush.msra.mxu0 %v399
    %3421 = vmatpush.msra.mxu0 %v393
    %3422 = vmatpush.msra.mxu0 %v387
    %3423 = vmatpush.msra.mxu0 %v381
    %3424 = vmatpush.msra.mxu0 %v375
    %3425 = vmatpush.msra.mxu0 %v369
    %3426 = vmatmul.f32.gmra.mxu0 %v3329
    %v3427 = vpop.f32.mrf.mxu0
    %v3428 = vadd.f32 0.0, %v3427
    %3429 = vdwg.mxu0
    %3430 = vmatpush.msra.mxu0 %v460
    %3431 = vmatpush.msra.mxu0 %v454
    %3432 = vmatpush.msra.mxu0 %v448
    %3433 = vmatpush.msra.mxu0 %v442
    %3434 = vmatpush.msra.mxu0 %v436
    %3435 = vmatpush.msra.mxu0 %v430
    %3436 = vmatpush.msra.mxu0 %v424
    %3437 = vmatpush.msra.mxu0 %v418
    %3438 = vmatpush.msra.mxu0 %v412
    %3439 = vmatpush.msra.mxu0 %v406
    %3440 = vmatpush.msra.mxu0 %v400
    %3441 = vmatpush.msra.mxu0 %v394
    %3442 = vmatpush.msra.mxu0 %v388
    %3443 = vmatpush.msra.mxu0 %v382
    %3444 = vmatpush.msra.mxu0 %v376
    %3445 = vmatpush.msra.mxu0 %v370
    %3446 = vmatmul.f32.gmra.mxu0 %v3329
    %v3447 = vpop.f32.mrf.mxu0
    %v3448 = vadd.f32 0.0, %v3447
    %3449 = vdwg.mxu0
    %s3450 = scalar_lea.vmem [#allocation2], 51
    %v3451 = vld [vmem:[%s3450] ss:$8 sm:$0x7]
    %s3452 = scalar_lea.vmem [#allocation2], 28
    %v3453 = vld [vmem:[%s3452] ss:$8 sm:$0x7]
    %v3454 = vadd.f32 %v3348, %v585
    %v3455 = vadd.f32 %v3368, %v586
    %v3456 = vadd.f32 %v3388, %v587
    %v3457 = vadd.f32 %v3451, %v3454
    %v3458 = vxor.u32 %v3457, 2147483648
    %v3459 = vmul.f32 %v3458, 1.442695
    %v3460 = vpow.pop %v3459
    %v3461 = vadd.f32 %v3460, 1.0
    %v3462 = vrcp.pop %v3461
    %v3463 = vmul.f32 %v3461, %v3462
    %v3464 = vsub.f32 1.0, %v3463
    %v3465 = vmul.f32 %v3462, %v3464
    %v3466 = vadd.f32 %v3462, %v3465
    %vm3467 = vweird.f32 %v3461
    %vm3468 = vweird.f32 %v3462
    %vm3469 = vmor %vm3467, %vm3468
    %v3470 = vsel %vm3469, %v3462, %v3466
    %v3471 = vand.u32 2147483647, %v3461
    %vm3472 = vcmp.eq.f32.partialorder %v3471, 8.507059e+37
    %v3473 = vand.u32 %v3461, 2147483648
    %v3474 = vor.u32 1.1754944e-38, %v3473
    %v3475 = vsel %vm3472, %v3474, %v3470
    %v3476 = vmul.f32 1.0, %v3475
    %v3478 = vrot.slane %v3451, 1
    %v3480 = vadd.f32 %v3478, %v3455
    %v3481 = vxor.u32 %v3480, 2147483648
    %v3482 = vmul.f32 %v3481, 1.442695
    %v3483 = vpow.pop %v3482
    %v3484 = vadd.f32 %v3483, 1.0
    %v3485 = vrcp.pop %v3484
    %v3486 = vmul.f32 %v3484, %v3485
    %v3487 = vsub.f32 1.0, %v3486
    %v3488 = vmul.f32 %v3485, %v3487
    %v3489 = vadd.f32 %v3485, %v3488
    %vm3490 = vweird.f32 %v3484
    %vm3491 = vweird.f32 %v3485
    %vm3492 = vmor %vm3490, %vm3491
    %v3493 = vsel %vm3492, %v3485, %v3489
    %v3494 = vand.u32 2147483647, %v3484
    %vm3495 = vcmp.eq.f32.partialorder %v3494, 8.507059e+37
    %v3496 = vand.u32 %v3484, 2147483648
    %v3497 = vor.u32 1.1754944e-38, %v3496
    %v3498 = vsel %vm3495, %v3497, %v3493
    %v3499 = vmul.f32 1.0, %v3498
    %v3500 = vmul.f32 %v3476, %v3456
    %v3501 = vrot.slane %v3451, 2
    %v3503 = vadd.f32 %v3501, %v3500
    %v3504 = vtanh.pop %v3503
    %v3505 = vsub.f32 1.0, %v3499
    %v3506 = vmul.f32 %v3505, %v3504
    %v3507 = vmul.f32 %v3499, %v3329
    %v3508 = vadd.f32 %v3506, %v3507
    %v3509 = vadd.f32 %v3408, %v647
    %v3510 = vadd.f32 %v3428, %v648
    %v3511 = vadd.f32 %v3448, %v649
    %3513 = vst [vmem:[#allocation1] sm:$0xff] %v3509
    %s3514 = scalar_lea.vmem [#allocation1], 1
    %v3515 = vld [vmem:[%s3514] ss:$9 sm:$0xff]
    %v3517 = vadd.f32 %v3453, %v3515
    %v3518 = vxor.u32 %v3517, 2147483648
    %v3519 = vmul.f32 %v3518, 1.442695
    %v3520 = vpow.pop %v3519
    %v3521 = vadd.f32 %v3520, 1.0
    %v3522 = vrcp.pop %v3521
    %v3523 = vmul.f32 %v3521, %v3522
    %v3524 = vsub.f32 1.0, %v3523
    %v3525 = vmul.f32 %v3522, %v3524
    %v3526 = vadd.f32 %v3522, %v3525
    %vm3527 = vweird.f32 %v3521
    %vm3528 = vweird.f32 %v3522
    %vm3529 = vmor %vm3527, %vm3528
    %v3530 = vsel %vm3529, %v3522, %v3526
    %v3531 = vand.u32 2147483647, %v3521
    %vm3532 = vcmp.eq.f32.partialorder %v3531, 8.507059e+37
    %v3533 = vand.u32 %v3521, 2147483648
    %v3534 = vor.u32 1.1754944e-38, %v3533
    %v3535 = vsel %vm3532, %v3534, %v3530
    %v3536 = vmul.f32 1.0, %v3535
    %v3538 = vrot.slane %v3453, 1
    %3541 = vst [vmem:[#allocation1] sm:$0xff] %v3510
    %s3542 = scalar_lea.vmem [#allocation1], 1
    %v3543 = vld [vmem:[%s3542] ss:$9 sm:$0xff]
    %v3545 = vadd.f32 %v3538, %v3543
    %v3546 = vxor.u32 %v3545, 2147483648
    %v3547 = vmul.f32 %v3546, 1.442695
    %v3548 = vpow.pop %v3547
    %v3549 = vadd.f32 %v3548, 1.0
    %v3550 = vrcp.pop %v3549
    %v3551 = vmul.f32 %v3549, %v3550
    %v3552 = vsub.f32 1.0, %v3551
    %v3553 = vmul.f32 %v3550, %v3552
    %v3554 = vadd.f32 %v3550, %v3553
    %vm3555 = vweird.f32 %v3549
    %vm3556 = vweird.f32 %v3550
    %vm3557 = vmor %vm3555, %vm3556
    %v3558 = vsel %vm3557, %v3550, %v3554
    %v3559 = vand.u32 2147483647, %v3549
    %vm3560 = vcmp.eq.f32.partialorder %v3559, 8.507059e+37
    %v3561 = vand.u32 %v3549, 2147483648
    %v3562 = vor.u32 1.1754944e-38, %v3561
    %v3563 = vsel %vm3560, %v3562, %v3558
    %v3564 = vmul.f32 1.0, %v3563
    %3566 = vst [vmem:[#allocation1] sm:$0xff] %v3511
    %s3567 = scalar_lea.vmem [#allocation1], 1
    %v3568 = vld [vmem:[%s3567] ss:$9 sm:$0xff]
    %v3570 = vmul.f32 %v3536, %v3568
    %v3571 = vrot.slane %v3453, 2
    %v3573 = vadd.f32 %v3571, %v3570
    %v3574 = vtanh.pop %v3573
    %v3575 = vsub.f32 1.0, %v3564
    %v3576 = vmul.f32 %v3575, %v3574
    %3578 = vst [vmem:[#allocation1] sm:$0xff] %v3329
    %s3579 = scalar_lea.vmem [#allocation1], 1
    %v3580 = vld [vmem:[%s3579] ss:$9 sm:$0xff]
    %v3582 = vmul.f32 %v3564, %v3580
    %v3583 = vadd.f32 %v3576, %v3582
    %3584 = vst [vmem:[#allocation3 + $0x13] sm:$0x1] %v3508
    %3585 = vst [vmem:[#allocation3 + $0xc] sm:$0x1] %v3583
    %v3587 = vperm.slane %v3583, 0
    %v3589 = vsel %vm728, %v3508, %v3587
    %3590 = vmatpush.msra.mxu0 %v455
    %3591 = vmatpush.msra.mxu0 %v449
    %3592 = vmatpush.msra.mxu0 %v443
    %3593 = vmatpush.msra.mxu0 %v437
    %3594 = vmatpush.msra.mxu0 %v431
    %3595 = vmatpush.msra.mxu0 %v425
    %3596 = vmatpush.msra.mxu0 %v419
    %3597 = vmatpush.msra.mxu0 %v413
    %3598 = vmatpush.msra.mxu0 %v407
    %3599 = vmatpush.msra.mxu0 %v401
    %3600 = vmatpush.msra.mxu0 %v395
    %3601 = vmatpush.msra.mxu0 %v389
    %3602 = vmatpush.msra.mxu0 %v383
    %3603 = vmatpush.msra.mxu0 %v377
    %3604 = vmatpush.msra.mxu0 %v371
    %3605 = vmatpush.msra.mxu0 %v365
    %3606 = vmatmul.f32.gmra.mxu0 %v3589
    %v3607 = vpop.f32.mrf.mxu0
    %v3608 = vadd.f32 0.0, %v3607
    %3609 = vdwg.mxu0
    %3610 = vmatpush.msra.mxu0 %v456
    %3611 = vmatpush.msra.mxu0 %v450
    %3612 = vmatpush.msra.mxu0 %v444
    %3613 = vmatpush.msra.mxu0 %v438
    %3614 = vmatpush.msra.mxu0 %v432
    %3615 = vmatpush.msra.mxu0 %v426
    %3616 = vmatpush.msra.mxu0 %v420
    %3617 = vmatpush.msra.mxu0 %v414
    %3618 = vmatpush.msra.mxu0 %v408
    %3619 = vmatpush.msra.mxu0 %v402
    %3620 = vmatpush.msra.mxu0 %v396
    %3621 = vmatpush.msra.mxu0 %v390
    %3622 = vmatpush.msra.mxu0 %v384
    %3623 = vmatpush.msra.mxu0 %v378
    %3624 = vmatpush.msra.mxu0 %v372
    %3625 = vmatpush.msra.mxu0 %v366
    %3626 = vmatmul.f32.gmra.mxu0 %v3589
    %v3627 = vpop.f32.mrf.mxu0
    %v3628 = vadd.f32 0.0, %v3627
    %3629 = vdwg.mxu0
    %3630 = vmatpush.msra.mxu0 %v457
    %3631 = vmatpush.msra.mxu0 %v451
    %3632 = vmatpush.msra.mxu0 %v445
    %3633 = vmatpush.msra.mxu0 %v439
    %3634 = vmatpush.msra.mxu0 %v433
    %3635 = vmatpush.msra.mxu0 %v427
    %3636 = vmatpush.msra.mxu0 %v421
    %3637 = vmatpush.msra.mxu0 %v415
    %3638 = vmatpush.msra.mxu0 %v409
    %3639 = vmatpush.msra.mxu0 %v403
    %3640 = vmatpush.msra.mxu0 %v397
    %3641 = vmatpush.msra.mxu0 %v391
    %3642 = vmatpush.msra.mxu0 %v385
    %3643 = vmatpush.msra.mxu0 %v379
    %3644 = vmatpush.msra.mxu0 %v373
    %3645 = vmatpush.msra.mxu0 %v367
    %3646 = vmatmul.f32.gmra.mxu0 %v3589
    %v3647 = vpop.f32.mrf.mxu0
    %v3648 = vadd.f32 0.0, %v3647
    %3649 = vdwg.mxu0
    %3650 = vmatpush.msra.mxu0 %v458
    %3651 = vmatpush.msra.mxu0 %v452
    %3652 = vmatpush.msra.mxu0 %v446
    %3653 = vmatpush.msra.mxu0 %v440
    %3654 = vmatpush.msra.mxu0 %v434
    %3655 = vmatpush.msra.mxu0 %v428
    %3656 = vmatpush.msra.mxu0 %v422
    %3657 = vmatpush.msra.mxu0 %v416
    %3658 = vmatpush.msra.mxu0 %v410
    %3659 = vmatpush.msra.mxu0 %v404
    %3660 = vmatpush.msra.mxu0 %v398
    %3661 = vmatpush.msra.mxu0 %v392
    %3662 = vmatpush.msra.mxu0 %v386
    %3663 = vmatpush.msra.mxu0 %v380
    %3664 = vmatpush.msra.mxu0 %v374
    %3665 = vmatpush.msra.mxu0 %v368
    %3666 = vmatmul.f32.gmra.mxu0 %v3589
    %v3667 = vpop.f32.mrf.mxu0
    %v3668 = vadd.f32 0.0, %v3667
    %3669 = vdwg.mxu0
    %3670 = vmatpush.msra.mxu0 %v459
    %3671 = vmatpush.msra.mxu0 %v453
    %3672 = vmatpush.msra.mxu0 %v447
    %3673 = vmatpush.msra.mxu0 %v441
    %3674 = vmatpush.msra.mxu0 %v435
    %3675 = vmatpush.msra.mxu0 %v429
    %3676 = vmatpush.msra.mxu0 %v423
    %3677 = vmatpush.msra.mxu0 %v417
    %3678 = vmatpush.msra.mxu0 %v411
    %3679 = vmatpush.msra.mxu0 %v405
    %3680 = vmatpush.msra.mxu0 %v399
    %3681 = vmatpush.msra.mxu0 %v393
    %3682 = vmatpush.msra.mxu0 %v387
    %3683 = vmatpush.msra.mxu0 %v381
    %3684 = vmatpush.msra.mxu0 %v375
    %3685 = vmatpush.msra.mxu0 %v369
    %3686 = vmatmul.f32.gmra.mxu0 %v3589
    %v3687 = vpop.f32.mrf.mxu0
    %v3688 = vadd.f32 0.0, %v3687
    %3689 = vdwg.mxu0
    %3690 = vmatpush.msra.mxu0 %v460
    %3691 = vmatpush.msra.mxu0 %v454
    %3692 = vmatpush.msra.mxu0 %v448
    %3693 = vmatpush.msra.mxu0 %v442
    %3694 = vmatpush.msra.mxu0 %v436
    %3695 = vmatpush.msra.mxu0 %v430
    %3696 = vmatpush.msra.mxu0 %v424
    %3697 = vmatpush.msra.mxu0 %v418
    %3698 = vmatpush.msra.mxu0 %v412
    %3699 = vmatpush.msra.mxu0 %v406
    %3700 = vmatpush.msra.mxu0 %v400
    %3701 = vmatpush.msra.mxu0 %v394
    %3702 = vmatpush.msra.mxu0 %v388
    %3703 = vmatpush.msra.mxu0 %v382
    %3704 = vmatpush.msra.mxu0 %v376
    %3705 = vmatpush.msra.mxu0 %v370
    %3706 = vmatmul.f32.gmra.mxu0 %v3589
    %v3707 = vpop.f32.mrf.mxu0
    %v3708 = vadd.f32 0.0, %v3707
    %3709 = vdwg.mxu0
    %s3710 = scalar_lea.vmem [#allocation2], 52
    %v3711 = vld [vmem:[%s3710] ss:$8 sm:$0x7]
    %s3712 = scalar_lea.vmem [#allocation2], 27
    %v3713 = vld [vmem:[%s3712] ss:$8 sm:$0x7]
    %v3714 = vadd.f32 %v3608, %v585
    %v3715 = vadd.f32 %v3628, %v586
    %v3716 = vadd.f32 %v3648, %v587
    %v3717 = vadd.f32 %v3711, %v3714
    %v3718 = vxor.u32 %v3717, 2147483648
    %v3719 = vmul.f32 %v3718, 1.442695
    %v3720 = vpow.pop %v3719
    %v3721 = vadd.f32 %v3720, 1.0
    %v3722 = vrcp.pop %v3721
    %v3723 = vmul.f32 %v3721, %v3722
    %v3724 = vsub.f32 1.0, %v3723
    %v3725 = vmul.f32 %v3722, %v3724
    %v3726 = vadd.f32 %v3722, %v3725
    %vm3727 = vweird.f32 %v3721
    %vm3728 = vweird.f32 %v3722
    %vm3729 = vmor %vm3727, %vm3728
    %v3730 = vsel %vm3729, %v3722, %v3726
    %v3731 = vand.u32 2147483647, %v3721
    %vm3732 = vcmp.eq.f32.partialorder %v3731, 8.507059e+37
    %v3733 = vand.u32 %v3721, 2147483648
    %v3734 = vor.u32 1.1754944e-38, %v3733
    %v3735 = vsel %vm3732, %v3734, %v3730
    %v3736 = vmul.f32 1.0, %v3735
    %v3738 = vrot.slane %v3711, 1
    %v3740 = vadd.f32 %v3738, %v3715
    %v3741 = vxor.u32 %v3740, 2147483648
    %v3742 = vmul.f32 %v3741, 1.442695
    %v3743 = vpow.pop %v3742
    %v3744 = vadd.f32 %v3743, 1.0
    %v3745 = vrcp.pop %v3744
    %v3746 = vmul.f32 %v3744, %v3745
    %v3747 = vsub.f32 1.0, %v3746
    %v3748 = vmul.f32 %v3745, %v3747
    %v3749 = vadd.f32 %v3745, %v3748
    %vm3750 = vweird.f32 %v3744
    %vm3751 = vweird.f32 %v3745
    %vm3752 = vmor %vm3750, %vm3751
    %v3753 = vsel %vm3752, %v3745, %v3749
    %v3754 = vand.u32 2147483647, %v3744
    %vm3755 = vcmp.eq.f32.partialorder %v3754, 8.507059e+37
    %v3756 = vand.u32 %v3744, 2147483648
    %v3757 = vor.u32 1.1754944e-38, %v3756
    %v3758 = vsel %vm3755, %v3757, %v3753
    %v3759 = vmul.f32 1.0, %v3758
    %v3760 = vmul.f32 %v3736, %v3716
    %v3761 = vrot.slane %v3711, 2
    %v3763 = vadd.f32 %v3761, %v3760
    %v3764 = vtanh.pop %v3763
    %v3765 = vsub.f32 1.0, %v3759
    %v3766 = vmul.f32 %v3765, %v3764
    %v3767 = vmul.f32 %v3759, %v3589
    %v3768 = vadd.f32 %v3766, %v3767
    %v3769 = vadd.f32 %v3668, %v647
    %v3770 = vadd.f32 %v3688, %v648
    %v3771 = vadd.f32 %v3708, %v649
    %3773 = vst [vmem:[#allocation1] sm:$0xff] %v3769
    %s3774 = scalar_lea.vmem [#allocation1], 1
    %v3775 = vld [vmem:[%s3774] ss:$9 sm:$0xff]
    %v3777 = vadd.f32 %v3713, %v3775
    %v3778 = vxor.u32 %v3777, 2147483648
    %v3779 = vmul.f32 %v3778, 1.442695
    %v3780 = vpow.pop %v3779
    %v3781 = vadd.f32 %v3780, 1.0
    %v3782 = vrcp.pop %v3781
    %v3783 = vmul.f32 %v3781, %v3782
    %v3784 = vsub.f32 1.0, %v3783
    %v3785 = vmul.f32 %v3782, %v3784
    %v3786 = vadd.f32 %v3782, %v3785
    %vm3787 = vweird.f32 %v3781
    %vm3788 = vweird.f32 %v3782
    %vm3789 = vmor %vm3787, %vm3788
    %v3790 = vsel %vm3789, %v3782, %v3786
    %v3791 = vand.u32 2147483647, %v3781
    %vm3792 = vcmp.eq.f32.partialorder %v3791, 8.507059e+37
    %v3793 = vand.u32 %v3781, 2147483648
    %v3794 = vor.u32 1.1754944e-38, %v3793
    %v3795 = vsel %vm3792, %v3794, %v3790
    %v3796 = vmul.f32 1.0, %v3795
    %v3798 = vrot.slane %v3713, 1
    %3801 = vst [vmem:[#allocation1] sm:$0xff] %v3770
    %s3802 = scalar_lea.vmem [#allocation1], 1
    %v3803 = vld [vmem:[%s3802] ss:$9 sm:$0xff]
    %v3805 = vadd.f32 %v3798, %v3803
    %v3806 = vxor.u32 %v3805, 2147483648
    %v3807 = vmul.f32 %v3806, 1.442695
    %v3808 = vpow.pop %v3807
    %v3809 = vadd.f32 %v3808, 1.0
    %v3810 = vrcp.pop %v3809
    %v3811 = vmul.f32 %v3809, %v3810
    %v3812 = vsub.f32 1.0, %v3811
    %v3813 = vmul.f32 %v3810, %v3812
    %v3814 = vadd.f32 %v3810, %v3813
    %vm3815 = vweird.f32 %v3809
    %vm3816 = vweird.f32 %v3810
    %vm3817 = vmor %vm3815, %vm3816
    %v3818 = vsel %vm3817, %v3810, %v3814
    %v3819 = vand.u32 2147483647, %v3809
    %vm3820 = vcmp.eq.f32.partialorder %v3819, 8.507059e+37
    %v3821 = vand.u32 %v3809, 2147483648
    %v3822 = vor.u32 1.1754944e-38, %v3821
    %v3823 = vsel %vm3820, %v3822, %v3818
    %v3824 = vmul.f32 1.0, %v3823
    %3826 = vst [vmem:[#allocation1] sm:$0xff] %v3771
    %s3827 = scalar_lea.vmem [#allocation1], 1
    %v3828 = vld [vmem:[%s3827] ss:$9 sm:$0xff]
    %v3830 = vmul.f32 %v3796, %v3828
    %v3831 = vrot.slane %v3713, 2
    %v3833 = vadd.f32 %v3831, %v3830
    %v3834 = vtanh.pop %v3833
    %v3835 = vsub.f32 1.0, %v3824
    %v3836 = vmul.f32 %v3835, %v3834
    %3838 = vst [vmem:[#allocation1] sm:$0xff] %v3589
    %s3839 = scalar_lea.vmem [#allocation1], 1
    %v3840 = vld [vmem:[%s3839] ss:$9 sm:$0xff]
    %v3842 = vmul.f32 %v3824, %v3840
    %v3843 = vadd.f32 %v3836, %v3842
    %3844 = vst [vmem:[#allocation3 + $0x14] sm:$0x1] %v3768
    %3845 = vst [vmem:[#allocation3 + $0xb] sm:$0x1] %v3843
    %v3847 = vperm.slane %v3843, 0
    %v3849 = vsel %vm728, %v3768, %v3847
    %3850 = vmatpush.msra.mxu0 %v455
    %3851 = vmatpush.msra.mxu0 %v449
    %3852 = vmatpush.msra.mxu0 %v443
    %3853 = vmatpush.msra.mxu0 %v437
    %3854 = vmatpush.msra.mxu0 %v431
    %3855 = vmatpush.msra.mxu0 %v425
    %3856 = vmatpush.msra.mxu0 %v419
    %3857 = vmatpush.msra.mxu0 %v413
    %3858 = vmatpush.msra.mxu0 %v407
    %3859 = vmatpush.msra.mxu0 %v401
    %3860 = vmatpush.msra.mxu0 %v395
    %3861 = vmatpush.msra.mxu0 %v389
    %3862 = vmatpush.msra.mxu0 %v383
    %3863 = vmatpush.msra.mxu0 %v377
    %3864 = vmatpush.msra.mxu0 %v371
    %3865 = vmatpush.msra.mxu0 %v365
    %3866 = vmatmul.f32.gmra.mxu0 %v3849
    %v3867 = vpop.f32.mrf.mxu0
    %v3868 = vadd.f32 0.0, %v3867
    %3869 = vdwg.mxu0
    %3870 = vmatpush.msra.mxu0 %v456
    %3871 = vmatpush.msra.mxu0 %v450
    %3872 = vmatpush.msra.mxu0 %v444
    %3873 = vmatpush.msra.mxu0 %v438
    %3874 = vmatpush.msra.mxu0 %v432
    %3875 = vmatpush.msra.mxu0 %v426
    %3876 = vmatpush.msra.mxu0 %v420
    %3877 = vmatpush.msra.mxu0 %v414
    %3878 = vmatpush.msra.mxu0 %v408
    %3879 = vmatpush.msra.mxu0 %v402
    %3880 = vmatpush.msra.mxu0 %v396
    %3881 = vmatpush.msra.mxu0 %v390
    %3882 = vmatpush.msra.mxu0 %v384
    %3883 = vmatpush.msra.mxu0 %v378
    %3884 = vmatpush.msra.mxu0 %v372
    %3885 = vmatpush.msra.mxu0 %v366
    %3886 = vmatmul.f32.gmra.mxu0 %v3849
    %v3887 = vpop.f32.mrf.mxu0
    %v3888 = vadd.f32 0.0, %v3887
    %3889 = vdwg.mxu0
    %3890 = vmatpush.msra.mxu0 %v457
    %3891 = vmatpush.msra.mxu0 %v451
    %3892 = vmatpush.msra.mxu0 %v445
    %3893 = vmatpush.msra.mxu0 %v439
    %3894 = vmatpush.msra.mxu0 %v433
    %3895 = vmatpush.msra.mxu0 %v427
    %3896 = vmatpush.msra.mxu0 %v421
    %3897 = vmatpush.msra.mxu0 %v415
    %3898 = vmatpush.msra.mxu0 %v409
    %3899 = vmatpush.msra.mxu0 %v403
    %3900 = vmatpush.msra.mxu0 %v397
    %3901 = vmatpush.msra.mxu0 %v391
    %3902 = vmatpush.msra.mxu0 %v385
    %3903 = vmatpush.msra.mxu0 %v379
    %3904 = vmatpush.msra.mxu0 %v373
    %3905 = vmatpush.msra.mxu0 %v367
    %3906 = vmatmul.f32.gmra.mxu0 %v3849
    %v3907 = vpop.f32.mrf.mxu0
    %v3908 = vadd.f32 0.0, %v3907
    %3909 = vdwg.mxu0
    %3910 = vmatpush.msra.mxu0 %v458
    %3911 = vmatpush.msra.mxu0 %v452
    %3912 = vmatpush.msra.mxu0 %v446
    %3913 = vmatpush.msra.mxu0 %v440
    %3914 = vmatpush.msra.mxu0 %v434
    %3915 = vmatpush.msra.mxu0 %v428
    %3916 = vmatpush.msra.mxu0 %v422
    %3917 = vmatpush.msra.mxu0 %v416
    %3918 = vmatpush.msra.mxu0 %v410
    %3919 = vmatpush.msra.mxu0 %v404
    %3920 = vmatpush.msra.mxu0 %v398
    %3921 = vmatpush.msra.mxu0 %v392
    %3922 = vmatpush.msra.mxu0 %v386
    %3923 = vmatpush.msra.mxu0 %v380
    %3924 = vmatpush.msra.mxu0 %v374
    %3925 = vmatpush.msra.mxu0 %v368
    %3926 = vmatmul.f32.gmra.mxu0 %v3849
    %v3927 = vpop.f32.mrf.mxu0
    %v3928 = vadd.f32 0.0, %v3927
    %3929 = vdwg.mxu0
    %3930 = vmatpush.msra.mxu0 %v459
    %3931 = vmatpush.msra.mxu0 %v453
    %3932 = vmatpush.msra.mxu0 %v447
    %3933 = vmatpush.msra.mxu0 %v441
    %3934 = vmatpush.msra.mxu0 %v435
    %3935 = vmatpush.msra.mxu0 %v429
    %3936 = vmatpush.msra.mxu0 %v423
    %3937 = vmatpush.msra.mxu0 %v417
    %3938 = vmatpush.msra.mxu0 %v411
    %3939 = vmatpush.msra.mxu0 %v405
    %3940 = vmatpush.msra.mxu0 %v399
    %3941 = vmatpush.msra.mxu0 %v393
    %3942 = vmatpush.msra.mxu0 %v387
    %3943 = vmatpush.msra.mxu0 %v381
    %3944 = vmatpush.msra.mxu0 %v375
    %3945 = vmatpush.msra.mxu0 %v369
    %3946 = vmatmul.f32.gmra.mxu0 %v3849
    %v3947 = vpop.f32.mrf.mxu0
    %v3948 = vadd.f32 0.0, %v3947
    %3949 = vdwg.mxu0
    %3950 = vmatpush.msra.mxu0 %v460
    %3951 = vmatpush.msra.mxu0 %v454
    %3952 = vmatpush.msra.mxu0 %v448
    %3953 = vmatpush.msra.mxu0 %v442
    %3954 = vmatpush.msra.mxu0 %v436
    %3955 = vmatpush.msra.mxu0 %v430
    %3956 = vmatpush.msra.mxu0 %v424
    %3957 = vmatpush.msra.mxu0 %v418
    %3958 = vmatpush.msra.mxu0 %v412
    %3959 = vmatpush.msra.mxu0 %v406
    %3960 = vmatpush.msra.mxu0 %v400
    %3961 = vmatpush.msra.mxu0 %v394
    %3962 = vmatpush.msra.mxu0 %v388
    %3963 = vmatpush.msra.mxu0 %v382
    %3964 = vmatpush.msra.mxu0 %v376
    %3965 = vmatpush.msra.mxu0 %v370
    %3966 = vmatmul.f32.gmra.mxu0 %v3849
    %v3967 = vpop.f32.mrf.mxu0
    %v3968 = vadd.f32 0.0, %v3967
    %3969 = vdwg.mxu0
    %s3970 = scalar_lea.vmem [#allocation2], 53
    %v3971 = vld [vmem:[%s3970] ss:$8 sm:$0x7]
    %s3972 = scalar_lea.vmem [#allocation2], 26
    %v3973 = vld [vmem:[%s3972] ss:$8 sm:$0x7]
    %v3974 = vadd.f32 %v3868, %v585
    %v3975 = vadd.f32 %v3888, %v586
    %v3976 = vadd.f32 %v3908, %v587
    %v3977 = vadd.f32 %v3971, %v3974
    %v3978 = vxor.u32 %v3977, 2147483648
    %v3979 = vmul.f32 %v3978, 1.442695
    %v3980 = vpow.pop %v3979
    %v3981 = vadd.f32 %v3980, 1.0
    %v3982 = vrcp.pop %v3981
    %v3983 = vmul.f32 %v3981, %v3982
    %v3984 = vsub.f32 1.0, %v3983
    %v3985 = vmul.f32 %v3982, %v3984
    %v3986 = vadd.f32 %v3982, %v3985
    %vm3987 = vweird.f32 %v3981
    %vm3988 = vweird.f32 %v3982
    %vm3989 = vmor %vm3987, %vm3988
    %v3990 = vsel %vm3989, %v3982, %v3986
    %v3991 = vand.u32 2147483647, %v3981
    %vm3992 = vcmp.eq.f32.partialorder %v3991, 8.507059e+37
    %v3993 = vand.u32 %v3981, 2147483648
    %v3994 = vor.u32 1.1754944e-38, %v3993
    %v3995 = vsel %vm3992, %v3994, %v3990
    %v3996 = vmul.f32 1.0, %v3995
    %v3998 = vrot.slane %v3971, 1
    %v4000 = vadd.f32 %v3998, %v3975
    %v4001 = vxor.u32 %v4000, 2147483648
    %v4002 = vmul.f32 %v4001, 1.442695
    %v4003 = vpow.pop %v4002
    %v4004 = vadd.f32 %v4003, 1.0
    %v4005 = vrcp.pop %v4004
    %v4006 = vmul.f32 %v4004, %v4005
    %v4007 = vsub.f32 1.0, %v4006
    %v4008 = vmul.f32 %v4005, %v4007
    %v4009 = vadd.f32 %v4005, %v4008
    %vm4010 = vweird.f32 %v4004
    %vm4011 = vweird.f32 %v4005
    %vm4012 = vmor %vm4010, %vm4011
    %v4013 = vsel %vm4012, %v4005, %v4009
    %v4014 = vand.u32 2147483647, %v4004
    %vm4015 = vcmp.eq.f32.partialorder %v4014, 8.507059e+37
    %v4016 = vand.u32 %v4004, 2147483648
    %v4017 = vor.u32 1.1754944e-38, %v4016
    %v4018 = vsel %vm4015, %v4017, %v4013
    %v4019 = vmul.f32 1.0, %v4018
    %v4020 = vmul.f32 %v3996, %v3976
    %v4021 = vrot.slane %v3971, 2
    %v4023 = vadd.f32 %v4021, %v4020
    %v4024 = vtanh.pop %v4023
    %v4025 = vsub.f32 1.0, %v4019
    %v4026 = vmul.f32 %v4025, %v4024
    %v4027 = vmul.f32 %v4019, %v3849
    %v4028 = vadd.f32 %v4026, %v4027
    %v4029 = vadd.f32 %v3928, %v647
    %v4030 = vadd.f32 %v3948, %v648
    %v4031 = vadd.f32 %v3968, %v649
    %4033 = vst [vmem:[#allocation1] sm:$0xff] %v4029
    %s4034 = scalar_lea.vmem [#allocation1], 1
    %v4035 = vld [vmem:[%s4034] ss:$9 sm:$0xff]
    %v4037 = vadd.f32 %v3973, %v4035
    %v4038 = vxor.u32 %v4037, 2147483648
    %v4039 = vmul.f32 %v4038, 1.442695
    %v4040 = vpow.pop %v4039
    %v4041 = vadd.f32 %v4040, 1.0
    %v4042 = vrcp.pop %v4041
    %v4043 = vmul.f32 %v4041, %v4042
    %v4044 = vsub.f32 1.0, %v4043
    %v4045 = vmul.f32 %v4042, %v4044
    %v4046 = vadd.f32 %v4042, %v4045
    %vm4047 = vweird.f32 %v4041
    %vm4048 = vweird.f32 %v4042
    %vm4049 = vmor %vm4047, %vm4048
    %v4050 = vsel %vm4049, %v4042, %v4046
    %v4051 = vand.u32 2147483647, %v4041
    %vm4052 = vcmp.eq.f32.partialorder %v4051, 8.507059e+37
    %v4053 = vand.u32 %v4041, 2147483648
    %v4054 = vor.u32 1.1754944e-38, %v4053
    %v4055 = vsel %vm4052, %v4054, %v4050
    %v4056 = vmul.f32 1.0, %v4055
    %v4058 = vrot.slane %v3973, 1
    %4061 = vst [vmem:[#allocation1] sm:$0xff] %v4030
    %s4062 = scalar_lea.vmem [#allocation1], 1
    %v4063 = vld [vmem:[%s4062] ss:$9 sm:$0xff]
    %v4065 = vadd.f32 %v4058, %v4063
    %v4066 = vxor.u32 %v4065, 2147483648
    %v4067 = vmul.f32 %v4066, 1.442695
    %v4068 = vpow.pop %v4067
    %v4069 = vadd.f32 %v4068, 1.0
    %v4070 = vrcp.pop %v4069
    %v4071 = vmul.f32 %v4069, %v4070
    %v4072 = vsub.f32 1.0, %v4071
    %v4073 = vmul.f32 %v4070, %v4072
    %v4074 = vadd.f32 %v4070, %v4073
    %vm4075 = vweird.f32 %v4069
    %vm4076 = vweird.f32 %v4070
    %vm4077 = vmor %vm4075, %vm4076
    %v4078 = vsel %vm4077, %v4070, %v4074
    %v4079 = vand.u32 2147483647, %v4069
    %vm4080 = vcmp.eq.f32.partialorder %v4079, 8.507059e+37
    %v4081 = vand.u32 %v4069, 2147483648
    %v4082 = vor.u32 1.1754944e-38, %v4081
    %v4083 = vsel %vm4080, %v4082, %v4078
    %v4084 = vmul.f32 1.0, %v4083
    %4086 = vst [vmem:[#allocation1] sm:$0xff] %v4031
    %s4087 = scalar_lea.vmem [#allocation1], 1
    %v4088 = vld [vmem:[%s4087] ss:$9 sm:$0xff]
    %v4090 = vmul.f32 %v4056, %v4088
    %v4091 = vrot.slane %v3973, 2
    %v4093 = vadd.f32 %v4091, %v4090
    %v4094 = vtanh.pop %v4093
    %v4095 = vsub.f32 1.0, %v4084
    %v4096 = vmul.f32 %v4095, %v4094
    %4098 = vst [vmem:[#allocation1] sm:$0xff] %v3849
    %s4099 = scalar_lea.vmem [#allocation1], 1
    %v4100 = vld [vmem:[%s4099] ss:$9 sm:$0xff]
    %v4102 = vmul.f32 %v4084, %v4100
    %v4103 = vadd.f32 %v4096, %v4102
    %4104 = vst [vmem:[#allocation3 + $0x15] sm:$0x1] %v4028
    %4105 = vst [vmem:[#allocation3 + $0xa] sm:$0x1] %v4103
    %v4107 = vperm.slane %v4103, 0
    %v4109 = vsel %vm728, %v4028, %v4107
    %4110 = vmatpush.msra.mxu0 %v455
    %4111 = vmatpush.msra.mxu0 %v449
    %4112 = vmatpush.msra.mxu0 %v443
    %4113 = vmatpush.msra.mxu0 %v437
    %4114 = vmatpush.msra.mxu0 %v431
    %4115 = vmatpush.msra.mxu0 %v425
    %4116 = vmatpush.msra.mxu0 %v419
    %4117 = vmatpush.msra.mxu0 %v413
    %4118 = vmatpush.msra.mxu0 %v407
    %4119 = vmatpush.msra.mxu0 %v401
    %4120 = vmatpush.msra.mxu0 %v395
    %4121 = vmatpush.msra.mxu0 %v389
    %4122 = vmatpush.msra.mxu0 %v383
    %4123 = vmatpush.msra.mxu0 %v377
    %4124 = vmatpush.msra.mxu0 %v371
    %4125 = vmatpush.msra.mxu0 %v365
    %4126 = vmatmul.f32.gmra.mxu0 %v4109
    %v4127 = vpop.f32.mrf.mxu0
    %v4128 = vadd.f32 0.0, %v4127
    %4129 = vdwg.mxu0
    %4130 = vmatpush.msra.mxu0 %v456
    %4131 = vmatpush.msra.mxu0 %v450
    %4132 = vmatpush.msra.mxu0 %v444
    %4133 = vmatpush.msra.mxu0 %v438
    %4134 = vmatpush.msra.mxu0 %v432
    %4135 = vmatpush.msra.mxu0 %v426
    %4136 = vmatpush.msra.mxu0 %v420
    %4137 = vmatpush.msra.mxu0 %v414
    %4138 = vmatpush.msra.mxu0 %v408
    %4139 = vmatpush.msra.mxu0 %v402
    %4140 = vmatpush.msra.mxu0 %v396
    %4141 = vmatpush.msra.mxu0 %v390
    %4142 = vmatpush.msra.mxu0 %v384
    %4143 = vmatpush.msra.mxu0 %v378
    %4144 = vmatpush.msra.mxu0 %v372
    %4145 = vmatpush.msra.mxu0 %v366
    %4146 = vmatmul.f32.gmra.mxu0 %v4109
    %v4147 = vpop.f32.mrf.mxu0
    %v4148 = vadd.f32 0.0, %v4147
    %4149 = vdwg.mxu0
    %4150 = vmatpush.msra.mxu0 %v457
    %4151 = vmatpush.msra.mxu0 %v451
    %4152 = vmatpush.msra.mxu0 %v445
    %4153 = vmatpush.msra.mxu0 %v439
    %4154 = vmatpush.msra.mxu0 %v433
    %4155 = vmatpush.msra.mxu0 %v427
    %4156 = vmatpush.msra.mxu0 %v421
    %4157 = vmatpush.msra.mxu0 %v415
    %4158 = vmatpush.msra.mxu0 %v409
    %4159 = vmatpush.msra.mxu0 %v403
    %4160 = vmatpush.msra.mxu0 %v397
    %4161 = vmatpush.msra.mxu0 %v391
    %4162 = vmatpush.msra.mxu0 %v385
    %4163 = vmatpush.msra.mxu0 %v379
    %4164 = vmatpush.msra.mxu0 %v373
    %4165 = vmatpush.msra.mxu0 %v367
    %4166 = vmatmul.f32.gmra.mxu0 %v4109
    %v4167 = vpop.f32.mrf.mxu0
    %v4168 = vadd.f32 0.0, %v4167
    %4169 = vdwg.mxu0
    %4170 = vmatpush.msra.mxu0 %v458
    %4171 = vmatpush.msra.mxu0 %v452
    %4172 = vmatpush.msra.mxu0 %v446
    %4173 = vmatpush.msra.mxu0 %v440
    %4174 = vmatpush.msra.mxu0 %v434
    %4175 = vmatpush.msra.mxu0 %v428
    %4176 = vmatpush.msra.mxu0 %v422
    %4177 = vmatpush.msra.mxu0 %v416
    %4178 = vmatpush.msra.mxu0 %v410
    %4179 = vmatpush.msra.mxu0 %v404
    %4180 = vmatpush.msra.mxu0 %v398
    %4181 = vmatpush.msra.mxu0 %v392
    %4182 = vmatpush.msra.mxu0 %v386
    %4183 = vmatpush.msra.mxu0 %v380
    %4184 = vmatpush.msra.mxu0 %v374
    %4185 = vmatpush.msra.mxu0 %v368
    %4186 = vmatmul.f32.gmra.mxu0 %v4109
    %v4187 = vpop.f32.mrf.mxu0
    %v4188 = vadd.f32 0.0, %v4187
    %4189 = vdwg.mxu0
    %4190 = vmatpush.msra.mxu0 %v459
    %4191 = vmatpush.msra.mxu0 %v453
    %4192 = vmatpush.msra.mxu0 %v447
    %4193 = vmatpush.msra.mxu0 %v441
    %4194 = vmatpush.msra.mxu0 %v435
    %4195 = vmatpush.msra.mxu0 %v429
    %4196 = vmatpush.msra.mxu0 %v423
    %4197 = vmatpush.msra.mxu0 %v417
    %4198 = vmatpush.msra.mxu0 %v411
    %4199 = vmatpush.msra.mxu0 %v405
    %4200 = vmatpush.msra.mxu0 %v399
    %4201 = vmatpush.msra.mxu0 %v393
    %4202 = vmatpush.msra.mxu0 %v387
    %4203 = vmatpush.msra.mxu0 %v381
    %4204 = vmatpush.msra.mxu0 %v375
    %4205 = vmatpush.msra.mxu0 %v369
    %4206 = vmatmul.f32.gmra.mxu0 %v4109
    %v4207 = vpop.f32.mrf.mxu0
    %v4208 = vadd.f32 0.0, %v4207
    %4209 = vdwg.mxu0
    %4210 = vmatpush.msra.mxu0 %v460
    %4211 = vmatpush.msra.mxu0 %v454
    %4212 = vmatpush.msra.mxu0 %v448
    %4213 = vmatpush.msra.mxu0 %v442
    %4214 = vmatpush.msra.mxu0 %v436
    %4215 = vmatpush.msra.mxu0 %v430
    %4216 = vmatpush.msra.mxu0 %v424
    %4217 = vmatpush.msra.mxu0 %v418
    %4218 = vmatpush.msra.mxu0 %v412
    %4219 = vmatpush.msra.mxu0 %v406
    %4220 = vmatpush.msra.mxu0 %v400
    %4221 = vmatpush.msra.mxu0 %v394
    %4222 = vmatpush.msra.mxu0 %v388
    %4223 = vmatpush.msra.mxu0 %v382
    %4224 = vmatpush.msra.mxu0 %v376
    %4225 = vmatpush.msra.mxu0 %v370
    %4226 = vmatmul.f32.gmra.mxu0 %v4109
    %v4227 = vpop.f32.mrf.mxu0
    %v4228 = vadd.f32 0.0, %v4227
    %4229 = vdwg.mxu0
    %s4230 = scalar_lea.vmem [#allocation2], 54
    %v4231 = vld [vmem:[%s4230] ss:$8 sm:$0x7]
    %s4232 = scalar_lea.vmem [#allocation2], 25
    %v4233 = vld [vmem:[%s4232] ss:$8 sm:$0x7]
    %v4234 = vadd.f32 %v4128, %v585
    %v4235 = vadd.f32 %v4148, %v586
    %v4236 = vadd.f32 %v4168, %v587
    %v4237 = vadd.f32 %v4231, %v4234
    %v4238 = vxor.u32 %v4237, 2147483648
    %v4239 = vmul.f32 %v4238, 1.442695
    %v4240 = vpow.pop %v4239
    %v4241 = vadd.f32 %v4240, 1.0
    %v4242 = vrcp.pop %v4241
    %v4243 = vmul.f32 %v4241, %v4242
    %v4244 = vsub.f32 1.0, %v4243
    %v4245 = vmul.f32 %v4242, %v4244
    %v4246 = vadd.f32 %v4242, %v4245
    %vm4247 = vweird.f32 %v4241
    %vm4248 = vweird.f32 %v4242
    %vm4249 = vmor %vm4247, %vm4248
    %v4250 = vsel %vm4249, %v4242, %v4246
    %v4251 = vand.u32 2147483647, %v4241
    %vm4252 = vcmp.eq.f32.partialorder %v4251, 8.507059e+37
    %v4253 = vand.u32 %v4241, 2147483648
    %v4254 = vor.u32 1.1754944e-38, %v4253
    %v4255 = vsel %vm4252, %v4254, %v4250
    %v4256 = vmul.f32 1.0, %v4255
    %v4258 = vrot.slane %v4231, 1
    %v4260 = vadd.f32 %v4258, %v4235
    %v4261 = vxor.u32 %v4260, 2147483648
    %v4262 = vmul.f32 %v4261, 1.442695
    %v4263 = vpow.pop %v4262
    %v4264 = vadd.f32 %v4263, 1.0
    %v4265 = vrcp.pop %v4264
    %v4266 = vmul.f32 %v4264, %v4265
    %v4267 = vsub.f32 1.0, %v4266
    %v4268 = vmul.f32 %v4265, %v4267
    %v4269 = vadd.f32 %v4265, %v4268
    %vm4270 = vweird.f32 %v4264
    %vm4271 = vweird.f32 %v4265
    %vm4272 = vmor %vm4270, %vm4271
    %v4273 = vsel %vm4272, %v4265, %v4269
    %v4274 = vand.u32 2147483647, %v4264
    %vm4275 = vcmp.eq.f32.partialorder %v4274, 8.507059e+37
    %v4276 = vand.u32 %v4264, 2147483648
    %v4277 = vor.u32 1.1754944e-38, %v4276
    %v4278 = vsel %vm4275, %v4277, %v4273
    %v4279 = vmul.f32 1.0, %v4278
    %v4280 = vmul.f32 %v4256, %v4236
    %v4281 = vrot.slane %v4231, 2
    %v4283 = vadd.f32 %v4281, %v4280
    %v4284 = vtanh.pop %v4283
    %v4285 = vsub.f32 1.0, %v4279
    %v4286 = vmul.f32 %v4285, %v4284
    %v4287 = vmul.f32 %v4279, %v4109
    %v4288 = vadd.f32 %v4286, %v4287
    %v4289 = vadd.f32 %v4188, %v647
    %v4290 = vadd.f32 %v4208, %v648
    %v4291 = vadd.f32 %v4228, %v649
    %4293 = vst [vmem:[#allocation1] sm:$0xff] %v4289
    %s4294 = scalar_lea.vmem [#allocation1], 1
    %v4295 = vld [vmem:[%s4294] ss:$9 sm:$0xff]
    %v4297 = vadd.f32 %v4233, %v4295
    %v4298 = vxor.u32 %v4297, 2147483648
    %v4299 = vmul.f32 %v4298, 1.442695
    %v4300 = vpow.pop %v4299
    %v4301 = vadd.f32 %v4300, 1.0
    %v4302 = vrcp.pop %v4301
    %v4303 = vmul.f32 %v4301, %v4302
    %v4304 = vsub.f32 1.0, %v4303
    %v4305 = vmul.f32 %v4302, %v4304
    %v4306 = vadd.f32 %v4302, %v4305
    %vm4307 = vweird.f32 %v4301
    %vm4308 = vweird.f32 %v4302
    %vm4309 = vmor %vm4307, %vm4308
    %v4310 = vsel %vm4309, %v4302, %v4306
    %v4311 = vand.u32 2147483647, %v4301
    %vm4312 = vcmp.eq.f32.partialorder %v4311, 8.507059e+37
    %v4313 = vand.u32 %v4301, 2147483648
    %v4314 = vor.u32 1.1754944e-38, %v4313
    %v4315 = vsel %vm4312, %v4314, %v4310
    %v4316 = vmul.f32 1.0, %v4315
    %v4318 = vrot.slane %v4233, 1
    %4321 = vst [vmem:[#allocation1] sm:$0xff] %v4290
    %s4322 = scalar_lea.vmem [#allocation1], 1
    %v4323 = vld [vmem:[%s4322] ss:$9 sm:$0xff]
    %v4325 = vadd.f32 %v4318, %v4323
    %v4326 = vxor.u32 %v4325, 2147483648
    %v4327 = vmul.f32 %v4326, 1.442695
    %v4328 = vpow.pop %v4327
    %v4329 = vadd.f32 %v4328, 1.0
    %v4330 = vrcp.pop %v4329
    %v4331 = vmul.f32 %v4329, %v4330
    %v4332 = vsub.f32 1.0, %v4331
    %v4333 = vmul.f32 %v4330, %v4332
    %v4334 = vadd.f32 %v4330, %v4333
    %vm4335 = vweird.f32 %v4329
    %vm4336 = vweird.f32 %v4330
    %vm4337 = vmor %vm4335, %vm4336
    %v4338 = vsel %vm4337, %v4330, %v4334
    %v4339 = vand.u32 2147483647, %v4329
    %vm4340 = vcmp.eq.f32.partialorder %v4339, 8.507059e+37
    %v4341 = vand.u32 %v4329, 2147483648
    %v4342 = vor.u32 1.1754944e-38, %v4341
    %v4343 = vsel %vm4340, %v4342, %v4338
    %v4344 = vmul.f32 1.0, %v4343
    %4346 = vst [vmem:[#allocation1] sm:$0xff] %v4291
    %s4347 = scalar_lea.vmem [#allocation1], 1
    %v4348 = vld [vmem:[%s4347] ss:$9 sm:$0xff]
    %v4350 = vmul.f32 %v4316, %v4348
    %v4351 = vrot.slane %v4233, 2
    %v4353 = vadd.f32 %v4351, %v4350
    %v4354 = vtanh.pop %v4353
    %v4355 = vsub.f32 1.0, %v4344
    %v4356 = vmul.f32 %v4355, %v4354
    %4358 = vst [vmem:[#allocation1] sm:$0xff] %v4109
    %s4359 = scalar_lea.vmem [#allocation1], 1
    %v4360 = vld [vmem:[%s4359] ss:$9 sm:$0xff]
    %v4362 = vmul.f32 %v4344, %v4360
    %v4363 = vadd.f32 %v4356, %v4362
    %4364 = vst [vmem:[#allocation3 + $0x16] sm:$0x1] %v4288
    %4365 = vst [vmem:[#allocation3 + $0x9] sm:$0x1] %v4363
    %v4367 = vperm.slane %v4363, 0
    %v4369 = vsel %vm728, %v4288, %v4367
    %4370 = vmatpush.msra.mxu0 %v455
    %4371 = vmatpush.msra.mxu0 %v449
    %4372 = vmatpush.msra.mxu0 %v443
    %4373 = vmatpush.msra.mxu0 %v437
    %4374 = vmatpush.msra.mxu0 %v431
    %4375 = vmatpush.msra.mxu0 %v425
    %4376 = vmatpush.msra.mxu0 %v419
    %4377 = vmatpush.msra.mxu0 %v413
    %4378 = vmatpush.msra.mxu0 %v407
    %4379 = vmatpush.msra.mxu0 %v401
    %4380 = vmatpush.msra.mxu0 %v395
    %4381 = vmatpush.msra.mxu0 %v389
    %4382 = vmatpush.msra.mxu0 %v383
    %4383 = vmatpush.msra.mxu0 %v377
    %4384 = vmatpush.msra.mxu0 %v371
    %4385 = vmatpush.msra.mxu0 %v365
    %4386 = vmatmul.f32.gmra.mxu0 %v4369
    %v4387 = vpop.f32.mrf.mxu0
    %v4388 = vadd.f32 0.0, %v4387
    %4389 = vdwg.mxu0
    %4390 = vmatpush.msra.mxu0 %v456
    %4391 = vmatpush.msra.mxu0 %v450
    %4392 = vmatpush.msra.mxu0 %v444
    %4393 = vmatpush.msra.mxu0 %v438
    %4394 = vmatpush.msra.mxu0 %v432
    %4395 = vmatpush.msra.mxu0 %v426
    %4396 = vmatpush.msra.mxu0 %v420
    %4397 = vmatpush.msra.mxu0 %v414
    %4398 = vmatpush.msra.mxu0 %v408
    %4399 = vmatpush.msra.mxu0 %v402
    %4400 = vmatpush.msra.mxu0 %v396
    %4401 = vmatpush.msra.mxu0 %v390
    %4402 = vmatpush.msra.mxu0 %v384
    %4403 = vmatpush.msra.mxu0 %v378
    %4404 = vmatpush.msra.mxu0 %v372
    %4405 = vmatpush.msra.mxu0 %v366
    %4406 = vmatmul.f32.gmra.mxu0 %v4369
    %v4407 = vpop.f32.mrf.mxu0
    %v4408 = vadd.f32 0.0, %v4407
    %4409 = vdwg.mxu0
    %4410 = vmatpush.msra.mxu0 %v457
    %4411 = vmatpush.msra.mxu0 %v451
    %4412 = vmatpush.msra.mxu0 %v445
    %4413 = vmatpush.msra.mxu0 %v439
    %4414 = vmatpush.msra.mxu0 %v433
    %4415 = vmatpush.msra.mxu0 %v427
    %4416 = vmatpush.msra.mxu0 %v421
    %4417 = vmatpush.msra.mxu0 %v415
    %4418 = vmatpush.msra.mxu0 %v409
    %4419 = vmatpush.msra.mxu0 %v403
    %4420 = vmatpush.msra.mxu0 %v397
    %4421 = vmatpush.msra.mxu0 %v391
    %4422 = vmatpush.msra.mxu0 %v385
    %4423 = vmatpush.msra.mxu0 %v379
    %4424 = vmatpush.msra.mxu0 %v373
    %4425 = vmatpush.msra.mxu0 %v367
    %4426 = vmatmul.f32.gmra.mxu0 %v4369
    %v4427 = vpop.f32.mrf.mxu0
    %v4428 = vadd.f32 0.0, %v4427
    %4429 = vdwg.mxu0
    %4430 = vmatpush.msra.mxu0 %v458
    %4431 = vmatpush.msra.mxu0 %v452
    %4432 = vmatpush.msra.mxu0 %v446
    %4433 = vmatpush.msra.mxu0 %v440
    %4434 = vmatpush.msra.mxu0 %v434
    %4435 = vmatpush.msra.mxu0 %v428
    %4436 = vmatpush.msra.mxu0 %v422
    %4437 = vmatpush.msra.mxu0 %v416
    %4438 = vmatpush.msra.mxu0 %v410
    %4439 = vmatpush.msra.mxu0 %v404
    %4440 = vmatpush.msra.mxu0 %v398
    %4441 = vmatpush.msra.mxu0 %v392
    %4442 = vmatpush.msra.mxu0 %v386
    %4443 = vmatpush.msra.mxu0 %v380
    %4444 = vmatpush.msra.mxu0 %v374
    %4445 = vmatpush.msra.mxu0 %v368
    %4446 = vmatmul.f32.gmra.mxu0 %v4369
    %v4447 = vpop.f32.mrf.mxu0
    %v4448 = vadd.f32 0.0, %v4447
    %4449 = vdwg.mxu0
    %4450 = vmatpush.msra.mxu0 %v459
    %4451 = vmatpush.msra.mxu0 %v453
    %4452 = vmatpush.msra.mxu0 %v447
    %4453 = vmatpush.msra.mxu0 %v441
    %4454 = vmatpush.msra.mxu0 %v435
    %4455 = vmatpush.msra.mxu0 %v429
    %4456 = vmatpush.msra.mxu0 %v423
    %4457 = vmatpush.msra.mxu0 %v417
    %4458 = vmatpush.msra.mxu0 %v411
    %4459 = vmatpush.msra.mxu0 %v405
    %4460 = vmatpush.msra.mxu0 %v399
    %4461 = vmatpush.msra.mxu0 %v393
    %4462 = vmatpush.msra.mxu0 %v387
    %4463 = vmatpush.msra.mxu0 %v381
    %4464 = vmatpush.msra.mxu0 %v375
    %4465 = vmatpush.msra.mxu0 %v369
    %4466 = vmatmul.f32.gmra.mxu0 %v4369
    %v4467 = vpop.f32.mrf.mxu0
    %v4468 = vadd.f32 0.0, %v4467
    %4469 = vdwg.mxu0
    %4470 = vmatpush.msra.mxu0 %v460
    %4471 = vmatpush.msra.mxu0 %v454
    %4472 = vmatpush.msra.mxu0 %v448
    %4473 = vmatpush.msra.mxu0 %v442
    %4474 = vmatpush.msra.mxu0 %v436
    %4475 = vmatpush.msra.mxu0 %v430
    %4476 = vmatpush.msra.mxu0 %v424
    %4477 = vmatpush.msra.mxu0 %v418
    %4478 = vmatpush.msra.mxu0 %v412
    %4479 = vmatpush.msra.mxu0 %v406
    %4480 = vmatpush.msra.mxu0 %v400
    %4481 = vmatpush.msra.mxu0 %v394
    %4482 = vmatpush.msra.mxu0 %v388
    %4483 = vmatpush.msra.mxu0 %v382
    %4484 = vmatpush.msra.mxu0 %v376
    %4485 = vmatpush.msra.mxu0 %v370
    %4486 = vmatmul.f32.gmra.mxu0 %v4369
    %v4487 = vpop.f32.mrf.mxu0
    %v4488 = vadd.f32 0.0, %v4487
    %4489 = vdwg.mxu0
    %s4490 = scalar_lea.vmem [#allocation2], 55
    %v4491 = vld [vmem:[%s4490] ss:$8 sm:$0x7]
    %s4492 = scalar_lea.vmem [#allocation2], 24
    %v4493 = vld [vmem:[%s4492] ss:$8 sm:$0x7]
    %v4494 = vadd.f32 %v4388, %v585
    %v4495 = vadd.f32 %v4408, %v586
    %v4496 = vadd.f32 %v4428, %v587
    %v4497 = vadd.f32 %v4491, %v4494
    %v4498 = vxor.u32 %v4497, 2147483648
    %v4499 = vmul.f32 %v4498, 1.442695
    %v4500 = vpow.pop %v4499
    %v4501 = vadd.f32 %v4500, 1.0
    %v4502 = vrcp.pop %v4501
    %v4503 = vmul.f32 %v4501, %v4502
    %v4504 = vsub.f32 1.0, %v4503
    %v4505 = vmul.f32 %v4502, %v4504
    %v4506 = vadd.f32 %v4502, %v4505
    %vm4507 = vweird.f32 %v4501
    %vm4508 = vweird.f32 %v4502
    %vm4509 = vmor %vm4507, %vm4508
    %v4510 = vsel %vm4509, %v4502, %v4506
    %v4511 = vand.u32 2147483647, %v4501
    %vm4512 = vcmp.eq.f32.partialorder %v4511, 8.507059e+37
    %v4513 = vand.u32 %v4501, 2147483648
    %v4514 = vor.u32 1.1754944e-38, %v4513
    %v4515 = vsel %vm4512, %v4514, %v4510
    %v4516 = vmul.f32 1.0, %v4515
    %v4518 = vrot.slane %v4491, 1
    %v4520 = vadd.f32 %v4518, %v4495
    %v4521 = vxor.u32 %v4520, 2147483648
    %v4522 = vmul.f32 %v4521, 1.442695
    %v4523 = vpow.pop %v4522
    %v4524 = vadd.f32 %v4523, 1.0
    %v4525 = vrcp.pop %v4524
    %v4526 = vmul.f32 %v4524, %v4525
    %v4527 = vsub.f32 1.0, %v4526
    %v4528 = vmul.f32 %v4525, %v4527
    %v4529 = vadd.f32 %v4525, %v4528
    %vm4530 = vweird.f32 %v4524
    %vm4531 = vweird.f32 %v4525
    %vm4532 = vmor %vm4530, %vm4531
    %v4533 = vsel %vm4532, %v4525, %v4529
    %v4534 = vand.u32 2147483647, %v4524
    %vm4535 = vcmp.eq.f32.partialorder %v4534, 8.507059e+37
    %v4536 = vand.u32 %v4524, 2147483648
    %v4537 = vor.u32 1.1754944e-38, %v4536
    %v4538 = vsel %vm4535, %v4537, %v4533
    %v4539 = vmul.f32 1.0, %v4538
    %v4540 = vmul.f32 %v4516, %v4496
    %v4541 = vrot.slane %v4491, 2
    %v4543 = vadd.f32 %v4541, %v4540
    %v4544 = vtanh.pop %v4543
    %v4545 = vsub.f32 1.0, %v4539
    %v4546 = vmul.f32 %v4545, %v4544
    %v4547 = vmul.f32 %v4539, %v4369
    %v4548 = vadd.f32 %v4546, %v4547
    %v4549 = vadd.f32 %v4448, %v647
    %v4550 = vadd.f32 %v4468, %v648
    %v4551 = vadd.f32 %v4488, %v649
    %4553 = vst [vmem:[#allocation1] sm:$0xff] %v4549
    %s4554 = scalar_lea.vmem [#allocation1], 1
    %v4555 = vld [vmem:[%s4554] ss:$9 sm:$0xff]
    %v4557 = vadd.f32 %v4493, %v4555
    %v4558 = vxor.u32 %v4557, 2147483648
    %v4559 = vmul.f32 %v4558, 1.442695
    %v4560 = vpow.pop %v4559
    %v4561 = vadd.f32 %v4560, 1.0
    %v4562 = vrcp.pop %v4561
    %v4563 = vmul.f32 %v4561, %v4562
    %v4564 = vsub.f32 1.0, %v4563
    %v4565 = vmul.f32 %v4562, %v4564
    %v4566 = vadd.f32 %v4562, %v4565
    %vm4567 = vweird.f32 %v4561
    %vm4568 = vweird.f32 %v4562
    %vm4569 = vmor %vm4567, %vm4568
    %v4570 = vsel %vm4569, %v4562, %v4566
    %v4571 = vand.u32 2147483647, %v4561
    %vm4572 = vcmp.eq.f32.partialorder %v4571, 8.507059e+37
    %v4573 = vand.u32 %v4561, 2147483648
    %v4574 = vor.u32 1.1754944e-38, %v4573
    %v4575 = vsel %vm4572, %v4574, %v4570
    %v4576 = vmul.f32 1.0, %v4575
    %v4578 = vrot.slane %v4493, 1
    %4581 = vst [vmem:[#allocation1] sm:$0xff] %v4550
    %s4582 = scalar_lea.vmem [#allocation1], 1
    %v4583 = vld [vmem:[%s4582] ss:$9 sm:$0xff]
    %v4585 = vadd.f32 %v4578, %v4583
    %v4586 = vxor.u32 %v4585, 2147483648
    %v4587 = vmul.f32 %v4586, 1.442695
    %v4588 = vpow.pop %v4587
    %v4589 = vadd.f32 %v4588, 1.0
    %v4590 = vrcp.pop %v4589
    %v4591 = vmul.f32 %v4589, %v4590
    %v4592 = vsub.f32 1.0, %v4591
    %v4593 = vmul.f32 %v4590, %v4592
    %v4594 = vadd.f32 %v4590, %v4593
    %vm4595 = vweird.f32 %v4589
    %vm4596 = vweird.f32 %v4590
    %vm4597 = vmor %vm4595, %vm4596
    %v4598 = vsel %vm4597, %v4590, %v4594
    %v4599 = vand.u32 2147483647, %v4589
    %vm4600 = vcmp.eq.f32.partialorder %v4599, 8.507059e+37
    %v4601 = vand.u32 %v4589, 2147483648
    %v4602 = vor.u32 1.1754944e-38, %v4601
    %v4603 = vsel %vm4600, %v4602, %v4598
    %v4604 = vmul.f32 1.0, %v4603
    %4606 = vst [vmem:[#allocation1] sm:$0xff] %v4551
    %s4607 = scalar_lea.vmem [#allocation1], 1
    %v4608 = vld [vmem:[%s4607] ss:$9 sm:$0xff]
    %v4610 = vmul.f32 %v4576, %v4608
    %v4611 = vrot.slane %v4493, 2
    %v4613 = vadd.f32 %v4611, %v4610
    %v4614 = vtanh.pop %v4613
    %v4615 = vsub.f32 1.0, %v4604
    %v4616 = vmul.f32 %v4615, %v4614
    %4618 = vst [vmem:[#allocation1] sm:$0xff] %v4369
    %s4619 = scalar_lea.vmem [#allocation1], 1
    %v4620 = vld [vmem:[%s4619] ss:$9 sm:$0xff]
    %v4622 = vmul.f32 %v4604, %v4620
    %v4623 = vadd.f32 %v4616, %v4622
    %4624 = vst [vmem:[#allocation3 + $0x17] sm:$0x1] %v4548
    %4625 = vst [vmem:[#allocation3 + $0x8] sm:$0x1] %v4623
    %s4626 = sld [smem:[#allocation4]]
    %s4627 = sshra.s32 %s4626, 3
    %s4628 = sand.u32 %s4626, 7
    %s4629 = sshra.s32 %s4626, 3
    %s4630 = sand.u32 %s4626, 7
    %s4631 = smul.u32 %s4627, 2
    %s4632 = smul.u32 %s4631, 8
    %s4633 = sadd.s32 %s4632, %s4630
    %s4634 = scalar_lea.vmem [#allocation3], %s4633
    %v4635 = vld [vmem:[%s4634] ss:$8 sm:$0x3]
    %v4636 = vld [vmem:[#allocation10] sm:$0xff]
    %v4637 = vld [vmem:[#allocation10 + $0x8] sm:$0xff]
    %v4638 = vld [vmem:[#allocation10 + $0x10] sm:$0xff]
    %v4639 = vld [vmem:[#allocation10 + $0x18] sm:$0xff]
    %v4640 = vld [vmem:[#allocation10 + $0x20] sm:$0xff]
    %v4641 = vld [vmem:[#allocation10 + $0x28] sm:$0xff]
    %v4642 = vld [vmem:[#allocation10 + $0x30] sm:$0xff]
    %v4643 = vld [vmem:[#allocation10 + $0x38] sm:$0xff]
    %v4644 = vld [vmem:[#allocation10 + $0x40] sm:$0xff]
    %v4645 = vld [vmem:[#allocation10 + $0x48] sm:$0xff]
    %v4646 = vld [vmem:[#allocation10 + $0x50] sm:$0xff]
    %v4647 = vld [vmem:[#allocation10 + $0x58] sm:$0xff]
    %v4648 = vld [vmem:[#allocation10 + $0x60] sm:$0xff]
    %v4649 = vld [vmem:[#allocation10 + $0x68] sm:$0xff]
    %v4650 = vld [vmem:[#allocation10 + $0x70] sm:$0xff]
    %v4651 = vld [vmem:[#allocation10 + $0x78] sm:$0xff]
    %v4652 = vld [vmem:[#allocation10 + $0x80] sm:$0xff]
    %v4653 = vld [vmem:[#allocation10 + $0x88] sm:$0xff]
    %v4654 = vld [vmem:[#allocation10 + $0x90] sm:$0xff]
    %v4655 = vld [vmem:[#allocation10 + $0x98] sm:$0xff]
    %v4656 = vld [vmem:[#allocation10 + $0xa0] sm:$0xff]
    %v4657 = vld [vmem:[#allocation10 + $0xa8] sm:$0xff]
    %v4658 = vld [vmem:[#allocation10 + $0xb0] sm:$0xff]
    %v4659 = vld [vmem:[#allocation10 + $0xb8] sm:$0xff]
    %v4660 = vld [vmem:[#allocation10 + $0xc0] sm:$0xff]
    %v4661 = vld [vmem:[#allocation10 + $0xc8] sm:$0xff]
    %v4662 = vld [vmem:[#allocation10 + $0xd0] sm:$0xff]
    %v4663 = vld [vmem:[#allocation10 + $0xd8] sm:$0xff]
    %v4664 = vld [vmem:[#allocation10 + $0xe0] sm:$0xff]
    %v4665 = vld [vmem:[#allocation10 + $0xe8] sm:$0xff]
    %v4666 = vld [vmem:[#allocation10 + $0xf0] sm:$0xff]
    %v4667 = vld [vmem:[#allocation10 + $0xf8] sm:$0xff]
    %v4668 = vld [vmem:[#allocation10 + $0x100] sm:$0xff]
    %v4669 = vld [vmem:[#allocation10 + $0x108] sm:$0xff]
    %v4670 = vld [vmem:[#allocation10 + $0x110] sm:$0xff]
    %v4671 = vld [vmem:[#allocation10 + $0x118] sm:$0xff]
    %v4672 = vld [vmem:[#allocation10 + $0x120] sm:$0xff]
    %v4673 = vld [vmem:[#allocation10 + $0x128] sm:$0xff]
    %v4674 = vld [vmem:[#allocation10 + $0x130] sm:$0xff]
    %v4675 = vld [vmem:[#allocation10 + $0x138] sm:$0xff]
    %v4676 = vld [vmem:[#allocation10 + $0x140] sm:$0xff]
    %v4677 = vld [vmem:[#allocation10 + $0x148] sm:$0xff]
    %v4678 = vld [vmem:[#allocation10 + $0x150] sm:$0xff]
    %v4679 = vld [vmem:[#allocation10 + $0x158] sm:$0xff]
    %v4680 = vld [vmem:[#allocation10 + $0x160] sm:$0xff]
    %v4681 = vld [vmem:[#allocation10 + $0x168] sm:$0xff]
    %v4682 = vld [vmem:[#allocation10 + $0x170] sm:$0xff]
    %v4683 = vld [vmem:[#allocation10 + $0x178] sm:$0xff]
    %v4684 = vld [vmem:[#allocation10 + $0x180] sm:$0xff]
    %v4685 = vld [vmem:[#allocation10 + $0x188] sm:$0xff]
    %v4686 = vld [vmem:[#allocation10 + $0x190] sm:$0xff]
    %v4687 = vld [vmem:[#allocation10 + $0x198] sm:$0xff]
    %v4688 = vld [vmem:[#allocation10 + $0x1a0] sm:$0xff]
    %v4689 = vld [vmem:[#allocation10 + $0x1a8] sm:$0xff]
    %v4690 = vld [vmem:[#allocation10 + $0x1b0] sm:$0xff]
    %v4691 = vld [vmem:[#allocation10 + $0x1b8] sm:$0xff]
    %v4692 = vld [vmem:[#allocation10 + $0x1c0] sm:$0xff]
    %v4693 = vld [vmem:[#allocation10 + $0x1c8] sm:$0xff]
    %v4694 = vld [vmem:[#allocation10 + $0x1d0] sm:$0xff]
    %v4695 = vld [vmem:[#allocation10 + $0x1d8] sm:$0xff]
    %v4696 = vld [vmem:[#allocation10 + $0x1e0] sm:$0xff]
    %v4697 = vld [vmem:[#allocation10 + $0x1e8] sm:$0xff]
    %v4698 = vld [vmem:[#allocation10 + $0x1f0] sm:$0xff]
    %v4699 = vld [vmem:[#allocation10 + $0x1f8] sm:$0xff]
    %v4700 = vld [vmem:[#allocation10 + $0x200] sm:$0xff]
    %v4701 = vld [vmem:[#allocation10 + $0x208] sm:$0xff]
    %v4702 = vld [vmem:[#allocation10 + $0x210] sm:$0xff]
    %v4703 = vld [vmem:[#allocation10 + $0x218] sm:$0xff]
    %v4704 = vld [vmem:[#allocation10 + $0x220] sm:$0xff]
    %v4705 = vld [vmem:[#allocation10 + $0x228] sm:$0xff]
    %v4706 = vld [vmem:[#allocation10 + $0x230] sm:$0xff]
    %v4707 = vld [vmem:[#allocation10 + $0x238] sm:$0xff]
    %v4708 = vld [vmem:[#allocation10 + $0x240] sm:$0xff]
    %v4709 = vld [vmem:[#allocation10 + $0x248] sm:$0xff]
    %v4710 = vld [vmem:[#allocation10 + $0x250] sm:$0xff]
    %v4711 = vld [vmem:[#allocation10 + $0x258] sm:$0xff]
    %v4712 = vld [vmem:[#allocation10 + $0x260] sm:$0xff]
    %v4713 = vld [vmem:[#allocation10 + $0x268] sm:$0xff]
    %v4714 = vld [vmem:[#allocation10 + $0x270] sm:$0xff]
    %v4715 = vld [vmem:[#allocation10 + $0x278] sm:$0xff]
    %v4716 = vld [vmem:[#allocation10 + $0x280] sm:$0xff]
    %v4717 = vld [vmem:[#allocation10 + $0x288] sm:$0xff]
    %v4718 = vld [vmem:[#allocation10 + $0x290] sm:$0xff]
    %v4719 = vld [vmem:[#allocation10 + $0x298] sm:$0xff]
    %v4720 = vld [vmem:[#allocation10 + $0x2a0] sm:$0xff]
    %v4721 = vld [vmem:[#allocation10 + $0x2a8] sm:$0xff]
    %v4722 = vld [vmem:[#allocation10 + $0x2b0] sm:$0xff]
    %v4723 = vld [vmem:[#allocation10 + $0x2b8] sm:$0xff]
    %v4724 = vld [vmem:[#allocation10 + $0x2c0] sm:$0xff]
    %v4725 = vld [vmem:[#allocation10 + $0x2c8] sm:$0xff]
    %v4726 = vld [vmem:[#allocation10 + $0x2d0] sm:$0xff]
    %v4727 = vld [vmem:[#allocation10 + $0x2d8] sm:$0xff]
    %v4728 = vld [vmem:[#allocation10 + $0x2e0] sm:$0xff]
    %v4729 = vld [vmem:[#allocation10 + $0x2e8] sm:$0xff]
    %v4730 = vld [vmem:[#allocation10 + $0x2f0] sm:$0xff]
    %v4731 = vld [vmem:[#allocation10 + $0x2f8] sm:$0xff]
    %v4733 = vperm.slane %v4635, 0
    %v4734 = vperm.slane %v4635, 1
    %v4738 = vperm.slane %v140, 0
    %v4739 = vperm.slane %v140, 1
    %v4740 = vperm.slane %v140, 2
    %4744 = vmatpush.msra.mxu0 %v4681
    %4745 = vmatpush.msra.mxu0 %v4678
    %4746 = vmatpush.msra.mxu0 %v4675
    %4747 = vmatpush.msra.mxu0 %v4672
    %4748 = vmatpush.msra.mxu0 %v4669
    %4749 = vmatpush.msra.mxu0 %v4666
    %4750 = vmatpush.msra.mxu0 %v4663
    %4751 = vmatpush.msra.mxu0 %v4660
    %4752 = vmatpush.msra.mxu0 %v4657
    %4753 = vmatpush.msra.mxu0 %v4654
    %4754 = vmatpush.msra.mxu0 %v4651
    %4755 = vmatpush.msra.mxu0 %v4648
    %4756 = vmatpush.msra.mxu0 %v4645
    %4757 = vmatpush.msra.mxu0 %v4642
    %4758 = vmatpush.msra.mxu0 %v4639
    %4759 = vmatpush.msra.mxu0 %v4636
    %4760 = vmatmul.f32.gmra.mxu0 %v4733
    %v4761 = vpop.f32.mrf.mxu0
    %v4762 = vadd.f32 %v4738, %v4761
    %4763 = vdwg.mxu0
    %4764 = vmatpush.msra.mxu0 %v4729
    %4765 = vmatpush.msra.mxu0 %v4726
    %4766 = vmatpush.msra.mxu0 %v4723
    %4767 = vmatpush.msra.mxu0 %v4720
    %4768 = vmatpush.msra.mxu0 %v4717
    %4769 = vmatpush.msra.mxu0 %v4714
    %4770 = vmatpush.msra.mxu0 %v4711
    %4771 = vmatpush.msra.mxu0 %v4708
    %4772 = vmatpush.msra.mxu0 %v4705
    %4773 = vmatpush.msra.mxu0 %v4702
    %4774 = vmatpush.msra.mxu0 %v4699
    %4775 = vmatpush.msra.mxu0 %v4696
    %4776 = vmatpush.msra.mxu0 %v4693
    %4777 = vmatpush.msra.mxu0 %v4690
    %4778 = vmatpush.msra.mxu0 %v4687
    %4779 = vmatpush.msra.mxu0 %v4684
    %4780 = vmatmul.f32.gmra.mxu0 %v4734
    %v4781 = vpop.f32.mrf.mxu0
    %v4782 = vadd.f32 %v4762, %v4781
    %4783 = vdwg.mxu0
    %4784 = vmatpush.msra.mxu0 %v4682
    %4785 = vmatpush.msra.mxu0 %v4679
    %4786 = vmatpush.msra.mxu0 %v4676
    %4787 = vmatpush.msra.mxu0 %v4673
    %4788 = vmatpush.msra.mxu0 %v4670
    %4789 = vmatpush.msra.mxu0 %v4667
    %4790 = vmatpush.msra.mxu0 %v4664
    %4791 = vmatpush.msra.mxu0 %v4661
    %4792 = vmatpush.msra.mxu0 %v4658
    %4793 = vmatpush.msra.mxu0 %v4655
    %4794 = vmatpush.msra.mxu0 %v4652
    %4795 = vmatpush.msra.mxu0 %v4649
    %4796 = vmatpush.msra.mxu0 %v4646
    %4797 = vmatpush.msra.mxu0 %v4643
    %4798 = vmatpush.msra.mxu0 %v4640
    %4799 = vmatpush.msra.mxu0 %v4637
    %4800 = vmatmul.f32.gmra.mxu0 %v4733
    %v4801 = vpop.f32.mrf.mxu0
    %v4802 = vadd.f32 %v4739, %v4801
    %4803 = vdwg.mxu0
    %4804 = vmatpush.msra.mxu0 %v4730
    %4805 = vmatpush.msra.mxu0 %v4727
    %4806 = vmatpush.msra.mxu0 %v4724
    %4807 = vmatpush.msra.mxu0 %v4721
    %4808 = vmatpush.msra.mxu0 %v4718
    %4809 = vmatpush.msra.mxu0 %v4715
    %4810 = vmatpush.msra.mxu0 %v4712
    %4811 = vmatpush.msra.mxu0 %v4709
    %4812 = vmatpush.msra.mxu0 %v4706
    %4813 = vmatpush.msra.mxu0 %v4703
    %4814 = vmatpush.msra.mxu0 %v4700
    %4815 = vmatpush.msra.mxu0 %v4697
    %4816 = vmatpush.msra.mxu0 %v4694
    %4817 = vmatpush.msra.mxu0 %v4691
    %4818 = vmatpush.msra.mxu0 %v4688
    %4819 = vmatpush.msra.mxu0 %v4685
    %4820 = vmatmul.f32.gmra.mxu0 %v4734
    %v4821 = vpop.f32.mrf.mxu0
    %v4822 = vadd.f32 %v4802, %v4821
    %4823 = vdwg.mxu0
    %4824 = vmatpush.msra.mxu0 %v4683
    %4825 = vmatpush.msra.mxu0 %v4680
    %4826 = vmatpush.msra.mxu0 %v4677
    %4827 = vmatpush.msra.mxu0 %v4674
    %4828 = vmatpush.msra.mxu0 %v4671
    %4829 = vmatpush.msra.mxu0 %v4668
    %4830 = vmatpush.msra.mxu0 %v4665
    %4831 = vmatpush.msra.mxu0 %v4662
    %4832 = vmatpush.msra.mxu0 %v4659
    %4833 = vmatpush.msra.mxu0 %v4656
    %4834 = vmatpush.msra.mxu0 %v4653
    %4835 = vmatpush.msra.mxu0 %v4650
    %4836 = vmatpush.msra.mxu0 %v4647
    %4837 = vmatpush.msra.mxu0 %v4644
    %4838 = vmatpush.msra.mxu0 %v4641
    %4839 = vmatpush.msra.mxu0 %v4638
    %4840 = vmatmul.f32.gmra.mxu0 %v4733
    %v4841 = vpop.f32.mrf.mxu0
    %v4842 = vadd.f32 %v4740, %v4841
    %4843 = vdwg.mxu0
    %4844 = vmatpush.msra.mxu0 %v4731
    %4845 = vmatpush.msra.mxu0 %v4728
    %4846 = vmatpush.msra.mxu0 %v4725
    %4847 = vmatpush.msra.mxu0 %v4722
    %4848 = vmatpush.msra.mxu0 %v4719
    %4849 = vmatpush.msra.mxu0 %v4716
    %4850 = vmatpush.msra.mxu0 %v4713
    %4851 = vmatpush.msra.mxu0 %v4710
    %4852 = vmatpush.msra.mxu0 %v4707
    %4853 = vmatpush.msra.mxu0 %v4704
    %4854 = vmatpush.msra.mxu0 %v4701
    %4855 = vmatpush.msra.mxu0 %v4698
    %4856 = vmatpush.msra.mxu0 %v4695
    %4857 = vmatpush.msra.mxu0 %v4692
    %4858 = vmatpush.msra.mxu0 %v4689
    %4859 = vmatpush.msra.mxu0 %v4686
    %4860 = vmatmul.f32.gmra.mxu0 %v4734
    %v4861 = vpop.f32.mrf.mxu0
    %v4862 = vadd.f32 %v4842, %v4861
    %4863 = vdwg.mxu0
    %v4864 = vadd.f32 %v4782, %v141
    %v4865 = vxor.u32 %v4864, 2147483648
    %v4866 = vmul.f32 %v4865, 1.442695
    %v4867 = vpow.pop %v4866
    %v4868 = vadd.f32 %v4867, 1.0
    %v4869 = vrcp.pop %v4868
    %v4870 = vmul.f32 %v4868, %v4869
    %v4871 = vsub.f32 1.0, %v4870
    %v4872 = vmul.f32 %v4869, %v4871
    %v4873 = vadd.f32 %v4869, %v4872
    %vm4874 = vweird.f32 %v4868
    %vm4875 = vweird.f32 %v4869
    %vm4876 = vmor %vm4874, %vm4875
    %v4877 = vsel %vm4876, %v4869, %v4873
    %v4878 = vand.u32 2147483647, %v4868
    %vm4879 = vcmp.eq.f32.partialorder %v4878, 8.507059e+37
    %v4880 = vand.u32 %v4868, 2147483648
    %v4881 = vor.u32 1.1754944e-38, %v4880
    %v4882 = vsel %vm4879, %v4881, %v4877
    %v4883 = vmul.f32 1.0, %v4882
    %v4885 = vperm.slane %v141, 1
    %v4887 = vadd.f32 %v4822, %v4885
    %v4888 = vxor.u32 %v4887, 2147483648
    %v4889 = vmul.f32 %v4888, 1.442695
    %v4890 = vpow.pop %v4889
    %v4891 = vadd.f32 %v4890, 1.0
    %v4892 = vrcp.pop %v4891
    %v4893 = vmul.f32 %v4891, %v4892
    %v4894 = vsub.f32 1.0, %v4893
    %v4895 = vmul.f32 %v4892, %v4894
    %v4896 = vadd.f32 %v4892, %v4895
    %vm4897 = vweird.f32 %v4891
    %vm4898 = vweird.f32 %v4892
    %vm4899 = vmor %vm4897, %vm4898
    %v4900 = vsel %vm4899, %v4892, %v4896
    %v4901 = vand.u32 2147483647, %v4891
    %vm4902 = vcmp.eq.f32.partialorder %v4901, 8.507059e+37
    %v4903 = vand.u32 %v4891, 2147483648
    %v4904 = vor.u32 1.1754944e-38, %v4903
    %v4905 = vsel %vm4902, %v4904, %v4900
    %v4906 = vmul.f32 1.0, %v4905
    %v4907 = vperm.slane %v141, 2
    %v4909 = vmul.f32 %v4883, %v4907
    %v4910 = vadd.f32 %v4862, %v4909
    %v4911 = vtanh.pop %v4910
    %v4912 = vsub.f32 1.0, %v4906
    %v4913 = vmul.f32 %v4912, %v4911
    %v4914 = vld [vmem:[#allocation3] sm:$0xff]
    %v4915 = vld [vmem:[#allocation3 + $0x8] sm:$0xff]
    %v4916 = vld [vmem:[#allocation3 + $0x10] sm:$0xff]
    %v4917 = vld [vmem:[#allocation3 + $0x18] sm:$0xff]
    %v4918 = vld [vmem:[#allocation12] sm:$0xff]
    %v4919 = vld [vmem:[#allocation12 + $0x8] sm:$0xff]
    %v4920 = vld [vmem:[#allocation12 + $0x10] sm:$0xff]
    %v4921 = vld [vmem:[#allocation12 + $0x18] sm:$0xff]
    %v4922 = vld [vmem:[#allocation12 + $0x20] sm:$0xff]
    %v4923 = vld [vmem:[#allocation12 + $0x28] sm:$0xff]
    %v4924 = vld [vmem:[#allocation12 + $0x30] sm:$0xff]
    %v4925 = vld [vmem:[#allocation12 + $0x38] sm:$0xff]
    %v4926 = vld [vmem:[#allocation12 + $0x40] sm:$0xff]
    %v4927 = vld [vmem:[#allocation12 + $0x48] sm:$0xff]
    %v4928 = vld [vmem:[#allocation12 + $0x50] sm:$0xff]
    %v4929 = vld [vmem:[#allocation12 + $0x58] sm:$0xff]
    %v4930 = vld [vmem:[#allocation12 + $0x60] sm:$0xff]
    %v4931 = vld [vmem:[#allocation12 + $0x68] sm:$0xff]
    %v4932 = vld [vmem:[#allocation12 + $0x70] sm:$0xff]
    %v4933 = vld [vmem:[#allocation12 + $0x78] sm:$0xff]
    %v4934 = vld [vmem:[#allocation12 + $0x80] sm:$0xff]
    %v4935 = vld [vmem:[#allocation12 + $0x88] sm:$0xff]
    %v4936 = vld [vmem:[#allocation12 + $0x90] sm:$0xff]
    %v4937 = vld [vmem:[#allocation12 + $0x98] sm:$0xff]
    %v4938 = vld [vmem:[#allocation12 + $0xa0] sm:$0xff]
    %v4939 = vld [vmem:[#allocation12 + $0xa8] sm:$0xff]
    %v4940 = vld [vmem:[#allocation12 + $0xb0] sm:$0xff]
    %v4941 = vld [vmem:[#allocation12 + $0xb8] sm:$0xff]
    %v4942 = vld [vmem:[#allocation12 + $0xc0] sm:$0xff]
    %v4943 = vld [vmem:[#allocation12 + $0xc8] sm:$0xff]
    %v4944 = vld [vmem:[#allocation12 + $0xd0] sm:$0xff]
    %v4945 = vld [vmem:[#allocation12 + $0xd8] sm:$0xff]
    %v4946 = vld [vmem:[#allocation12 + $0xe0] sm:$0xff]
    %v4947 = vld [vmem:[#allocation12 + $0xe8] sm:$0xff]
    %v4948 = vld [vmem:[#allocation12 + $0xf0] sm:$0xff]
    %v4949 = vld [vmem:[#allocation12 + $0xf8] sm:$0xff]
    %v4951 = vperm.slane %v142, 0
    %4953 = vmatpush.msra.mxu0 %v4933
    %4954 = vmatpush.msra.mxu0 %v4932
    %4955 = vmatpush.msra.mxu0 %v4931
    %4956 = vmatpush.msra.mxu0 %v4930
    %4957 = vmatpush.msra.mxu0 %v4929
    %4958 = vmatpush.msra.mxu0 %v4928
    %4959 = vmatpush.msra.mxu0 %v4927
    %4960 = vmatpush.msra.mxu0 %v4926
    %4961 = vmatpush.msra.mxu0 %v4925
    %4962 = vmatpush.msra.mxu0 %v4924
    %4963 = vmatpush.msra.mxu0 %v4923
    %4964 = vmatpush.msra.mxu0 %v4922
    %4965 = vmatpush.msra.mxu0 %v4921
    %4966 = vmatpush.msra.mxu0 %v4920
    %4967 = vmatpush.msra.mxu0 %v4919
    %4968 = vmatpush.msra.mxu0 %v4918
    %4969 = vmatmul.f32.gmra.mxu0 %v4914
    %v4970 = vpop.f32.mrf.mxu0
    %v4971 = vadd.f32 %v4951, %v4970
    %4972 = vmatmul.f32.gmra.mxu0 %v4916
    %v4973 = vpop.f32.mrf.mxu0
    %v4974 = vadd.f32 %v4951, %v4973
    %4975 = vdwg.mxu0
    %4976 = vmatpush.msra.mxu0 %v4949
    %4977 = vmatpush.msra.mxu0 %v4948
    %4978 = vmatpush.msra.mxu0 %v4947
    %4979 = vmatpush.msra.mxu0 %v4946
    %4980 = vmatpush.msra.mxu0 %v4945
    %4981 = vmatpush.msra.mxu0 %v4944
    %4982 = vmatpush.msra.mxu0 %v4943
    %4983 = vmatpush.msra.mxu0 %v4942
    %4984 = vmatpush.msra.mxu0 %v4941
    %4985 = vmatpush.msra.mxu0 %v4940
    %4986 = vmatpush.msra.mxu0 %v4939
    %4987 = vmatpush.msra.mxu0 %v4938
    %4988 = vmatpush.msra.mxu0 %v4937
    %4989 = vmatpush.msra.mxu0 %v4936
    %4990 = vmatpush.msra.mxu0 %v4935
    %4991 = vmatpush.msra.mxu0 %v4934
    %4992 = vmatmul.f32.gmra.mxu0 %v4915
    %v4993 = vpop.f32.mrf.mxu0
    %v4994 = vadd.f32 %v4971, %v4993
    %4995 = vmatmul.f32.gmra.mxu0 %v4917
    %v4996 = vpop.f32.mrf.mxu0
    %v4997 = vadd.f32 %v4974, %v4996
    %4998 = vdwg.mxu0
    %v4999 = vld [vmem:[#allocation13] sm:$0xff]
    %v5000 = vld [vmem:[#allocation13 + $0x8] sm:$0xff]
    %v5001 = vld [vmem:[#allocation13 + $0x10] sm:$0xff]
    %v5002 = vld [vmem:[#allocation13 + $0x18] sm:$0xff]
    %v5003 = vld [vmem:[#allocation13 + $0x20] sm:$0xff]
    %v5004 = vld [vmem:[#allocation13 + $0x28] sm:$0xff]
    %v5005 = vld [vmem:[#allocation13 + $0x30] sm:$0xff]
    %v5006 = vld [vmem:[#allocation13 + $0x38] sm:$0xff]
    %v5007 = vld [vmem:[#allocation13 + $0x40] sm:$0xff]
    %v5008 = vld [vmem:[#allocation13 + $0x48] sm:$0xff]
    %v5009 = vld [vmem:[#allocation13 + $0x50] sm:$0xff]
    %v5010 = vld [vmem:[#allocation13 + $0x58] sm:$0xff]
    %v5011 = vld [vmem:[#allocation13 + $0x60] sm:$0xff]
    %v5012 = vld [vmem:[#allocation13 + $0x68] sm:$0xff]
    %v5013 = vld [vmem:[#allocation13 + $0x70] sm:$0xff]
    %v5014 = vld [vmem:[#allocation13 + $0x78] sm:$0xff]
    %5015 = vmatpush.msra.mxu0 %v5014
    %5016 = vmatpush.msra.mxu0 %v5013
    %5017 = vmatpush.msra.mxu0 %v5012
    %5018 = vmatpush.msra.mxu0 %v5011
    %5019 = vmatpush.msra.mxu0 %v5010
    %5020 = vmatpush.msra.mxu0 %v5009
    %5021 = vmatpush.msra.mxu0 %v5008
    %5022 = vmatpush.msra.mxu0 %v5007
    %5023 = vmatpush.msra.mxu0 %v5006
    %5024 = vmatpush.msra.mxu0 %v5005
    %5025 = vmatpush.msra.mxu0 %v5004
    %5026 = vmatpush.msra.mxu0 %v5003
    %5027 = vmatpush.msra.mxu0 %v5002
    %5028 = vmatpush.msra.mxu0 %v5001
    %5029 = vmatpush.msra.mxu0 %v5000
    %5030 = vmatpush.msra.mxu0 %v4999
    %5031 = vmatmul.f32.gmra.mxu0 %v4913
    %v5032 = vpop.f32.mrf.mxu0
    %v5033 = vadd.f32 %v143, %v5032
    %5034 = vdwg.mxu0
    %v5035 = vperm.slane %v5033, 0
    %v5036 = vadd.f32 %v4994, %v5035
    %v5037 = vadd.f32 %v4997, %v5035
    %v5038 = vtanh.pop %v5036
    %v5039 = vtanh.pop %v5037
    %v5041 = vperm.slane %v144, 0
    %v5043 = vmul.f32 %v5038, %v5041
    %v5044 = vmul.f32 %v5039, %v5041
    %5045 = vadd.xlane.f32.xlu0 %v5043
    %v5046 = vpop.xlane.xlu0 %5045
    %5047 = vadd.xlane.f32.xlu0 %v5044
    %v5048 = vpop.xlane.xlu0 %5047
    %v5049 = vmax.f32 %v5046, %v5048
    %v5050 = vrot.slane %v5049, 4
    %v5051 = vmax.f32 %v5049, %v5050
    %v5052 = vrot.slane %v5051, 2
    %v5053 = vmax.f32 %v5051, %v5052
    %v5054 = vrot.slane %v5053, 1
    %v5055 = vmax.f32 %v5053, %v5054
    %v5056 = vsub.f32 %v5046, %v5055
    %v5057 = vsub.f32 %v5048, %v5055
    %v5058 = vmul.f32 %v5056, 1.442695
    %v5059 = vpow.pop %v5058
    %v5060 = vmul.f32 %v5057, 1.442695
    %v5061 = vpow.pop %v5060
    %v5062 = vadd.f32 %v5059, %v5061
    %v5063 = vrot.slane %v5062, 4
    %v5064 = vadd.f32 %v5062, %v5063
    %v5065 = vrot.slane %v5064, 2
    %v5066 = vadd.f32 %v5064, %v5065
    %v5067 = vrot.slane %v5066, 1
    %v5068 = vadd.f32 %v5066, %v5067
    %v5069 = vrcp.pop %v5068
    %v5070 = vmul.f32 %v5068, %v5069
    %v5071 = vsub.f32 1.0, %v5070
    %v5072 = vmul.f32 %v5069, %v5071
    %v5073 = vadd.f32 %v5069, %v5072
    %vm5074 = vweird.f32 %v5068
    %vm5075 = vweird.f32 %v5069
    %vm5076 = vmor %vm5074, %vm5075
    %v5077 = vsel %vm5076, %v5069, %v5073
    %v5078 = vand.u32 2147483647, %v5068
    %vm5079 = vcmp.eq.f32.partialorder %v5078, 8.507059e+37
    %v5080 = vand.u32 %v5068, 2147483648
    %v5081 = vor.u32 1.1754944e-38, %v5080
    %v5082 = vsel %vm5079, %v5081, %v5077
    %v5083 = vmul.f32 %v5059, %v5082
    %v5084 = vmul.f32 %v5061, %v5082
    %vm5085 = vcmask 7168
    %5086 = vst.msk [vmem:[%s8] sm:$0xff] %vm5085, %v5083
    %5087 = vst.msk [vmem:[%s8 + $0x8] sm:$0xff] %vm5085, %v5084
    // Predicated region
    $region62: #{tpu_custom_call.1} parent=1 // pred_check
      _
    $region63: #{tpu_custom_call.1} parent=1 // pred_check_branch
      %5089 = sbr.rel (0) target = $region65
    $region64: #{tpu_custom_call.1} parent=1 // pred_region
      _
    $region65: #{tpu_custom_call.1} parent=1 // pred_fallthru
      _
    // Predicated region
    $region66: #{tpu_custom_call.1} parent=1 // pred_check
      _
    $region67: #{tpu_custom_call.1} parent=1 // pred_check_branch
      %5091 = sbr.rel (0) target = $region69
    $region68: #{tpu_custom_call.1} parent=1 // pred_region
      _
    $region69: #{tpu_custom_call.1} parent=1 // pred_fallthru
      _
    %5092 = vsyncpa [#allocation6], 1
    %5093 = vsyncpa [#allocation8], 1
    %5094 = vsyncpa [#allocation11], 1
    %5095 = vsyncpa [#allocation14], 1

</llo_original>
